<compile_context>
chip_gen: v5e
topology: v5e:2x2
jax: 0.10.0
libtpu: 0.0.40
codegen_flags: <defaults>
</compile_context>

<pallas_src>
import functools

import jax
import jax.numpy as jnp
from jax.experimental import pallas as pl
from jax.experimental.pallas import tpu as pltpu

EPS = 1e-5


def _resnet_block_kernel(xf_ref, w1_ref, b1_ref, w2_ref, b2_ref, out_ref,
                         ypad_ref, *, H, W):
    # xf_ref   : (Lp, Cp)     flattened reflection-padded input, f32
    #                         (Lp = (H+3)*(W+2): H+2 padded rows + 1 slack row)
    # w*_ref   : (3, 3, Cp, Cp) conv weights, HWIO, compute dtype (bf16 or f32)
    # b*_ref   : (1, Cp)      conv biases, f32
    # out_ref  : (Lacc, Cp)   flat output (Lacc = H*(W+2); cols >= W are junk)
    # ypad_ref : (Lp, Cp)     f32 VMEM scratch holding the padded intermediate
    Wp = W + 2
    Lacc = H * Wp
    Cp = out_ref.shape[-1]
    cd = w1_ref.dtype                       # MXU compute dtype
    inv_n = jnp.float32(1.0 / (H * W))

    # Column index inside each width-(W+2) flat row.  Columns >= W are
    # out-of-image "wrap" positions: masked out of the statistics and
    # discarded by the wrapper.
    col = jax.lax.broadcasted_iota(jnp.int32, (Lacc, 1), 0) % Wp
    valid = col < W

    def conv3x3(tap, w_ref, b_ref):
        # 3x3 conv as 9 MXU matmuls on contiguous flat slices (no per-tap
        # 2-D slice+reshape relayouts).  Accumulate in f32.
        acc = None
        for dh in range(3):
            for dw in range(3):
                lhs = tap(dh * Wp + dw).astype(cd)
                t = jnp.dot(lhs, w_ref[dh, dw],
                            preferred_element_type=jnp.float32)
                acc = t if acc is None else acc + t
        return acc + b_ref[...].astype(jnp.float32)

    def instance_norm(a):
        # Single-pass masked statistics (sum & sum-of-squares) in f32 over the
        # H*W valid positions of each channel (biased variance, like PyTorch).
        av = jnp.where(valid, a, 0.0)
        s = jnp.sum(av, axis=0, keepdims=True)
        s2 = jnp.sum(av * av, axis=0, keepdims=True)
        mean = s * inv_n
        var = jnp.maximum(s2 * inv_n - mean * mean, 0.0)
        return (a - mean) * jax.lax.rsqrt(var + EPS)

    # ---- conv1 -> InstanceNorm -> ReLU -------------------------------------
    y = conv3x3(lambda off: xf_ref[pl.ds(off, Lacc), :], w1_ref, b1_ref)
    y = jnp.maximum(instance_norm(y), 0.0)           # (Lacc, Cp) f32

    # ---- reflection-pad the intermediate into the flat VMEM scratch --------
    # One shifted bulk store places y at padded rows 1..H (flat offset Wp+1).
    ypad_ref[pl.ds(Wp + 1, Lacc), :] = y
    # Left/right reflected borders: for a padded-flat position j,
    #   left  border (col 0)   needs the value at j+2  (== y[row, 1])
    #   right border (col W+1) needs the value at j-2  (== y[row, W-2]).
    # Patch them with two contiguous shifted reads + selects over rows 1..H.
    cur = ypad_ref[pl.ds(Wp, Lacc), :]
    plus2 = ypad_ref[pl.ds(Wp + 2, Lacc), :]
    minus2 = ypad_ref[pl.ds(Wp - 2, Lacc), :]
    fixed = jnp.where(col == 0, plus2, jnp.where(col == W + 1, minus2, cur))
    ypad_ref[pl.ds(Wp, Lacc), :] = fixed
    # Top/bottom reflected rows: padded row 0 == padded row 2,
    # padded row H+1 == padded row H-1 (two narrow row copies).
    ypad_ref[pl.ds(0, Wp), :] = ypad_ref[pl.ds(2 * Wp, Wp), :]
    ypad_ref[pl.ds((H + 1) * Wp, Wp), :] = ypad_ref[pl.ds((H - 1) * Wp, Wp), :]
    # Slack row (only feeds discarded wrap columns) -- keep it finite.
    ypad_ref[pl.ds((H + 2) * Wp, Wp), :] = jnp.zeros((Wp, Cp), jnp.float32)

    # ---- conv2 -> InstanceNorm ----------------------------------------------
    z = instance_norm(
        conv3x3(lambda off: ypad_ref[pl.ds(off, Lacc), :], w2_ref, b2_ref))

    # ---- residual add: original x sits at flat offset Wp+1 of the padded
    # input, f32 (inputs are not down-cast, so the skip path stays exact). ----
    res = xf_ref[pl.ds(Wp + 1, Lacc), :]
    out_ref[...] = (res + z).astype(out_ref.dtype)


def resnet_block_pallas(x_nchw, w1, b1, w2, b2, *, compute_dtype=jnp.bfloat16):
    """x_nchw: (N, C, H, W) f32; w*: (3,3,C,C) HWIO; b*: (C,)."""
    N, C, H, W = x_nchw.shape
    if H < 3 or W < 3:
        raise ValueError("ResnetBlock Pallas kernel requires H >= 3 and W >= 3")
    Wp = W + 2
    Lp = (H + 3) * Wp            # H+2 padded rows + 1 slack row (tap headroom)
    Lacc = H * Wp                # flat accumulator / output length
    Cp = ((C + 127) // 128) * 128  # lane-dense channel dim (no-op for C=256)

    # Glue / layout plumbing (fused by XLA): NCHW->NHWC, outer reflection pad
    # (extra slack row at the bottom is never read by valid outputs), channel
    # zero-pad to Cp, flatten the spatial dims.  For real CycleGAN dims
    # (C a multiple of 128) the channel pad is a no-op.
    x_nhwc = jnp.transpose(x_nchw, (0, 2, 3, 1)).astype(jnp.float32)
    xpad = jnp.pad(x_nhwc, ((0, 0), (1, 2), (1, 1), (0, 0)), mode="reflect")
    dc = Cp - C
    if dc:
        xpad = jnp.pad(xpad, ((0, 0), (0, 0), (0, 0), (0, dc)))
        w1 = jnp.pad(w1, ((0, 0), (0, 0), (0, dc), (0, dc)))
        w2 = jnp.pad(w2, ((0, 0), (0, 0), (0, dc), (0, dc)))
        b1 = jnp.pad(b1, (0, dc))
        b2 = jnp.pad(b2, (0, dc))
    xflat = xpad.reshape(N, Lp, Cp)
    w1c = w1.astype(compute_dtype)
    w2c = w2.astype(compute_dtype)
    b1r = b1.reshape(1, Cp).astype(jnp.float32)
    b2r = b2.reshape(1, Cp).astype(jnp.float32)

    kernel = functools.partial(_resnet_block_kernel, H=H, W=W)

    out_flat = pl.pallas_call(
        kernel,
        out_shape=jax.ShapeDtypeStruct((N, Lacc, Cp), jnp.float32),
        grid_spec=pltpu.PrefetchScalarGridSpec(
            num_scalar_prefetch=0,
            grid=(N,),
            in_specs=[
                pl.BlockSpec((None, Lp, Cp), lambda n: (n, 0, 0)),
                pl.BlockSpec((3, 3, Cp, Cp), lambda n: (0, 0, 0, 0)),
                pl.BlockSpec((1, Cp), lambda n: (0, 0)),
                pl.BlockSpec((3, 3, Cp, Cp), lambda n: (0, 0, 0, 0)),
                pl.BlockSpec((1, Cp), lambda n: (0, 0)),
            ],
            out_specs=pl.BlockSpec((None, Lacc, Cp), lambda n: (n, 0, 0)),
            scratch_shapes=[pltpu.VMEM((Lp, Cp), jnp.float32)],
        ),
        compiler_params=pltpu.CompilerParams(
            dimension_semantics=("parallel",),
            vmem_limit_bytes=32 * 1024 * 1024,
        ),
    )(xflat, w1c, b1r, w2c, b2r)

    # Drop the wrap columns / padded channels, back to NCHW.
    out = out_flat.reshape(N, H, Wp, Cp)[:, :, :W, :C]
    return jnp.transpose(out, (0, 3, 1, 2)).astype(x_nchw.dtype)


def resnet_block_reference(x_nchw, w1, b1, w2, b2):
    """Plain-JAX reference (same semantics as the PyTorch module)."""
    def conv(x, w, b):
        xp = jnp.pad(x, ((0, 0), (0, 0), (1, 1), (1, 1)), mode="reflect")
        y = jax.lax.conv_general_dilated(
            xp, w, window_strides=(1, 1), padding="VALID",
            dimension_numbers=("NCHW", "HWIO", "NCHW"))
        return y + b[None, :, None, None]

    def inorm(y):
        mean = jnp.mean(y, axis=(2, 3), keepdims=True)
        var = jnp.mean((y - mean) ** 2, axis=(2, 3), keepdims=True)
        return (y - mean) * jax.lax.rsqrt(var + EPS)

    y = jnp.maximum(inorm(conv(x_nchw, w1, b1)), 0.0)
    z = inorm(conv(y, w2, b2))
    return x_nchw + z


if __name__ == "__main__":
    # Small deterministic problem: batch=2, dim=4 channels, 16x16 spatial.
    N, C, H, W = 2, 4, 16, 16
    key = jax.random.PRNGKey(0)
    kx, k1, kb1, k2, kb2 = jax.random.split(key, 5)

    x = jax.random.normal(kx, (N, C, H, W), dtype=jnp.float32)
    w1 = jax.random.normal(k1, (3, 3, C, C), dtype=jnp.float32) * 0.1
    b1 = jax.random.normal(kb1, (C,), dtype=jnp.float32) * 0.1
    w2 = jax.random.normal(k2, (3, 3, C, C), dtype=jnp.float32) * 0.1
    b2 = jax.random.normal(kb2, (C,), dtype=jnp.float32) * 0.1

    ref = jax.block_until_ready(resnet_block_reference(x, w1, b1, w2, b2))

    # f32 MXU path: exact semantics of the PyTorch block (tight check).
    out_f32 = jax.block_until_ready(
        resnet_block_pallas(x, w1, b1, w2, b2, compute_dtype=jnp.float32))
    assert out_f32.shape == (N, C, H, W)
    err32 = float(jnp.max(jnp.abs(out_f32 - ref)))
    assert jnp.allclose(out_f32, ref, atol=1e-4, rtol=1e-4), (
        f"f32 path max abs err {err32}")

    # bf16 MXU path (default; v6e/v7x-friendly).  Looser tolerance is the
    # expected bf16 matmul rounding; IN / rsqrt / residual stay f32.
    out_bf16 = jax.block_until_ready(
        resnet_block_pallas(x, w1, b1, w2, b2, compute_dtype=jnp.bfloat16))
    assert out_bf16.shape == (N, C, H, W)
    err16 = float(jnp.max(jnp.abs(out_bf16 - ref)))
    assert err16 < 0.3, f"bf16 path max abs err {err16}"

    print("KERNEL_OK")
</pallas_src>

<mosaic_0001>
module attributes {stable_mosaic.version = 11 : i64} {
  func.func @_resnet_block_kernel(%arg0: i32, %arg1: memref<1x342x128xf32, #tpu.memory_space<vmem>>, %arg2: memref<3x3x128x128xf32, #tpu.memory_space<vmem>>, %arg3: memref<1x128xf32, #tpu.memory_space<vmem>>, %arg4: memref<3x3x128x128xf32, #tpu.memory_space<vmem>>, %arg5: memref<1x128xf32, #tpu.memory_space<vmem>>, %arg6: memref<1x288x128xf32, #tpu.memory_space<vmem>>, %arg7: memref<342x128xf32, #tpu.memory_space<vmem>>) attributes {dimension_semantics = [#tpu.dimension_semantics<parallel>], iteration_bounds = array<i64: 2>, scalar_prefetch = 0 : i64, scratch_operands = 1 : i64, tpu.core_type = #tpu.core_type<tc>, window_params = [{transform_indices = @transform_0, window_bounds = array<i64: 1, 342, 128>}, {pipeline_mode = #tpu.pipeline_mode<synchronous>, transform_indices = @transform_1, window_bounds = array<i64: 3, 3, 128, 128>}, {pipeline_mode = #tpu.pipeline_mode<synchronous>, transform_indices = @transform_2, window_bounds = array<i64: 1, 128>}, {pipeline_mode = #tpu.pipeline_mode<synchronous>, transform_indices = @transform_3, window_bounds = array<i64: 3, 3, 128, 128>}, {pipeline_mode = #tpu.pipeline_mode<synchronous>, transform_indices = @transform_4, window_bounds = array<i64: 1, 128>}, {transform_indices = @transform_5, window_bounds = array<i64: 1, 288, 128>}]} {
    %0 = tpu.iota {dimensions = array<i32: 0>} : vector<288x1xi32>
    %c18_i32 = arith.constant 18 : i32
    %c0_i32 = arith.constant 0 : i32
    %1 = arith.cmpi eq, %c18_i32, %c0_i32 : i32
    %c1_i32 = arith.constant 1 : i32
    %2 = arith.select %1, %c1_i32, %c18_i32 : i32
    %3 = vector.broadcast %2 : i32 to vector<288x1xi32>
    %4 = arith.remsi %0, %3 : vector<288x1xi32>
    %c0_i32_0 = arith.constant 0 : i32
    %5 = vector.broadcast %c0_i32_0 : i32 to vector<288x1xi32>
    %6 = arith.cmpi ne, %4, %5 : vector<288x1xi32>
    %c0_i32_1 = arith.constant 0 : i32
    %7 = vector.broadcast %c0_i32_1 : i32 to vector<288x1xi32>
    %8 = arith.cmpi slt, %4, %7 : vector<288x1xi32>
    %c0_i32_2 = arith.constant 0 : i32
    %9 = arith.cmpi slt, %2, %c0_i32_2 : i32
    %10 = vector.broadcast %9 : i1 to vector<288x1xi1>
    %11 = vector.broadcast %10 : vector<288x1xi1> to vector<288x1xi1>
    %12 = arith.xori %8, %11 : vector<288x1xi1>
    %13 = arith.andi %12, %6 : vector<288x1xi1>
    %14 = vector.broadcast %2 : i32 to vector<288x1xi32>
    %15 = arith.addi %4, %14 : vector<288x1xi32>
    %16 = arith.select %13, %15, %4 : vector<288x1xi1>, vector<288x1xi32>
    %c16_i32 = arith.constant 16 : i32
    %17 = vector.broadcast %c16_i32 : i32 to vector<288x1xi32>
    %18 = arith.cmpi slt, %16, %17 : vector<288x1xi32>
    %c0 = arith.constant 0 : index
    %c0_3 = arith.constant 0 : index
    %c0_4 = arith.constant 0 : index
    %19 = vector.load %arg1[%c0, %c0_3, %c0_4] : memref<1x342x128xf32, #tpu.memory_space<vmem>>, vector<1x288x128xf32>
    %20 = vector.shape_cast %19 : vector<1x288x128xf32> to vector<288x128xf32>
    %c0_5 = arith.constant 0 : index
    %c0_6 = arith.constant 0 : index
    %c0_7 = arith.constant 0 : index
    %c0_8 = arith.constant 0 : index
    %21 = vector.load %arg2[%c0_5, %c0_6, %c0_7, %c0_8] : memref<3x3x128x128xf32, #tpu.memory_space<vmem>>, vector<1x1x128x128xf32>
    %22 = vector.shape_cast %21 : vector<1x1x128x128xf32> to vector<128x128xf32>
    %cst = arith.constant dense<0.000000e+00> : vector<288x128xf32>
    %23 = tpu.matmul %20, %22, %cst {dimension_numbers = #tpu.dot_dimension_numbers<[1], [0], [0], [1], [0, 0, 1, 1], [], []>} : vector<288x128xf32>, vector<128x128xf32>, vector<288x128xf32> -> vector<288x128xf32>
    %c0_9 = arith.constant 0 : index
    %c1 = arith.constant 1 : index
    %c0_10 = arith.constant 0 : index
    %24 = vector.load %arg1[%c0_9, %c1, %c0_10] : memref<1x342x128xf32, #tpu.memory_space<vmem>>, vector<1x288x128xf32>
    %25 = vector.shape_cast %24 : vector<1x288x128xf32> to vector<288x128xf32>
    %c0_11 = arith.constant 0 : index
    %c1_12 = arith.constant 1 : index
    %c0_13 = arith.constant 0 : index
    %c0_14 = arith.constant 0 : index
    %26 = vector.load %arg2[%c0_11, %c1_12, %c0_13, %c0_14] : memref<3x3x128x128xf32, #tpu.memory_space<vmem>>, vector<1x1x128x128xf32>
    %27 = vector.shape_cast %26 : vector<1x1x128x128xf32> to vector<128x128xf32>
    %cst_15 = arith.constant dense<0.000000e+00> : vector<288x128xf32>
    %28 = tpu.matmul %25, %27, %cst_15 {dimension_numbers = #tpu.dot_dimension_numbers<[1], [0], [0], [1], [0, 0, 1, 1], [], []>} : vector<288x128xf32>, vector<128x128xf32>, vector<288x128xf32> -> vector<288x128xf32>
    %29 = arith.addf %23, %28 : vector<288x128xf32>
    %c0_16 = arith.constant 0 : index
    %c2 = arith.constant 2 : index
    %c0_17 = arith.constant 0 : index
    %30 = vector.load %arg1[%c0_16, %c2, %c0_17] : memref<1x342x128xf32, #tpu.memory_space<vmem>>, vector<1x288x128xf32>
    %31 = vector.shape_cast %30 : vector<1x288x128xf32> to vector<288x128xf32>
    %c0_18 = arith.constant 0 : index
    %c2_19 = arith.constant 2 : index
    %c0_20 = arith.constant 0 : index
    %c0_21 = arith.constant 0 : index
    %32 = vector.load %arg2[%c0_18, %c2_19, %c0_20, %c0_21] : memref<3x3x128x128xf32, #tpu.memory_space<vmem>>, vector<1x1x128x128xf32>
    %33 = vector.shape_cast %32 : vector<1x1x128x128xf32> to vector<128x128xf32>
    %cst_22 = arith.constant dense<0.000000e+00> : vector<288x128xf32>
    %34 = tpu.matmul %31, %33, %cst_22 {dimension_numbers = #tpu.dot_dimension_numbers<[1], [0], [0], [1], [0, 0, 1, 1], [], []>} : vector<288x128xf32>, vector<128x128xf32>, vector<288x128xf32> -> vector<288x128xf32>
    %35 = arith.addf %29, %34 : vector<288x128xf32>
    %c0_23 = arith.constant 0 : index
    %c18 = arith.constant 18 : index
    %c0_24 = arith.constant 0 : index
    %36 = vector.load %arg1[%c0_23, %c18, %c0_24] : memref<1x342x128xf32, #tpu.memory_space<vmem>>, vector<1x288x128xf32>
    %37 = vector.shape_cast %36 : vector<1x288x128xf32> to vector<288x128xf32>
    %c1_25 = arith.constant 1 : index
    %c0_26 = arith.constant 0 : index
    %c0_27 = arith.constant 0 : index
    %c0_28 = arith.constant 0 : index
    %38 = vector.load %arg2[%c1_25, %c0_26, %c0_27, %c0_28] : memref<3x3x128x128xf32, #tpu.memory_space<vmem>>, vector<1x1x128x128xf32>
    %39 = vector.shape_cast %38 : vector<1x1x128x128xf32> to vector<128x128xf32>
    %cst_29 = arith.constant dense<0.000000e+00> : vector<288x128xf32>
    %40 = tpu.matmul %37, %39, %cst_29 {dimension_numbers = #tpu.dot_dimension_numbers<[1], [0], [0], [1], [0, 0, 1, 1], [], []>} : vector<288x128xf32>, vector<128x128xf32>, vector<288x128xf32> -> vector<288x128xf32>
    %41 = arith.addf %35, %40 : vector<288x128xf32>
    %c0_30 = arith.constant 0 : index
    %c19 = arith.constant 19 : index
    %c0_31 = arith.constant 0 : index
    %42 = vector.load %arg1[%c0_30, %c19, %c0_31] : memref<1x342x128xf32, #tpu.memory_space<vmem>>, vector<1x288x128xf32>
    %43 = vector.shape_cast %42 : vector<1x288x128xf32> to vector<288x128xf32>
    %c1_32 = arith.constant 1 : index
    %c1_33 = arith.constant 1 : index
    %c0_34 = arith.constant 0 : index
    %c0_35 = arith.constant 0 : index
    %44 = vector.load %arg2[%c1_32, %c1_33, %c0_34, %c0_35] : memref<3x3x128x128xf32, #tpu.memory_space<vmem>>, vector<1x1x128x128xf32>
    %45 = vector.shape_cast %44 : vector<1x1x128x128xf32> to vector<128x128xf32>
    %cst_36 = arith.constant dense<0.000000e+00> : vector<288x128xf32>
    %46 = tpu.matmul %43, %45, %cst_36 {dimension_numbers = #tpu.dot_dimension_numbers<[1], [0], [0], [1], [0, 0, 1, 1], [], []>} : vector<288x128xf32>, vector<128x128xf32>, vector<288x128xf32> -> vector<288x128xf32>
    %47 = arith.addf %41, %46 : vector<288x128xf32>
    %c0_37 = arith.constant 0 : index
    %c20 = arith.constant 20 : index
    %c0_38 = arith.constant 0 : index
    %48 = vector.load %arg1[%c0_37, %c20, %c0_38] : memref<1x342x128xf32, #tpu.memory_space<vmem>>, vector<1x288x128xf32>
    %49 = vector.shape_cast %48 : vector<1x288x128xf32> to vector<288x128xf32>
    %c1_39 = arith.constant 1 : index
    %c2_40 = arith.constant 2 : index
    %c0_41 = arith.constant 0 : index
    %c0_42 = arith.constant 0 : index
    %50 = vector.load %arg2[%c1_39, %c2_40, %c0_41, %c0_42] : memref<3x3x128x128xf32, #tpu.memory_space<vmem>>, vector<1x1x128x128xf32>
    %51 = vector.shape_cast %50 : vector<1x1x128x128xf32> to vector<128x128xf32>
    %cst_43 = arith.constant dense<0.000000e+00> : vector<288x128xf32>
    %52 = tpu.matmul %49, %51, %cst_43 {dimension_numbers = #tpu.dot_dimension_numbers<[1], [0], [0], [1], [0, 0, 1, 1], [], []>} : vector<288x128xf32>, vector<128x128xf32>, vector<288x128xf32> -> vector<288x128xf32>
    %53 = arith.addf %47, %52 : vector<288x128xf32>
    %c0_44 = arith.constant 0 : index
    %c36 = arith.constant 36 : index
    %c0_45 = arith.constant 0 : index
    %54 = vector.load %arg1[%c0_44, %c36, %c0_45] : memref<1x342x128xf32, #tpu.memory_space<vmem>>, vector<1x288x128xf32>
    %55 = vector.shape_cast %54 : vector<1x288x128xf32> to vector<288x128xf32>
    %c2_46 = arith.constant 2 : index
    %c0_47 = arith.constant 0 : index
    %c0_48 = arith.constant 0 : index
    %c0_49 = arith.constant 0 : index
    %56 = vector.load %arg2[%c2_46, %c0_47, %c0_48, %c0_49] : memref<3x3x128x128xf32, #tpu.memory_space<vmem>>, vector<1x1x128x128xf32>
    %57 = vector.shape_cast %56 : vector<1x1x128x128xf32> to vector<128x128xf32>
    %cst_50 = arith.constant dense<0.000000e+00> : vector<288x128xf32>
    %58 = tpu.matmul %55, %57, %cst_50 {dimension_numbers = #tpu.dot_dimension_numbers<[1], [0], [0], [1], [0, 0, 1, 1], [], []>} : vector<288x128xf32>, vector<128x128xf32>, vector<288x128xf32> -> vector<288x128xf32>
    %59 = arith.addf %53, %58 : vector<288x128xf32>
    %c0_51 = arith.constant 0 : index
    %c37 = arith.constant 37 : index
    %c0_52 = arith.constant 0 : index
    %60 = vector.load %arg1[%c0_51, %c37, %c0_52] : memref<1x342x128xf32, #tpu.memory_space<vmem>>, vector<1x288x128xf32>
    %61 = vector.shape_cast %60 : vector<1x288x128xf32> to vector<288x128xf32>
    %c2_53 = arith.constant 2 : index
    %c1_54 = arith.constant 1 : index
    %c0_55 = arith.constant 0 : index
    %c0_56 = arith.constant 0 : index
    %62 = vector.load %arg2[%c2_53, %c1_54, %c0_55, %c0_56] : memref<3x3x128x128xf32, #tpu.memory_space<vmem>>, vector<1x1x128x128xf32>
    %63 = vector.shape_cast %62 : vector<1x1x128x128xf32> to vector<128x128xf32>
    %cst_57 = arith.constant dense<0.000000e+00> : vector<288x128xf32>
    %64 = tpu.matmul %61, %63, %cst_57 {dimension_numbers = #tpu.dot_dimension_numbers<[1], [0], [0], [1], [0, 0, 1, 1], [], []>} : vector<288x128xf32>, vector<128x128xf32>, vector<288x128xf32> -> vector<288x128xf32>
    %65 = arith.addf %59, %64 : vector<288x128xf32>
    %c0_58 = arith.constant 0 : index
    %c38 = arith.constant 38 : index
    %c0_59 = arith.constant 0 : index
    %66 = vector.load %arg1[%c0_58, %c38, %c0_59] : memref<1x342x128xf32, #tpu.memory_space<vmem>>, vector<1x288x128xf32>
    %67 = vector.shape_cast %66 : vector<1x288x128xf32> to vector<288x128xf32>
    %c2_60 = arith.constant 2 : index
    %c2_61 = arith.constant 2 : index
    %c0_62 = arith.constant 0 : index
    %c0_63 = arith.constant 0 : index
    %68 = vector.load %arg2[%c2_60, %c2_61, %c0_62, %c0_63] : memref<3x3x128x128xf32, #tpu.memory_space<vmem>>, vector<1x1x128x128xf32>
    %69 = vector.shape_cast %68 : vector<1x1x128x128xf32> to vector<128x128xf32>
    %cst_64 = arith.constant dense<0.000000e+00> : vector<288x128xf32>
    %70 = tpu.matmul %67, %69, %cst_64 {dimension_numbers = #tpu.dot_dimension_numbers<[1], [0], [0], [1], [0, 0, 1, 1], [], []>} : vector<288x128xf32>, vector<128x128xf32>, vector<288x128xf32> -> vector<288x128xf32>
    %71 = arith.addf %65, %70 : vector<288x128xf32>
    %c0_65 = arith.constant 0 : index
    %c0_66 = arith.constant 0 : index
    %72 = vector.load %arg3[%c0_65, %c0_66] : memref<1x128xf32, #tpu.memory_space<vmem>>, vector<1x128xf32>
    %73 = vector.broadcast %72 : vector<1x128xf32> to vector<288x128xf32>
    %74 = arith.addf %71, %73 : vector<288x128xf32>
    %cst_67 = arith.constant 0.000000e+00 : f32
    %75 = vector.shape_cast %18 : vector<288x1xi1> to vector<288x1xi1>
    %76 = vector.broadcast %75 : vector<288x1xi1> to vector<288x128xi1>
    %77 = vector.broadcast %cst_67 : f32 to vector<288x128xf32>
    %78 = arith.select %76, %74, %77 : vector<288x128xi1>, vector<288x128xf32>
    %cst_68 = arith.constant dense<0.000000e+00> : vector<128xf32>
    %79 = vector.multi_reduction <add>, %78, %cst_68 [0] : vector<288x128xf32> to vector<128xf32>
    %80 = vector.shape_cast %79 : vector<128xf32> to vector<1x128xf32>
    %81 = arith.mulf %78, %78 : vector<288x128xf32>
    %cst_69 = arith.constant dense<0.000000e+00> : vector<128xf32>
    %82 = vector.multi_reduction <add>, %81, %cst_69 [0] : vector<288x128xf32> to vector<128xf32>
    %83 = vector.shape_cast %82 : vector<128xf32> to vector<1x128xf32>
    %cst_70 = arith.constant 3.906250e-03 : f32
    %84 = vector.broadcast %cst_70 : f32 to vector<1x128xf32>
    %85 = arith.mulf %80, %84 : vector<1x128xf32>
    %cst_71 = arith.constant 3.906250e-03 : f32
    %86 = vector.broadcast %cst_71 : f32 to vector<1x128xf32>
    %87 = arith.mulf %83, %86 : vector<1x128xf32>
    %88 = arith.mulf %85, %85 : vector<1x128xf32>
    %89 = arith.subf %87, %88 : vector<1x128xf32>
    %cst_72 = arith.constant 0.000000e+00 : f32
    %90 = vector.broadcast %cst_72 : f32 to vector<1x128xf32>
    %91 = arith.maximumf %89, %90 : vector<1x128xf32>
    %92 = vector.broadcast %85 : vector<1x128xf32> to vector<288x128xf32>
    %93 = arith.subf %74, %92 : vector<288x128xf32>
    %cst_73 = arith.constant 9.99999974E-6 : f32
    %94 = vector.broadcast %cst_73 : f32 to vector<1x128xf32>
    %95 = arith.addf %91, %94 : vector<1x128xf32>
    %96 = math.rsqrt %95 : vector<1x128xf32>
    %97 = vector.broadcast %96 : vector<1x128xf32> to vector<288x128xf32>
    %98 = arith.mulf %93, %97 : vector<288x128xf32>
    %cst_74 = arith.constant 0.000000e+00 : f32
    %99 = vector.broadcast %cst_74 : f32 to vector<288x128xf32>
    %100 = arith.maximumf %98, %99 : vector<288x128xf32>
    %c19_75 = arith.constant 19 : index
    %c0_76 = arith.constant 0 : index
    %101 = vector.load %arg7[%c19_75, %c0_76] : memref<342x128xf32, #tpu.memory_space<vmem>>, vector<288x128xf32>
    tpu.vector_store %arg7[%c19_75, %c0_76], %100 {strides = array<i32>} : memref<342x128xf32, #tpu.memory_space<vmem>>, vector<288x128xf32>,
    %c18_77 = arith.constant 18 : index
    %c0_78 = arith.constant 0 : index
    %102 = vector.load %arg7[%c18_77, %c0_78] : memref<342x128xf32, #tpu.memory_space<vmem>>, vector<288x128xf32>
    %c20_79 = arith.constant 20 : index
    %c0_80 = arith.constant 0 : index
    %103 = vector.load %arg7[%c20_79, %c0_80] : memref<342x128xf32, #tpu.memory_space<vmem>>, vector<288x128xf32>
    %c16 = arith.constant 16 : index
    %c0_81 = arith.constant 0 : index
    %104 = vector.load %arg7[%c16, %c0_81] : memref<342x128xf32, #tpu.memory_space<vmem>>, vector<288x128xf32>
    %c0_i32_82 = arith.constant 0 : i32
    %105 = vector.broadcast %c0_i32_82 : i32 to vector<288x1xi32>
    %106 = arith.cmpi eq, %16, %105 : vector<288x1xi32>
    %c17_i32 = arith.constant 17 : i32
    %107 = vector.broadcast %c17_i32 : i32 to vector<288x1xi32>
    %108 = arith.cmpi eq, %16, %107 : vector<288x1xi32>
    %109 = vector.shape_cast %108 : vector<288x1xi1> to vector<288x1xi1>
    %110 = vector.broadcast %109 : vector<288x1xi1> to vector<288x128xi1>
    %111 = arith.select %110, %104, %102 : vector<288x128xi1>, vector<288x128xf32>
    %112 = vector.shape_cast %106 : vector<288x1xi1> to vector<288x1xi1>
    %113 = vector.broadcast %112 : vector<288x1xi1> to vector<288x128xi1>
    %114 = arith.select %113, %103, %111 : vector<288x128xi1>, vector<288x128xf32>
    %c18_83 = arith.constant 18 : index
    %c0_84 = arith.constant 0 : index
    %115 = vector.load %arg7[%c18_83, %c0_84] : memref<342x128xf32, #tpu.memory_space<vmem>>, vector<288x128xf32>
    tpu.vector_store %arg7[%c18_83, %c0_84], %114 {strides = array<i32>} : memref<342x128xf32, #tpu.memory_space<vmem>>, vector<288x128xf32>,
    %c36_85 = arith.constant 36 : index
    %c0_86 = arith.constant 0 : index
    %116 = vector.load %arg7[%c36_85, %c0_86] : memref<342x128xf32, #tpu.memory_space<vmem>>, vector<18x128xf32>
    %c0_87 = arith.constant 0 : index
    %c0_88 = arith.constant 0 : index
    %117 = vector.load %arg7[%c0_87, %c0_88] : memref<342x128xf32, #tpu.memory_space<vmem>>, vector<18x128xf32>
    tpu.vector_store %arg7[%c0_87, %c0_88], %116 {strides = array<i32>} : memref<342x128xf32, #tpu.memory_space<vmem>>, vector<18x128xf32>,
    %c270 = arith.constant 270 : index
    %c0_89 = arith.constant 0 : index
    %118 = vector.load %arg7[%c270, %c0_89] : memref<342x128xf32, #tpu.memory_space<vmem>>, vector<18x128xf32>
    %c306 = arith.constant 306 : index
    %c0_90 = arith.constant 0 : index
    %119 = vector.load %arg7[%c306, %c0_90] : memref<342x128xf32, #tpu.memory_space<vmem>>, vector<18x128xf32>
    tpu.vector_store %arg7[%c306, %c0_90], %118 {strides = array<i32>} : memref<342x128xf32, #tpu.memory_space<vmem>>, vector<18x128xf32>,
    %cst_91 = arith.constant 0.000000e+00 : f32
    %120 = vector.broadcast %cst_91 : f32 to vector<18x128xf32>
    %c324 = arith.constant 324 : index
    %c0_92 = arith.constant 0 : index
    %121 = vector.load %arg7[%c324, %c0_92] : memref<342x128xf32, #tpu.memory_space<vmem>>, vector<18x128xf32>
    tpu.vector_store %arg7[%c324, %c0_92], %120 {strides = array<i32>} : memref<342x128xf32, #tpu.memory_space<vmem>>, vector<18x128xf32>,
    %c0_93 = arith.constant 0 : index
    %c0_94 = arith.constant 0 : index
    %122 = vector.load %arg7[%c0_93, %c0_94] : memref<342x128xf32, #tpu.memory_space<vmem>>, vector<288x128xf32>
    %c0_95 = arith.constant 0 : index
    %c0_96 = arith.constant 0 : index
    %c0_97 = arith.constant 0 : index
    %c0_98 = arith.constant 0 : index
    %123 = vector.load %arg4[%c0_95, %c0_96, %c0_97, %c0_98] : memref<3x3x128x128xf32, #tpu.memory_space<vmem>>, vector<1x1x128x128xf32>
    %124 = vector.shape_cast %123 : vector<1x1x128x128xf32> to vector<128x128xf32>
    %cst_99 = arith.constant dense<0.000000e+00> : vector<288x128xf32>
    %125 = tpu.matmul %122, %124, %cst_99 {dimension_numbers = #tpu.dot_dimension_numbers<[1], [0], [0], [1], [0, 0, 1, 1], [], []>} : vector<288x128xf32>, vector<128x128xf32>, vector<288x128xf32> -> vector<288x128xf32>
    %c1_100 = arith.constant 1 : index
    %c0_101 = arith.constant 0 : index
    %126 = vector.load %arg7[%c1_100, %c0_101] : memref<342x128xf32, #tpu.memory_space<vmem>>, vector<288x128xf32>
    %c0_102 = arith.constant 0 : index
    %c1_103 = arith.constant 1 : index
    %c0_104 = arith.constant 0 : index
    %c0_105 = arith.constant 0 : index
    %127 = vector.load %arg4[%c0_102, %c1_103, %c0_104, %c0_105] : memref<3x3x128x128xf32, #tpu.memory_space<vmem>>, vector<1x1x128x128xf32>
    %128 = vector.shape_cast %127 : vector<1x1x128x128xf32> to vector<128x128xf32>
    %cst_106 = arith.constant dense<0.000000e+00> : vector<288x128xf32>
    %129 = tpu.matmul %126, %128, %cst_106 {dimension_numbers = #tpu.dot_dimension_numbers<[1], [0], [0], [1], [0, 0, 1, 1], [], []>} : vector<288x128xf32>, vector<128x128xf32>, vector<288x128xf32> -> vector<288x128xf32>
    %130 = arith.addf %125, %129 : vector<288x128xf32>
    %c2_107 = arith.constant 2 : index
    %c0_108 = arith.constant 0 : index
    %131 = vector.load %arg7[%c2_107, %c0_108] : memref<342x128xf32, #tpu.memory_space<vmem>>, vector<288x128xf32>
    %c0_109 = arith.constant 0 : index
    %c2_110 = arith.constant 2 : index
    %c0_111 = arith.constant 0 : index
    %c0_112 = arith.constant 0 : index
    %132 = vector.load %arg4[%c0_109, %c2_110, %c0_111, %c0_112] : memref<3x3x128x128xf32, #tpu.memory_space<vmem>>, vector<1x1x128x128xf32>
    %133 = vector.shape_cast %132 : vector<1x1x128x128xf32> to vector<128x128xf32>
    %cst_113 = arith.constant dense<0.000000e+00> : vector<288x128xf32>
    %134 = tpu.matmul %131, %133, %cst_113 {dimension_numbers = #tpu.dot_dimension_numbers<[1], [0], [0], [1], [0, 0, 1, 1], [], []>} : vector<288x128xf32>, vector<128x128xf32>, vector<288x128xf32> -> vector<288x128xf32>
    %135 = arith.addf %130, %134 : vector<288x128xf32>
    %c18_114 = arith.constant 18 : index
    %c0_115 = arith.constant 0 : index
    %136 = vector.load %arg7[%c18_114, %c0_115] : memref<342x128xf32, #tpu.memory_space<vmem>>, vector<288x128xf32>
    %c1_116 = arith.constant 1 : index
    %c0_117 = arith.constant 0 : index
    %c0_118 = arith.constant 0 : index
    %c0_119 = arith.constant 0 : index
    %137 = vector.load %arg4[%c1_116, %c0_117, %c0_118, %c0_119] : memref<3x3x128x128xf32, #tpu.memory_space<vmem>>, vector<1x1x128x128xf32>
    %138 = vector.shape_cast %137 : vector<1x1x128x128xf32> to vector<128x128xf32>
    %cst_120 = arith.constant dense<0.000000e+00> : vector<288x128xf32>
    %139 = tpu.matmul %136, %138, %cst_120 {dimension_numbers = #tpu.dot_dimension_numbers<[1], [0], [0], [1], [0, 0, 1, 1], [], []>} : vector<288x128xf32>, vector<128x128xf32>, vector<288x128xf32> -> vector<288x128xf32>
    %140 = arith.addf %135, %139 : vector<288x128xf32>
    %c19_121 = arith.constant 19 : index
    %c0_122 = arith.constant 0 : index
    %141 = vector.load %arg7[%c19_121, %c0_122] : memref<342x128xf32, #tpu.memory_space<vmem>>, vector<288x128xf32>
    %c1_123 = arith.constant 1 : index
    %c1_124 = arith.constant 1 : index
    %c0_125 = arith.constant 0 : index
    %c0_126 = arith.constant 0 : index
    %142 = vector.load %arg4[%c1_123, %c1_124, %c0_125, %c0_126] : memref<3x3x128x128xf32, #tpu.memory_space<vmem>>, vector<1x1x128x128xf32>
    %143 = vector.shape_cast %142 : vector<1x1x128x128xf32> to vector<128x128xf32>
    %cst_127 = arith.constant dense<0.000000e+00> : vector<288x128xf32>
    %144 = tpu.matmul %141, %143, %cst_127 {dimension_numbers = #tpu.dot_dimension_numbers<[1], [0], [0], [1], [0, 0, 1, 1], [], []>} : vector<288x128xf32>, vector<128x128xf32>, vector<288x128xf32> -> vector<288x128xf32>
    %145 = arith.addf %140, %144 : vector<288x128xf32>
    %c20_128 = arith.constant 20 : index
    %c0_129 = arith.constant 0 : index
    %146 = vector.load %arg7[%c20_128, %c0_129] : memref<342x128xf32, #tpu.memory_space<vmem>>, vector<288x128xf32>
    %c1_130 = arith.constant 1 : index
    %c2_131 = arith.constant 2 : index
    %c0_132 = arith.constant 0 : index
    %c0_133 = arith.constant 0 : index
    %147 = vector.load %arg4[%c1_130, %c2_131, %c0_132, %c0_133] : memref<3x3x128x128xf32, #tpu.memory_space<vmem>>, vector<1x1x128x128xf32>
    %148 = vector.shape_cast %147 : vector<1x1x128x128xf32> to vector<128x128xf32>
    %cst_134 = arith.constant dense<0.000000e+00> : vector<288x128xf32>
    %149 = tpu.matmul %146, %148, %cst_134 {dimension_numbers = #tpu.dot_dimension_numbers<[1], [0], [0], [1], [0, 0, 1, 1], [], []>} : vector<288x128xf32>, vector<128x128xf32>, vector<288x128xf32> -> vector<288x128xf32>
    %150 = arith.addf %145, %149 : vector<288x128xf32>
    %c36_135 = arith.constant 36 : index
    %c0_136 = arith.constant 0 : index
    %151 = vector.load %arg7[%c36_135, %c0_136] : memref<342x128xf32, #tpu.memory_space<vmem>>, vector<288x128xf32>
    %c2_137 = arith.constant 2 : index
    %c0_138 = arith.constant 0 : index
    %c0_139 = arith.constant 0 : index
    %c0_140 = arith.constant 0 : index
    %152 = vector.load %arg4[%c2_137, %c0_138, %c0_139, %c0_140] : memref<3x3x128x128xf32, #tpu.memory_space<vmem>>, vector<1x1x128x128xf32>
    %153 = vector.shape_cast %152 : vector<1x1x128x128xf32> to vector<128x128xf32>
    %cst_141 = arith.constant dense<0.000000e+00> : vector<288x128xf32>
    %154 = tpu.matmul %151, %153, %cst_141 {dimension_numbers = #tpu.dot_dimension_numbers<[1], [0], [0], [1], [0, 0, 1, 1], [], []>} : vector<288x128xf32>, vector<128x128xf32>, vector<288x128xf32> -> vector<288x128xf32>
    %155 = arith.addf %150, %154 : vector<288x128xf32>
    %c37_142 = arith.constant 37 : index
    %c0_143 = arith.constant 0 : index
    %156 = vector.load %arg7[%c37_142, %c0_143] : memref<342x128xf32, #tpu.memory_space<vmem>>, vector<288x128xf32>
    %c2_144 = arith.constant 2 : index
    %c1_145 = arith.constant 1 : index
    %c0_146 = arith.constant 0 : index
    %c0_147 = arith.constant 0 : index
    %157 = vector.load %arg4[%c2_144, %c1_145, %c0_146, %c0_147] : memref<3x3x128x128xf32, #tpu.memory_space<vmem>>, vector<1x1x128x128xf32>
    %158 = vector.shape_cast %157 : vector<1x1x128x128xf32> to vector<128x128xf32>
    %cst_148 = arith.constant dense<0.000000e+00> : vector<288x128xf32>
    %159 = tpu.matmul %156, %158, %cst_148 {dimension_numbers = #tpu.dot_dimension_numbers<[1], [0], [0], [1], [0, 0, 1, 1], [], []>} : vector<288x128xf32>, vector<128x128xf32>, vector<288x128xf32> -> vector<288x128xf32>
    %160 = arith.addf %155, %159 : vector<288x128xf32>
    %c38_149 = arith.constant 38 : index
    %c0_150 = arith.constant 0 : index
    %161 = vector.load %arg7[%c38_149, %c0_150] : memref<342x128xf32, #tpu.memory_space<vmem>>, vector<288x128xf32>
    %c2_151 = arith.constant 2 : index
    %c2_152 = arith.constant 2 : index
    %c0_153 = arith.constant 0 : index
    %c0_154 = arith.constant 0 : index
    %162 = vector.load %arg4[%c2_151, %c2_152, %c0_153, %c0_154] : memref<3x3x128x128xf32, #tpu.memory_space<vmem>>, vector<1x1x128x128xf32>
    %163 = vector.shape_cast %162 : vector<1x1x128x128xf32> to vector<128x128xf32>
    %cst_155 = arith.constant dense<0.000000e+00> : vector<288x128xf32>
    %164 = tpu.matmul %161, %163, %cst_155 {dimension_numbers = #tpu.dot_dimension_numbers<[1], [0], [0], [1], [0, 0, 1, 1], [], []>} : vector<288x128xf32>, vector<128x128xf32>, vector<288x128xf32> -> vector<288x128xf32>
    %165 = arith.addf %160, %164 : vector<288x128xf32>
    %c0_156 = arith.constant 0 : index
    %c0_157 = arith.constant 0 : index
    %166 = vector.load %arg5[%c0_156, %c0_157] : memref<1x128xf32, #tpu.memory_space<vmem>>, vector<1x128xf32>
    %167 = vector.broadcast %166 : vector<1x128xf32> to vector<288x128xf32>
    %168 = arith.addf %165, %167 : vector<288x128xf32>
    %cst_158 = arith.constant 0.000000e+00 : f32
    %169 = vector.shape_cast %18 : vector<288x1xi1> to vector<288x1xi1>
    %170 = vector.broadcast %169 : vector<288x1xi1> to vector<288x128xi1>
    %171 = vector.broadcast %cst_158 : f32 to vector<288x128xf32>
    %172 = arith.select %170, %168, %171 : vector<288x128xi1>, vector<288x128xf32>
    %cst_159 = arith.constant dense<0.000000e+00> : vector<128xf32>
    %173 = vector.multi_reduction <add>, %172, %cst_159 [0] : vector<288x128xf32> to vector<128xf32>
    %174 = vector.shape_cast %173 : vector<128xf32> to vector<1x128xf32>
    %175 = arith.mulf %172, %172 : vector<288x128xf32>
    %cst_160 = arith.constant dense<0.000000e+00> : vector<128xf32>
    %176 = vector.multi_reduction <add>, %175, %cst_160 [0] : vector<288x128xf32> to vector<128xf32>
    %177 = vector.shape_cast %176 : vector<128xf32> to vector<1x128xf32>
    %cst_161 = arith.constant 3.906250e-03 : f32
    %178 = vector.broadcast %cst_161 : f32 to vector<1x128xf32>
    %179 = arith.mulf %174, %178 : vector<1x128xf32>
    %cst_162 = arith.constant 3.906250e-03 : f32
    %180 = vector.broadcast %cst_162 : f32 to vector<1x128xf32>
    %181 = arith.mulf %177, %180 : vector<1x128xf32>
    %182 = arith.mulf %179, %179 : vector<1x128xf32>
    %183 = arith.subf %181, %182 : vector<1x128xf32>
    %cst_163 = arith.constant 0.000000e+00 : f32
    %184 = vector.broadcast %cst_163 : f32 to vector<1x128xf32>
    %185 = arith.maximumf %183, %184 : vector<1x128xf32>
    %186 = vector.broadcast %179 : vector<1x128xf32> to vector<288x128xf32>
    %187 = arith.subf %168, %186 : vector<288x128xf32>
    %cst_164 = arith.constant 9.99999974E-6 : f32
    %188 = vector.broadcast %cst_164 : f32 to vector<1x128xf32>
    %189 = arith.addf %185, %188 : vector<1x128xf32>
    %190 = math.rsqrt %189 : vector<1x128xf32>
    %191 = vector.broadcast %190 : vector<1x128xf32> to vector<288x128xf32>
    %192 = arith.mulf %187, %191 : vector<288x128xf32>
    %c0_165 = arith.constant 0 : index
    %c19_166 = arith.constant 19 : index
    %c0_167 = arith.constant 0 : index
    %193 = vector.load %arg1[%c0_165, %c19_166, %c0_167] : memref<1x342x128xf32, #tpu.memory_space<vmem>>, vector<1x288x128xf32>
    %194 = vector.shape_cast %193 : vector<1x288x128xf32> to vector<288x128xf32>
    %195 = arith.addf %194, %192 : vector<288x128xf32>
    %c0_168 = arith.constant 0 : index
    %c0_169 = arith.constant 0 : index
    %c0_170 = arith.constant 0 : index
    %196 = vector.load %arg6[%c0_168, %c0_169, %c0_170] : memref<1x288x128xf32, #tpu.memory_space<vmem>>, vector<1x288x128xf32>
    %197 = vector.shape_cast %196 : vector<1x288x128xf32> to vector<288x128xf32>
    %198 = vector.shape_cast %195 : vector<288x128xf32> to vector<1x288x128xf32>
    tpu.vector_store %arg6[%c0_168, %c0_169, %c0_170], %198 {strides = array<i32>} : memref<1x288x128xf32, #tpu.memory_space<vmem>>, vector<1x288x128xf32>,
    return
  }
  func.func @transform_0(%arg0: i32) -> (i32, i32, i32) {
    %c0_i32 = arith.constant 0 : i32
    %c0_i32_0 = arith.constant 0 : i32
    %c0_i32_1 = arith.constant 0 : i32
    return %arg0, %c0_i32, %c0_i32_0 : i32, i32, i32
  }
  func.func @transform_1(%arg0: i32) -> (i32, i32, i32, i32) {
    %c0_i32 = arith.constant 0 : i32
    %c0_i32_0 = arith.constant 0 : i32
    %c0_i32_1 = arith.constant 0 : i32
    %c0_i32_2 = arith.constant 0 : i32
    %c0_i32_3 = arith.constant 0 : i32
    return %c0_i32, %c0_i32_0, %c0_i32_1, %c0_i32_2 : i32, i32, i32, i32
  }
  func.func @transform_2(%arg0: i32) -> (i32, i32) {
    %c0_i32 = arith.constant 0 : i32
    %c0_i32_0 = arith.constant 0 : i32
    %c0_i32_1 = arith.constant 0 : i32
    return %c0_i32, %c0_i32_0 : i32, i32
  }
  func.func @transform_3(%arg0: i32) -> (i32, i32, i32, i32) {
    %c0_i32 = arith.constant 0 : i32
    %c0_i32_0 = arith.constant 0 : i32
    %c0_i32_1 = arith.constant 0 : i32
    %c0_i32_2 = arith.constant 0 : i32
    %c0_i32_3 = arith.constant 0 : i32
    return %c0_i32, %c0_i32_0, %c0_i32_1, %c0_i32_2 : i32, i32, i32, i32
  }
  func.func @transform_4(%arg0: i32) -> (i32, i32) {
    %c0_i32 = arith.constant 0 : i32
    %c0_i32_0 = arith.constant 0 : i32
    %c0_i32_1 = arith.constant 0 : i32
    return %c0_i32, %c0_i32_0 : i32, i32
  }
  func.func @transform_5(%arg0: i32) -> (i32, i32, i32) {
    %c0_i32 = arith.constant 0 : i32
    %c0_i32_0 = arith.constant 0 : i32
    %c0_i32_1 = arith.constant 0 : i32
    return %arg0, %c0_i32, %c0_i32_0 : i32, i32, i32
  }
}

</mosaic_0001>

<llo_original>
// kernel: tpu_custom_call.1
$region0: #{tpu_custom_call.1}
  #allocation0 [shape = 'u32[]', space=smem, size = 0x4, offset = 0x4, fixed_abs, tag = 'smem constant byte address 0x4 - core index']
  #allocation1 [shape = 'u32[72,128]{1,0:T(1,128)}', space=vmem, size = 0x9000, scoped, tag = 'internal scratch']
  #allocation2 [shape = 'f32[342,128]{1,0:T(8,128)}', space=vmem, size = 0x2b000, scoped, tag = 'scratch operand']
  %s0 = inlined_call_operand.vmem [shape: f32[2,342,128], index: 0, kind: input, shape index: {}]
  %s1 = inlined_call_operand.vmem [shape: f32[3,3,128,128], index: 1, kind: input, shape index: {}]
  %s2 = inlined_call_operand.vmem [shape: f32[1,128], index: 2, kind: input, shape index: {}]
  %s3 = inlined_call_operand.hbm [shape: f32[3,3,128,128], index: 3, kind: input, shape index: {}]
  %s4 = inlined_call_operand.vmem [shape: f32[1,128], index: 4, kind: input, shape index: {}]
  %s5 = inlined_call_operand.hbm [shape: f32[2,288,128], index: 5, kind: output, shape index: {}]
  %s6 = sld [smem:[#allocation0]]
  $region57: #{tpu_custom_call.1} parent=0
    _
  %s8 = ssub.s32 1, %s6
  %s9 = scalar_select 0, %s8, %s6
  $region1: #{tpu_custom_call.1} parent=0
    #allocation3 [shape = 'u8[589824]{0}', space=vmem, size = 0x90000, scoped, tag = 'input window, operand 3, single buffered']
    #allocation4 [shape = 's32[2]{0}', space=sflag, size = 0x8, scoped, tag = 'scoped memory for tpu_custom_call.1']
    #allocation5 [shape = 's32[2]{0}', space=sflag, size = 0x8, scoped, tag = 'scoped memory for tpu_custom_call.1']
    #allocation6 [shape = 'u8[294912]{0}', space=vmem, size = 0x48000, scoped, tag = 'output window, operand 0']
    %10 = vsyncpa [#allocation4], 0
    %11 = vsyncpa [#allocation5], 0
    %s12 = scalar_lea.sflag [#allocation5], 1
    %13 = vsyncpa %s12, 0
    loop: start=0, step=1, limit=4
    $region2: #{tpu_custom_call.1} parent=1 // loop_pre_header
      _
    $region3: #{tpu_custom_call.1} parent=1 // loop_header
      %s15 = sphi 0, %s19
      %p16 = scmp.ge.s32.totalorder %s15, 4
      %s25 = sphi 0, %s27
      %s28 = sphi 0, %s25
      %s29 = sphi 0, %s28
      %s45 = sphi 0, %s29
      %s49 = sphi 0, %s49
      %s51 = sphi 0, %s49
      %s52 = sphi 0, %s51
      %s66 = sphi 0, %s52
      %s70 = sphi 0, %s70
      %s72 = sphi 0, %s70
      %s73 = sphi 0, %s72
      %s87 = sphi 0, %s73
      %s91 = sphi 0, %s91
      %s93 = sphi 0, %s91
      %s94 = sphi 0, %s93
      %s108 = sphi 0, %s94
      %s112 = sphi 0, %s112
      %s114 = sphi 0, %s112
      %s115 = sphi 0, %s114
      %s129 = sphi 0, %s115
      %s135 = sphi 0, %s137
      %s138 = sphi 0, %s135
      %s139 = sphi 0, %s138
      %s155 = sphi 0, %s139
    $region4: #{tpu_custom_call.1} parent=1 // loop_header_branch
      %18 = sbr.rel (%p16) target = $region8
    $region5: #{tpu_custom_call.1} parent=1 // loop_body
      %s20 = ssub.s32 %s15, 1
      %s21 = ssub.s32 %s15, 2
      %s22 = sadd.s32 %s15, 1
      %s23 = ssub.s32 %s15, %s22
      %p24 = scmp.eq.s32.totalorder %s23, 0
      %s26 = sadd.s32 %s25, 1
      %s27 = scalar_select %p24, %s25, %s26
      %p30 = pneg %p24
      %p31 = scmp.eq.s32.totalorder %s15, 1
      %p32 = por %p30, %p31
      %p33 = scmp.ne.s32.totalorder %s25, %s28
      %p34 = scmp.eq.s32.totalorder %s15, 0
      %p35 = por %p33, %p34
      %p36 = scmp.ne.s32.totalorder %s25, %s28
      %p37 = scmp.eq.s32.totalorder %s20, 1
      %p38 = por %p36, %p37
      %p39 = scmp.ne.s32.totalorder %s28, %s29
      %p40 = scmp.eq.s32.totalorder %s20, 0
      %p41 = por %p39, %p40
      %p42 = scmp.ne.s32.totalorder %s28, %s29
      %p43 = scmp.eq.s32.totalorder %s21, 1
      %p44 = por %p42, %p43
      %p46 = scmp.ne.s32.totalorder %s29, %s45
      %p47 = scmp.eq.s32.totalorder %s21, 0
      %p48 = por %p46, %p47
      %s50 = sadd.s32 %s49, 1
      %p53 = scmp.eq.s32.totalorder %s15, 1
      %p54 = scmp.ne.s32.totalorder %s49, %s51
      %p55 = scmp.eq.s32.totalorder %s15, 0
      %p56 = por %p54, %p55
      %p57 = scmp.ne.s32.totalorder %s49, %s51
      %p58 = scmp.eq.s32.totalorder %s20, 1
      %p59 = por %p57, %p58
      %p60 = scmp.ne.s32.totalorder %s51, %s52
      %p61 = scmp.eq.s32.totalorder %s20, 0
      %p62 = por %p60, %p61
      %p63 = scmp.ne.s32.totalorder %s51, %s52
      %p64 = scmp.eq.s32.totalorder %s21, 1
      %p65 = por %p63, %p64
      %p67 = scmp.ne.s32.totalorder %s52, %s66
      %p68 = scmp.eq.s32.totalorder %s21, 0
      %p69 = por %p67, %p68
      %s71 = sadd.s32 %s70, 1
      %p74 = scmp.eq.s32.totalorder %s15, 1
      %p75 = scmp.ne.s32.totalorder %s70, %s72
      %p76 = scmp.eq.s32.totalorder %s15, 0
      %p77 = por %p75, %p76
      %p78 = scmp.ne.s32.totalorder %s70, %s72
      %p79 = scmp.eq.s32.totalorder %s20, 1
      %p80 = por %p78, %p79
      %p81 = scmp.ne.s32.totalorder %s72, %s73
      %p82 = scmp.eq.s32.totalorder %s20, 0
      %p83 = por %p81, %p82
      %p84 = scmp.ne.s32.totalorder %s72, %s73
      %p85 = scmp.eq.s32.totalorder %s21, 1
      %p86 = por %p84, %p85
      %p88 = scmp.ne.s32.totalorder %s73, %s87
      %p89 = scmp.eq.s32.totalorder %s21, 0
      %p90 = por %p88, %p89
      %s92 = sadd.s32 %s91, 1
      %p95 = scmp.eq.s32.totalorder %s15, 1
      %p96 = scmp.ne.s32.totalorder %s91, %s93
      %p97 = scmp.eq.s32.totalorder %s15, 0
      %p98 = por %p96, %p97
      %p99 = scmp.ne.s32.totalorder %s91, %s93
      %p100 = scmp.eq.s32.totalorder %s20, 1
      %p101 = por %p99, %p100
      %p102 = scmp.ne.s32.totalorder %s93, %s94
      %p103 = scmp.eq.s32.totalorder %s20, 0
      %p104 = por %p102, %p103
      %p105 = scmp.ne.s32.totalorder %s93, %s94
      %p106 = scmp.eq.s32.totalorder %s21, 1
      %p107 = por %p105, %p106
      %p109 = scmp.ne.s32.totalorder %s94, %s108
      %p110 = scmp.eq.s32.totalorder %s21, 0
      %p111 = por %p109, %p110
      %s113 = sadd.s32 %s112, 1
      %p116 = scmp.eq.s32.totalorder %s15, 1
      %p117 = scmp.ne.s32.totalorder %s112, %s114
      %p118 = scmp.eq.s32.totalorder %s15, 0
      %p119 = por %p117, %p118
      %p120 = scmp.ne.s32.totalorder %s112, %s114
      %p121 = scmp.eq.s32.totalorder %s20, 1
      %p122 = por %p120, %p121
      %p123 = scmp.ne.s32.totalorder %s114, %s115
      %p124 = scmp.eq.s32.totalorder %s20, 0
      %p125 = por %p123, %p124
      %p126 = scmp.ne.s32.totalorder %s114, %s115
      %p127 = scmp.eq.s32.totalorder %s21, 1
      %p128 = por %p126, %p127
      %p130 = scmp.ne.s32.totalorder %s115, %s129
      %p131 = scmp.eq.s32.totalorder %s21, 0
      %p132 = por %p130, %p131
      %s133 = ssub.s32 %s15, %s22
      %p134 = scmp.eq.s32.totalorder %s133, 0
      %s136 = sadd.s32 %s135, 1
      %s137 = scalar_select %p134, %s135, %s136
      %p140 = pneg %p134
      %p141 = scmp.eq.s32.totalorder %s15, 1
      %p142 = por %p140, %p141
      %p143 = scmp.ne.s32.totalorder %s135, %s138
      %p144 = scmp.eq.s32.totalorder %s15, 0
      %p145 = por %p143, %p144
      %p146 = scmp.ne.s32.totalorder %s135, %s138
      %p147 = scmp.eq.s32.totalorder %s20, 1
      %p148 = por %p146, %p147
      %p149 = scmp.ne.s32.totalorder %s138, %s139
      %p150 = scmp.eq.s32.totalorder %s20, 0
      %p151 = por %p149, %p150
      %p152 = scmp.ne.s32.totalorder %s138, %s139
      %p153 = scmp.eq.s32.totalorder %s21, 1
      %p154 = por %p152, %p153
      %p156 = scmp.ne.s32.totalorder %s139, %s155
      %p157 = scmp.eq.s32.totalorder %s21, 0
      %p158 = por %p156, %p157
      %p159 = scmp.le.s32.totalorder 1, %s15
      %p160 = scmp.lt.s32.totalorder %s15, 3
      %p161 = pnand %p159, %p160
      %p162 = pneg %p161
      // Predicated region
      $region9: #{tpu_custom_call.1} parent=5 // pred_check
        _
      $region10: #{tpu_custom_call.1} parent=5 // pred_check_branch
        %164 = sbr.rel (%p161) target = $region12
      $region11: #{tpu_custom_call.1} parent=5 // pred_region
        %s165 = ssub.s32 %s15, 1
        // Predicated region
        $region13: #{tpu_custom_call.1} parent=11 // pred_check
          %p166 = pneg %p62
        $region14: #{tpu_custom_call.1} parent=11 // pred_check_branch
          %168 = sbr.rel (%p166) target = $region16
        $region15: #{tpu_custom_call.1} parent=11 // pred_region
          _
        $region16: #{tpu_custom_call.1} parent=11 // pred_fallthru
          _
        // Predicated region
        $region17: #{tpu_custom_call.1} parent=11 // pred_check
          %p169 = pneg %p83
        $region18: #{tpu_custom_call.1} parent=11 // pred_check_branch
          %171 = sbr.rel (%p169) target = $region20
        $region19: #{tpu_custom_call.1} parent=11 // pred_region
          _
        $region20: #{tpu_custom_call.1} parent=11 // pred_fallthru
          _
        // Predicated region
        $region21: #{tpu_custom_call.1} parent=11 // pred_check
          %p172 = pneg %p104
        $region22: #{tpu_custom_call.1} parent=11 // pred_check_branch
          %174 = sbr.rel (%p172) target = $region24
        $region23: #{tpu_custom_call.1} parent=11 // pred_region
          %176 = vsyncadd [#allocation4], 0
          %s177 = sshll.u32 %s3, 4
          %s178 = int_to_ptr.hbm [resolvable:$true] %s177
          %s179 = sshll.u32 [#allocation3], 4
          %s180 = int_to_ptr.vmem [resolvable:$true] %s179
          %185 = dma.hbm_to_vmem [thread:$0]  %s178, 18432, %s180, [#allocation4], 128, 128, 8
        $region24: #{tpu_custom_call.1} parent=11 // pred_fallthru
          _
        // Predicated region
        $region25: #{tpu_custom_call.1} parent=11 // pred_check
          %p186 = pneg %p125
        $region26: #{tpu_custom_call.1} parent=11 // pred_check_branch
          %188 = sbr.rel (%p186) target = $region28
        $region27: #{tpu_custom_call.1} parent=11 // pred_region
          _
        $region28: #{tpu_custom_call.1} parent=11 // pred_fallthru
          _
      $region12: #{tpu_custom_call.1} parent=5 // pred_fallthru
        _
      %p189 = scmp.lt.s32.totalorder %s15, 2
      // Predicated region
      $region29: #{tpu_custom_call.1} parent=5 // pred_check
        %p190 = pneg %p189
      $region30: #{tpu_custom_call.1} parent=5 // pred_check_branch
        %192 = sbr.rel (%p190) target = $region32
      $region31: #{tpu_custom_call.1} parent=5 // pred_region
        // Predicated region
        $region33: #{tpu_custom_call.1} parent=31 // pred_check
          %p193 = pneg %p35
        $region34: #{tpu_custom_call.1} parent=31 // pred_check_branch
          %195 = sbr.rel (%p193) target = $region36
        $region35: #{tpu_custom_call.1} parent=31 // pred_region
          %p196 = scmp.lt.s32.totalorder %s15, 1
          %s197 = scalar_select %p196, %s15, 1
          %s198 = smul.addr %s197, 43
          %s199 = smul.addr %s198, 8
          %s200 = scalar_lea.vmem %s0, %s199
        $region36: #{tpu_custom_call.1} parent=31 // pred_fallthru
          _
      $region32: #{tpu_custom_call.1} parent=5 // pred_fallthru
        _
      %p201 = scmp.le.s32.totalorder 1, %s15
      %p202 = scmp.lt.s32.totalorder %s15, 3
      %p203 = pnand %p201, %p202
      %p204 = pneg %p203
      // Predicated region
      $region37: #{tpu_custom_call.1} parent=5 // pred_check
        _
      $region38: #{tpu_custom_call.1} parent=5 // pred_check_branch
        %206 = sbr.rel (%p203) target = $region40
      $region39: #{tpu_custom_call.1} parent=5 // pred_region
        %s207 = ssub.s32 %s15, 1
        // Predicated region
        $region41: #{tpu_custom_call.1} parent=39 // pred_check
          %p208 = pneg %p104
        $region42: #{tpu_custom_call.1} parent=39 // pred_check_branch
          %210 = sbr.rel (%p208) target = $region44
        $region43: #{tpu_custom_call.1} parent=39 // pred_region
          %212 = dma.done [#allocation4], 18432
        $region44: #{tpu_custom_call.1} parent=39 // pred_fallthru
          _
        %p213 = scmp.lt.s32.totalorder %s20, 1
        %s214 = scalar_select %p213, %s20, 1
        %s215 = smul.addr %s214, 43
        %s216 = smul.addr %s215, 8
        %s217 = scalar_lea.vmem %s0, %s216
        %p218 = pneg %p41
        %p219 = pneg %p38
        %p220 = pneg %p62
        %p221 = pneg %p59
        %p222 = pneg %p83
        %p223 = pneg %p80
        %p224 = pneg %p104
        %p225 = pneg %p101
        %p226 = pneg %p125
        %p227 = pneg %p122
        %p228 = pneg %p151
        %p229 = pneg %p148
        %s230 = sand.u32 %s138, 1
        %s231 = scalar_lea.sflag [#allocation5], %s230
        %s232 = sand.u32 %s138, 1
        %s233 = smul.addr %s232, 288
        %s234 = scalar_lea.vmem [#allocation6], %s233
        %p235 = scmp.lt.s32.totalorder %s20, 1
        %s236 = scalar_select %p235, %s20, 1
        %s237 = smul.addr %s236, 43
        %s238 = smul.addr %s237, 8
        %s239 = scalar_lea.vmem %s0, %s238
        %v240 = vlaneseq
        %v241 = vshrl.u32 %v240, 7
        %v242 = vadd.s32 %v241, 8
        %v243 = vadd.s32 %v241, 16
        %v244 = vadd.s32 %v241, 24
        %v245 = vadd.s32 %v241, 32
        %v246 = vadd.s32 %v241, 40
        %v247 = vadd.s32 %v241, 48
        %v248 = vadd.s32 %v241, 56
        %v249 = vadd.s32 %v241, 64
        %v250 = vadd.s32 %v241, 72
        %v251 = vadd.s32 %v241, 80
        %v252 = vadd.s32 %v241, 88
        %v253 = vadd.s32 %v241, 96
        %v254 = vadd.s32 %v241, 104
        %v255 = vadd.s32 %v241, 112
        %v256 = vadd.s32 %v241, 120
        %v257 = vadd.s32 %v241, 128
        %v258 = vadd.s32 %v241, 136
        %v259 = vadd.s32 %v241, 144
        %v260 = vadd.s32 %v241, 152
        %v261 = vadd.s32 %v241, 160
        %v262 = vadd.s32 %v241, 168
        %v263 = vadd.s32 %v241, 176
        %v264 = vadd.s32 %v241, 184
        %v265 = vadd.s32 %v241, 192
        %v266 = vadd.s32 %v241, 200
        %v267 = vadd.s32 %v241, 208
        %v268 = vadd.s32 %v241, 216
        %v269 = vadd.s32 %v241, 224
        %v270 = vadd.s32 %v241, 232
        %v271 = vadd.s32 %v241, 240
        %v272 = vadd.s32 %v241, 248
        %v273 = vadd.s32 %v241, 256
        %v274 = vadd.s32 %v241, 264
        %v275 = vadd.s32 %v241, 272
        %v276 = vadd.s32 %v241, 280
        %vm277 = vcmp.lt.s32.totalorder %v241, 0
        %v278 = vsub.s32 0, %v241
        %v279 = vsel %vm277, %v278, %v241
        %v280 = vand.u32 %v279, 65535
        %v281 = vshrl.u32 %v279, 16
        %v283 = vmul.u32 %v280, 14564
        %v284 = vmul.u32 %v280, 58254
        %v285 = vmul.u32 %v281, 14564
        %v286 = vmul.u32 %v281, 58254
        %v287 = vshll.u32 %v284, 16
        %v288 = vshrl.u32 %v284, 16
        %v289 = vshll.u32 %v285, 16
        %v290 = vshrl.u32 %v285, 16
        %vm291 = vc.u32 %v283, %v287
        %v292 = vsel %vm291, 1, 0
        %v293 = vadd.s32 %v283, %v287
        %v294 = vadd.s32 %v286, %v292
        %vm295 = vc.u32 %v293, %v289
        %v296 = vsel %vm295, 1, 0
        %v297 = vadd.s32 %v293, %v289
        %v298 = vadd.s32 %v294, %v296
        %v299 = vadd.s32 %v298, %v288
        %v300 = vadd.s32 %v299, %v290
        %v301 = vshrl.u32 %v300, 4
        %v302 = vmul.u32 %v301, 18
        %v303 = vsub.s32 %v279, %v302
        %v304 = vsub.s32 0, %v303
        %v305 = vsel %vm277, %v304, %v303
        %vm306 = vcmp.lt.s32.totalorder %v242, 0
        %v307 = vsub.s32 0, %v242
        %v308 = vsel %vm306, %v307, %v242
        %v309 = vand.u32 %v308, 65535
        %v310 = vshrl.u32 %v308, 16
        %v312 = vmul.u32 %v309, 14564
        %v313 = vmul.u32 %v309, 58254
        %v314 = vmul.u32 %v310, 14564
        %v315 = vmul.u32 %v310, 58254
        %v316 = vshll.u32 %v313, 16
        %v317 = vshrl.u32 %v313, 16
        %v318 = vshll.u32 %v314, 16
        %v319 = vshrl.u32 %v314, 16
        %vm320 = vc.u32 %v312, %v316
        %v321 = vsel %vm320, 1, 0
        %v322 = vadd.s32 %v312, %v316
        %v323 = vadd.s32 %v315, %v321
        %vm324 = vc.u32 %v322, %v318
        %v325 = vsel %vm324, 1, 0
        %v326 = vadd.s32 %v322, %v318
        %v327 = vadd.s32 %v323, %v325
        %v328 = vadd.s32 %v327, %v317
        %v329 = vadd.s32 %v328, %v319
        %v330 = vshrl.u32 %v329, 4
        %v331 = vmul.u32 %v330, 18
        %v332 = vsub.s32 %v308, %v331
        %v333 = vsub.s32 0, %v332
        %v334 = vsel %vm306, %v333, %v332
        %vm335 = vcmp.lt.s32.totalorder %v243, 0
        %v336 = vsub.s32 0, %v243
        %v337 = vsel %vm335, %v336, %v243
        %v338 = vand.u32 %v337, 65535
        %v339 = vshrl.u32 %v337, 16
        %v341 = vmul.u32 %v338, 14564
        %v342 = vmul.u32 %v338, 58254
        %v343 = vmul.u32 %v339, 14564
        %v344 = vmul.u32 %v339, 58254
        %v345 = vshll.u32 %v342, 16
        %v346 = vshrl.u32 %v342, 16
        %v347 = vshll.u32 %v343, 16
        %v348 = vshrl.u32 %v343, 16
        %vm349 = vc.u32 %v341, %v345
        %v350 = vsel %vm349, 1, 0
        %v351 = vadd.s32 %v341, %v345
        %v352 = vadd.s32 %v344, %v350
        %vm353 = vc.u32 %v351, %v347
        %v354 = vsel %vm353, 1, 0
        %v355 = vadd.s32 %v351, %v347
        %v356 = vadd.s32 %v352, %v354
        %v357 = vadd.s32 %v356, %v346
        %v358 = vadd.s32 %v357, %v348
        %v359 = vshrl.u32 %v358, 4
        %v360 = vmul.u32 %v359, 18
        %v361 = vsub.s32 %v337, %v360
        %v362 = vsub.s32 0, %v361
        %v363 = vsel %vm335, %v362, %v361
        %vm364 = vcmp.lt.s32.totalorder %v244, 0
        %v365 = vsub.s32 0, %v244
        %v366 = vsel %vm364, %v365, %v244
        %v367 = vand.u32 %v366, 65535
        %v368 = vshrl.u32 %v366, 16
        %v370 = vmul.u32 %v367, 14564
        %v371 = vmul.u32 %v367, 58254
        %v372 = vmul.u32 %v368, 14564
        %v373 = vmul.u32 %v368, 58254
        %v374 = vshll.u32 %v371, 16
        %v375 = vshrl.u32 %v371, 16
        %v376 = vshll.u32 %v372, 16
        %v377 = vshrl.u32 %v372, 16
        %vm378 = vc.u32 %v370, %v374
        %v379 = vsel %vm378, 1, 0
        %v380 = vadd.s32 %v370, %v374
        %v381 = vadd.s32 %v373, %v379
        %vm382 = vc.u32 %v380, %v376
        %v383 = vsel %vm382, 1, 0
        %v384 = vadd.s32 %v380, %v376
        %v385 = vadd.s32 %v381, %v383
        %v386 = vadd.s32 %v385, %v375
        %v387 = vadd.s32 %v386, %v377
        %v388 = vshrl.u32 %v387, 4
        %v389 = vmul.u32 %v388, 18
        %v390 = vsub.s32 %v366, %v389
        %v391 = vsub.s32 0, %v390
        %v392 = vsel %vm364, %v391, %v390
        %vm393 = vcmp.lt.s32.totalorder %v245, 0
        %v394 = vsub.s32 0, %v245
        %v395 = vsel %vm393, %v394, %v245
        %v396 = vand.u32 %v395, 65535
        %v397 = vshrl.u32 %v395, 16
        %v399 = vmul.u32 %v396, 14564
        %v400 = vmul.u32 %v396, 58254
        %v401 = vmul.u32 %v397, 14564
        %v402 = vmul.u32 %v397, 58254
        %v403 = vshll.u32 %v400, 16
        %v404 = vshrl.u32 %v400, 16
        %v405 = vshll.u32 %v401, 16
        %v406 = vshrl.u32 %v401, 16
        %vm407 = vc.u32 %v399, %v403
        %v408 = vsel %vm407, 1, 0
        %v409 = vadd.s32 %v399, %v403
        %v410 = vadd.s32 %v402, %v408
        %vm411 = vc.u32 %v409, %v405
        %v412 = vsel %vm411, 1, 0
        %v413 = vadd.s32 %v409, %v405
        %v414 = vadd.s32 %v410, %v412
        %v415 = vadd.s32 %v414, %v404
        %v416 = vadd.s32 %v415, %v406
        %v417 = vshrl.u32 %v416, 4
        %v418 = vmul.u32 %v417, 18
        %v419 = vsub.s32 %v395, %v418
        %v420 = vsub.s32 0, %v419
        %v421 = vsel %vm393, %v420, %v419
        %vm422 = vcmp.lt.s32.totalorder %v246, 0
        %v423 = vsub.s32 0, %v246
        %v424 = vsel %vm422, %v423, %v246
        %v425 = vand.u32 %v424, 65535
        %v426 = vshrl.u32 %v424, 16
        %v428 = vmul.u32 %v425, 14564
        %v429 = vmul.u32 %v425, 58254
        %v430 = vmul.u32 %v426, 14564
        %v431 = vmul.u32 %v426, 58254
        %v432 = vshll.u32 %v429, 16
        %v433 = vshrl.u32 %v429, 16
        %v434 = vshll.u32 %v430, 16
        %v435 = vshrl.u32 %v430, 16
        %vm436 = vc.u32 %v428, %v432
        %v437 = vsel %vm436, 1, 0
        %v438 = vadd.s32 %v428, %v432
        %v439 = vadd.s32 %v431, %v437
        %vm440 = vc.u32 %v438, %v434
        %v441 = vsel %vm440, 1, 0
        %v442 = vadd.s32 %v438, %v434
        %v443 = vadd.s32 %v439, %v441
        %v444 = vadd.s32 %v443, %v433
        %v445 = vadd.s32 %v444, %v435
        %v446 = vshrl.u32 %v445, 4
        %v447 = vmul.u32 %v446, 18
        %v448 = vsub.s32 %v424, %v447
        %v449 = vsub.s32 0, %v448
        %v450 = vsel %vm422, %v449, %v448
        %vm451 = vcmp.lt.s32.totalorder %v247, 0
        %v452 = vsub.s32 0, %v247
        %v453 = vsel %vm451, %v452, %v247
        %v454 = vand.u32 %v453, 65535
        %v455 = vshrl.u32 %v453, 16
        %v457 = vmul.u32 %v454, 14564
        %v458 = vmul.u32 %v454, 58254
        %v459 = vmul.u32 %v455, 14564
        %v460 = vmul.u32 %v455, 58254
        %v461 = vshll.u32 %v458, 16
        %v462 = vshrl.u32 %v458, 16
        %v463 = vshll.u32 %v459, 16
        %v464 = vshrl.u32 %v459, 16
        %vm465 = vc.u32 %v457, %v461
        %v466 = vsel %vm465, 1, 0
        %v467 = vadd.s32 %v457, %v461
        %v468 = vadd.s32 %v460, %v466
        %vm469 = vc.u32 %v467, %v463
        %v470 = vsel %vm469, 1, 0
        %v471 = vadd.s32 %v467, %v463
        %v472 = vadd.s32 %v468, %v470
        %v473 = vadd.s32 %v472, %v462
        %v474 = vadd.s32 %v473, %v464
        %v475 = vshrl.u32 %v474, 4
        %v476 = vmul.u32 %v475, 18
        %v477 = vsub.s32 %v453, %v476
        %v478 = vsub.s32 0, %v477
        %v479 = vsel %vm451, %v478, %v477
        %vm480 = vcmp.lt.s32.totalorder %v248, 0
        %v481 = vsub.s32 0, %v248
        %v482 = vsel %vm480, %v481, %v248
        %v483 = vand.u32 %v482, 65535
        %v484 = vshrl.u32 %v482, 16
        %v486 = vmul.u32 %v483, 14564
        %v487 = vmul.u32 %v483, 58254
        %v488 = vmul.u32 %v484, 14564
        %v489 = vmul.u32 %v484, 58254
        %v490 = vshll.u32 %v487, 16
        %v491 = vshrl.u32 %v487, 16
        %v492 = vshll.u32 %v488, 16
        %v493 = vshrl.u32 %v488, 16
        %vm494 = vc.u32 %v486, %v490
        %v495 = vsel %vm494, 1, 0
        %v496 = vadd.s32 %v486, %v490
        %v497 = vadd.s32 %v489, %v495
        %vm498 = vc.u32 %v496, %v492
        %v499 = vsel %vm498, 1, 0
        %v500 = vadd.s32 %v496, %v492
        %v501 = vadd.s32 %v497, %v499
        %v502 = vadd.s32 %v501, %v491
        %v503 = vadd.s32 %v502, %v493
        %v504 = vshrl.u32 %v503, 4
        %v505 = vmul.u32 %v504, 18
        %v506 = vsub.s32 %v482, %v505
        %v507 = vsub.s32 0, %v506
        %v508 = vsel %vm480, %v507, %v506
        %vm509 = vcmp.lt.s32.totalorder %v249, 0
        %v510 = vsub.s32 0, %v249
        %v511 = vsel %vm509, %v510, %v249
        %v512 = vand.u32 %v511, 65535
        %v513 = vshrl.u32 %v511, 16
        %v515 = vmul.u32 %v512, 14564
        %v516 = vmul.u32 %v512, 58254
        %v517 = vmul.u32 %v513, 14564
        %v518 = vmul.u32 %v513, 58254
        %v519 = vshll.u32 %v516, 16
        %v520 = vshrl.u32 %v516, 16
        %v521 = vshll.u32 %v517, 16
        %v522 = vshrl.u32 %v517, 16
        %vm523 = vc.u32 %v515, %v519
        %v524 = vsel %vm523, 1, 0
        %v525 = vadd.s32 %v515, %v519
        %v526 = vadd.s32 %v518, %v524
        %vm527 = vc.u32 %v525, %v521
        %v528 = vsel %vm527, 1, 0
        %v529 = vadd.s32 %v525, %v521
        %v530 = vadd.s32 %v526, %v528
        %v531 = vadd.s32 %v530, %v520
        %v532 = vadd.s32 %v531, %v522
        %v533 = vshrl.u32 %v532, 4
        %v534 = vmul.u32 %v533, 18
        %v535 = vsub.s32 %v511, %v534
        %v536 = vsub.s32 0, %v535
        %v537 = vsel %vm509, %v536, %v535
        %vm538 = vcmp.lt.s32.totalorder %v250, 0
        %v539 = vsub.s32 0, %v250
        %v540 = vsel %vm538, %v539, %v250
        %v541 = vand.u32 %v540, 65535
        %v542 = vshrl.u32 %v540, 16
        %v544 = vmul.u32 %v541, 14564
        %v545 = vmul.u32 %v541, 58254
        %v546 = vmul.u32 %v542, 14564
        %v547 = vmul.u32 %v542, 58254
        %v548 = vshll.u32 %v545, 16
        %v549 = vshrl.u32 %v545, 16
        %v550 = vshll.u32 %v546, 16
        %v551 = vshrl.u32 %v546, 16
        %vm552 = vc.u32 %v544, %v548
        %v553 = vsel %vm552, 1, 0
        %v554 = vadd.s32 %v544, %v548
        %v555 = vadd.s32 %v547, %v553
        %vm556 = vc.u32 %v554, %v550
        %v557 = vsel %vm556, 1, 0
        %v558 = vadd.s32 %v554, %v550
        %v559 = vadd.s32 %v555, %v557
        %v560 = vadd.s32 %v559, %v549
        %v561 = vadd.s32 %v560, %v551
        %v562 = vshrl.u32 %v561, 4
        %v563 = vmul.u32 %v562, 18
        %v564 = vsub.s32 %v540, %v563
        %v565 = vsub.s32 0, %v564
        %v566 = vsel %vm538, %v565, %v564
        %vm567 = vcmp.lt.s32.totalorder %v251, 0
        %v568 = vsub.s32 0, %v251
        %v569 = vsel %vm567, %v568, %v251
        %v570 = vand.u32 %v569, 65535
        %v571 = vshrl.u32 %v569, 16
        %v573 = vmul.u32 %v570, 14564
        %v574 = vmul.u32 %v570, 58254
        %v575 = vmul.u32 %v571, 14564
        %v576 = vmul.u32 %v571, 58254
        %v577 = vshll.u32 %v574, 16
        %v578 = vshrl.u32 %v574, 16
        %v579 = vshll.u32 %v575, 16
        %v580 = vshrl.u32 %v575, 16
        %vm581 = vc.u32 %v573, %v577
        %v582 = vsel %vm581, 1, 0
        %v583 = vadd.s32 %v573, %v577
        %v584 = vadd.s32 %v576, %v582
        %vm585 = vc.u32 %v583, %v579
        %v586 = vsel %vm585, 1, 0
        %v587 = vadd.s32 %v583, %v579
        %v588 = vadd.s32 %v584, %v586
        %v589 = vadd.s32 %v588, %v578
        %v590 = vadd.s32 %v589, %v580
        %v591 = vshrl.u32 %v590, 4
        %v592 = vmul.u32 %v591, 18
        %v593 = vsub.s32 %v569, %v592
        %v594 = vsub.s32 0, %v593
        %v595 = vsel %vm567, %v594, %v593
        %vm596 = vcmp.lt.s32.totalorder %v252, 0
        %v597 = vsub.s32 0, %v252
        %v598 = vsel %vm596, %v597, %v252
        %v599 = vand.u32 %v598, 65535
        %v600 = vshrl.u32 %v598, 16
        %v602 = vmul.u32 %v599, 14564
        %v603 = vmul.u32 %v599, 58254
        %v604 = vmul.u32 %v600, 14564
        %v605 = vmul.u32 %v600, 58254
        %v606 = vshll.u32 %v603, 16
        %v607 = vshrl.u32 %v603, 16
        %v608 = vshll.u32 %v604, 16
        %v609 = vshrl.u32 %v604, 16
        %vm610 = vc.u32 %v602, %v606
        %v611 = vsel %vm610, 1, 0
        %v612 = vadd.s32 %v602, %v606
        %v613 = vadd.s32 %v605, %v611
        %vm614 = vc.u32 %v612, %v608
        %v615 = vsel %vm614, 1, 0
        %v616 = vadd.s32 %v612, %v608
        %v617 = vadd.s32 %v613, %v615
        %v618 = vadd.s32 %v617, %v607
        %v619 = vadd.s32 %v618, %v609
        %v620 = vshrl.u32 %v619, 4
        %v621 = vmul.u32 %v620, 18
        %v622 = vsub.s32 %v598, %v621
        %v623 = vsub.s32 0, %v622
        %v624 = vsel %vm596, %v623, %v622
        %vm625 = vcmp.lt.s32.totalorder %v253, 0
        %v626 = vsub.s32 0, %v253
        %v627 = vsel %vm625, %v626, %v253
        %v628 = vand.u32 %v627, 65535
        %v629 = vshrl.u32 %v627, 16
        %v631 = vmul.u32 %v628, 14564
        %v632 = vmul.u32 %v628, 58254
        %v633 = vmul.u32 %v629, 14564
        %v634 = vmul.u32 %v629, 58254
        %v635 = vshll.u32 %v632, 16
        %v636 = vshrl.u32 %v632, 16
        %v637 = vshll.u32 %v633, 16
        %v638 = vshrl.u32 %v633, 16
        %vm639 = vc.u32 %v631, %v635
        %v640 = vsel %vm639, 1, 0
        %v641 = vadd.s32 %v631, %v635
        %v642 = vadd.s32 %v634, %v640
        %vm643 = vc.u32 %v641, %v637
        %v644 = vsel %vm643, 1, 0
        %v645 = vadd.s32 %v641, %v637
        %v646 = vadd.s32 %v642, %v644
        %v647 = vadd.s32 %v646, %v636
        %v648 = vadd.s32 %v647, %v638
        %v649 = vshrl.u32 %v648, 4
        %v650 = vmul.u32 %v649, 18
        %v651 = vsub.s32 %v627, %v650
        %v652 = vsub.s32 0, %v651
        %v653 = vsel %vm625, %v652, %v651
        %vm654 = vcmp.lt.s32.totalorder %v254, 0
        %v655 = vsub.s32 0, %v254
        %v656 = vsel %vm654, %v655, %v254
        %v657 = vand.u32 %v656, 65535
        %v658 = vshrl.u32 %v656, 16
        %v660 = vmul.u32 %v657, 14564
        %v661 = vmul.u32 %v657, 58254
        %v662 = vmul.u32 %v658, 14564
        %v663 = vmul.u32 %v658, 58254
        %v664 = vshll.u32 %v661, 16
        %v665 = vshrl.u32 %v661, 16
        %v666 = vshll.u32 %v662, 16
        %v667 = vshrl.u32 %v662, 16
        %vm668 = vc.u32 %v660, %v664
        %v669 = vsel %vm668, 1, 0
        %v670 = vadd.s32 %v660, %v664
        %v671 = vadd.s32 %v663, %v669
        %vm672 = vc.u32 %v670, %v666
        %v673 = vsel %vm672, 1, 0
        %v674 = vadd.s32 %v670, %v666
        %v675 = vadd.s32 %v671, %v673
        %v676 = vadd.s32 %v675, %v665
        %v677 = vadd.s32 %v676, %v667
        %v678 = vshrl.u32 %v677, 4
        %v679 = vmul.u32 %v678, 18
        %v680 = vsub.s32 %v656, %v679
        %v681 = vsub.s32 0, %v680
        %v682 = vsel %vm654, %v681, %v680
        %vm683 = vcmp.lt.s32.totalorder %v255, 0
        %v684 = vsub.s32 0, %v255
        %v685 = vsel %vm683, %v684, %v255
        %v686 = vand.u32 %v685, 65535
        %v687 = vshrl.u32 %v685, 16
        %v689 = vmul.u32 %v686, 14564
        %v690 = vmul.u32 %v686, 58254
        %v691 = vmul.u32 %v687, 14564
        %v692 = vmul.u32 %v687, 58254
        %v693 = vshll.u32 %v690, 16
        %v694 = vshrl.u32 %v690, 16
        %v695 = vshll.u32 %v691, 16
        %v696 = vshrl.u32 %v691, 16
        %vm697 = vc.u32 %v689, %v693
        %v698 = vsel %vm697, 1, 0
        %v699 = vadd.s32 %v689, %v693
        %v700 = vadd.s32 %v692, %v698
        %vm701 = vc.u32 %v699, %v695
        %v702 = vsel %vm701, 1, 0
        %v703 = vadd.s32 %v699, %v695
        %v704 = vadd.s32 %v700, %v702
        %v705 = vadd.s32 %v704, %v694
        %v706 = vadd.s32 %v705, %v696
        %v707 = vshrl.u32 %v706, 4
        %v708 = vmul.u32 %v707, 18
        %v709 = vsub.s32 %v685, %v708
        %v710 = vsub.s32 0, %v709
        %v711 = vsel %vm683, %v710, %v709
        %vm712 = vcmp.lt.s32.totalorder %v256, 0
        %v713 = vsub.s32 0, %v256
        %v714 = vsel %vm712, %v713, %v256
        %v715 = vand.u32 %v714, 65535
        %v716 = vshrl.u32 %v714, 16
        %v718 = vmul.u32 %v715, 14564
        %v719 = vmul.u32 %v715, 58254
        %v720 = vmul.u32 %v716, 14564
        %v721 = vmul.u32 %v716, 58254
        %v722 = vshll.u32 %v719, 16
        %v723 = vshrl.u32 %v719, 16
        %v724 = vshll.u32 %v720, 16
        %v725 = vshrl.u32 %v720, 16
        %vm726 = vc.u32 %v718, %v722
        %v727 = vsel %vm726, 1, 0
        %v728 = vadd.s32 %v718, %v722
        %v729 = vadd.s32 %v721, %v727
        %vm730 = vc.u32 %v728, %v724
        %v731 = vsel %vm730, 1, 0
        %v732 = vadd.s32 %v728, %v724
        %v733 = vadd.s32 %v729, %v731
        %v734 = vadd.s32 %v733, %v723
        %v735 = vadd.s32 %v734, %v725
        %v736 = vshrl.u32 %v735, 4
        %v737 = vmul.u32 %v736, 18
        %v738 = vsub.s32 %v714, %v737
        %v739 = vsub.s32 0, %v738
        %v740 = vsel %vm712, %v739, %v738
        %vm741 = vcmp.lt.s32.totalorder %v257, 0
        %v742 = vsub.s32 0, %v257
        %v743 = vsel %vm741, %v742, %v257
        %v744 = vand.u32 %v743, 65535
        %v745 = vshrl.u32 %v743, 16
        %v747 = vmul.u32 %v744, 14564
        %v748 = vmul.u32 %v744, 58254
        %v749 = vmul.u32 %v745, 14564
        %v750 = vmul.u32 %v745, 58254
        %v751 = vshll.u32 %v748, 16
        %v752 = vshrl.u32 %v748, 16
        %v753 = vshll.u32 %v749, 16
        %v754 = vshrl.u32 %v749, 16
        %vm755 = vc.u32 %v747, %v751
        %v756 = vsel %vm755, 1, 0
        %v757 = vadd.s32 %v747, %v751
        %v758 = vadd.s32 %v750, %v756
        %vm759 = vc.u32 %v757, %v753
        %v760 = vsel %vm759, 1, 0
        %v761 = vadd.s32 %v757, %v753
        %v762 = vadd.s32 %v758, %v760
        %v763 = vadd.s32 %v762, %v752
        %v764 = vadd.s32 %v763, %v754
        %v765 = vshrl.u32 %v764, 4
        %v766 = vmul.u32 %v765, 18
        %v767 = vsub.s32 %v743, %v766
        %v768 = vsub.s32 0, %v767
        %v769 = vsel %vm741, %v768, %v767
        %vm770 = vcmp.lt.s32.totalorder %v258, 0
        %v771 = vsub.s32 0, %v258
        %v772 = vsel %vm770, %v771, %v258
        %v773 = vand.u32 %v772, 65535
        %v774 = vshrl.u32 %v772, 16
        %v776 = vmul.u32 %v773, 14564
        %v777 = vmul.u32 %v773, 58254
        %v778 = vmul.u32 %v774, 14564
        %v779 = vmul.u32 %v774, 58254
        %v780 = vshll.u32 %v777, 16
        %v781 = vshrl.u32 %v777, 16
        %v782 = vshll.u32 %v778, 16
        %v783 = vshrl.u32 %v778, 16
        %vm784 = vc.u32 %v776, %v780
        %v785 = vsel %vm784, 1, 0
        %v786 = vadd.s32 %v776, %v780
        %v787 = vadd.s32 %v779, %v785
        %vm788 = vc.u32 %v786, %v782
        %v789 = vsel %vm788, 1, 0
        %v790 = vadd.s32 %v786, %v782
        %v791 = vadd.s32 %v787, %v789
        %v792 = vadd.s32 %v791, %v781
        %v793 = vadd.s32 %v792, %v783
        %v794 = vshrl.u32 %v793, 4
        %v795 = vmul.u32 %v794, 18
        %v796 = vsub.s32 %v772, %v795
        %v797 = vsub.s32 0, %v796
        %v798 = vsel %vm770, %v797, %v796
        %vm799 = vcmp.lt.s32.totalorder %v259, 0
        %v800 = vsub.s32 0, %v259
        %v801 = vsel %vm799, %v800, %v259
        %v802 = vand.u32 %v801, 65535
        %v803 = vshrl.u32 %v801, 16
        %v805 = vmul.u32 %v802, 14564
        %v806 = vmul.u32 %v802, 58254
        %v807 = vmul.u32 %v803, 14564
        %v808 = vmul.u32 %v803, 58254
        %v809 = vshll.u32 %v806, 16
        %v810 = vshrl.u32 %v806, 16
        %v811 = vshll.u32 %v807, 16
        %v812 = vshrl.u32 %v807, 16
        %vm813 = vc.u32 %v805, %v809
        %v814 = vsel %vm813, 1, 0
        %v815 = vadd.s32 %v805, %v809
        %v816 = vadd.s32 %v808, %v814
        %vm817 = vc.u32 %v815, %v811
        %v818 = vsel %vm817, 1, 0
        %v819 = vadd.s32 %v815, %v811
        %v820 = vadd.s32 %v816, %v818
        %v821 = vadd.s32 %v820, %v810
        %v822 = vadd.s32 %v821, %v812
        %v823 = vshrl.u32 %v822, 4
        %v824 = vmul.u32 %v823, 18
        %v825 = vsub.s32 %v801, %v824
        %v826 = vsub.s32 0, %v825
        %v827 = vsel %vm799, %v826, %v825
        %vm828 = vcmp.lt.s32.totalorder %v260, 0
        %v829 = vsub.s32 0, %v260
        %v830 = vsel %vm828, %v829, %v260
        %v831 = vand.u32 %v830, 65535
        %v832 = vshrl.u32 %v830, 16
        %v834 = vmul.u32 %v831, 14564
        %v835 = vmul.u32 %v831, 58254
        %v836 = vmul.u32 %v832, 14564
        %v837 = vmul.u32 %v832, 58254
        %v838 = vshll.u32 %v835, 16
        %v839 = vshrl.u32 %v835, 16
        %v840 = vshll.u32 %v836, 16
        %v841 = vshrl.u32 %v836, 16
        %vm842 = vc.u32 %v834, %v838
        %v843 = vsel %vm842, 1, 0
        %v844 = vadd.s32 %v834, %v838
        %v845 = vadd.s32 %v837, %v843
        %vm846 = vc.u32 %v844, %v840
        %v847 = vsel %vm846, 1, 0
        %v848 = vadd.s32 %v844, %v840
        %v849 = vadd.s32 %v845, %v847
        %v850 = vadd.s32 %v849, %v839
        %v851 = vadd.s32 %v850, %v841
        %v852 = vshrl.u32 %v851, 4
        %v853 = vmul.u32 %v852, 18
        %v854 = vsub.s32 %v830, %v853
        %v855 = vsub.s32 0, %v854
        %v856 = vsel %vm828, %v855, %v854
        %vm857 = vcmp.lt.s32.totalorder %v261, 0
        %v858 = vsub.s32 0, %v261
        %v859 = vsel %vm857, %v858, %v261
        %v860 = vand.u32 %v859, 65535
        %v861 = vshrl.u32 %v859, 16
        %v863 = vmul.u32 %v860, 14564
        %v864 = vmul.u32 %v860, 58254
        %v865 = vmul.u32 %v861, 14564
        %v866 = vmul.u32 %v861, 58254
        %v867 = vshll.u32 %v864, 16
        %v868 = vshrl.u32 %v864, 16
        %v869 = vshll.u32 %v865, 16
        %v870 = vshrl.u32 %v865, 16
        %vm871 = vc.u32 %v863, %v867
        %v872 = vsel %vm871, 1, 0
        %v873 = vadd.s32 %v863, %v867
        %v874 = vadd.s32 %v866, %v872
        %vm875 = vc.u32 %v873, %v869
        %v876 = vsel %vm875, 1, 0
        %v877 = vadd.s32 %v873, %v869
        %v878 = vadd.s32 %v874, %v876
        %v879 = vadd.s32 %v878, %v868
        %v880 = vadd.s32 %v879, %v870
        %v881 = vshrl.u32 %v880, 4
        %v882 = vmul.u32 %v881, 18
        %v883 = vsub.s32 %v859, %v882
        %v884 = vsub.s32 0, %v883
        %v885 = vsel %vm857, %v884, %v883
        %vm886 = vcmp.lt.s32.totalorder %v262, 0
        %v887 = vsub.s32 0, %v262
        %v888 = vsel %vm886, %v887, %v262
        %v889 = vand.u32 %v888, 65535
        %v890 = vshrl.u32 %v888, 16
        %v892 = vmul.u32 %v889, 14564
        %v893 = vmul.u32 %v889, 58254
        %v894 = vmul.u32 %v890, 14564
        %v895 = vmul.u32 %v890, 58254
        %v896 = vshll.u32 %v893, 16
        %v897 = vshrl.u32 %v893, 16
        %v898 = vshll.u32 %v894, 16
        %v899 = vshrl.u32 %v894, 16
        %vm900 = vc.u32 %v892, %v896
        %v901 = vsel %vm900, 1, 0
        %v902 = vadd.s32 %v892, %v896
        %v903 = vadd.s32 %v895, %v901
        %vm904 = vc.u32 %v902, %v898
        %v905 = vsel %vm904, 1, 0
        %v906 = vadd.s32 %v902, %v898
        %v907 = vadd.s32 %v903, %v905
        %v908 = vadd.s32 %v907, %v897
        %v909 = vadd.s32 %v908, %v899
        %v910 = vshrl.u32 %v909, 4
        %v911 = vmul.u32 %v910, 18
        %v912 = vsub.s32 %v888, %v911
        %v913 = vsub.s32 0, %v912
        %v914 = vsel %vm886, %v913, %v912
        %vm915 = vcmp.lt.s32.totalorder %v263, 0
        %v916 = vsub.s32 0, %v263
        %v917 = vsel %vm915, %v916, %v263
        %v918 = vand.u32 %v917, 65535
        %v919 = vshrl.u32 %v917, 16
        %v921 = vmul.u32 %v918, 14564
        %v922 = vmul.u32 %v918, 58254
        %v923 = vmul.u32 %v919, 14564
        %v924 = vmul.u32 %v919, 58254
        %v925 = vshll.u32 %v922, 16
        %v926 = vshrl.u32 %v922, 16
        %v927 = vshll.u32 %v923, 16
        %v928 = vshrl.u32 %v923, 16
        %vm929 = vc.u32 %v921, %v925
        %v930 = vsel %vm929, 1, 0
        %v931 = vadd.s32 %v921, %v925
        %v932 = vadd.s32 %v924, %v930
        %vm933 = vc.u32 %v931, %v927
        %v934 = vsel %vm933, 1, 0
        %v935 = vadd.s32 %v931, %v927
        %v936 = vadd.s32 %v932, %v934
        %v937 = vadd.s32 %v936, %v926
        %v938 = vadd.s32 %v937, %v928
        %v939 = vshrl.u32 %v938, 4
        %v940 = vmul.u32 %v939, 18
        %v941 = vsub.s32 %v917, %v940
        %v942 = vsub.s32 0, %v941
        %v943 = vsel %vm915, %v942, %v941
        %vm944 = vcmp.lt.s32.totalorder %v264, 0
        %v945 = vsub.s32 0, %v264
        %v946 = vsel %vm944, %v945, %v264
        %v947 = vand.u32 %v946, 65535
        %v948 = vshrl.u32 %v946, 16
        %v950 = vmul.u32 %v947, 14564
        %v951 = vmul.u32 %v947, 58254
        %v952 = vmul.u32 %v948, 14564
        %v953 = vmul.u32 %v948, 58254
        %v954 = vshll.u32 %v951, 16
        %v955 = vshrl.u32 %v951, 16
        %v956 = vshll.u32 %v952, 16
        %v957 = vshrl.u32 %v952, 16
        %vm958 = vc.u32 %v950, %v954
        %v959 = vsel %vm958, 1, 0
        %v960 = vadd.s32 %v950, %v954
        %v961 = vadd.s32 %v953, %v959
        %vm962 = vc.u32 %v960, %v956
        %v963 = vsel %vm962, 1, 0
        %v964 = vadd.s32 %v960, %v956
        %v965 = vadd.s32 %v961, %v963
        %v966 = vadd.s32 %v965, %v955
        %v967 = vadd.s32 %v966, %v957
        %v968 = vshrl.u32 %v967, 4
        %v969 = vmul.u32 %v968, 18
        %v970 = vsub.s32 %v946, %v969
        %v971 = vsub.s32 0, %v970
        %v972 = vsel %vm944, %v971, %v970
        %vm973 = vcmp.lt.s32.totalorder %v265, 0
        %v974 = vsub.s32 0, %v265
        %v975 = vsel %vm973, %v974, %v265
        %v976 = vand.u32 %v975, 65535
        %v977 = vshrl.u32 %v975, 16
        %v979 = vmul.u32 %v976, 14564
        %v980 = vmul.u32 %v976, 58254
        %v981 = vmul.u32 %v977, 14564
        %v982 = vmul.u32 %v977, 58254
        %v983 = vshll.u32 %v980, 16
        %v984 = vshrl.u32 %v980, 16
        %v985 = vshll.u32 %v981, 16
        %v986 = vshrl.u32 %v981, 16
        %vm987 = vc.u32 %v979, %v983
        %v988 = vsel %vm987, 1, 0
        %v989 = vadd.s32 %v979, %v983
        %v990 = vadd.s32 %v982, %v988
        %vm991 = vc.u32 %v989, %v985
        %v992 = vsel %vm991, 1, 0
        %v993 = vadd.s32 %v989, %v985
        %v994 = vadd.s32 %v990, %v992
        %v995 = vadd.s32 %v994, %v984
        %v996 = vadd.s32 %v995, %v986
        %v997 = vshrl.u32 %v996, 4
        %v998 = vmul.u32 %v997, 18
        %v999 = vsub.s32 %v975, %v998
        %v1000 = vsub.s32 0, %v999
        %v1001 = vsel %vm973, %v1000, %v999
        %vm1002 = vcmp.lt.s32.totalorder %v266, 0
        %v1003 = vsub.s32 0, %v266
        %v1004 = vsel %vm1002, %v1003, %v266
        %v1005 = vand.u32 %v1004, 65535
        %v1006 = vshrl.u32 %v1004, 16
        %v1008 = vmul.u32 %v1005, 14564
        %v1009 = vmul.u32 %v1005, 58254
        %v1010 = vmul.u32 %v1006, 14564
        %v1011 = vmul.u32 %v1006, 58254
        %v1012 = vshll.u32 %v1009, 16
        %v1013 = vshrl.u32 %v1009, 16
        %v1014 = vshll.u32 %v1010, 16
        %v1015 = vshrl.u32 %v1010, 16
        %vm1016 = vc.u32 %v1008, %v1012
        %v1017 = vsel %vm1016, 1, 0
        %v1018 = vadd.s32 %v1008, %v1012
        %v1019 = vadd.s32 %v1011, %v1017
        %vm1020 = vc.u32 %v1018, %v1014
        %v1021 = vsel %vm1020, 1, 0
        %v1022 = vadd.s32 %v1018, %v1014
        %v1023 = vadd.s32 %v1019, %v1021
        %v1024 = vadd.s32 %v1023, %v1013
        %v1025 = vadd.s32 %v1024, %v1015
        %v1026 = vshrl.u32 %v1025, 4
        %v1027 = vmul.u32 %v1026, 18
        %v1028 = vsub.s32 %v1004, %v1027
        %v1029 = vsub.s32 0, %v1028
        %v1030 = vsel %vm1002, %v1029, %v1028
        %vm1031 = vcmp.lt.s32.totalorder %v267, 0
        %v1032 = vsub.s32 0, %v267
        %v1033 = vsel %vm1031, %v1032, %v267
        %v1034 = vand.u32 %v1033, 65535
        %v1035 = vshrl.u32 %v1033, 16
        %v1037 = vmul.u32 %v1034, 14564
        %v1038 = vmul.u32 %v1034, 58254
        %v1039 = vmul.u32 %v1035, 14564
        %v1040 = vmul.u32 %v1035, 58254
        %v1041 = vshll.u32 %v1038, 16
        %v1042 = vshrl.u32 %v1038, 16
        %v1043 = vshll.u32 %v1039, 16
        %v1044 = vshrl.u32 %v1039, 16
        %vm1045 = vc.u32 %v1037, %v1041
        %v1046 = vsel %vm1045, 1, 0
        %v1047 = vadd.s32 %v1037, %v1041
        %v1048 = vadd.s32 %v1040, %v1046
        %vm1049 = vc.u32 %v1047, %v1043
        %v1050 = vsel %vm1049, 1, 0
        %v1051 = vadd.s32 %v1047, %v1043
        %v1052 = vadd.s32 %v1048, %v1050
        %v1053 = vadd.s32 %v1052, %v1042
        %v1054 = vadd.s32 %v1053, %v1044
        %v1055 = vshrl.u32 %v1054, 4
        %v1056 = vmul.u32 %v1055, 18
        %v1057 = vsub.s32 %v1033, %v1056
        %v1058 = vsub.s32 0, %v1057
        %v1059 = vsel %vm1031, %v1058, %v1057
        %vm1060 = vcmp.lt.s32.totalorder %v268, 0
        %v1061 = vsub.s32 0, %v268
        %v1062 = vsel %vm1060, %v1061, %v268
        %v1063 = vand.u32 %v1062, 65535
        %v1064 = vshrl.u32 %v1062, 16
        %v1066 = vmul.u32 %v1063, 14564
        %v1067 = vmul.u32 %v1063, 58254
        %v1068 = vmul.u32 %v1064, 14564
        %v1069 = vmul.u32 %v1064, 58254
        %v1070 = vshll.u32 %v1067, 16
        %v1071 = vshrl.u32 %v1067, 16
        %v1072 = vshll.u32 %v1068, 16
        %v1073 = vshrl.u32 %v1068, 16
        %vm1074 = vc.u32 %v1066, %v1070
        %v1075 = vsel %vm1074, 1, 0
        %v1076 = vadd.s32 %v1066, %v1070
        %v1077 = vadd.s32 %v1069, %v1075
        %vm1078 = vc.u32 %v1076, %v1072
        %v1079 = vsel %vm1078, 1, 0
        %v1080 = vadd.s32 %v1076, %v1072
        %v1081 = vadd.s32 %v1077, %v1079
        %v1082 = vadd.s32 %v1081, %v1071
        %v1083 = vadd.s32 %v1082, %v1073
        %v1084 = vshrl.u32 %v1083, 4
        %v1085 = vmul.u32 %v1084, 18
        %v1086 = vsub.s32 %v1062, %v1085
        %v1087 = vsub.s32 0, %v1086
        %v1088 = vsel %vm1060, %v1087, %v1086
        %vm1089 = vcmp.lt.s32.totalorder %v269, 0
        %v1090 = vsub.s32 0, %v269
        %v1091 = vsel %vm1089, %v1090, %v269
        %v1092 = vand.u32 %v1091, 65535
        %v1093 = vshrl.u32 %v1091, 16
        %v1095 = vmul.u32 %v1092, 14564
        %v1096 = vmul.u32 %v1092, 58254
        %v1097 = vmul.u32 %v1093, 14564
        %v1098 = vmul.u32 %v1093, 58254
        %v1099 = vshll.u32 %v1096, 16
        %v1100 = vshrl.u32 %v1096, 16
        %v1101 = vshll.u32 %v1097, 16
        %v1102 = vshrl.u32 %v1097, 16
        %vm1103 = vc.u32 %v1095, %v1099
        %v1104 = vsel %vm1103, 1, 0
        %v1105 = vadd.s32 %v1095, %v1099
        %v1106 = vadd.s32 %v1098, %v1104
        %vm1107 = vc.u32 %v1105, %v1101
        %v1108 = vsel %vm1107, 1, 0
        %v1109 = vadd.s32 %v1105, %v1101
        %v1110 = vadd.s32 %v1106, %v1108
        %v1111 = vadd.s32 %v1110, %v1100
        %v1112 = vadd.s32 %v1111, %v1102
        %v1113 = vshrl.u32 %v1112, 4
        %v1114 = vmul.u32 %v1113, 18
        %v1115 = vsub.s32 %v1091, %v1114
        %v1116 = vsub.s32 0, %v1115
        %v1117 = vsel %vm1089, %v1116, %v1115
        %vm1118 = vcmp.lt.s32.totalorder %v270, 0
        %v1119 = vsub.s32 0, %v270
        %v1120 = vsel %vm1118, %v1119, %v270
        %v1121 = vand.u32 %v1120, 65535
        %v1122 = vshrl.u32 %v1120, 16
        %v1124 = vmul.u32 %v1121, 14564
        %v1125 = vmul.u32 %v1121, 58254
        %v1126 = vmul.u32 %v1122, 14564
        %v1127 = vmul.u32 %v1122, 58254
        %v1128 = vshll.u32 %v1125, 16
        %v1129 = vshrl.u32 %v1125, 16
        %v1130 = vshll.u32 %v1126, 16
        %v1131 = vshrl.u32 %v1126, 16
        %vm1132 = vc.u32 %v1124, %v1128
        %v1133 = vsel %vm1132, 1, 0
        %v1134 = vadd.s32 %v1124, %v1128
        %v1135 = vadd.s32 %v1127, %v1133
        %vm1136 = vc.u32 %v1134, %v1130
        %v1137 = vsel %vm1136, 1, 0
        %v1138 = vadd.s32 %v1134, %v1130
        %v1139 = vadd.s32 %v1135, %v1137
        %v1140 = vadd.s32 %v1139, %v1129
        %v1141 = vadd.s32 %v1140, %v1131
        %v1142 = vshrl.u32 %v1141, 4
        %v1143 = vmul.u32 %v1142, 18
        %v1144 = vsub.s32 %v1120, %v1143
        %v1145 = vsub.s32 0, %v1144
        %v1146 = vsel %vm1118, %v1145, %v1144
        %vm1147 = vcmp.lt.s32.totalorder %v271, 0
        %v1148 = vsub.s32 0, %v271
        %v1149 = vsel %vm1147, %v1148, %v271
        %v1150 = vand.u32 %v1149, 65535
        %v1151 = vshrl.u32 %v1149, 16
        %v1153 = vmul.u32 %v1150, 14564
        %v1154 = vmul.u32 %v1150, 58254
        %v1155 = vmul.u32 %v1151, 14564
        %v1156 = vmul.u32 %v1151, 58254
        %v1157 = vshll.u32 %v1154, 16
        %v1158 = vshrl.u32 %v1154, 16
        %v1159 = vshll.u32 %v1155, 16
        %v1160 = vshrl.u32 %v1155, 16
        %vm1161 = vc.u32 %v1153, %v1157
        %v1162 = vsel %vm1161, 1, 0
        %v1163 = vadd.s32 %v1153, %v1157
        %v1164 = vadd.s32 %v1156, %v1162
        %vm1165 = vc.u32 %v1163, %v1159
        %v1166 = vsel %vm1165, 1, 0
        %v1167 = vadd.s32 %v1163, %v1159
        %v1168 = vadd.s32 %v1164, %v1166
        %v1169 = vadd.s32 %v1168, %v1158
        %v1170 = vadd.s32 %v1169, %v1160
        %v1171 = vshrl.u32 %v1170, 4
        %v1172 = vmul.u32 %v1171, 18
        %v1173 = vsub.s32 %v1149, %v1172
        %v1174 = vsub.s32 0, %v1173
        %v1175 = vsel %vm1147, %v1174, %v1173
        %vm1176 = vcmp.lt.s32.totalorder %v272, 0
        %v1177 = vsub.s32 0, %v272
        %v1178 = vsel %vm1176, %v1177, %v272
        %v1179 = vand.u32 %v1178, 65535
        %v1180 = vshrl.u32 %v1178, 16
        %v1182 = vmul.u32 %v1179, 14564
        %v1183 = vmul.u32 %v1179, 58254
        %v1184 = vmul.u32 %v1180, 14564
        %v1185 = vmul.u32 %v1180, 58254
        %v1186 = vshll.u32 %v1183, 16
        %v1187 = vshrl.u32 %v1183, 16
        %v1188 = vshll.u32 %v1184, 16
        %v1189 = vshrl.u32 %v1184, 16
        %vm1190 = vc.u32 %v1182, %v1186
        %v1191 = vsel %vm1190, 1, 0
        %v1192 = vadd.s32 %v1182, %v1186
        %v1193 = vadd.s32 %v1185, %v1191
        %vm1194 = vc.u32 %v1192, %v1188
        %v1195 = vsel %vm1194, 1, 0
        %v1196 = vadd.s32 %v1192, %v1188
        %v1197 = vadd.s32 %v1193, %v1195
        %v1198 = vadd.s32 %v1197, %v1187
        %v1199 = vadd.s32 %v1198, %v1189
        %v1200 = vshrl.u32 %v1199, 4
        %v1201 = vmul.u32 %v1200, 18
        %v1202 = vsub.s32 %v1178, %v1201
        %v1203 = vsub.s32 0, %v1202
        %v1204 = vsel %vm1176, %v1203, %v1202
        %vm1205 = vcmp.lt.s32.totalorder %v273, 0
        %v1206 = vsub.s32 0, %v273
        %v1207 = vsel %vm1205, %v1206, %v273
        %v1208 = vand.u32 %v1207, 65535
        %v1209 = vshrl.u32 %v1207, 16
        %v1211 = vmul.u32 %v1208, 14564
        %v1212 = vmul.u32 %v1208, 58254
        %v1213 = vmul.u32 %v1209, 14564
        %v1214 = vmul.u32 %v1209, 58254
        %v1215 = vshll.u32 %v1212, 16
        %v1216 = vshrl.u32 %v1212, 16
        %v1217 = vshll.u32 %v1213, 16
        %v1218 = vshrl.u32 %v1213, 16
        %vm1219 = vc.u32 %v1211, %v1215
        %v1220 = vsel %vm1219, 1, 0
        %v1221 = vadd.s32 %v1211, %v1215
        %v1222 = vadd.s32 %v1214, %v1220
        %vm1223 = vc.u32 %v1221, %v1217
        %v1224 = vsel %vm1223, 1, 0
        %v1225 = vadd.s32 %v1221, %v1217
        %v1226 = vadd.s32 %v1222, %v1224
        %v1227 = vadd.s32 %v1226, %v1216
        %v1228 = vadd.s32 %v1227, %v1218
        %v1229 = vshrl.u32 %v1228, 4
        %v1230 = vmul.u32 %v1229, 18
        %v1231 = vsub.s32 %v1207, %v1230
        %v1232 = vsub.s32 0, %v1231
        %v1233 = vsel %vm1205, %v1232, %v1231
        %vm1234 = vcmp.lt.s32.totalorder %v274, 0
        %v1235 = vsub.s32 0, %v274
        %v1236 = vsel %vm1234, %v1235, %v274
        %v1237 = vand.u32 %v1236, 65535
        %v1238 = vshrl.u32 %v1236, 16
        %v1240 = vmul.u32 %v1237, 14564
        %v1241 = vmul.u32 %v1237, 58254
        %v1242 = vmul.u32 %v1238, 14564
        %v1243 = vmul.u32 %v1238, 58254
        %v1244 = vshll.u32 %v1241, 16
        %v1245 = vshrl.u32 %v1241, 16
        %v1246 = vshll.u32 %v1242, 16
        %v1247 = vshrl.u32 %v1242, 16
        %vm1248 = vc.u32 %v1240, %v1244
        %v1249 = vsel %vm1248, 1, 0
        %v1250 = vadd.s32 %v1240, %v1244
        %v1251 = vadd.s32 %v1243, %v1249
        %vm1252 = vc.u32 %v1250, %v1246
        %v1253 = vsel %vm1252, 1, 0
        %v1254 = vadd.s32 %v1250, %v1246
        %v1255 = vadd.s32 %v1251, %v1253
        %v1256 = vadd.s32 %v1255, %v1245
        %v1257 = vadd.s32 %v1256, %v1247
        %v1258 = vshrl.u32 %v1257, 4
        %v1259 = vmul.u32 %v1258, 18
        %v1260 = vsub.s32 %v1236, %v1259
        %v1261 = vsub.s32 0, %v1260
        %v1262 = vsel %vm1234, %v1261, %v1260
        %vm1263 = vcmp.lt.s32.totalorder %v275, 0
        %v1264 = vsub.s32 0, %v275
        %v1265 = vsel %vm1263, %v1264, %v275
        %v1266 = vand.u32 %v1265, 65535
        %v1267 = vshrl.u32 %v1265, 16
        %v1269 = vmul.u32 %v1266, 14564
        %v1270 = vmul.u32 %v1266, 58254
        %v1271 = vmul.u32 %v1267, 14564
        %v1272 = vmul.u32 %v1267, 58254
        %v1273 = vshll.u32 %v1270, 16
        %v1274 = vshrl.u32 %v1270, 16
        %v1275 = vshll.u32 %v1271, 16
        %v1276 = vshrl.u32 %v1271, 16
        %vm1277 = vc.u32 %v1269, %v1273
        %v1278 = vsel %vm1277, 1, 0
        %v1279 = vadd.s32 %v1269, %v1273
        %v1280 = vadd.s32 %v1272, %v1278
        %vm1281 = vc.u32 %v1279, %v1275
        %v1282 = vsel %vm1281, 1, 0
        %v1283 = vadd.s32 %v1279, %v1275
        %v1284 = vadd.s32 %v1280, %v1282
        %v1285 = vadd.s32 %v1284, %v1274
        %v1286 = vadd.s32 %v1285, %v1276
        %v1287 = vshrl.u32 %v1286, 4
        %v1288 = vmul.u32 %v1287, 18
        %v1289 = vsub.s32 %v1265, %v1288
        %v1290 = vsub.s32 0, %v1289
        %v1291 = vsel %vm1263, %v1290, %v1289
        %vm1292 = vcmp.lt.s32.totalorder %v276, 0
        %v1293 = vsub.s32 0, %v276
        %v1294 = vsel %vm1292, %v1293, %v276
        %v1295 = vand.u32 %v1294, 65535
        %v1296 = vshrl.u32 %v1294, 16
        %v1298 = vmul.u32 %v1295, 14564
        %v1299 = vmul.u32 %v1295, 58254
        %v1300 = vmul.u32 %v1296, 14564
        %v1301 = vmul.u32 %v1296, 58254
        %v1302 = vshll.u32 %v1299, 16
        %v1303 = vshrl.u32 %v1299, 16
        %v1304 = vshll.u32 %v1300, 16
        %v1305 = vshrl.u32 %v1300, 16
        %vm1306 = vc.u32 %v1298, %v1302
        %v1307 = vsel %vm1306, 1, 0
        %v1308 = vadd.s32 %v1298, %v1302
        %v1309 = vadd.s32 %v1301, %v1307
        %vm1310 = vc.u32 %v1308, %v1304
        %v1311 = vsel %vm1310, 1, 0
        %v1312 = vadd.s32 %v1308, %v1304
        %v1313 = vadd.s32 %v1309, %v1311
        %v1314 = vadd.s32 %v1313, %v1303
        %v1315 = vadd.s32 %v1314, %v1305
        %v1316 = vshrl.u32 %v1315, 4
        %v1317 = vmul.u32 %v1316, 18
        %v1318 = vsub.s32 %v1294, %v1317
        %v1319 = vsub.s32 0, %v1318
        %v1320 = vsel %vm1292, %v1319, %v1318
        %vm1321 = vcmp.ne.s32.totalorder %v305, 0
        %vm1322 = vcmp.ne.s32.totalorder %v334, 0
        %vm1323 = vcmp.ne.s32.totalorder %v363, 0
        %vm1324 = vcmp.ne.s32.totalorder %v392, 0
        %vm1325 = vcmp.ne.s32.totalorder %v421, 0
        %vm1326 = vcmp.ne.s32.totalorder %v450, 0
        %vm1327 = vcmp.ne.s32.totalorder %v479, 0
        %vm1328 = vcmp.ne.s32.totalorder %v508, 0
        %vm1329 = vcmp.ne.s32.totalorder %v537, 0
        %vm1330 = vcmp.ne.s32.totalorder %v566, 0
        %vm1331 = vcmp.ne.s32.totalorder %v595, 0
        %vm1332 = vcmp.ne.s32.totalorder %v624, 0
        %vm1333 = vcmp.ne.s32.totalorder %v653, 0
        %vm1334 = vcmp.ne.s32.totalorder %v682, 0
        %vm1335 = vcmp.ne.s32.totalorder %v711, 0
        %vm1336 = vcmp.ne.s32.totalorder %v740, 0
        %vm1337 = vcmp.ne.s32.totalorder %v769, 0
        %vm1338 = vcmp.ne.s32.totalorder %v798, 0
        %vm1339 = vcmp.ne.s32.totalorder %v827, 0
        %vm1340 = vcmp.ne.s32.totalorder %v856, 0
        %vm1341 = vcmp.ne.s32.totalorder %v885, 0
        %vm1342 = vcmp.ne.s32.totalorder %v914, 0
        %vm1343 = vcmp.ne.s32.totalorder %v943, 0
        %vm1344 = vcmp.ne.s32.totalorder %v972, 0
        %vm1345 = vcmp.ne.s32.totalorder %v1001, 0
        %vm1346 = vcmp.ne.s32.totalorder %v1030, 0
        %vm1347 = vcmp.ne.s32.totalorder %v1059, 0
        %vm1348 = vcmp.ne.s32.totalorder %v1088, 0
        %vm1349 = vcmp.ne.s32.totalorder %v1117, 0
        %vm1350 = vcmp.ne.s32.totalorder %v1146, 0
        %vm1351 = vcmp.ne.s32.totalorder %v1175, 0
        %vm1352 = vcmp.ne.s32.totalorder %v1204, 0
        %vm1353 = vcmp.ne.s32.totalorder %v1233, 0
        %vm1354 = vcmp.ne.s32.totalorder %v1262, 0
        %vm1355 = vcmp.ne.s32.totalorder %v1291, 0
        %vm1356 = vcmp.ne.s32.totalorder %v1320, 0
        %vm1357 = vcmp.lt.s32.totalorder %v305, 0
        %vm1358 = vcmp.lt.s32.totalorder %v334, 0
        %vm1359 = vcmp.lt.s32.totalorder %v363, 0
        %vm1360 = vcmp.lt.s32.totalorder %v392, 0
        %vm1361 = vcmp.lt.s32.totalorder %v421, 0
        %vm1362 = vcmp.lt.s32.totalorder %v450, 0
        %vm1363 = vcmp.lt.s32.totalorder %v479, 0
        %vm1364 = vcmp.lt.s32.totalorder %v508, 0
        %vm1365 = vcmp.lt.s32.totalorder %v537, 0
        %vm1366 = vcmp.lt.s32.totalorder %v566, 0
        %vm1367 = vcmp.lt.s32.totalorder %v595, 0
        %vm1368 = vcmp.lt.s32.totalorder %v624, 0
        %vm1369 = vcmp.lt.s32.totalorder %v653, 0
        %vm1370 = vcmp.lt.s32.totalorder %v682, 0
        %vm1371 = vcmp.lt.s32.totalorder %v711, 0
        %vm1372 = vcmp.lt.s32.totalorder %v740, 0
        %vm1373 = vcmp.lt.s32.totalorder %v769, 0
        %vm1374 = vcmp.lt.s32.totalorder %v798, 0
        %vm1375 = vcmp.lt.s32.totalorder %v827, 0
        %vm1376 = vcmp.lt.s32.totalorder %v856, 0
        %vm1377 = vcmp.lt.s32.totalorder %v885, 0
        %vm1378 = vcmp.lt.s32.totalorder %v914, 0
        %vm1379 = vcmp.lt.s32.totalorder %v943, 0
        %vm1380 = vcmp.lt.s32.totalorder %v972, 0
        %vm1381 = vcmp.lt.s32.totalorder %v1001, 0
        %vm1382 = vcmp.lt.s32.totalorder %v1030, 0
        %vm1383 = vcmp.lt.s32.totalorder %v1059, 0
        %vm1384 = vcmp.lt.s32.totalorder %v1088, 0
        %vm1385 = vcmp.lt.s32.totalorder %v1117, 0
        %vm1386 = vcmp.lt.s32.totalorder %v1146, 0
        %vm1387 = vcmp.lt.s32.totalorder %v1175, 0
        %vm1388 = vcmp.lt.s32.totalorder %v1204, 0
        %vm1389 = vcmp.lt.s32.totalorder %v1233, 0
        %vm1390 = vcmp.lt.s32.totalorder %v1262, 0
        %vm1391 = vcmp.lt.s32.totalorder %v1291, 0
        %vm1392 = vcmp.lt.s32.totalorder %v1320, 0
        %vm1393 = vmand %vm1357, %vm1321
        %vm1394 = vmand %vm1358, %vm1322
        %vm1395 = vmand %vm1359, %vm1323
        %vm1396 = vmand %vm1360, %vm1324
        %vm1397 = vmand %vm1361, %vm1325
        %vm1398 = vmand %vm1362, %vm1326
        %vm1399 = vmand %vm1363, %vm1327
        %vm1400 = vmand %vm1364, %vm1328
        %vm1401 = vmand %vm1365, %vm1329
        %vm1402 = vmand %vm1366, %vm1330
        %vm1403 = vmand %vm1367, %vm1331
        %vm1404 = vmand %vm1368, %vm1332
        %vm1405 = vmand %vm1369, %vm1333
        %vm1406 = vmand %vm1370, %vm1334
        %vm1407 = vmand %vm1371, %vm1335
        %vm1408 = vmand %vm1372, %vm1336
        %vm1409 = vmand %vm1373, %vm1337
        %vm1410 = vmand %vm1374, %vm1338
        %vm1411 = vmand %vm1375, %vm1339
        %vm1412 = vmand %vm1376, %vm1340
        %vm1413 = vmand %vm1377, %vm1341
        %vm1414 = vmand %vm1378, %vm1342
        %vm1415 = vmand %vm1379, %vm1343
        %vm1416 = vmand %vm1380, %vm1344
        %vm1417 = vmand %vm1381, %vm1345
        %vm1418 = vmand %vm1382, %vm1346
        %vm1419 = vmand %vm1383, %vm1347
        %vm1420 = vmand %vm1384, %vm1348
        %vm1421 = vmand %vm1385, %vm1349
        %vm1422 = vmand %vm1386, %vm1350
        %vm1423 = vmand %vm1387, %vm1351
        %vm1424 = vmand %vm1388, %vm1352
        %vm1425 = vmand %vm1389, %vm1353
        %vm1426 = vmand %vm1390, %vm1354
        %vm1427 = vmand %vm1391, %vm1355
        %vm1428 = vmand %vm1392, %vm1356
        %v1429 = vadd.s32 %v305, 18
        %v1430 = vadd.s32 %v334, 18
        %v1431 = vadd.s32 %v363, 18
        %v1432 = vadd.s32 %v392, 18
        %v1433 = vadd.s32 %v421, 18
        %v1434 = vadd.s32 %v450, 18
        %v1435 = vadd.s32 %v479, 18
        %v1436 = vadd.s32 %v508, 18
        %v1437 = vadd.s32 %v537, 18
        %v1438 = vadd.s32 %v566, 18
        %v1439 = vadd.s32 %v595, 18
        %v1440 = vadd.s32 %v624, 18
        %v1441 = vadd.s32 %v653, 18
        %v1442 = vadd.s32 %v682, 18
        %v1443 = vadd.s32 %v711, 18
        %v1444 = vadd.s32 %v740, 18
        %v1445 = vadd.s32 %v769, 18
        %v1446 = vadd.s32 %v798, 18
        %v1447 = vadd.s32 %v827, 18
        %v1448 = vadd.s32 %v856, 18
        %v1449 = vadd.s32 %v885, 18
        %v1450 = vadd.s32 %v914, 18
        %v1451 = vadd.s32 %v943, 18
        %v1452 = vadd.s32 %v972, 18
        %v1453 = vadd.s32 %v1001, 18
        %v1454 = vadd.s32 %v1030, 18
        %v1455 = vadd.s32 %v1059, 18
        %v1456 = vadd.s32 %v1088, 18
        %v1457 = vadd.s32 %v1117, 18
        %v1458 = vadd.s32 %v1146, 18
        %v1459 = vadd.s32 %v1175, 18
        %v1460 = vadd.s32 %v1204, 18
        %v1461 = vadd.s32 %v1233, 18
        %v1462 = vadd.s32 %v1262, 18
        %v1463 = vadd.s32 %v1291, 18
        %v1464 = vadd.s32 %v1320, 18
        %v1465 = vsel %vm1393, %v1429, %v305
        %v1466 = vsel %vm1394, %v1430, %v334
        %v1467 = vsel %vm1395, %v1431, %v363
        %v1468 = vsel %vm1396, %v1432, %v392
        %v1469 = vsel %vm1397, %v1433, %v421
        %v1470 = vsel %vm1398, %v1434, %v450
        %v1471 = vsel %vm1399, %v1435, %v479
        %v1472 = vsel %vm1400, %v1436, %v508
        %v1473 = vsel %vm1401, %v1437, %v537
        %v1474 = vsel %vm1402, %v1438, %v566
        %v1475 = vsel %vm1403, %v1439, %v595
        %v1476 = vsel %vm1404, %v1440, %v624
        %v1477 = vsel %vm1405, %v1441, %v653
        %v1478 = vsel %vm1406, %v1442, %v682
        %v1479 = vsel %vm1407, %v1443, %v711
        %v1480 = vsel %vm1408, %v1444, %v740
        %v1481 = vsel %vm1409, %v1445, %v769
        %v1482 = vsel %vm1410, %v1446, %v798
        %v1483 = vsel %vm1411, %v1447, %v827
        %v1484 = vsel %vm1412, %v1448, %v856
        %v1485 = vsel %vm1413, %v1449, %v885
        %v1486 = vsel %vm1414, %v1450, %v914
        %v1487 = vsel %vm1415, %v1451, %v943
        %v1488 = vsel %vm1416, %v1452, %v972
        %v1489 = vsel %vm1417, %v1453, %v1001
        %v1490 = vsel %vm1418, %v1454, %v1030
        %v1491 = vsel %vm1419, %v1455, %v1059
        %v1492 = vsel %vm1420, %v1456, %v1088
        %v1493 = vsel %vm1421, %v1457, %v1117
        %v1494 = vsel %vm1422, %v1458, %v1146
        %v1495 = vsel %vm1423, %v1459, %v1175
        %v1496 = vsel %vm1424, %v1460, %v1204
        %v1497 = vsel %vm1425, %v1461, %v1233
        %v1498 = vsel %vm1426, %v1462, %v1262
        %v1499 = vsel %vm1427, %v1463, %v1291
        %v1500 = vsel %vm1428, %v1464, %v1320
        %vm1501 = vcmp.lt.s32.totalorder %v1465, 16
        %vm1502 = vcmp.lt.s32.totalorder %v1466, 16
        %vm1503 = vcmp.lt.s32.totalorder %v1467, 16
        %vm1504 = vcmp.lt.s32.totalorder %v1468, 16
        %vm1505 = vcmp.lt.s32.totalorder %v1469, 16
        %vm1506 = vcmp.lt.s32.totalorder %v1470, 16
        %vm1507 = vcmp.lt.s32.totalorder %v1471, 16
        %vm1508 = vcmp.lt.s32.totalorder %v1472, 16
        %vm1509 = vcmp.lt.s32.totalorder %v1473, 16
        %vm1510 = vcmp.lt.s32.totalorder %v1474, 16
        %vm1511 = vcmp.lt.s32.totalorder %v1475, 16
        %vm1512 = vcmp.lt.s32.totalorder %v1476, 16
        %vm1513 = vcmp.lt.s32.totalorder %v1477, 16
        %vm1514 = vcmp.lt.s32.totalorder %v1478, 16
        %vm1515 = vcmp.lt.s32.totalorder %v1479, 16
        %vm1516 = vcmp.lt.s32.totalorder %v1480, 16
        %vm1517 = vcmp.lt.s32.totalorder %v1481, 16
        %vm1518 = vcmp.lt.s32.totalorder %v1482, 16
        %vm1519 = vcmp.lt.s32.totalorder %v1483, 16
        %vm1520 = vcmp.lt.s32.totalorder %v1484, 16
        %vm1521 = vcmp.lt.s32.totalorder %v1485, 16
        %vm1522 = vcmp.lt.s32.totalorder %v1486, 16
        %vm1523 = vcmp.lt.s32.totalorder %v1487, 16
        %vm1524 = vcmp.lt.s32.totalorder %v1488, 16
        %vm1525 = vcmp.lt.s32.totalorder %v1489, 16
        %vm1526 = vcmp.lt.s32.totalorder %v1490, 16
        %vm1527 = vcmp.lt.s32.totalorder %v1491, 16
        %vm1528 = vcmp.lt.s32.totalorder %v1492, 16
        %vm1529 = vcmp.lt.s32.totalorder %v1493, 16
        %vm1530 = vcmp.lt.s32.totalorder %v1494, 16
        %vm1531 = vcmp.lt.s32.totalorder %v1495, 16
        %vm1532 = vcmp.lt.s32.totalorder %v1496, 16
        %vm1533 = vcmp.lt.s32.totalorder %v1497, 16
        %vm1534 = vcmp.lt.s32.totalorder %v1498, 16
        %vm1535 = vcmp.lt.s32.totalorder %v1499, 16
        %vm1536 = vcmp.lt.s32.totalorder %v1500, 16
        %v1537 = vld [vmem:[%s239] sm:$0xff]
        %v1538 = vld [vmem:[%s239 + $0x8] sm:$0xff]
        %v1539 = vld [vmem:[%s239 + $0x10] sm:$0xff]
        %v1540 = vld [vmem:[%s239 + $0x18] sm:$0xff]
        %v1541 = vld [vmem:[%s239 + $0x20] sm:$0xff]
        %v1542 = vld [vmem:[%s239 + $0x28] sm:$0xff]
        %v1543 = vld [vmem:[%s239 + $0x30] sm:$0xff]
        %v1544 = vld [vmem:[%s239 + $0x38] sm:$0xff]
        %v1545 = vld [vmem:[%s239 + $0x40] sm:$0xff]
        %v1546 = vld [vmem:[%s239 + $0x48] sm:$0xff]
        %v1547 = vld [vmem:[%s239 + $0x50] sm:$0xff]
        %v1548 = vld [vmem:[%s239 + $0x58] sm:$0xff]
        %v1549 = vld [vmem:[%s239 + $0x60] sm:$0xff]
        %v1550 = vld [vmem:[%s239 + $0x68] sm:$0xff]
        %v1551 = vld [vmem:[%s239 + $0x70] sm:$0xff]
        %v1552 = vld [vmem:[%s239 + $0x78] sm:$0xff]
        %v1553 = vld [vmem:[%s239 + $0x80] sm:$0xff]
        %v1554 = vld [vmem:[%s239 + $0x88] sm:$0xff]
        %v1555 = vld [vmem:[%s239 + $0x90] sm:$0xff]
        %v1556 = vld [vmem:[%s239 + $0x98] sm:$0xff]
        %v1557 = vld [vmem:[%s239 + $0xa0] sm:$0xff]
        %v1558 = vld [vmem:[%s239 + $0xa8] sm:$0xff]
        %v1559 = vld [vmem:[%s239 + $0xb0] sm:$0xff]
        %v1560 = vld [vmem:[%s239 + $0xb8] sm:$0xff]
        %v1561 = vld [vmem:[%s239 + $0xc0] sm:$0xff]
        %v1562 = vld [vmem:[%s239 + $0xc8] sm:$0xff]
        %v1563 = vld [vmem:[%s239 + $0xd0] sm:$0xff]
        %v1564 = vld [vmem:[%s239 + $0xd8] sm:$0xff]
        %v1565 = vld [vmem:[%s239 + $0xe0] sm:$0xff]
        %v1566 = vld [vmem:[%s239 + $0xe8] sm:$0xff]
        %v1567 = vld [vmem:[%s239 + $0xf0] sm:$0xff]
        %v1568 = vld [vmem:[%s239 + $0xf8] sm:$0xff]
        %v1569 = vld [vmem:[%s239 + $0x100] sm:$0xff]
        %v1570 = vld [vmem:[%s239 + $0x108] sm:$0xff]
        %v1571 = vld [vmem:[%s239 + $0x110] sm:$0xff]
        %v1572 = vld [vmem:[%s239 + $0x118] sm:$0xff]
        %v1573 = vld [vmem:[%s1] sm:$0xff]
        %v1574 = vld [vmem:[%s1 + $0x8] sm:$0xff]
        %v1575 = vld [vmem:[%s1 + $0x10] sm:$0xff]
        %v1576 = vld [vmem:[%s1 + $0x18] sm:$0xff]
        %v1577 = vld [vmem:[%s1 + $0x20] sm:$0xff]
        %v1578 = vld [vmem:[%s1 + $0x28] sm:$0xff]
        %v1579 = vld [vmem:[%s1 + $0x30] sm:$0xff]
        %v1580 = vld [vmem:[%s1 + $0x38] sm:$0xff]
        %v1581 = vld [vmem:[%s1 + $0x40] sm:$0xff]
        %v1582 = vld [vmem:[%s1 + $0x48] sm:$0xff]
        %v1583 = vld [vmem:[%s1 + $0x50] sm:$0xff]
        %v1584 = vld [vmem:[%s1 + $0x58] sm:$0xff]
        %v1585 = vld [vmem:[%s1 + $0x60] sm:$0xff]
        %v1586 = vld [vmem:[%s1 + $0x68] sm:$0xff]
        %v1587 = vld [vmem:[%s1 + $0x70] sm:$0xff]
        %v1588 = vld [vmem:[%s1 + $0x78] sm:$0xff]
        %v1589 = vld [vmem:[%s239 + $0x1] sm:$0xff]
        %v1590 = vld [vmem:[%s239 + $0x9] sm:$0xff]
        %v1591 = vld [vmem:[%s239 + $0x11] sm:$0xff]
        %v1592 = vld [vmem:[%s239 + $0x19] sm:$0xff]
        %v1593 = vld [vmem:[%s239 + $0x21] sm:$0xff]
        %v1594 = vld [vmem:[%s239 + $0x29] sm:$0xff]
        %v1595 = vld [vmem:[%s239 + $0x31] sm:$0xff]
        %v1596 = vld [vmem:[%s239 + $0x39] sm:$0xff]
        %v1597 = vld [vmem:[%s239 + $0x41] sm:$0xff]
        %v1598 = vld [vmem:[%s239 + $0x49] sm:$0xff]
        %v1599 = vld [vmem:[%s239 + $0x51] sm:$0xff]
        %v1600 = vld [vmem:[%s239 + $0x59] sm:$0xff]
        %v1601 = vld [vmem:[%s239 + $0x61] sm:$0xff]
        %v1602 = vld [vmem:[%s239 + $0x69] sm:$0xff]
        %v1603 = vld [vmem:[%s239 + $0x71] sm:$0xff]
        %v1604 = vld [vmem:[%s239 + $0x79] sm:$0xff]
        %v1605 = vld [vmem:[%s239 + $0x81] sm:$0xff]
        %v1606 = vld [vmem:[%s239 + $0x89] sm:$0xff]
        %v1607 = vld [vmem:[%s239 + $0x91] sm:$0xff]
        %v1608 = vld [vmem:[%s239 + $0x99] sm:$0xff]
        %v1609 = vld [vmem:[%s239 + $0xa1] sm:$0xff]
        %v1610 = vld [vmem:[%s239 + $0xa9] sm:$0xff]
        %v1611 = vld [vmem:[%s239 + $0xb1] sm:$0xff]
        %v1612 = vld [vmem:[%s239 + $0xb9] sm:$0xff]
        %v1613 = vld [vmem:[%s239 + $0xc1] sm:$0xff]
        %v1614 = vld [vmem:[%s239 + $0xc9] sm:$0xff]
        %v1615 = vld [vmem:[%s239 + $0xd1] sm:$0xff]
        %v1616 = vld [vmem:[%s239 + $0xd9] sm:$0xff]
        %v1617 = vld [vmem:[%s239 + $0xe1] sm:$0xff]
        %v1618 = vld [vmem:[%s239 + $0xe9] sm:$0xff]
        %v1619 = vld [vmem:[%s239 + $0xf1] sm:$0xff]
        %v1620 = vld [vmem:[%s239 + $0xf9] sm:$0xff]
        %v1621 = vld [vmem:[%s239 + $0x101] sm:$0xff]
        %v1622 = vld [vmem:[%s239 + $0x109] sm:$0xff]
        %v1623 = vld [vmem:[%s239 + $0x111] sm:$0xff]
        %v1624 = vld [vmem:[%s239 + $0x119] sm:$0xff]
        %s1625 = scalar_lea.vmem %s1, 128
        %v1626 = vld [vmem:[%s1625] sm:$0xff]
        %v1627 = vld [vmem:[%s1625 + $0x8] sm:$0xff]
        %v1628 = vld [vmem:[%s1625 + $0x10] sm:$0xff]
        %v1629 = vld [vmem:[%s1625 + $0x18] sm:$0xff]
        %v1630 = vld [vmem:[%s1625 + $0x20] sm:$0xff]
        %v1631 = vld [vmem:[%s1625 + $0x28] sm:$0xff]
        %v1632 = vld [vmem:[%s1625 + $0x30] sm:$0xff]
        %v1633 = vld [vmem:[%s1625 + $0x38] sm:$0xff]
        %v1634 = vld [vmem:[%s1625 + $0x40] sm:$0xff]
        %v1635 = vld [vmem:[%s1625 + $0x48] sm:$0xff]
        %v1636 = vld [vmem:[%s1625 + $0x50] sm:$0xff]
        %v1637 = vld [vmem:[%s1625 + $0x58] sm:$0xff]
        %v1638 = vld [vmem:[%s1625 + $0x60] sm:$0xff]
        %v1639 = vld [vmem:[%s1625 + $0x68] sm:$0xff]
        %v1640 = vld [vmem:[%s1625 + $0x70] sm:$0xff]
        %v1641 = vld [vmem:[%s1625 + $0x78] sm:$0xff]
        %1642 = vmatpush.msra.mxu0 %v1641
        %1643 = vmatpush.msra.mxu0 %v1640
        %1644 = vmatpush.msra.mxu0 %v1639
        %1645 = vmatpush.msra.mxu0 %v1638
        %1646 = vmatpush.msra.mxu0 %v1637
        %1647 = vmatpush.msra.mxu0 %v1636
        %1648 = vmatpush.msra.mxu0 %v1635
        %1649 = vmatpush.msra.mxu0 %v1634
        %1650 = vmatpush.msra.mxu0 %v1633
        %1651 = vmatpush.msra.mxu0 %v1632
        %1652 = vmatpush.msra.mxu0 %v1631
        %1653 = vmatpush.msra.mxu0 %v1630
        %1654 = vmatpush.msra.mxu0 %v1629
        %1655 = vmatpush.msra.mxu0 %v1628
        %1656 = vmatpush.msra.mxu0 %v1627
        %1657 = vmatpush.msra.mxu0 %v1626
        %1658 = vmatmul.f32.gmra.mxu0 %v1589
        %v1659 = vpop.f32.mrf.mxu0
        %v1660 = vadd.f32 0.0, %v1659
        %1661 = vmatmul.f32.gmra.mxu0 %v1590
        %v1662 = vpop.f32.mrf.mxu0
        %v1663 = vadd.f32 0.0, %v1662
        %1664 = vmatmul.f32.gmra.mxu0 %v1591
        %v1665 = vpop.f32.mrf.mxu0
        %v1666 = vadd.f32 0.0, %v1665
        %1667 = vmatmul.f32.gmra.mxu0 %v1592
        %v1668 = vpop.f32.mrf.mxu0
        %v1669 = vadd.f32 0.0, %v1668
        %1670 = vmatmul.f32.gmra.mxu0 %v1593
        %v1671 = vpop.f32.mrf.mxu0
        %v1672 = vadd.f32 0.0, %v1671
        %1673 = vmatmul.f32.gmra.mxu0 %v1594
        %v1674 = vpop.f32.mrf.mxu0
        %v1675 = vadd.f32 0.0, %v1674
        %1676 = vmatmul.f32.gmra.mxu0 %v1595
        %v1677 = vpop.f32.mrf.mxu0
        %v1678 = vadd.f32 0.0, %v1677
        %1679 = vmatmul.f32.gmra.mxu0 %v1596
        %v1680 = vpop.f32.mrf.mxu0
        %v1681 = vadd.f32 0.0, %v1680
        %1682 = vmatmul.f32.gmra.mxu0 %v1597
        %v1683 = vpop.f32.mrf.mxu0
        %v1684 = vadd.f32 0.0, %v1683
        %1685 = vmatmul.f32.gmra.mxu0 %v1598
        %v1686 = vpop.f32.mrf.mxu0
        %v1687 = vadd.f32 0.0, %v1686
        %1688 = vmatmul.f32.gmra.mxu0 %v1599
        %v1689 = vpop.f32.mrf.mxu0
        %v1690 = vadd.f32 0.0, %v1689
        %1691 = vmatmul.f32.gmra.mxu0 %v1600
        %v1692 = vpop.f32.mrf.mxu0
        %v1693 = vadd.f32 0.0, %v1692
        %1694 = vmatmul.f32.gmra.mxu0 %v1601
        %v1695 = vpop.f32.mrf.mxu0
        %v1696 = vadd.f32 0.0, %v1695
        %1697 = vmatmul.f32.gmra.mxu0 %v1602
        %v1698 = vpop.f32.mrf.mxu0
        %v1699 = vadd.f32 0.0, %v1698
        %1700 = vmatmul.f32.gmra.mxu0 %v1603
        %v1701 = vpop.f32.mrf.mxu0
        %v1702 = vadd.f32 0.0, %v1701
        %1703 = vmatmul.f32.gmra.mxu0 %v1604
        %v1704 = vpop.f32.mrf.mxu0
        %v1705 = vadd.f32 0.0, %v1704
        %1706 = vmatmul.f32.gmra.mxu0 %v1605
        %v1707 = vpop.f32.mrf.mxu0
        %v1708 = vadd.f32 0.0, %v1707
        %1709 = vmatmul.f32.gmra.mxu0 %v1606
        %v1710 = vpop.f32.mrf.mxu0
        %v1711 = vadd.f32 0.0, %v1710
        %1712 = vmatmul.f32.gmra.mxu0 %v1607
        %v1713 = vpop.f32.mrf.mxu0
        %v1714 = vadd.f32 0.0, %v1713
        %1715 = vmatmul.f32.gmra.mxu0 %v1608
        %v1716 = vpop.f32.mrf.mxu0
        %v1717 = vadd.f32 0.0, %v1716
        %1718 = vmatmul.f32.gmra.mxu0 %v1609
        %v1719 = vpop.f32.mrf.mxu0
        %v1720 = vadd.f32 0.0, %v1719
        %1721 = vmatmul.f32.gmra.mxu0 %v1610
        %v1722 = vpop.f32.mrf.mxu0
        %v1723 = vadd.f32 0.0, %v1722
        %1724 = vmatmul.f32.gmra.mxu0 %v1611
        %v1725 = vpop.f32.mrf.mxu0
        %v1726 = vadd.f32 0.0, %v1725
        %1727 = vmatmul.f32.gmra.mxu0 %v1612
        %v1728 = vpop.f32.mrf.mxu0
        %v1729 = vadd.f32 0.0, %v1728
        %1730 = vmatmul.f32.gmra.mxu0 %v1613
        %v1731 = vpop.f32.mrf.mxu0
        %v1732 = vadd.f32 0.0, %v1731
        %1733 = vmatmul.f32.gmra.mxu0 %v1614
        %v1734 = vpop.f32.mrf.mxu0
        %v1735 = vadd.f32 0.0, %v1734
        %1736 = vmatmul.f32.gmra.mxu0 %v1615
        %v1737 = vpop.f32.mrf.mxu0
        %v1738 = vadd.f32 0.0, %v1737
        %1739 = vmatmul.f32.gmra.mxu0 %v1616
        %v1740 = vpop.f32.mrf.mxu0
        %v1741 = vadd.f32 0.0, %v1740
        %1742 = vmatmul.f32.gmra.mxu0 %v1617
        %v1743 = vpop.f32.mrf.mxu0
        %v1744 = vadd.f32 0.0, %v1743
        %1745 = vmatmul.f32.gmra.mxu0 %v1618
        %v1746 = vpop.f32.mrf.mxu0
        %v1747 = vadd.f32 0.0, %v1746
        %1748 = vmatmul.f32.gmra.mxu0 %v1619
        %v1749 = vpop.f32.mrf.mxu0
        %v1750 = vadd.f32 0.0, %v1749
        %1751 = vmatmul.f32.gmra.mxu0 %v1620
        %v1752 = vpop.f32.mrf.mxu0
        %v1753 = vadd.f32 0.0, %v1752
        %1754 = vmatmul.f32.gmra.mxu0 %v1621
        %v1755 = vpop.f32.mrf.mxu0
        %v1756 = vadd.f32 0.0, %v1755
        %1757 = vmatmul.f32.gmra.mxu0 %v1622
        %v1758 = vpop.f32.mrf.mxu0
        %v1759 = vadd.f32 0.0, %v1758
        %1760 = vmatmul.f32.gmra.mxu0 %v1623
        %v1761 = vpop.f32.mrf.mxu0
        %v1762 = vadd.f32 0.0, %v1761
        %1763 = vmatmul.f32.gmra.mxu0 %v1624
        %v1764 = vpop.f32.mrf.mxu0
        %v1765 = vadd.f32 0.0, %v1764
        %1766 = vdwg.mxu0
        %1767 = vmatpush.msra.mxu0 %v1588
        %1768 = vmatpush.msra.mxu0 %v1587
        %1769 = vmatpush.msra.mxu0 %v1586
        %1770 = vmatpush.msra.mxu0 %v1585
        %1771 = vmatpush.msra.mxu0 %v1584
        %1772 = vmatpush.msra.mxu0 %v1583
        %1773 = vmatpush.msra.mxu0 %v1582
        %1774 = vmatpush.msra.mxu0 %v1581
        %1775 = vmatpush.msra.mxu0 %v1580
        %1776 = vmatpush.msra.mxu0 %v1579
        %1777 = vmatpush.msra.mxu0 %v1578
        %1778 = vmatpush.msra.mxu0 %v1577
        %1779 = vmatpush.msra.mxu0 %v1576
        %1780 = vmatpush.msra.mxu0 %v1575
        %1781 = vmatpush.msra.mxu0 %v1574
        %1782 = vmatpush.msra.mxu0 %v1573
        %1783 = vmatmul.f32.gmra.mxu0 %v1537
        %v1784 = vpop.f32.mrf.mxu0
        %v1785 = vadd.f32 %v1660, %v1784
        %1786 = vmatmul.f32.gmra.mxu0 %v1538
        %v1787 = vpop.f32.mrf.mxu0
        %v1788 = vadd.f32 %v1663, %v1787
        %1789 = vmatmul.f32.gmra.mxu0 %v1539
        %v1790 = vpop.f32.mrf.mxu0
        %v1791 = vadd.f32 %v1666, %v1790
        %1792 = vmatmul.f32.gmra.mxu0 %v1540
        %v1793 = vpop.f32.mrf.mxu0
        %v1794 = vadd.f32 %v1669, %v1793
        %1795 = vmatmul.f32.gmra.mxu0 %v1541
        %v1796 = vpop.f32.mrf.mxu0
        %v1797 = vadd.f32 %v1672, %v1796
        %1798 = vmatmul.f32.gmra.mxu0 %v1542
        %v1799 = vpop.f32.mrf.mxu0
        %v1800 = vadd.f32 %v1675, %v1799
        %1801 = vmatmul.f32.gmra.mxu0 %v1543
        %v1802 = vpop.f32.mrf.mxu0
        %v1803 = vadd.f32 %v1678, %v1802
        %1804 = vmatmul.f32.gmra.mxu0 %v1544
        %v1805 = vpop.f32.mrf.mxu0
        %v1806 = vadd.f32 %v1681, %v1805
        %1807 = vmatmul.f32.gmra.mxu0 %v1545
        %v1808 = vpop.f32.mrf.mxu0
        %v1809 = vadd.f32 %v1684, %v1808
        %1810 = vmatmul.f32.gmra.mxu0 %v1546
        %v1811 = vpop.f32.mrf.mxu0
        %v1812 = vadd.f32 %v1687, %v1811
        %1813 = vmatmul.f32.gmra.mxu0 %v1547
        %v1814 = vpop.f32.mrf.mxu0
        %v1815 = vadd.f32 %v1690, %v1814
        %1816 = vmatmul.f32.gmra.mxu0 %v1548
        %v1817 = vpop.f32.mrf.mxu0
        %v1818 = vadd.f32 %v1693, %v1817
        %1819 = vmatmul.f32.gmra.mxu0 %v1549
        %v1820 = vpop.f32.mrf.mxu0
        %v1821 = vadd.f32 %v1696, %v1820
        %1822 = vmatmul.f32.gmra.mxu0 %v1550
        %v1823 = vpop.f32.mrf.mxu0
        %v1824 = vadd.f32 %v1699, %v1823
        %1825 = vmatmul.f32.gmra.mxu0 %v1551
        %v1826 = vpop.f32.mrf.mxu0
        %v1827 = vadd.f32 %v1702, %v1826
        %1828 = vmatmul.f32.gmra.mxu0 %v1552
        %v1829 = vpop.f32.mrf.mxu0
        %v1830 = vadd.f32 %v1705, %v1829
        %1831 = vmatmul.f32.gmra.mxu0 %v1553
        %v1832 = vpop.f32.mrf.mxu0
        %v1833 = vadd.f32 %v1708, %v1832
        %1834 = vmatmul.f32.gmra.mxu0 %v1554
        %v1835 = vpop.f32.mrf.mxu0
        %v1836 = vadd.f32 %v1711, %v1835
        %1837 = vmatmul.f32.gmra.mxu0 %v1555
        %v1838 = vpop.f32.mrf.mxu0
        %v1839 = vadd.f32 %v1714, %v1838
        %1840 = vmatmul.f32.gmra.mxu0 %v1556
        %v1841 = vpop.f32.mrf.mxu0
        %v1842 = vadd.f32 %v1717, %v1841
        %1843 = vmatmul.f32.gmra.mxu0 %v1557
        %v1844 = vpop.f32.mrf.mxu0
        %v1845 = vadd.f32 %v1720, %v1844
        %1846 = vmatmul.f32.gmra.mxu0 %v1558
        %v1847 = vpop.f32.mrf.mxu0
        %v1848 = vadd.f32 %v1723, %v1847
        %1849 = vmatmul.f32.gmra.mxu0 %v1559
        %v1850 = vpop.f32.mrf.mxu0
        %v1851 = vadd.f32 %v1726, %v1850
        %1852 = vmatmul.f32.gmra.mxu0 %v1560
        %v1853 = vpop.f32.mrf.mxu0
        %v1854 = vadd.f32 %v1729, %v1853
        %1855 = vmatmul.f32.gmra.mxu0 %v1561
        %v1856 = vpop.f32.mrf.mxu0
        %v1857 = vadd.f32 %v1732, %v1856
        %1858 = vmatmul.f32.gmra.mxu0 %v1562
        %v1859 = vpop.f32.mrf.mxu0
        %v1860 = vadd.f32 %v1735, %v1859
        %1861 = vmatmul.f32.gmra.mxu0 %v1563
        %v1862 = vpop.f32.mrf.mxu0
        %v1863 = vadd.f32 %v1738, %v1862
        %1864 = vmatmul.f32.gmra.mxu0 %v1564
        %v1865 = vpop.f32.mrf.mxu0
        %v1866 = vadd.f32 %v1741, %v1865
        %1867 = vmatmul.f32.gmra.mxu0 %v1565
        %v1868 = vpop.f32.mrf.mxu0
        %v1869 = vadd.f32 %v1744, %v1868
        %1870 = vmatmul.f32.gmra.mxu0 %v1566
        %v1871 = vpop.f32.mrf.mxu0
        %v1872 = vadd.f32 %v1747, %v1871
        %1873 = vmatmul.f32.gmra.mxu0 %v1567
        %v1874 = vpop.f32.mrf.mxu0
        %v1875 = vadd.f32 %v1750, %v1874
        %1876 = vmatmul.f32.gmra.mxu0 %v1568
        %v1877 = vpop.f32.mrf.mxu0
        %v1878 = vadd.f32 %v1753, %v1877
        %1879 = vmatmul.f32.gmra.mxu0 %v1569
        %v1880 = vpop.f32.mrf.mxu0
        %v1881 = vadd.f32 %v1756, %v1880
        %1882 = vmatmul.f32.gmra.mxu0 %v1570
        %v1883 = vpop.f32.mrf.mxu0
        %v1884 = vadd.f32 %v1759, %v1883
        %1885 = vmatmul.f32.gmra.mxu0 %v1571
        %v1886 = vpop.f32.mrf.mxu0
        %v1887 = vadd.f32 %v1762, %v1886
        %1888 = vmatmul.f32.gmra.mxu0 %v1572
        %v1889 = vpop.f32.mrf.mxu0
        %v1890 = vadd.f32 %v1765, %v1889
        %1891 = vdwg.mxu0
        %v1892 = vld [vmem:[%s239 + $0x2] sm:$0xff]
        %v1893 = vld [vmem:[%s239 + $0xa] sm:$0xff]
        %v1894 = vld [vmem:[%s239 + $0x12] sm:$0xff]
        %v1895 = vld [vmem:[%s239 + $0x1a] sm:$0xff]
        %v1896 = vld [vmem:[%s239 + $0x22] sm:$0xff]
        %v1897 = vld [vmem:[%s239 + $0x2a] sm:$0xff]
        %v1898 = vld [vmem:[%s239 + $0x32] sm:$0xff]
        %v1899 = vld [vmem:[%s239 + $0x3a] sm:$0xff]
        %v1900 = vld [vmem:[%s239 + $0x42] sm:$0xff]
        %v1901 = vld [vmem:[%s239 + $0x4a] sm:$0xff]
        %v1902 = vld [vmem:[%s239 + $0x52] sm:$0xff]
        %v1903 = vld [vmem:[%s239 + $0x5a] sm:$0xff]
        %v1904 = vld [vmem:[%s239 + $0x62] sm:$0xff]
        %v1905 = vld [vmem:[%s239 + $0x6a] sm:$0xff]
        %v1906 = vld [vmem:[%s239 + $0x72] sm:$0xff]
        %v1907 = vld [vmem:[%s239 + $0x7a] sm:$0xff]
        %v1908 = vld [vmem:[%s239 + $0x82] sm:$0xff]
        %v1909 = vld [vmem:[%s239 + $0x8a] sm:$0xff]
        %v1910 = vld [vmem:[%s239 + $0x92] sm:$0xff]
        %v1911 = vld [vmem:[%s239 + $0x9a] sm:$0xff]
        %v1912 = vld [vmem:[%s239 + $0xa2] sm:$0xff]
        %v1913 = vld [vmem:[%s239 + $0xaa] sm:$0xff]
        %v1914 = vld [vmem:[%s239 + $0xb2] sm:$0xff]
        %v1915 = vld [vmem:[%s239 + $0xba] sm:$0xff]
        %v1916 = vld [vmem:[%s239 + $0xc2] sm:$0xff]
        %v1917 = vld [vmem:[%s239 + $0xca] sm:$0xff]
        %v1918 = vld [vmem:[%s239 + $0xd2] sm:$0xff]
        %v1919 = vld [vmem:[%s239 + $0xda] sm:$0xff]
        %v1920 = vld [vmem:[%s239 + $0xe2] sm:$0xff]
        %v1921 = vld [vmem:[%s239 + $0xea] sm:$0xff]
        %v1922 = vld [vmem:[%s239 + $0xf2] sm:$0xff]
        %v1923 = vld [vmem:[%s239 + $0xfa] sm:$0xff]
        %v1924 = vld [vmem:[%s239 + $0x102] sm:$0xff]
        %v1925 = vld [vmem:[%s239 + $0x10a] sm:$0xff]
        %v1926 = vld [vmem:[%s239 + $0x112] sm:$0xff]
        %v1927 = vld [vmem:[%s239 + $0x11a] sm:$0xff]
        %s1928 = scalar_lea.vmem %s1, 256
        %v1929 = vld [vmem:[%s1928] sm:$0xff]
        %v1930 = vld [vmem:[%s1928 + $0x8] sm:$0xff]
        %v1931 = vld [vmem:[%s1928 + $0x10] sm:$0xff]
        %v1932 = vld [vmem:[%s1928 + $0x18] sm:$0xff]
        %v1933 = vld [vmem:[%s1928 + $0x20] sm:$0xff]
        %v1934 = vld [vmem:[%s1928 + $0x28] sm:$0xff]
        %v1935 = vld [vmem:[%s1928 + $0x30] sm:$0xff]
        %v1936 = vld [vmem:[%s1928 + $0x38] sm:$0xff]
        %v1937 = vld [vmem:[%s1928 + $0x40] sm:$0xff]
        %v1938 = vld [vmem:[%s1928 + $0x48] sm:$0xff]
        %v1939 = vld [vmem:[%s1928 + $0x50] sm:$0xff]
        %v1940 = vld [vmem:[%s1928 + $0x58] sm:$0xff]
        %v1941 = vld [vmem:[%s1928 + $0x60] sm:$0xff]
        %v1942 = vld [vmem:[%s1928 + $0x68] sm:$0xff]
        %v1943 = vld [vmem:[%s1928 + $0x70] sm:$0xff]
        %v1944 = vld [vmem:[%s1928 + $0x78] sm:$0xff]
        %1945 = vmatpush.msra.mxu0 %v1944
        %1946 = vmatpush.msra.mxu0 %v1943
        %1947 = vmatpush.msra.mxu0 %v1942
        %1948 = vmatpush.msra.mxu0 %v1941
        %1949 = vmatpush.msra.mxu0 %v1940
        %1950 = vmatpush.msra.mxu0 %v1939
        %1951 = vmatpush.msra.mxu0 %v1938
        %1952 = vmatpush.msra.mxu0 %v1937
        %1953 = vmatpush.msra.mxu0 %v1936
        %1954 = vmatpush.msra.mxu0 %v1935
        %1955 = vmatpush.msra.mxu0 %v1934
        %1956 = vmatpush.msra.mxu0 %v1933
        %1957 = vmatpush.msra.mxu0 %v1932
        %1958 = vmatpush.msra.mxu0 %v1931
        %1959 = vmatpush.msra.mxu0 %v1930
        %1960 = vmatpush.msra.mxu0 %v1929
        %1961 = vmatmul.f32.gmra.mxu0 %v1892
        %v1962 = vpop.f32.mrf.mxu0
        %v1963 = vadd.f32 0.0, %v1962
        %1964 = vmatmul.f32.gmra.mxu0 %v1893
        %v1965 = vpop.f32.mrf.mxu0
        %v1966 = vadd.f32 0.0, %v1965
        %1967 = vmatmul.f32.gmra.mxu0 %v1894
        %v1968 = vpop.f32.mrf.mxu0
        %v1969 = vadd.f32 0.0, %v1968
        %1970 = vmatmul.f32.gmra.mxu0 %v1895
        %v1971 = vpop.f32.mrf.mxu0
        %v1972 = vadd.f32 0.0, %v1971
        %1973 = vmatmul.f32.gmra.mxu0 %v1896
        %v1974 = vpop.f32.mrf.mxu0
        %v1975 = vadd.f32 0.0, %v1974
        %1976 = vmatmul.f32.gmra.mxu0 %v1897
        %v1977 = vpop.f32.mrf.mxu0
        %v1978 = vadd.f32 0.0, %v1977
        %1979 = vmatmul.f32.gmra.mxu0 %v1898
        %v1980 = vpop.f32.mrf.mxu0
        %v1981 = vadd.f32 0.0, %v1980
        %1982 = vmatmul.f32.gmra.mxu0 %v1899
        %v1983 = vpop.f32.mrf.mxu0
        %v1984 = vadd.f32 0.0, %v1983
        %1985 = vmatmul.f32.gmra.mxu0 %v1900
        %v1986 = vpop.f32.mrf.mxu0
        %v1987 = vadd.f32 0.0, %v1986
        %1988 = vmatmul.f32.gmra.mxu0 %v1901
        %v1989 = vpop.f32.mrf.mxu0
        %v1990 = vadd.f32 0.0, %v1989
        %1991 = vmatmul.f32.gmra.mxu0 %v1902
        %v1992 = vpop.f32.mrf.mxu0
        %v1993 = vadd.f32 0.0, %v1992
        %1994 = vmatmul.f32.gmra.mxu0 %v1903
        %v1995 = vpop.f32.mrf.mxu0
        %v1996 = vadd.f32 0.0, %v1995
        %1997 = vmatmul.f32.gmra.mxu0 %v1904
        %v1998 = vpop.f32.mrf.mxu0
        %v1999 = vadd.f32 0.0, %v1998
        %2000 = vmatmul.f32.gmra.mxu0 %v1905
        %v2001 = vpop.f32.mrf.mxu0
        %v2002 = vadd.f32 0.0, %v2001
        %2003 = vmatmul.f32.gmra.mxu0 %v1906
        %v2004 = vpop.f32.mrf.mxu0
        %v2005 = vadd.f32 0.0, %v2004
        %2006 = vmatmul.f32.gmra.mxu0 %v1907
        %v2007 = vpop.f32.mrf.mxu0
        %v2008 = vadd.f32 0.0, %v2007
        %2009 = vmatmul.f32.gmra.mxu0 %v1908
        %v2010 = vpop.f32.mrf.mxu0
        %v2011 = vadd.f32 0.0, %v2010
        %2012 = vmatmul.f32.gmra.mxu0 %v1909
        %v2013 = vpop.f32.mrf.mxu0
        %v2014 = vadd.f32 0.0, %v2013
        %2015 = vmatmul.f32.gmra.mxu0 %v1910
        %v2016 = vpop.f32.mrf.mxu0
        %v2017 = vadd.f32 0.0, %v2016
        %2018 = vmatmul.f32.gmra.mxu0 %v1911
        %v2019 = vpop.f32.mrf.mxu0
        %v2020 = vadd.f32 0.0, %v2019
        %2021 = vmatmul.f32.gmra.mxu0 %v1912
        %v2022 = vpop.f32.mrf.mxu0
        %v2023 = vadd.f32 0.0, %v2022
        %2024 = vmatmul.f32.gmra.mxu0 %v1913
        %v2025 = vpop.f32.mrf.mxu0
        %v2026 = vadd.f32 0.0, %v2025
        %2027 = vmatmul.f32.gmra.mxu0 %v1914
        %v2028 = vpop.f32.mrf.mxu0
        %v2029 = vadd.f32 0.0, %v2028
        %2030 = vmatmul.f32.gmra.mxu0 %v1915
        %v2031 = vpop.f32.mrf.mxu0
        %v2032 = vadd.f32 0.0, %v2031
        %2033 = vmatmul.f32.gmra.mxu0 %v1916
        %v2034 = vpop.f32.mrf.mxu0
        %v2035 = vadd.f32 0.0, %v2034
        %2036 = vmatmul.f32.gmra.mxu0 %v1917
        %v2037 = vpop.f32.mrf.mxu0
        %v2038 = vadd.f32 0.0, %v2037
        %2039 = vmatmul.f32.gmra.mxu0 %v1918
        %v2040 = vpop.f32.mrf.mxu0
        %v2041 = vadd.f32 0.0, %v2040
        %2042 = vmatmul.f32.gmra.mxu0 %v1919
        %v2043 = vpop.f32.mrf.mxu0
        %v2044 = vadd.f32 0.0, %v2043
        %2045 = vmatmul.f32.gmra.mxu0 %v1920
        %v2046 = vpop.f32.mrf.mxu0
        %v2047 = vadd.f32 0.0, %v2046
        %2048 = vmatmul.f32.gmra.mxu0 %v1921
        %v2049 = vpop.f32.mrf.mxu0
        %v2050 = vadd.f32 0.0, %v2049
        %2051 = vmatmul.f32.gmra.mxu0 %v1922
        %v2052 = vpop.f32.mrf.mxu0
        %v2053 = vadd.f32 0.0, %v2052
        %2054 = vmatmul.f32.gmra.mxu0 %v1923
        %v2055 = vpop.f32.mrf.mxu0
        %v2056 = vadd.f32 0.0, %v2055
        %2057 = vmatmul.f32.gmra.mxu0 %v1924
        %v2058 = vpop.f32.mrf.mxu0
        %v2059 = vadd.f32 0.0, %v2058
        %2060 = vmatmul.f32.gmra.mxu0 %v1925
        %v2061 = vpop.f32.mrf.mxu0
        %v2062 = vadd.f32 0.0, %v2061
        %2063 = vmatmul.f32.gmra.mxu0 %v1926
        %v2064 = vpop.f32.mrf.mxu0
        %v2065 = vadd.f32 0.0, %v2064
        %2066 = vmatmul.f32.gmra.mxu0 %v1927
        %v2067 = vpop.f32.mrf.mxu0
        %v2068 = vadd.f32 0.0, %v2067
        %2069 = vdwg.mxu0
        %v2070 = vadd.f32 %v1785, %v1963
        %v2071 = vadd.f32 %v1788, %v1966
        %v2072 = vadd.f32 %v1791, %v1969
        %v2073 = vadd.f32 %v1794, %v1972
        %v2074 = vadd.f32 %v1797, %v1975
        %v2075 = vadd.f32 %v1800, %v1978
        %v2076 = vadd.f32 %v1803, %v1981
        %v2077 = vadd.f32 %v1806, %v1984
        %v2078 = vadd.f32 %v1809, %v1987
        %v2079 = vadd.f32 %v1812, %v1990
        %v2080 = vadd.f32 %v1815, %v1993
        %v2081 = vadd.f32 %v1818, %v1996
        %v2082 = vadd.f32 %v1821, %v1999
        %v2083 = vadd.f32 %v1824, %v2002
        %v2084 = vadd.f32 %v1827, %v2005
        %v2085 = vadd.f32 %v1830, %v2008
        %v2086 = vadd.f32 %v1833, %v2011
        %v2087 = vadd.f32 %v1836, %v2014
        %v2088 = vadd.f32 %v1839, %v2017
        %v2089 = vadd.f32 %v1842, %v2020
        %v2090 = vadd.f32 %v1845, %v2023
        %v2091 = vadd.f32 %v1848, %v2026
        %v2092 = vadd.f32 %v1851, %v2029
        %v2093 = vadd.f32 %v1854, %v2032
        %v2094 = vadd.f32 %v1857, %v2035
        %v2095 = vadd.f32 %v1860, %v2038
        %v2096 = vadd.f32 %v1863, %v2041
        %v2097 = vadd.f32 %v1866, %v2044
        %v2098 = vadd.f32 %v1869, %v2047
        %v2099 = vadd.f32 %v1872, %v2050
        %v2100 = vadd.f32 %v1875, %v2053
        %v2101 = vadd.f32 %v1878, %v2056
        %v2102 = vadd.f32 %v1881, %v2059
        %v2103 = vadd.f32 %v1884, %v2062
        %v2104 = vadd.f32 %v1887, %v2065
        %v2105 = vadd.f32 %v1890, %v2068
        %v2106 = vld [vmem:[%s239 + $0x12] sm:$0xff]
        %v2107 = vld [vmem:[%s239 + $0x1a] sm:$0xff]
        %v2108 = vld [vmem:[%s239 + $0x22] sm:$0xff]
        %v2109 = vld [vmem:[%s239 + $0x2a] sm:$0xff]
        %v2110 = vld [vmem:[%s239 + $0x32] sm:$0xff]
        %v2111 = vld [vmem:[%s239 + $0x3a] sm:$0xff]
        %v2112 = vld [vmem:[%s239 + $0x42] sm:$0xff]
        %v2113 = vld [vmem:[%s239 + $0x4a] sm:$0xff]
        %v2114 = vld [vmem:[%s239 + $0x52] sm:$0xff]
        %v2115 = vld [vmem:[%s239 + $0x5a] sm:$0xff]
        %v2116 = vld [vmem:[%s239 + $0x62] sm:$0xff]
        %v2117 = vld [vmem:[%s239 + $0x6a] sm:$0xff]
        %v2118 = vld [vmem:[%s239 + $0x72] sm:$0xff]
        %v2119 = vld [vmem:[%s239 + $0x7a] sm:$0xff]
        %v2120 = vld [vmem:[%s239 + $0x82] sm:$0xff]
        %v2121 = vld [vmem:[%s239 + $0x8a] sm:$0xff]
        %v2122 = vld [vmem:[%s239 + $0x92] sm:$0xff]
        %v2123 = vld [vmem:[%s239 + $0x9a] sm:$0xff]
        %v2124 = vld [vmem:[%s239 + $0xa2] sm:$0xff]
        %v2125 = vld [vmem:[%s239 + $0xaa] sm:$0xff]
        %v2126 = vld [vmem:[%s239 + $0xb2] sm:$0xff]
        %v2127 = vld [vmem:[%s239 + $0xba] sm:$0xff]
        %v2128 = vld [vmem:[%s239 + $0xc2] sm:$0xff]
        %v2129 = vld [vmem:[%s239 + $0xca] sm:$0xff]
        %v2130 = vld [vmem:[%s239 + $0xd2] sm:$0xff]
        %v2131 = vld [vmem:[%s239 + $0xda] sm:$0xff]
        %v2132 = vld [vmem:[%s239 + $0xe2] sm:$0xff]
        %v2133 = vld [vmem:[%s239 + $0xea] sm:$0xff]
        %v2134 = vld [vmem:[%s239 + $0xf2] sm:$0xff]
        %v2135 = vld [vmem:[%s239 + $0xfa] sm:$0xff]
        %v2136 = vld [vmem:[%s239 + $0x102] sm:$0xff]
        %v2137 = vld [vmem:[%s239 + $0x10a] sm:$0xff]
        %v2138 = vld [vmem:[%s239 + $0x112] sm:$0xff]
        %v2139 = vld [vmem:[%s239 + $0x11a] sm:$0xff]
        %v2140 = vld [vmem:[%s239 + $0x122] sm:$0xff]
        %v2141 = vld [vmem:[%s239 + $0x12a] sm:$0xff]
        %s2142 = scalar_lea.vmem %s1, 384
        %v2143 = vld [vmem:[%s2142] sm:$0xff]
        %v2144 = vld [vmem:[%s2142 + $0x8] sm:$0xff]
        %v2145 = vld [vmem:[%s2142 + $0x10] sm:$0xff]
        %v2146 = vld [vmem:[%s2142 + $0x18] sm:$0xff]
        %v2147 = vld [vmem:[%s2142 + $0x20] sm:$0xff]
        %v2148 = vld [vmem:[%s2142 + $0x28] sm:$0xff]
        %v2149 = vld [vmem:[%s2142 + $0x30] sm:$0xff]
        %v2150 = vld [vmem:[%s2142 + $0x38] sm:$0xff]
        %v2151 = vld [vmem:[%s2142 + $0x40] sm:$0xff]
        %v2152 = vld [vmem:[%s2142 + $0x48] sm:$0xff]
        %v2153 = vld [vmem:[%s2142 + $0x50] sm:$0xff]
        %v2154 = vld [vmem:[%s2142 + $0x58] sm:$0xff]
        %v2155 = vld [vmem:[%s2142 + $0x60] sm:$0xff]
        %v2156 = vld [vmem:[%s2142 + $0x68] sm:$0xff]
        %v2157 = vld [vmem:[%s2142 + $0x70] sm:$0xff]
        %v2158 = vld [vmem:[%s2142 + $0x78] sm:$0xff]
        %2159 = vmatpush.msra.mxu0 %v2158
        %2160 = vmatpush.msra.mxu0 %v2157
        %2161 = vmatpush.msra.mxu0 %v2156
        %2162 = vmatpush.msra.mxu0 %v2155
        %2163 = vmatpush.msra.mxu0 %v2154
        %2164 = vmatpush.msra.mxu0 %v2153
        %2165 = vmatpush.msra.mxu0 %v2152
        %2166 = vmatpush.msra.mxu0 %v2151
        %2167 = vmatpush.msra.mxu0 %v2150
        %2168 = vmatpush.msra.mxu0 %v2149
        %2169 = vmatpush.msra.mxu0 %v2148
        %2170 = vmatpush.msra.mxu0 %v2147
        %2171 = vmatpush.msra.mxu0 %v2146
        %2172 = vmatpush.msra.mxu0 %v2145
        %2173 = vmatpush.msra.mxu0 %v2144
        %2174 = vmatpush.msra.mxu0 %v2143
        %2175 = vmatmul.f32.gmra.mxu0 %v2106
        %v2176 = vpop.f32.mrf.mxu0
        %v2177 = vadd.f32 0.0, %v2176
        %2178 = vmatmul.f32.gmra.mxu0 %v2107
        %v2179 = vpop.f32.mrf.mxu0
        %v2180 = vadd.f32 0.0, %v2179
        %2181 = vmatmul.f32.gmra.mxu0 %v2108
        %v2182 = vpop.f32.mrf.mxu0
        %v2183 = vadd.f32 0.0, %v2182
        %2184 = vmatmul.f32.gmra.mxu0 %v2109
        %v2185 = vpop.f32.mrf.mxu0
        %v2186 = vadd.f32 0.0, %v2185
        %2187 = vmatmul.f32.gmra.mxu0 %v2110
        %v2188 = vpop.f32.mrf.mxu0
        %v2189 = vadd.f32 0.0, %v2188
        %2190 = vmatmul.f32.gmra.mxu0 %v2111
        %v2191 = vpop.f32.mrf.mxu0
        %v2192 = vadd.f32 0.0, %v2191
        %2193 = vmatmul.f32.gmra.mxu0 %v2112
        %v2194 = vpop.f32.mrf.mxu0
        %v2195 = vadd.f32 0.0, %v2194
        %2196 = vmatmul.f32.gmra.mxu0 %v2113
        %v2197 = vpop.f32.mrf.mxu0
        %v2198 = vadd.f32 0.0, %v2197
        %2199 = vmatmul.f32.gmra.mxu0 %v2114
        %v2200 = vpop.f32.mrf.mxu0
        %v2201 = vadd.f32 0.0, %v2200
        %2202 = vmatmul.f32.gmra.mxu0 %v2115
        %v2203 = vpop.f32.mrf.mxu0
        %v2204 = vadd.f32 0.0, %v2203
        %2205 = vmatmul.f32.gmra.mxu0 %v2116
        %v2206 = vpop.f32.mrf.mxu0
        %v2207 = vadd.f32 0.0, %v2206
        %2208 = vmatmul.f32.gmra.mxu0 %v2117
        %v2209 = vpop.f32.mrf.mxu0
        %v2210 = vadd.f32 0.0, %v2209
        %2211 = vmatmul.f32.gmra.mxu0 %v2118
        %v2212 = vpop.f32.mrf.mxu0
        %v2213 = vadd.f32 0.0, %v2212
        %2214 = vmatmul.f32.gmra.mxu0 %v2119
        %v2215 = vpop.f32.mrf.mxu0
        %v2216 = vadd.f32 0.0, %v2215
        %2217 = vmatmul.f32.gmra.mxu0 %v2120
        %v2218 = vpop.f32.mrf.mxu0
        %v2219 = vadd.f32 0.0, %v2218
        %2220 = vmatmul.f32.gmra.mxu0 %v2121
        %v2221 = vpop.f32.mrf.mxu0
        %v2222 = vadd.f32 0.0, %v2221
        %2223 = vmatmul.f32.gmra.mxu0 %v2122
        %v2224 = vpop.f32.mrf.mxu0
        %v2225 = vadd.f32 0.0, %v2224
        %2226 = vmatmul.f32.gmra.mxu0 %v2123
        %v2227 = vpop.f32.mrf.mxu0
        %v2228 = vadd.f32 0.0, %v2227
        %2229 = vmatmul.f32.gmra.mxu0 %v2124
        %v2230 = vpop.f32.mrf.mxu0
        %v2231 = vadd.f32 0.0, %v2230
        %2232 = vmatmul.f32.gmra.mxu0 %v2125
        %v2233 = vpop.f32.mrf.mxu0
        %v2234 = vadd.f32 0.0, %v2233
        %2235 = vmatmul.f32.gmra.mxu0 %v2126
        %v2236 = vpop.f32.mrf.mxu0
        %v2237 = vadd.f32 0.0, %v2236
        %2238 = vmatmul.f32.gmra.mxu0 %v2127
        %v2239 = vpop.f32.mrf.mxu0
        %v2240 = vadd.f32 0.0, %v2239
        %2241 = vmatmul.f32.gmra.mxu0 %v2128
        %v2242 = vpop.f32.mrf.mxu0
        %v2243 = vadd.f32 0.0, %v2242
        %2244 = vmatmul.f32.gmra.mxu0 %v2129
        %v2245 = vpop.f32.mrf.mxu0
        %v2246 = vadd.f32 0.0, %v2245
        %2247 = vmatmul.f32.gmra.mxu0 %v2130
        %v2248 = vpop.f32.mrf.mxu0
        %v2249 = vadd.f32 0.0, %v2248
        %2250 = vmatmul.f32.gmra.mxu0 %v2131
        %v2251 = vpop.f32.mrf.mxu0
        %v2252 = vadd.f32 0.0, %v2251
        %2253 = vmatmul.f32.gmra.mxu0 %v2132
        %v2254 = vpop.f32.mrf.mxu0
        %v2255 = vadd.f32 0.0, %v2254
        %2256 = vmatmul.f32.gmra.mxu0 %v2133
        %v2257 = vpop.f32.mrf.mxu0
        %v2258 = vadd.f32 0.0, %v2257
        %2259 = vmatmul.f32.gmra.mxu0 %v2134
        %v2260 = vpop.f32.mrf.mxu0
        %v2261 = vadd.f32 0.0, %v2260
        %2262 = vmatmul.f32.gmra.mxu0 %v2135
        %v2263 = vpop.f32.mrf.mxu0
        %v2264 = vadd.f32 0.0, %v2263
        %2265 = vmatmul.f32.gmra.mxu0 %v2136
        %v2266 = vpop.f32.mrf.mxu0
        %v2267 = vadd.f32 0.0, %v2266
        %2268 = vmatmul.f32.gmra.mxu0 %v2137
        %v2269 = vpop.f32.mrf.mxu0
        %v2270 = vadd.f32 0.0, %v2269
        %2271 = vmatmul.f32.gmra.mxu0 %v2138
        %v2272 = vpop.f32.mrf.mxu0
        %v2273 = vadd.f32 0.0, %v2272
        %2274 = vmatmul.f32.gmra.mxu0 %v2139
        %v2275 = vpop.f32.mrf.mxu0
        %v2276 = vadd.f32 0.0, %v2275
        %2277 = vmatmul.f32.gmra.mxu0 %v2140
        %v2278 = vpop.f32.mrf.mxu0
        %v2279 = vadd.f32 0.0, %v2278
        %2280 = vmatmul.f32.gmra.mxu0 %v2141
        %v2281 = vpop.f32.mrf.mxu0
        %v2282 = vadd.f32 0.0, %v2281
        %2283 = vdwg.mxu0
        %v2284 = vadd.f32 %v2070, %v2177
        %v2285 = vadd.f32 %v2071, %v2180
        %v2286 = vadd.f32 %v2072, %v2183
        %v2287 = vadd.f32 %v2073, %v2186
        %v2288 = vadd.f32 %v2074, %v2189
        %v2289 = vadd.f32 %v2075, %v2192
        %v2290 = vadd.f32 %v2076, %v2195
        %v2291 = vadd.f32 %v2077, %v2198
        %v2292 = vadd.f32 %v2078, %v2201
        %v2293 = vadd.f32 %v2079, %v2204
        %v2294 = vadd.f32 %v2080, %v2207
        %v2295 = vadd.f32 %v2081, %v2210
        %v2296 = vadd.f32 %v2082, %v2213
        %v2297 = vadd.f32 %v2083, %v2216
        %v2298 = vadd.f32 %v2084, %v2219
        %v2299 = vadd.f32 %v2085, %v2222
        %v2300 = vadd.f32 %v2086, %v2225
        %v2301 = vadd.f32 %v2087, %v2228
        %v2302 = vadd.f32 %v2088, %v2231
        %v2303 = vadd.f32 %v2089, %v2234
        %v2304 = vadd.f32 %v2090, %v2237
        %v2305 = vadd.f32 %v2091, %v2240
        %v2306 = vadd.f32 %v2092, %v2243
        %v2307 = vadd.f32 %v2093, %v2246
        %v2308 = vadd.f32 %v2094, %v2249
        %v2309 = vadd.f32 %v2095, %v2252
        %v2310 = vadd.f32 %v2096, %v2255
        %v2311 = vadd.f32 %v2097, %v2258
        %v2312 = vadd.f32 %v2098, %v2261
        %v2313 = vadd.f32 %v2099, %v2264
        %v2314 = vadd.f32 %v2100, %v2267
        %v2315 = vadd.f32 %v2101, %v2270
        %v2316 = vadd.f32 %v2102, %v2273
        %v2317 = vadd.f32 %v2103, %v2276
        %v2318 = vadd.f32 %v2104, %v2279
        %v2319 = vadd.f32 %v2105, %v2282
        %v2320 = vld [vmem:[%s239 + $0x13] sm:$0xff]
        %v2321 = vld [vmem:[%s239 + $0x1b] sm:$0xff]
        %v2322 = vld [vmem:[%s239 + $0x23] sm:$0xff]
        %v2323 = vld [vmem:[%s239 + $0x2b] sm:$0xff]
        %v2324 = vld [vmem:[%s239 + $0x33] sm:$0xff]
        %v2325 = vld [vmem:[%s239 + $0x3b] sm:$0xff]
        %v2326 = vld [vmem:[%s239 + $0x43] sm:$0xff]
        %v2327 = vld [vmem:[%s239 + $0x4b] sm:$0xff]
        %v2328 = vld [vmem:[%s239 + $0x53] sm:$0xff]
        %v2329 = vld [vmem:[%s239 + $0x5b] sm:$0xff]
        %v2330 = vld [vmem:[%s239 + $0x63] sm:$0xff]
        %v2331 = vld [vmem:[%s239 + $0x6b] sm:$0xff]
        %v2332 = vld [vmem:[%s239 + $0x73] sm:$0xff]
        %v2333 = vld [vmem:[%s239 + $0x7b] sm:$0xff]
        %v2334 = vld [vmem:[%s239 + $0x83] sm:$0xff]
        %v2335 = vld [vmem:[%s239 + $0x8b] sm:$0xff]
        %v2336 = vld [vmem:[%s239 + $0x93] sm:$0xff]
        %v2337 = vld [vmem:[%s239 + $0x9b] sm:$0xff]
        %v2338 = vld [vmem:[%s239 + $0xa3] sm:$0xff]
        %v2339 = vld [vmem:[%s239 + $0xab] sm:$0xff]
        %v2340 = vld [vmem:[%s239 + $0xb3] sm:$0xff]
        %v2341 = vld [vmem:[%s239 + $0xbb] sm:$0xff]
        %v2342 = vld [vmem:[%s239 + $0xc3] sm:$0xff]
        %v2343 = vld [vmem:[%s239 + $0xcb] sm:$0xff]
        %v2344 = vld [vmem:[%s239 + $0xd3] sm:$0xff]
        %v2345 = vld [vmem:[%s239 + $0xdb] sm:$0xff]
        %v2346 = vld [vmem:[%s239 + $0xe3] sm:$0xff]
        %v2347 = vld [vmem:[%s239 + $0xeb] sm:$0xff]
        %v2348 = vld [vmem:[%s239 + $0xf3] sm:$0xff]
        %v2349 = vld [vmem:[%s239 + $0xfb] sm:$0xff]
        %v2350 = vld [vmem:[%s239 + $0x103] sm:$0xff]
        %v2351 = vld [vmem:[%s239 + $0x10b] sm:$0xff]
        %v2352 = vld [vmem:[%s239 + $0x113] sm:$0xff]
        %v2353 = vld [vmem:[%s239 + $0x11b] sm:$0xff]
        %v2354 = vld [vmem:[%s239 + $0x123] sm:$0xff]
        %v2355 = vld [vmem:[%s239 + $0x12b] sm:$0xff]
        %s2356 = scalar_lea.vmem %s1, 512
        %v2357 = vld [vmem:[%s2356] sm:$0xff]
        %v2358 = vld [vmem:[%s2356 + $0x8] sm:$0xff]
        %v2359 = vld [vmem:[%s2356 + $0x10] sm:$0xff]
        %v2360 = vld [vmem:[%s2356 + $0x18] sm:$0xff]
        %v2361 = vld [vmem:[%s2356 + $0x20] sm:$0xff]
        %v2362 = vld [vmem:[%s2356 + $0x28] sm:$0xff]
        %v2363 = vld [vmem:[%s2356 + $0x30] sm:$0xff]
        %v2364 = vld [vmem:[%s2356 + $0x38] sm:$0xff]
        %v2365 = vld [vmem:[%s2356 + $0x40] sm:$0xff]
        %v2366 = vld [vmem:[%s2356 + $0x48] sm:$0xff]
        %v2367 = vld [vmem:[%s2356 + $0x50] sm:$0xff]
        %v2368 = vld [vmem:[%s2356 + $0x58] sm:$0xff]
        %v2369 = vld [vmem:[%s2356 + $0x60] sm:$0xff]
        %v2370 = vld [vmem:[%s2356 + $0x68] sm:$0xff]
        %v2371 = vld [vmem:[%s2356 + $0x70] sm:$0xff]
        %v2372 = vld [vmem:[%s2356 + $0x78] sm:$0xff]
        %2373 = vmatpush.msra.mxu0 %v2372
        %2374 = vmatpush.msra.mxu0 %v2371
        %2375 = vmatpush.msra.mxu0 %v2370
        %2376 = vmatpush.msra.mxu0 %v2369
        %2377 = vmatpush.msra.mxu0 %v2368
        %2378 = vmatpush.msra.mxu0 %v2367
        %2379 = vmatpush.msra.mxu0 %v2366
        %2380 = vmatpush.msra.mxu0 %v2365
        %2381 = vmatpush.msra.mxu0 %v2364
        %2382 = vmatpush.msra.mxu0 %v2363
        %2383 = vmatpush.msra.mxu0 %v2362
        %2384 = vmatpush.msra.mxu0 %v2361
        %2385 = vmatpush.msra.mxu0 %v2360
        %2386 = vmatpush.msra.mxu0 %v2359
        %2387 = vmatpush.msra.mxu0 %v2358
        %2388 = vmatpush.msra.mxu0 %v2357
        %2389 = vmatmul.f32.gmra.mxu0 %v2320
        %v2390 = vpop.f32.mrf.mxu0
        %v2391 = vadd.f32 0.0, %v2390
        %2392 = vmatmul.f32.gmra.mxu0 %v2321
        %v2393 = vpop.f32.mrf.mxu0
        %v2394 = vadd.f32 0.0, %v2393
        %2395 = vmatmul.f32.gmra.mxu0 %v2322
        %v2396 = vpop.f32.mrf.mxu0
        %v2397 = vadd.f32 0.0, %v2396
        %2398 = vmatmul.f32.gmra.mxu0 %v2323
        %v2399 = vpop.f32.mrf.mxu0
        %v2400 = vadd.f32 0.0, %v2399
        %2401 = vmatmul.f32.gmra.mxu0 %v2324
        %v2402 = vpop.f32.mrf.mxu0
        %v2403 = vadd.f32 0.0, %v2402
        %2404 = vmatmul.f32.gmra.mxu0 %v2325
        %v2405 = vpop.f32.mrf.mxu0
        %v2406 = vadd.f32 0.0, %v2405
        %2407 = vmatmul.f32.gmra.mxu0 %v2326
        %v2408 = vpop.f32.mrf.mxu0
        %v2409 = vadd.f32 0.0, %v2408
        %2410 = vmatmul.f32.gmra.mxu0 %v2327
        %v2411 = vpop.f32.mrf.mxu0
        %v2412 = vadd.f32 0.0, %v2411
        %2413 = vmatmul.f32.gmra.mxu0 %v2328
        %v2414 = vpop.f32.mrf.mxu0
        %v2415 = vadd.f32 0.0, %v2414
        %2416 = vmatmul.f32.gmra.mxu0 %v2329
        %v2417 = vpop.f32.mrf.mxu0
        %v2418 = vadd.f32 0.0, %v2417
        %2419 = vmatmul.f32.gmra.mxu0 %v2330
        %v2420 = vpop.f32.mrf.mxu0
        %v2421 = vadd.f32 0.0, %v2420
        %2422 = vmatmul.f32.gmra.mxu0 %v2331
        %v2423 = vpop.f32.mrf.mxu0
        %v2424 = vadd.f32 0.0, %v2423
        %2425 = vmatmul.f32.gmra.mxu0 %v2332
        %v2426 = vpop.f32.mrf.mxu0
        %v2427 = vadd.f32 0.0, %v2426
        %2428 = vmatmul.f32.gmra.mxu0 %v2333
        %v2429 = vpop.f32.mrf.mxu0
        %v2430 = vadd.f32 0.0, %v2429
        %2431 = vmatmul.f32.gmra.mxu0 %v2334
        %v2432 = vpop.f32.mrf.mxu0
        %v2433 = vadd.f32 0.0, %v2432
        %2434 = vmatmul.f32.gmra.mxu0 %v2335
        %v2435 = vpop.f32.mrf.mxu0
        %v2436 = vadd.f32 0.0, %v2435
        %2437 = vmatmul.f32.gmra.mxu0 %v2336
        %v2438 = vpop.f32.mrf.mxu0
        %v2439 = vadd.f32 0.0, %v2438
        %2440 = vmatmul.f32.gmra.mxu0 %v2337
        %v2441 = vpop.f32.mrf.mxu0
        %v2442 = vadd.f32 0.0, %v2441
        %2443 = vmatmul.f32.gmra.mxu0 %v2338
        %v2444 = vpop.f32.mrf.mxu0
        %v2445 = vadd.f32 0.0, %v2444
        %2446 = vmatmul.f32.gmra.mxu0 %v2339
        %v2447 = vpop.f32.mrf.mxu0
        %v2448 = vadd.f32 0.0, %v2447
        %2449 = vmatmul.f32.gmra.mxu0 %v2340
        %v2450 = vpop.f32.mrf.mxu0
        %v2451 = vadd.f32 0.0, %v2450
        %2452 = vmatmul.f32.gmra.mxu0 %v2341
        %v2453 = vpop.f32.mrf.mxu0
        %v2454 = vadd.f32 0.0, %v2453
        %2455 = vmatmul.f32.gmra.mxu0 %v2342
        %v2456 = vpop.f32.mrf.mxu0
        %v2457 = vadd.f32 0.0, %v2456
        %2458 = vmatmul.f32.gmra.mxu0 %v2343
        %v2459 = vpop.f32.mrf.mxu0
        %v2460 = vadd.f32 0.0, %v2459
        %2461 = vmatmul.f32.gmra.mxu0 %v2344
        %v2462 = vpop.f32.mrf.mxu0
        %v2463 = vadd.f32 0.0, %v2462
        %2464 = vmatmul.f32.gmra.mxu0 %v2345
        %v2465 = vpop.f32.mrf.mxu0
        %v2466 = vadd.f32 0.0, %v2465
        %2467 = vmatmul.f32.gmra.mxu0 %v2346
        %v2468 = vpop.f32.mrf.mxu0
        %v2469 = vadd.f32 0.0, %v2468
        %2470 = vmatmul.f32.gmra.mxu0 %v2347
        %v2471 = vpop.f32.mrf.mxu0
        %v2472 = vadd.f32 0.0, %v2471
        %2473 = vmatmul.f32.gmra.mxu0 %v2348
        %v2474 = vpop.f32.mrf.mxu0
        %v2475 = vadd.f32 0.0, %v2474
        %2476 = vmatmul.f32.gmra.mxu0 %v2349
        %v2477 = vpop.f32.mrf.mxu0
        %v2478 = vadd.f32 0.0, %v2477
        %2479 = vmatmul.f32.gmra.mxu0 %v2350
        %v2480 = vpop.f32.mrf.mxu0
        %v2481 = vadd.f32 0.0, %v2480
        %2482 = vmatmul.f32.gmra.mxu0 %v2351
        %v2483 = vpop.f32.mrf.mxu0
        %v2484 = vadd.f32 0.0, %v2483
        %2485 = vmatmul.f32.gmra.mxu0 %v2352
        %v2486 = vpop.f32.mrf.mxu0
        %v2487 = vadd.f32 0.0, %v2486
        %2488 = vmatmul.f32.gmra.mxu0 %v2353
        %v2489 = vpop.f32.mrf.mxu0
        %v2490 = vadd.f32 0.0, %v2489
        %2491 = vmatmul.f32.gmra.mxu0 %v2354
        %v2492 = vpop.f32.mrf.mxu0
        %v2493 = vadd.f32 0.0, %v2492
        %2494 = vmatmul.f32.gmra.mxu0 %v2355
        %v2495 = vpop.f32.mrf.mxu0
        %v2496 = vadd.f32 0.0, %v2495
        %2497 = vdwg.mxu0
        %v2498 = vadd.f32 %v2284, %v2391
        %v2499 = vadd.f32 %v2285, %v2394
        %v2500 = vadd.f32 %v2286, %v2397
        %v2501 = vadd.f32 %v2287, %v2400
        %v2502 = vadd.f32 %v2288, %v2403
        %v2503 = vadd.f32 %v2289, %v2406
        %v2504 = vadd.f32 %v2290, %v2409
        %v2505 = vadd.f32 %v2291, %v2412
        %v2506 = vadd.f32 %v2292, %v2415
        %v2507 = vadd.f32 %v2293, %v2418
        %v2508 = vadd.f32 %v2294, %v2421
        %v2509 = vadd.f32 %v2295, %v2424
        %v2510 = vadd.f32 %v2296, %v2427
        %v2511 = vadd.f32 %v2297, %v2430
        %v2512 = vadd.f32 %v2298, %v2433
        %v2513 = vadd.f32 %v2299, %v2436
        %v2514 = vadd.f32 %v2300, %v2439
        %v2515 = vadd.f32 %v2301, %v2442
        %v2516 = vadd.f32 %v2302, %v2445
        %v2517 = vadd.f32 %v2303, %v2448
        %v2518 = vadd.f32 %v2304, %v2451
        %v2519 = vadd.f32 %v2305, %v2454
        %v2520 = vadd.f32 %v2306, %v2457
        %v2521 = vadd.f32 %v2307, %v2460
        %v2522 = vadd.f32 %v2308, %v2463
        %v2523 = vadd.f32 %v2309, %v2466
        %v2524 = vadd.f32 %v2310, %v2469
        %v2525 = vadd.f32 %v2311, %v2472
        %v2526 = vadd.f32 %v2312, %v2475
        %v2527 = vadd.f32 %v2313, %v2478
        %v2528 = vadd.f32 %v2314, %v2481
        %v2529 = vadd.f32 %v2315, %v2484
        %v2530 = vadd.f32 %v2316, %v2487
        %v2531 = vadd.f32 %v2317, %v2490
        %v2532 = vadd.f32 %v2318, %v2493
        %v2533 = vadd.f32 %v2319, %v2496
        %v2534 = vld [vmem:[%s239 + $0x14] sm:$0xff]
        %v2535 = vld [vmem:[%s239 + $0x1c] sm:$0xff]
        %v2536 = vld [vmem:[%s239 + $0x24] sm:$0xff]
        %v2537 = vld [vmem:[%s239 + $0x2c] sm:$0xff]
        %v2538 = vld [vmem:[%s239 + $0x34] sm:$0xff]
        %v2539 = vld [vmem:[%s239 + $0x3c] sm:$0xff]
        %v2540 = vld [vmem:[%s239 + $0x44] sm:$0xff]
        %v2541 = vld [vmem:[%s239 + $0x4c] sm:$0xff]
        %v2542 = vld [vmem:[%s239 + $0x54] sm:$0xff]
        %v2543 = vld [vmem:[%s239 + $0x5c] sm:$0xff]
        %v2544 = vld [vmem:[%s239 + $0x64] sm:$0xff]
        %v2545 = vld [vmem:[%s239 + $0x6c] sm:$0xff]
        %v2546 = vld [vmem:[%s239 + $0x74] sm:$0xff]
        %v2547 = vld [vmem:[%s239 + $0x7c] sm:$0xff]
        %v2548 = vld [vmem:[%s239 + $0x84] sm:$0xff]
        %v2549 = vld [vmem:[%s239 + $0x8c] sm:$0xff]
        %v2550 = vld [vmem:[%s239 + $0x94] sm:$0xff]
        %v2551 = vld [vmem:[%s239 + $0x9c] sm:$0xff]
        %v2552 = vld [vmem:[%s239 + $0xa4] sm:$0xff]
        %v2553 = vld [vmem:[%s239 + $0xac] sm:$0xff]
        %v2554 = vld [vmem:[%s239 + $0xb4] sm:$0xff]
        %v2555 = vld [vmem:[%s239 + $0xbc] sm:$0xff]
        %v2556 = vld [vmem:[%s239 + $0xc4] sm:$0xff]
        %v2557 = vld [vmem:[%s239 + $0xcc] sm:$0xff]
        %v2558 = vld [vmem:[%s239 + $0xd4] sm:$0xff]
        %v2559 = vld [vmem:[%s239 + $0xdc] sm:$0xff]
        %v2560 = vld [vmem:[%s239 + $0xe4] sm:$0xff]
        %v2561 = vld [vmem:[%s239 + $0xec] sm:$0xff]
        %v2562 = vld [vmem:[%s239 + $0xf4] sm:$0xff]
        %v2563 = vld [vmem:[%s239 + $0xfc] sm:$0xff]
        %v2564 = vld [vmem:[%s239 + $0x104] sm:$0xff]
        %v2565 = vld [vmem:[%s239 + $0x10c] sm:$0xff]
        %v2566 = vld [vmem:[%s239 + $0x114] sm:$0xff]
        %v2567 = vld [vmem:[%s239 + $0x11c] sm:$0xff]
        %v2568 = vld [vmem:[%s239 + $0x124] sm:$0xff]
        %v2569 = vld [vmem:[%s239 + $0x12c] sm:$0xff]
        %s2570 = scalar_lea.vmem %s1, 640
        %v2571 = vld [vmem:[%s2570] sm:$0xff]
        %v2572 = vld [vmem:[%s2570 + $0x8] sm:$0xff]
        %v2573 = vld [vmem:[%s2570 + $0x10] sm:$0xff]
        %v2574 = vld [vmem:[%s2570 + $0x18] sm:$0xff]
        %v2575 = vld [vmem:[%s2570 + $0x20] sm:$0xff]
        %v2576 = vld [vmem:[%s2570 + $0x28] sm:$0xff]
        %v2577 = vld [vmem:[%s2570 + $0x30] sm:$0xff]
        %v2578 = vld [vmem:[%s2570 + $0x38] sm:$0xff]
        %v2579 = vld [vmem:[%s2570 + $0x40] sm:$0xff]
        %v2580 = vld [vmem:[%s2570 + $0x48] sm:$0xff]
        %v2581 = vld [vmem:[%s2570 + $0x50] sm:$0xff]
        %v2582 = vld [vmem:[%s2570 + $0x58] sm:$0xff]
        %v2583 = vld [vmem:[%s2570 + $0x60] sm:$0xff]
        %v2584 = vld [vmem:[%s2570 + $0x68] sm:$0xff]
        %v2585 = vld [vmem:[%s2570 + $0x70] sm:$0xff]
        %v2586 = vld [vmem:[%s2570 + $0x78] sm:$0xff]
        %2587 = vmatpush.msra.mxu0 %v2586
        %2588 = vmatpush.msra.mxu0 %v2585
        %2589 = vmatpush.msra.mxu0 %v2584
        %2590 = vmatpush.msra.mxu0 %v2583
        %2591 = vmatpush.msra.mxu0 %v2582
        %2592 = vmatpush.msra.mxu0 %v2581
        %2593 = vmatpush.msra.mxu0 %v2580
        %2594 = vmatpush.msra.mxu0 %v2579
        %2595 = vmatpush.msra.mxu0 %v2578
        %2596 = vmatpush.msra.mxu0 %v2577
        %2597 = vmatpush.msra.mxu0 %v2576
        %2598 = vmatpush.msra.mxu0 %v2575
        %2599 = vmatpush.msra.mxu0 %v2574
        %2600 = vmatpush.msra.mxu0 %v2573
        %2601 = vmatpush.msra.mxu0 %v2572
        %2602 = vmatpush.msra.mxu0 %v2571
        %2603 = vmatmul.f32.gmra.mxu0 %v2534
        %v2604 = vpop.f32.mrf.mxu0
        %v2605 = vadd.f32 0.0, %v2604
        %2606 = vmatmul.f32.gmra.mxu0 %v2535
        %v2607 = vpop.f32.mrf.mxu0
        %v2608 = vadd.f32 0.0, %v2607
        %2609 = vmatmul.f32.gmra.mxu0 %v2536
        %v2610 = vpop.f32.mrf.mxu0
        %v2611 = vadd.f32 0.0, %v2610
        %2612 = vmatmul.f32.gmra.mxu0 %v2537
        %v2613 = vpop.f32.mrf.mxu0
        %v2614 = vadd.f32 0.0, %v2613
        %2615 = vmatmul.f32.gmra.mxu0 %v2538
        %v2616 = vpop.f32.mrf.mxu0
        %v2617 = vadd.f32 0.0, %v2616
        %2618 = vmatmul.f32.gmra.mxu0 %v2539
        %v2619 = vpop.f32.mrf.mxu0
        %v2620 = vadd.f32 0.0, %v2619
        %2621 = vmatmul.f32.gmra.mxu0 %v2540
        %v2622 = vpop.f32.mrf.mxu0
        %v2623 = vadd.f32 0.0, %v2622
        %2624 = vmatmul.f32.gmra.mxu0 %v2541
        %v2625 = vpop.f32.mrf.mxu0
        %v2626 = vadd.f32 0.0, %v2625
        %2627 = vmatmul.f32.gmra.mxu0 %v2542
        %v2628 = vpop.f32.mrf.mxu0
        %v2629 = vadd.f32 0.0, %v2628
        %2630 = vmatmul.f32.gmra.mxu0 %v2543
        %v2631 = vpop.f32.mrf.mxu0
        %v2632 = vadd.f32 0.0, %v2631
        %2633 = vmatmul.f32.gmra.mxu0 %v2544
        %v2634 = vpop.f32.mrf.mxu0
        %v2635 = vadd.f32 0.0, %v2634
        %2636 = vmatmul.f32.gmra.mxu0 %v2545
        %v2637 = vpop.f32.mrf.mxu0
        %v2638 = vadd.f32 0.0, %v2637
        %2639 = vmatmul.f32.gmra.mxu0 %v2546
        %v2640 = vpop.f32.mrf.mxu0
        %v2641 = vadd.f32 0.0, %v2640
        %2642 = vmatmul.f32.gmra.mxu0 %v2547
        %v2643 = vpop.f32.mrf.mxu0
        %v2644 = vadd.f32 0.0, %v2643
        %2645 = vmatmul.f32.gmra.mxu0 %v2548
        %v2646 = vpop.f32.mrf.mxu0
        %v2647 = vadd.f32 0.0, %v2646
        %2648 = vmatmul.f32.gmra.mxu0 %v2549
        %v2649 = vpop.f32.mrf.mxu0
        %v2650 = vadd.f32 0.0, %v2649
        %2651 = vmatmul.f32.gmra.mxu0 %v2550
        %v2652 = vpop.f32.mrf.mxu0
        %v2653 = vadd.f32 0.0, %v2652
        %2654 = vmatmul.f32.gmra.mxu0 %v2551
        %v2655 = vpop.f32.mrf.mxu0
        %v2656 = vadd.f32 0.0, %v2655
        %2657 = vmatmul.f32.gmra.mxu0 %v2552
        %v2658 = vpop.f32.mrf.mxu0
        %v2659 = vadd.f32 0.0, %v2658
        %2660 = vmatmul.f32.gmra.mxu0 %v2553
        %v2661 = vpop.f32.mrf.mxu0
        %v2662 = vadd.f32 0.0, %v2661
        %2663 = vmatmul.f32.gmra.mxu0 %v2554
        %v2664 = vpop.f32.mrf.mxu0
        %v2665 = vadd.f32 0.0, %v2664
        %2666 = vmatmul.f32.gmra.mxu0 %v2555
        %v2667 = vpop.f32.mrf.mxu0
        %v2668 = vadd.f32 0.0, %v2667
        %2669 = vmatmul.f32.gmra.mxu0 %v2556
        %v2670 = vpop.f32.mrf.mxu0
        %v2671 = vadd.f32 0.0, %v2670
        %2672 = vmatmul.f32.gmra.mxu0 %v2557
        %v2673 = vpop.f32.mrf.mxu0
        %v2674 = vadd.f32 0.0, %v2673
        %2675 = vmatmul.f32.gmra.mxu0 %v2558
        %v2676 = vpop.f32.mrf.mxu0
        %v2677 = vadd.f32 0.0, %v2676
        %2678 = vmatmul.f32.gmra.mxu0 %v2559
        %v2679 = vpop.f32.mrf.mxu0
        %v2680 = vadd.f32 0.0, %v2679
        %2681 = vmatmul.f32.gmra.mxu0 %v2560
        %v2682 = vpop.f32.mrf.mxu0
        %v2683 = vadd.f32 0.0, %v2682
        %2684 = vmatmul.f32.gmra.mxu0 %v2561
        %v2685 = vpop.f32.mrf.mxu0
        %v2686 = vadd.f32 0.0, %v2685
        %2687 = vmatmul.f32.gmra.mxu0 %v2562
        %v2688 = vpop.f32.mrf.mxu0
        %v2689 = vadd.f32 0.0, %v2688
        %2690 = vmatmul.f32.gmra.mxu0 %v2563
        %v2691 = vpop.f32.mrf.mxu0
        %v2692 = vadd.f32 0.0, %v2691
        %2693 = vmatmul.f32.gmra.mxu0 %v2564
        %v2694 = vpop.f32.mrf.mxu0
        %v2695 = vadd.f32 0.0, %v2694
        %2696 = vmatmul.f32.gmra.mxu0 %v2565
        %v2697 = vpop.f32.mrf.mxu0
        %v2698 = vadd.f32 0.0, %v2697
        %2699 = vmatmul.f32.gmra.mxu0 %v2566
        %v2700 = vpop.f32.mrf.mxu0
        %v2701 = vadd.f32 0.0, %v2700
        %2702 = vmatmul.f32.gmra.mxu0 %v2567
        %v2703 = vpop.f32.mrf.mxu0
        %v2704 = vadd.f32 0.0, %v2703
        %2705 = vmatmul.f32.gmra.mxu0 %v2568
        %v2706 = vpop.f32.mrf.mxu0
        %v2707 = vadd.f32 0.0, %v2706
        %2708 = vmatmul.f32.gmra.mxu0 %v2569
        %v2709 = vpop.f32.mrf.mxu0
        %v2710 = vadd.f32 0.0, %v2709
        %2711 = vdwg.mxu0
        %v2712 = vadd.f32 %v2498, %v2605
        %v2713 = vadd.f32 %v2499, %v2608
        %v2714 = vadd.f32 %v2500, %v2611
        %v2715 = vadd.f32 %v2501, %v2614
        %v2716 = vadd.f32 %v2502, %v2617
        %v2717 = vadd.f32 %v2503, %v2620
        %v2718 = vadd.f32 %v2504, %v2623
        %v2719 = vadd.f32 %v2505, %v2626
        %v2720 = vadd.f32 %v2506, %v2629
        %v2721 = vadd.f32 %v2507, %v2632
        %v2722 = vadd.f32 %v2508, %v2635
        %v2723 = vadd.f32 %v2509, %v2638
        %v2724 = vadd.f32 %v2510, %v2641
        %v2725 = vadd.f32 %v2511, %v2644
        %v2726 = vadd.f32 %v2512, %v2647
        %v2727 = vadd.f32 %v2513, %v2650
        %v2728 = vadd.f32 %v2514, %v2653
        %v2729 = vadd.f32 %v2515, %v2656
        %v2730 = vadd.f32 %v2516, %v2659
        %v2731 = vadd.f32 %v2517, %v2662
        %v2732 = vadd.f32 %v2518, %v2665
        %v2733 = vadd.f32 %v2519, %v2668
        %v2734 = vadd.f32 %v2520, %v2671
        %v2735 = vadd.f32 %v2521, %v2674
        %v2736 = vadd.f32 %v2522, %v2677
        %v2737 = vadd.f32 %v2523, %v2680
        %v2738 = vadd.f32 %v2524, %v2683
        %v2739 = vadd.f32 %v2525, %v2686
        %v2740 = vadd.f32 %v2526, %v2689
        %v2741 = vadd.f32 %v2527, %v2692
        %v2742 = vadd.f32 %v2528, %v2695
        %v2743 = vadd.f32 %v2529, %v2698
        %v2744 = vadd.f32 %v2530, %v2701
        %v2745 = vadd.f32 %v2531, %v2704
        %v2746 = vadd.f32 %v2532, %v2707
        %v2747 = vadd.f32 %v2533, %v2710
        %v2748 = vld [vmem:[%s239 + $0x24] sm:$0xff]
        %v2749 = vld [vmem:[%s239 + $0x2c] sm:$0xff]
        %v2750 = vld [vmem:[%s239 + $0x34] sm:$0xff]
        %v2751 = vld [vmem:[%s239 + $0x3c] sm:$0xff]
        %v2752 = vld [vmem:[%s239 + $0x44] sm:$0xff]
        %v2753 = vld [vmem:[%s239 + $0x4c] sm:$0xff]
        %v2754 = vld [vmem:[%s239 + $0x54] sm:$0xff]
        %v2755 = vld [vmem:[%s239 + $0x5c] sm:$0xff]
        %v2756 = vld [vmem:[%s239 + $0x64] sm:$0xff]
        %v2757 = vld [vmem:[%s239 + $0x6c] sm:$0xff]
        %v2758 = vld [vmem:[%s239 + $0x74] sm:$0xff]
        %v2759 = vld [vmem:[%s239 + $0x7c] sm:$0xff]
        %v2760 = vld [vmem:[%s239 + $0x84] sm:$0xff]
        %v2761 = vld [vmem:[%s239 + $0x8c] sm:$0xff]
        %v2762 = vld [vmem:[%s239 + $0x94] sm:$0xff]
        %v2763 = vld [vmem:[%s239 + $0x9c] sm:$0xff]
        %v2764 = vld [vmem:[%s239 + $0xa4] sm:$0xff]
        %v2765 = vld [vmem:[%s239 + $0xac] sm:$0xff]
        %v2766 = vld [vmem:[%s239 + $0xb4] sm:$0xff]
        %v2767 = vld [vmem:[%s239 + $0xbc] sm:$0xff]
        %v2768 = vld [vmem:[%s239 + $0xc4] sm:$0xff]
        %v2769 = vld [vmem:[%s239 + $0xcc] sm:$0xff]
        %v2770 = vld [vmem:[%s239 + $0xd4] sm:$0xff]
        %v2771 = vld [vmem:[%s239 + $0xdc] sm:$0xff]
        %v2772 = vld [vmem:[%s239 + $0xe4] sm:$0xff]
        %v2773 = vld [vmem:[%s239 + $0xec] sm:$0xff]
        %v2774 = vld [vmem:[%s239 + $0xf4] sm:$0xff]
        %v2775 = vld [vmem:[%s239 + $0xfc] sm:$0xff]
        %v2776 = vld [vmem:[%s239 + $0x104] sm:$0xff]
        %v2777 = vld [vmem:[%s239 + $0x10c] sm:$0xff]
        %v2778 = vld [vmem:[%s239 + $0x114] sm:$0xff]
        %v2779 = vld [vmem:[%s239 + $0x11c] sm:$0xff]
        %v2780 = vld [vmem:[%s239 + $0x124] sm:$0xff]
        %v2781 = vld [vmem:[%s239 + $0x12c] sm:$0xff]
        %v2782 = vld [vmem:[%s239 + $0x134] sm:$0xff]
        %v2783 = vld [vmem:[%s239 + $0x13c] sm:$0xff]
        %s2784 = scalar_lea.vmem %s1, 768
        %v2785 = vld [vmem:[%s2784] sm:$0xff]
        %v2786 = vld [vmem:[%s2784 + $0x8] sm:$0xff]
        %v2787 = vld [vmem:[%s2784 + $0x10] sm:$0xff]
        %v2788 = vld [vmem:[%s2784 + $0x18] sm:$0xff]
        %v2789 = vld [vmem:[%s2784 + $0x20] sm:$0xff]
        %v2790 = vld [vmem:[%s2784 + $0x28] sm:$0xff]
        %v2791 = vld [vmem:[%s2784 + $0x30] sm:$0xff]
        %v2792 = vld [vmem:[%s2784 + $0x38] sm:$0xff]
        %v2793 = vld [vmem:[%s2784 + $0x40] sm:$0xff]
        %v2794 = vld [vmem:[%s2784 + $0x48] sm:$0xff]
        %v2795 = vld [vmem:[%s2784 + $0x50] sm:$0xff]
        %v2796 = vld [vmem:[%s2784 + $0x58] sm:$0xff]
        %v2797 = vld [vmem:[%s2784 + $0x60] sm:$0xff]
        %v2798 = vld [vmem:[%s2784 + $0x68] sm:$0xff]
        %v2799 = vld [vmem:[%s2784 + $0x70] sm:$0xff]
        %v2800 = vld [vmem:[%s2784 + $0x78] sm:$0xff]
        %2801 = vmatpush.msra.mxu0 %v2800
        %2802 = vmatpush.msra.mxu0 %v2799
        %2803 = vmatpush.msra.mxu0 %v2798
        %2804 = vmatpush.msra.mxu0 %v2797
        %2805 = vmatpush.msra.mxu0 %v2796
        %2806 = vmatpush.msra.mxu0 %v2795
        %2807 = vmatpush.msra.mxu0 %v2794
        %2808 = vmatpush.msra.mxu0 %v2793
        %2809 = vmatpush.msra.mxu0 %v2792
        %2810 = vmatpush.msra.mxu0 %v2791
        %2811 = vmatpush.msra.mxu0 %v2790
        %2812 = vmatpush.msra.mxu0 %v2789
        %2813 = vmatpush.msra.mxu0 %v2788
        %2814 = vmatpush.msra.mxu0 %v2787
        %2815 = vmatpush.msra.mxu0 %v2786
        %2816 = vmatpush.msra.mxu0 %v2785
        %2817 = vmatmul.f32.gmra.mxu0 %v2748
        %v2818 = vpop.f32.mrf.mxu0
        %v2819 = vadd.f32 0.0, %v2818
        %2820 = vmatmul.f32.gmra.mxu0 %v2749
        %v2821 = vpop.f32.mrf.mxu0
        %v2822 = vadd.f32 0.0, %v2821
        %2823 = vmatmul.f32.gmra.mxu0 %v2750
        %v2824 = vpop.f32.mrf.mxu0
        %v2825 = vadd.f32 0.0, %v2824
        %2826 = vmatmul.f32.gmra.mxu0 %v2751
        %v2827 = vpop.f32.mrf.mxu0
        %v2828 = vadd.f32 0.0, %v2827
        %2829 = vmatmul.f32.gmra.mxu0 %v2752
        %v2830 = vpop.f32.mrf.mxu0
        %v2831 = vadd.f32 0.0, %v2830
        %2832 = vmatmul.f32.gmra.mxu0 %v2753
        %v2833 = vpop.f32.mrf.mxu0
        %v2834 = vadd.f32 0.0, %v2833
        %2835 = vmatmul.f32.gmra.mxu0 %v2754
        %v2836 = vpop.f32.mrf.mxu0
        %v2837 = vadd.f32 0.0, %v2836
        %2838 = vmatmul.f32.gmra.mxu0 %v2755
        %v2839 = vpop.f32.mrf.mxu0
        %v2840 = vadd.f32 0.0, %v2839
        %2841 = vmatmul.f32.gmra.mxu0 %v2756
        %v2842 = vpop.f32.mrf.mxu0
        %v2843 = vadd.f32 0.0, %v2842
        %2844 = vmatmul.f32.gmra.mxu0 %v2757
        %v2845 = vpop.f32.mrf.mxu0
        %v2846 = vadd.f32 0.0, %v2845
        %2847 = vmatmul.f32.gmra.mxu0 %v2758
        %v2848 = vpop.f32.mrf.mxu0
        %v2849 = vadd.f32 0.0, %v2848
        %2850 = vmatmul.f32.gmra.mxu0 %v2759
        %v2851 = vpop.f32.mrf.mxu0
        %v2852 = vadd.f32 0.0, %v2851
        %2853 = vmatmul.f32.gmra.mxu0 %v2760
        %v2854 = vpop.f32.mrf.mxu0
        %v2855 = vadd.f32 0.0, %v2854
        %2856 = vmatmul.f32.gmra.mxu0 %v2761
        %v2857 = vpop.f32.mrf.mxu0
        %v2858 = vadd.f32 0.0, %v2857
        %2859 = vmatmul.f32.gmra.mxu0 %v2762
        %v2860 = vpop.f32.mrf.mxu0
        %v2861 = vadd.f32 0.0, %v2860
        %2862 = vmatmul.f32.gmra.mxu0 %v2763
        %v2863 = vpop.f32.mrf.mxu0
        %v2864 = vadd.f32 0.0, %v2863
        %2865 = vmatmul.f32.gmra.mxu0 %v2764
        %v2866 = vpop.f32.mrf.mxu0
        %v2867 = vadd.f32 0.0, %v2866
        %2868 = vmatmul.f32.gmra.mxu0 %v2765
        %v2869 = vpop.f32.mrf.mxu0
        %v2870 = vadd.f32 0.0, %v2869
        %2871 = vmatmul.f32.gmra.mxu0 %v2766
        %v2872 = vpop.f32.mrf.mxu0
        %v2873 = vadd.f32 0.0, %v2872
        %2874 = vmatmul.f32.gmra.mxu0 %v2767
        %v2875 = vpop.f32.mrf.mxu0
        %v2876 = vadd.f32 0.0, %v2875
        %2877 = vmatmul.f32.gmra.mxu0 %v2768
        %v2878 = vpop.f32.mrf.mxu0
        %v2879 = vadd.f32 0.0, %v2878
        %2880 = vmatmul.f32.gmra.mxu0 %v2769
        %v2881 = vpop.f32.mrf.mxu0
        %v2882 = vadd.f32 0.0, %v2881
        %2883 = vmatmul.f32.gmra.mxu0 %v2770
        %v2884 = vpop.f32.mrf.mxu0
        %v2885 = vadd.f32 0.0, %v2884
        %2886 = vmatmul.f32.gmra.mxu0 %v2771
        %v2887 = vpop.f32.mrf.mxu0
        %v2888 = vadd.f32 0.0, %v2887
        %2889 = vmatmul.f32.gmra.mxu0 %v2772
        %v2890 = vpop.f32.mrf.mxu0
        %v2891 = vadd.f32 0.0, %v2890
        %2892 = vmatmul.f32.gmra.mxu0 %v2773
        %v2893 = vpop.f32.mrf.mxu0
        %v2894 = vadd.f32 0.0, %v2893
        %2895 = vmatmul.f32.gmra.mxu0 %v2774
        %v2896 = vpop.f32.mrf.mxu0
        %v2897 = vadd.f32 0.0, %v2896
        %2898 = vmatmul.f32.gmra.mxu0 %v2775
        %v2899 = vpop.f32.mrf.mxu0
        %v2900 = vadd.f32 0.0, %v2899
        %2901 = vmatmul.f32.gmra.mxu0 %v2776
        %v2902 = vpop.f32.mrf.mxu0
        %v2903 = vadd.f32 0.0, %v2902
        %2904 = vmatmul.f32.gmra.mxu0 %v2777
        %v2905 = vpop.f32.mrf.mxu0
        %v2906 = vadd.f32 0.0, %v2905
        %2907 = vmatmul.f32.gmra.mxu0 %v2778
        %v2908 = vpop.f32.mrf.mxu0
        %v2909 = vadd.f32 0.0, %v2908
        %2910 = vmatmul.f32.gmra.mxu0 %v2779
        %v2911 = vpop.f32.mrf.mxu0
        %v2912 = vadd.f32 0.0, %v2911
        %2913 = vmatmul.f32.gmra.mxu0 %v2780
        %v2914 = vpop.f32.mrf.mxu0
        %v2915 = vadd.f32 0.0, %v2914
        %2916 = vmatmul.f32.gmra.mxu0 %v2781
        %v2917 = vpop.f32.mrf.mxu0
        %v2918 = vadd.f32 0.0, %v2917
        %2919 = vmatmul.f32.gmra.mxu0 %v2782
        %v2920 = vpop.f32.mrf.mxu0
        %v2921 = vadd.f32 0.0, %v2920
        %2922 = vmatmul.f32.gmra.mxu0 %v2783
        %v2923 = vpop.f32.mrf.mxu0
        %v2924 = vadd.f32 0.0, %v2923
        %2925 = vdwg.mxu0
        %v2926 = vadd.f32 %v2712, %v2819
        %v2927 = vadd.f32 %v2713, %v2822
        %v2928 = vadd.f32 %v2714, %v2825
        %v2929 = vadd.f32 %v2715, %v2828
        %v2930 = vadd.f32 %v2716, %v2831
        %v2931 = vadd.f32 %v2717, %v2834
        %v2932 = vadd.f32 %v2718, %v2837
        %v2933 = vadd.f32 %v2719, %v2840
        %v2934 = vadd.f32 %v2720, %v2843
        %v2935 = vadd.f32 %v2721, %v2846
        %v2936 = vadd.f32 %v2722, %v2849
        %v2937 = vadd.f32 %v2723, %v2852
        %v2938 = vadd.f32 %v2724, %v2855
        %v2939 = vadd.f32 %v2725, %v2858
        %v2940 = vadd.f32 %v2726, %v2861
        %v2941 = vadd.f32 %v2727, %v2864
        %v2942 = vadd.f32 %v2728, %v2867
        %v2943 = vadd.f32 %v2729, %v2870
        %v2944 = vadd.f32 %v2730, %v2873
        %v2945 = vadd.f32 %v2731, %v2876
        %v2946 = vadd.f32 %v2732, %v2879
        %v2947 = vadd.f32 %v2733, %v2882
        %v2948 = vadd.f32 %v2734, %v2885
        %v2949 = vadd.f32 %v2735, %v2888
        %v2950 = vadd.f32 %v2736, %v2891
        %v2951 = vadd.f32 %v2737, %v2894
        %v2952 = vadd.f32 %v2738, %v2897
        %v2953 = vadd.f32 %v2739, %v2900
        %v2954 = vadd.f32 %v2740, %v2903
        %v2955 = vadd.f32 %v2741, %v2906
        %v2956 = vadd.f32 %v2742, %v2909
        %v2957 = vadd.f32 %v2743, %v2912
        %v2958 = vadd.f32 %v2744, %v2915
        %v2959 = vadd.f32 %v2745, %v2918
        %v2960 = vadd.f32 %v2746, %v2921
        %v2961 = vadd.f32 %v2747, %v2924
        %v2962 = vld [vmem:[%s239 + $0x25] sm:$0xff]
        %v2963 = vld [vmem:[%s239 + $0x2d] sm:$0xff]
        %v2964 = vld [vmem:[%s239 + $0x35] sm:$0xff]
        %v2965 = vld [vmem:[%s239 + $0x3d] sm:$0xff]
        %v2966 = vld [vmem:[%s239 + $0x45] sm:$0xff]
        %v2967 = vld [vmem:[%s239 + $0x4d] sm:$0xff]
        %v2968 = vld [vmem:[%s239 + $0x55] sm:$0xff]
        %v2969 = vld [vmem:[%s239 + $0x5d] sm:$0xff]
        %v2970 = vld [vmem:[%s239 + $0x65] sm:$0xff]
        %v2971 = vld [vmem:[%s239 + $0x6d] sm:$0xff]
        %v2972 = vld [vmem:[%s239 + $0x75] sm:$0xff]
        %v2973 = vld [vmem:[%s239 + $0x7d] sm:$0xff]
        %v2974 = vld [vmem:[%s239 + $0x85] sm:$0xff]
        %v2975 = vld [vmem:[%s239 + $0x8d] sm:$0xff]
        %v2976 = vld [vmem:[%s239 + $0x95] sm:$0xff]
        %v2977 = vld [vmem:[%s239 + $0x9d] sm:$0xff]
        %v2978 = vld [vmem:[%s239 + $0xa5] sm:$0xff]
        %v2979 = vld [vmem:[%s239 + $0xad] sm:$0xff]
        %v2980 = vld [vmem:[%s239 + $0xb5] sm:$0xff]
        %v2981 = vld [vmem:[%s239 + $0xbd] sm:$0xff]
        %v2982 = vld [vmem:[%s239 + $0xc5] sm:$0xff]
        %v2983 = vld [vmem:[%s239 + $0xcd] sm:$0xff]
        %v2984 = vld [vmem:[%s239 + $0xd5] sm:$0xff]
        %v2985 = vld [vmem:[%s239 + $0xdd] sm:$0xff]
        %v2986 = vld [vmem:[%s239 + $0xe5] sm:$0xff]
        %v2987 = vld [vmem:[%s239 + $0xed] sm:$0xff]
        %v2988 = vld [vmem:[%s239 + $0xf5] sm:$0xff]
        %v2989 = vld [vmem:[%s239 + $0xfd] sm:$0xff]
        %v2990 = vld [vmem:[%s239 + $0x105] sm:$0xff]
        %v2991 = vld [vmem:[%s239 + $0x10d] sm:$0xff]
        %v2992 = vld [vmem:[%s239 + $0x115] sm:$0xff]
        %v2993 = vld [vmem:[%s239 + $0x11d] sm:$0xff]
        %v2994 = vld [vmem:[%s239 + $0x125] sm:$0xff]
        %v2995 = vld [vmem:[%s239 + $0x12d] sm:$0xff]
        %v2996 = vld [vmem:[%s239 + $0x135] sm:$0xff]
        %v2997 = vld [vmem:[%s239 + $0x13d] sm:$0xff]
        %s2998 = scalar_lea.vmem %s1, 896
        %v2999 = vld [vmem:[%s2998] sm:$0xff]
        %v3000 = vld [vmem:[%s2998 + $0x8] sm:$0xff]
        %v3001 = vld [vmem:[%s2998 + $0x10] sm:$0xff]
        %v3002 = vld [vmem:[%s2998 + $0x18] sm:$0xff]
        %v3003 = vld [vmem:[%s2998 + $0x20] sm:$0xff]
        %v3004 = vld [vmem:[%s2998 + $0x28] sm:$0xff]
        %v3005 = vld [vmem:[%s2998 + $0x30] sm:$0xff]
        %v3006 = vld [vmem:[%s2998 + $0x38] sm:$0xff]
        %v3007 = vld [vmem:[%s2998 + $0x40] sm:$0xff]
        %v3008 = vld [vmem:[%s2998 + $0x48] sm:$0xff]
        %v3009 = vld [vmem:[%s2998 + $0x50] sm:$0xff]
        %v3010 = vld [vmem:[%s2998 + $0x58] sm:$0xff]
        %v3011 = vld [vmem:[%s2998 + $0x60] sm:$0xff]
        %v3012 = vld [vmem:[%s2998 + $0x68] sm:$0xff]
        %v3013 = vld [vmem:[%s2998 + $0x70] sm:$0xff]
        %v3014 = vld [vmem:[%s2998 + $0x78] sm:$0xff]
        %3015 = vmatpush.msra.mxu0 %v3014
        %3016 = vmatpush.msra.mxu0 %v3013
        %3017 = vmatpush.msra.mxu0 %v3012
        %3018 = vmatpush.msra.mxu0 %v3011
        %3019 = vmatpush.msra.mxu0 %v3010
        %3020 = vmatpush.msra.mxu0 %v3009
        %3021 = vmatpush.msra.mxu0 %v3008
        %3022 = vmatpush.msra.mxu0 %v3007
        %3023 = vmatpush.msra.mxu0 %v3006
        %3024 = vmatpush.msra.mxu0 %v3005
        %3025 = vmatpush.msra.mxu0 %v3004
        %3026 = vmatpush.msra.mxu0 %v3003
        %3027 = vmatpush.msra.mxu0 %v3002
        %3028 = vmatpush.msra.mxu0 %v3001
        %3029 = vmatpush.msra.mxu0 %v3000
        %3030 = vmatpush.msra.mxu0 %v2999
        %3031 = vmatmul.f32.gmra.mxu0 %v2962
        %v3032 = vpop.f32.mrf.mxu0
        %v3033 = vadd.f32 0.0, %v3032
        %3034 = vmatmul.f32.gmra.mxu0 %v2963
        %v3035 = vpop.f32.mrf.mxu0
        %v3036 = vadd.f32 0.0, %v3035
        %3037 = vmatmul.f32.gmra.mxu0 %v2964
        %v3038 = vpop.f32.mrf.mxu0
        %v3039 = vadd.f32 0.0, %v3038
        %3040 = vmatmul.f32.gmra.mxu0 %v2965
        %v3041 = vpop.f32.mrf.mxu0
        %v3042 = vadd.f32 0.0, %v3041
        %3043 = vmatmul.f32.gmra.mxu0 %v2966
        %v3044 = vpop.f32.mrf.mxu0
        %v3045 = vadd.f32 0.0, %v3044
        %3046 = vmatmul.f32.gmra.mxu0 %v2967
        %v3047 = vpop.f32.mrf.mxu0
        %v3048 = vadd.f32 0.0, %v3047
        %3049 = vmatmul.f32.gmra.mxu0 %v2968
        %v3050 = vpop.f32.mrf.mxu0
        %v3051 = vadd.f32 0.0, %v3050
        %3052 = vmatmul.f32.gmra.mxu0 %v2969
        %v3053 = vpop.f32.mrf.mxu0
        %v3054 = vadd.f32 0.0, %v3053
        %3055 = vmatmul.f32.gmra.mxu0 %v2970
        %v3056 = vpop.f32.mrf.mxu0
        %v3057 = vadd.f32 0.0, %v3056
        %3058 = vmatmul.f32.gmra.mxu0 %v2971
        %v3059 = vpop.f32.mrf.mxu0
        %v3060 = vadd.f32 0.0, %v3059
        %3061 = vmatmul.f32.gmra.mxu0 %v2972
        %v3062 = vpop.f32.mrf.mxu0
        %v3063 = vadd.f32 0.0, %v3062
        %3064 = vmatmul.f32.gmra.mxu0 %v2973
        %v3065 = vpop.f32.mrf.mxu0
        %v3066 = vadd.f32 0.0, %v3065
        %3067 = vmatmul.f32.gmra.mxu0 %v2974
        %v3068 = vpop.f32.mrf.mxu0
        %v3069 = vadd.f32 0.0, %v3068
        %3070 = vmatmul.f32.gmra.mxu0 %v2975
        %v3071 = vpop.f32.mrf.mxu0
        %v3072 = vadd.f32 0.0, %v3071
        %3073 = vmatmul.f32.gmra.mxu0 %v2976
        %v3074 = vpop.f32.mrf.mxu0
        %v3075 = vadd.f32 0.0, %v3074
        %3076 = vmatmul.f32.gmra.mxu0 %v2977
        %v3077 = vpop.f32.mrf.mxu0
        %v3078 = vadd.f32 0.0, %v3077
        %3079 = vmatmul.f32.gmra.mxu0 %v2978
        %v3080 = vpop.f32.mrf.mxu0
        %v3081 = vadd.f32 0.0, %v3080
        %3082 = vmatmul.f32.gmra.mxu0 %v2979
        %v3083 = vpop.f32.mrf.mxu0
        %v3084 = vadd.f32 0.0, %v3083
        %3085 = vmatmul.f32.gmra.mxu0 %v2980
        %v3086 = vpop.f32.mrf.mxu0
        %v3087 = vadd.f32 0.0, %v3086
        %3088 = vmatmul.f32.gmra.mxu0 %v2981
        %v3089 = vpop.f32.mrf.mxu0
        %v3090 = vadd.f32 0.0, %v3089
        %3091 = vmatmul.f32.gmra.mxu0 %v2982
        %v3092 = vpop.f32.mrf.mxu0
        %v3093 = vadd.f32 0.0, %v3092
        %3094 = vmatmul.f32.gmra.mxu0 %v2983
        %v3095 = vpop.f32.mrf.mxu0
        %v3096 = vadd.f32 0.0, %v3095
        %3097 = vmatmul.f32.gmra.mxu0 %v2984
        %v3098 = vpop.f32.mrf.mxu0
        %v3099 = vadd.f32 0.0, %v3098
        %3100 = vmatmul.f32.gmra.mxu0 %v2985
        %v3101 = vpop.f32.mrf.mxu0
        %v3102 = vadd.f32 0.0, %v3101
        %3103 = vmatmul.f32.gmra.mxu0 %v2986
        %v3104 = vpop.f32.mrf.mxu0
        %v3105 = vadd.f32 0.0, %v3104
        %3106 = vmatmul.f32.gmra.mxu0 %v2987
        %v3107 = vpop.f32.mrf.mxu0
        %v3108 = vadd.f32 0.0, %v3107
        %3109 = vmatmul.f32.gmra.mxu0 %v2988
        %v3110 = vpop.f32.mrf.mxu0
        %v3111 = vadd.f32 0.0, %v3110
        %3112 = vmatmul.f32.gmra.mxu0 %v2989
        %v3113 = vpop.f32.mrf.mxu0
        %v3114 = vadd.f32 0.0, %v3113
        %3115 = vmatmul.f32.gmra.mxu0 %v2990
        %v3116 = vpop.f32.mrf.mxu0
        %v3117 = vadd.f32 0.0, %v3116
        %3118 = vmatmul.f32.gmra.mxu0 %v2991
        %v3119 = vpop.f32.mrf.mxu0
        %v3120 = vadd.f32 0.0, %v3119
        %3121 = vmatmul.f32.gmra.mxu0 %v2992
        %v3122 = vpop.f32.mrf.mxu0
        %v3123 = vadd.f32 0.0, %v3122
        %3124 = vmatmul.f32.gmra.mxu0 %v2993
        %v3125 = vpop.f32.mrf.mxu0
        %v3126 = vadd.f32 0.0, %v3125
        %3127 = vmatmul.f32.gmra.mxu0 %v2994
        %v3128 = vpop.f32.mrf.mxu0
        %v3129 = vadd.f32 0.0, %v3128
        %3130 = vmatmul.f32.gmra.mxu0 %v2995
        %v3131 = vpop.f32.mrf.mxu0
        %v3132 = vadd.f32 0.0, %v3131
        %3133 = vmatmul.f32.gmra.mxu0 %v2996
        %v3134 = vpop.f32.mrf.mxu0
        %v3135 = vadd.f32 0.0, %v3134
        %3136 = vmatmul.f32.gmra.mxu0 %v2997
        %v3137 = vpop.f32.mrf.mxu0
        %v3138 = vadd.f32 0.0, %v3137
        %3139 = vdwg.mxu0
        %v3140 = vadd.f32 %v2926, %v3033
        %v3141 = vadd.f32 %v2927, %v3036
        %v3142 = vadd.f32 %v2928, %v3039
        %v3143 = vadd.f32 %v2929, %v3042
        %v3144 = vadd.f32 %v2930, %v3045
        %v3145 = vadd.f32 %v2931, %v3048
        %v3146 = vadd.f32 %v2932, %v3051
        %v3147 = vadd.f32 %v2933, %v3054
        %v3148 = vadd.f32 %v2934, %v3057
        %v3149 = vadd.f32 %v2935, %v3060
        %v3150 = vadd.f32 %v2936, %v3063
        %v3151 = vadd.f32 %v2937, %v3066
        %v3152 = vadd.f32 %v2938, %v3069
        %v3153 = vadd.f32 %v2939, %v3072
        %v3154 = vadd.f32 %v2940, %v3075
        %v3155 = vadd.f32 %v2941, %v3078
        %v3156 = vadd.f32 %v2942, %v3081
        %v3157 = vadd.f32 %v2943, %v3084
        %v3158 = vadd.f32 %v2944, %v3087
        %v3159 = vadd.f32 %v2945, %v3090
        %v3160 = vadd.f32 %v2946, %v3093
        %v3161 = vadd.f32 %v2947, %v3096
        %v3162 = vadd.f32 %v2948, %v3099
        %v3163 = vadd.f32 %v2949, %v3102
        %v3164 = vadd.f32 %v2950, %v3105
        %v3165 = vadd.f32 %v2951, %v3108
        %v3166 = vadd.f32 %v2952, %v3111
        %v3167 = vadd.f32 %v2953, %v3114
        %v3168 = vadd.f32 %v2954, %v3117
        %v3169 = vadd.f32 %v2955, %v3120
        %v3170 = vadd.f32 %v2956, %v3123
        %v3171 = vadd.f32 %v2957, %v3126
        %v3172 = vadd.f32 %v2958, %v3129
        %v3173 = vadd.f32 %v2959, %v3132
        %v3174 = vadd.f32 %v2960, %v3135
        %v3175 = vadd.f32 %v2961, %v3138
        %v3176 = vld [vmem:[%s239 + $0x26] sm:$0xff]
        %v3177 = vld [vmem:[%s239 + $0x2e] sm:$0xff]
        %v3178 = vld [vmem:[%s239 + $0x36] sm:$0xff]
        %v3179 = vld [vmem:[%s239 + $0x3e] sm:$0xff]
        %v3180 = vld [vmem:[%s239 + $0x46] sm:$0xff]
        %v3181 = vld [vmem:[%s239 + $0x4e] sm:$0xff]
        %v3182 = vld [vmem:[%s239 + $0x56] sm:$0xff]
        %v3183 = vld [vmem:[%s239 + $0x5e] sm:$0xff]
        %v3184 = vld [vmem:[%s239 + $0x66] sm:$0xff]
        %v3185 = vld [vmem:[%s239 + $0x6e] sm:$0xff]
        %v3186 = vld [vmem:[%s239 + $0x76] sm:$0xff]
        %v3187 = vld [vmem:[%s239 + $0x7e] sm:$0xff]
        %v3188 = vld [vmem:[%s239 + $0x86] sm:$0xff]
        %v3189 = vld [vmem:[%s239 + $0x8e] sm:$0xff]
        %v3190 = vld [vmem:[%s239 + $0x96] sm:$0xff]
        %v3191 = vld [vmem:[%s239 + $0x9e] sm:$0xff]
        %v3192 = vld [vmem:[%s239 + $0xa6] sm:$0xff]
        %v3193 = vld [vmem:[%s239 + $0xae] sm:$0xff]
        %v3194 = vld [vmem:[%s239 + $0xb6] sm:$0xff]
        %v3195 = vld [vmem:[%s239 + $0xbe] sm:$0xff]
        %v3196 = vld [vmem:[%s239 + $0xc6] sm:$0xff]
        %v3197 = vld [vmem:[%s239 + $0xce] sm:$0xff]
        %v3198 = vld [vmem:[%s239 + $0xd6] sm:$0xff]
        %v3199 = vld [vmem:[%s239 + $0xde] sm:$0xff]
        %v3200 = vld [vmem:[%s239 + $0xe6] sm:$0xff]
        %v3201 = vld [vmem:[%s239 + $0xee] sm:$0xff]
        %v3202 = vld [vmem:[%s239 + $0xf6] sm:$0xff]
        %v3203 = vld [vmem:[%s239 + $0xfe] sm:$0xff]
        %v3204 = vld [vmem:[%s239 + $0x106] sm:$0xff]
        %v3205 = vld [vmem:[%s239 + $0x10e] sm:$0xff]
        %v3206 = vld [vmem:[%s239 + $0x116] sm:$0xff]
        %v3207 = vld [vmem:[%s239 + $0x11e] sm:$0xff]
        %v3208 = vld [vmem:[%s239 + $0x126] sm:$0xff]
        %v3209 = vld [vmem:[%s239 + $0x12e] sm:$0xff]
        %v3210 = vld [vmem:[%s239 + $0x136] sm:$0xff]
        %v3211 = vld [vmem:[%s239 + $0x13e] sm:$0xff]
        %s3212 = scalar_lea.vmem %s1, 1024
        %v3213 = vld [vmem:[%s3212] sm:$0xff]
        %v3214 = vld [vmem:[%s3212 + $0x8] sm:$0xff]
        %v3215 = vld [vmem:[%s3212 + $0x10] sm:$0xff]
        %v3216 = vld [vmem:[%s3212 + $0x18] sm:$0xff]
        %v3217 = vld [vmem:[%s3212 + $0x20] sm:$0xff]
        %v3218 = vld [vmem:[%s3212 + $0x28] sm:$0xff]
        %v3219 = vld [vmem:[%s3212 + $0x30] sm:$0xff]
        %v3220 = vld [vmem:[%s3212 + $0x38] sm:$0xff]
        %v3221 = vld [vmem:[%s3212 + $0x40] sm:$0xff]
        %v3222 = vld [vmem:[%s3212 + $0x48] sm:$0xff]
        %v3223 = vld [vmem:[%s3212 + $0x50] sm:$0xff]
        %v3224 = vld [vmem:[%s3212 + $0x58] sm:$0xff]
        %v3225 = vld [vmem:[%s3212 + $0x60] sm:$0xff]
        %v3226 = vld [vmem:[%s3212 + $0x68] sm:$0xff]
        %v3227 = vld [vmem:[%s3212 + $0x70] sm:$0xff]
        %v3228 = vld [vmem:[%s3212 + $0x78] sm:$0xff]
        %3229 = vmatpush.msra.mxu0 %v3228
        %3230 = vmatpush.msra.mxu0 %v3227
        %3231 = vmatpush.msra.mxu0 %v3226
        %3232 = vmatpush.msra.mxu0 %v3225
        %3233 = vmatpush.msra.mxu0 %v3224
        %3234 = vmatpush.msra.mxu0 %v3223
        %3235 = vmatpush.msra.mxu0 %v3222
        %3236 = vmatpush.msra.mxu0 %v3221
        %3237 = vmatpush.msra.mxu0 %v3220
        %3238 = vmatpush.msra.mxu0 %v3219
        %3239 = vmatpush.msra.mxu0 %v3218
        %3240 = vmatpush.msra.mxu0 %v3217
        %3241 = vmatpush.msra.mxu0 %v3216
        %3242 = vmatpush.msra.mxu0 %v3215
        %3243 = vmatpush.msra.mxu0 %v3214
        %3244 = vmatpush.msra.mxu0 %v3213
        %3245 = vmatmul.f32.gmra.mxu0 %v3176
        %v3246 = vpop.f32.mrf.mxu0
        %v3247 = vadd.f32 0.0, %v3246
        %3248 = vmatmul.f32.gmra.mxu0 %v3177
        %v3249 = vpop.f32.mrf.mxu0
        %v3250 = vadd.f32 0.0, %v3249
        %3251 = vmatmul.f32.gmra.mxu0 %v3178
        %v3252 = vpop.f32.mrf.mxu0
        %v3253 = vadd.f32 0.0, %v3252
        %3254 = vmatmul.f32.gmra.mxu0 %v3179
        %v3255 = vpop.f32.mrf.mxu0
        %v3256 = vadd.f32 0.0, %v3255
        %3257 = vmatmul.f32.gmra.mxu0 %v3180
        %v3258 = vpop.f32.mrf.mxu0
        %v3259 = vadd.f32 0.0, %v3258
        %3260 = vmatmul.f32.gmra.mxu0 %v3181
        %v3261 = vpop.f32.mrf.mxu0
        %v3262 = vadd.f32 0.0, %v3261
        %3263 = vmatmul.f32.gmra.mxu0 %v3182
        %v3264 = vpop.f32.mrf.mxu0
        %v3265 = vadd.f32 0.0, %v3264
        %3266 = vmatmul.f32.gmra.mxu0 %v3183
        %v3267 = vpop.f32.mrf.mxu0
        %v3268 = vadd.f32 0.0, %v3267
        %3269 = vmatmul.f32.gmra.mxu0 %v3184
        %v3270 = vpop.f32.mrf.mxu0
        %v3271 = vadd.f32 0.0, %v3270
        %3272 = vmatmul.f32.gmra.mxu0 %v3185
        %v3273 = vpop.f32.mrf.mxu0
        %v3274 = vadd.f32 0.0, %v3273
        %3275 = vmatmul.f32.gmra.mxu0 %v3186
        %v3276 = vpop.f32.mrf.mxu0
        %v3277 = vadd.f32 0.0, %v3276
        %3278 = vmatmul.f32.gmra.mxu0 %v3187
        %v3279 = vpop.f32.mrf.mxu0
        %v3280 = vadd.f32 0.0, %v3279
        %3281 = vmatmul.f32.gmra.mxu0 %v3188
        %v3282 = vpop.f32.mrf.mxu0
        %v3283 = vadd.f32 0.0, %v3282
        %3284 = vmatmul.f32.gmra.mxu0 %v3189
        %v3285 = vpop.f32.mrf.mxu0
        %v3286 = vadd.f32 0.0, %v3285
        %3287 = vmatmul.f32.gmra.mxu0 %v3190
        %v3288 = vpop.f32.mrf.mxu0
        %v3289 = vadd.f32 0.0, %v3288
        %3290 = vmatmul.f32.gmra.mxu0 %v3191
        %v3291 = vpop.f32.mrf.mxu0
        %v3292 = vadd.f32 0.0, %v3291
        %3293 = vmatmul.f32.gmra.mxu0 %v3192
        %v3294 = vpop.f32.mrf.mxu0
        %v3295 = vadd.f32 0.0, %v3294
        %3296 = vmatmul.f32.gmra.mxu0 %v3193
        %v3297 = vpop.f32.mrf.mxu0
        %v3298 = vadd.f32 0.0, %v3297
        %3299 = vmatmul.f32.gmra.mxu0 %v3194
        %v3300 = vpop.f32.mrf.mxu0
        %v3301 = vadd.f32 0.0, %v3300
        %3302 = vmatmul.f32.gmra.mxu0 %v3195
        %v3303 = vpop.f32.mrf.mxu0
        %v3304 = vadd.f32 0.0, %v3303
        %3305 = vmatmul.f32.gmra.mxu0 %v3196
        %v3306 = vpop.f32.mrf.mxu0
        %v3307 = vadd.f32 0.0, %v3306
        %3308 = vmatmul.f32.gmra.mxu0 %v3197
        %v3309 = vpop.f32.mrf.mxu0
        %v3310 = vadd.f32 0.0, %v3309
        %3311 = vmatmul.f32.gmra.mxu0 %v3198
        %v3312 = vpop.f32.mrf.mxu0
        %v3313 = vadd.f32 0.0, %v3312
        %3314 = vmatmul.f32.gmra.mxu0 %v3199
        %v3315 = vpop.f32.mrf.mxu0
        %v3316 = vadd.f32 0.0, %v3315
        %3317 = vmatmul.f32.gmra.mxu0 %v3200
        %v3318 = vpop.f32.mrf.mxu0
        %v3319 = vadd.f32 0.0, %v3318
        %3320 = vmatmul.f32.gmra.mxu0 %v3201
        %v3321 = vpop.f32.mrf.mxu0
        %v3322 = vadd.f32 0.0, %v3321
        %3323 = vmatmul.f32.gmra.mxu0 %v3202
        %v3324 = vpop.f32.mrf.mxu0
        %v3325 = vadd.f32 0.0, %v3324
        %3326 = vmatmul.f32.gmra.mxu0 %v3203
        %v3327 = vpop.f32.mrf.mxu0
        %v3328 = vadd.f32 0.0, %v3327
        %3329 = vmatmul.f32.gmra.mxu0 %v3204
        %v3330 = vpop.f32.mrf.mxu0
        %v3331 = vadd.f32 0.0, %v3330
        %3332 = vmatmul.f32.gmra.mxu0 %v3205
        %v3333 = vpop.f32.mrf.mxu0
        %v3334 = vadd.f32 0.0, %v3333
        %3335 = vmatmul.f32.gmra.mxu0 %v3206
        %v3336 = vpop.f32.mrf.mxu0
        %v3337 = vadd.f32 0.0, %v3336
        %3338 = vmatmul.f32.gmra.mxu0 %v3207
        %v3339 = vpop.f32.mrf.mxu0
        %v3340 = vadd.f32 0.0, %v3339
        %3341 = vmatmul.f32.gmra.mxu0 %v3208
        %v3342 = vpop.f32.mrf.mxu0
        %v3343 = vadd.f32 0.0, %v3342
        %3344 = vmatmul.f32.gmra.mxu0 %v3209
        %v3345 = vpop.f32.mrf.mxu0
        %v3346 = vadd.f32 0.0, %v3345
        %3347 = vmatmul.f32.gmra.mxu0 %v3210
        %v3348 = vpop.f32.mrf.mxu0
        %v3349 = vadd.f32 0.0, %v3348
        %3350 = vmatmul.f32.gmra.mxu0 %v3211
        %v3351 = vpop.f32.mrf.mxu0
        %v3352 = vadd.f32 0.0, %v3351
        %3353 = vdwg.mxu0
        %v3354 = vadd.f32 %v3140, %v3247
        %v3355 = vadd.f32 %v3141, %v3250
        %v3356 = vadd.f32 %v3142, %v3253
        %v3357 = vadd.f32 %v3143, %v3256
        %v3358 = vadd.f32 %v3144, %v3259
        %v3359 = vadd.f32 %v3145, %v3262
        %v3360 = vadd.f32 %v3146, %v3265
        %v3361 = vadd.f32 %v3147, %v3268
        %v3362 = vadd.f32 %v3148, %v3271
        %v3363 = vadd.f32 %v3149, %v3274
        %v3364 = vadd.f32 %v3150, %v3277
        %v3365 = vadd.f32 %v3151, %v3280
        %v3366 = vadd.f32 %v3152, %v3283
        %v3367 = vadd.f32 %v3153, %v3286
        %v3368 = vadd.f32 %v3154, %v3289
        %v3369 = vadd.f32 %v3155, %v3292
        %v3370 = vadd.f32 %v3156, %v3295
        %v3371 = vadd.f32 %v3157, %v3298
        %v3372 = vadd.f32 %v3158, %v3301
        %v3373 = vadd.f32 %v3159, %v3304
        %v3374 = vadd.f32 %v3160, %v3307
        %v3375 = vadd.f32 %v3161, %v3310
        %v3376 = vadd.f32 %v3162, %v3313
        %v3377 = vadd.f32 %v3163, %v3316
        %v3378 = vadd.f32 %v3164, %v3319
        %v3379 = vadd.f32 %v3165, %v3322
        %v3380 = vadd.f32 %v3166, %v3325
        %v3381 = vadd.f32 %v3167, %v3328
        %v3382 = vadd.f32 %v3168, %v3331
        %v3383 = vadd.f32 %v3169, %v3334
        %v3384 = vadd.f32 %v3170, %v3337
        %v3385 = vadd.f32 %v3171, %v3340
        %v3386 = vadd.f32 %v3172, %v3343
        %v3387 = vadd.f32 %v3173, %v3346
        %v3388 = vadd.f32 %v3174, %v3349
        %v3389 = vadd.f32 %v3175, %v3352
        %v3390 = vld [vmem:[%s2] sm:$0x1]
        %v3392 = vperm.slane %v3390, 0
        %v3394 = vadd.f32 %v3354, %v3392
        %v3395 = vadd.f32 %v3355, %v3392
        %v3396 = vadd.f32 %v3356, %v3392
        %v3397 = vadd.f32 %v3357, %v3392
        %v3398 = vadd.f32 %v3358, %v3392
        %v3399 = vadd.f32 %v3359, %v3392
        %v3400 = vadd.f32 %v3360, %v3392
        %v3401 = vadd.f32 %v3361, %v3392
        %v3402 = vadd.f32 %v3362, %v3392
        %v3403 = vadd.f32 %v3363, %v3392
        %v3404 = vadd.f32 %v3364, %v3392
        %v3405 = vadd.f32 %v3365, %v3392
        %v3406 = vadd.f32 %v3366, %v3392
        %v3407 = vadd.f32 %v3367, %v3392
        %v3408 = vadd.f32 %v3368, %v3392
        %v3409 = vadd.f32 %v3369, %v3392
        %v3410 = vadd.f32 %v3370, %v3392
        %v3411 = vadd.f32 %v3371, %v3392
        %v3412 = vadd.f32 %v3372, %v3392
        %v3413 = vadd.f32 %v3373, %v3392
        %v3414 = vadd.f32 %v3374, %v3392
        %v3415 = vadd.f32 %v3375, %v3392
        %v3416 = vadd.f32 %v3376, %v3392
        %v3417 = vadd.f32 %v3377, %v3392
        %v3418 = vadd.f32 %v3378, %v3392
        %v3419 = vadd.f32 %v3379, %v3392
        %v3420 = vadd.f32 %v3380, %v3392
        %v3421 = vadd.f32 %v3381, %v3392
        %v3422 = vadd.f32 %v3382, %v3392
        %v3423 = vadd.f32 %v3383, %v3392
        %v3424 = vadd.f32 %v3384, %v3392
        %v3425 = vadd.f32 %v3385, %v3392
        %v3426 = vadd.f32 %v3386, %v3392
        %v3427 = vadd.f32 %v3387, %v3392
        %v3428 = vadd.f32 %v3388, %v3392
        %v3429 = vadd.f32 %v3389, %v3392
        %v3430 = vsel %vm1501, 1, 0
        %v3431 = vsel %vm1502, 1, 0
        %v3432 = vsel %vm1503, 1, 0
        %v3433 = vsel %vm1504, 1, 0
        %v3434 = vsel %vm1505, 1, 0
        %v3435 = vsel %vm1506, 1, 0
        %v3436 = vsel %vm1507, 1, 0
        %v3437 = vsel %vm1508, 1, 0
        %v3438 = vsel %vm1509, 1, 0
        %v3439 = vsel %vm1510, 1, 0
        %v3440 = vsel %vm1511, 1, 0
        %v3441 = vsel %vm1512, 1, 0
        %v3442 = vsel %vm1513, 1, 0
        %v3443 = vsel %vm1514, 1, 0
        %v3444 = vsel %vm1515, 1, 0
        %v3445 = vsel %vm1516, 1, 0
        %v3446 = vsel %vm1517, 1, 0
        %v3447 = vsel %vm1518, 1, 0
        %v3448 = vsel %vm1519, 1, 0
        %v3449 = vsel %vm1520, 1, 0
        %v3450 = vsel %vm1521, 1, 0
        %v3451 = vsel %vm1522, 1, 0
        %v3452 = vsel %vm1523, 1, 0
        %v3453 = vsel %vm1524, 1, 0
        %v3454 = vsel %vm1525, 1, 0
        %v3455 = vsel %vm1526, 1, 0
        %v3456 = vsel %vm1527, 1, 0
        %v3457 = vsel %vm1528, 1, 0
        %v3458 = vsel %vm1529, 1, 0
        %v3459 = vsel %vm1530, 1, 0
        %v3460 = vsel %vm1531, 1, 0
        %v3461 = vsel %vm1532, 1, 0
        %v3462 = vsel %vm1533, 1, 0
        %v3463 = vsel %vm1534, 1, 0
        %v3464 = vsel %vm1535, 1, 0
        %v3465 = vsel %vm1536, 1, 0
        %vm3466 = vcmp.eq.s32.totalorder %v3430, 1
        %vm3467 = vcmp.eq.s32.totalorder %v3431, 1
        %vm3468 = vcmp.eq.s32.totalorder %v3432, 1
        %vm3469 = vcmp.eq.s32.totalorder %v3433, 1
        %vm3470 = vcmp.eq.s32.totalorder %v3434, 1
        %vm3471 = vcmp.eq.s32.totalorder %v3435, 1
        %vm3472 = vcmp.eq.s32.totalorder %v3436, 1
        %vm3473 = vcmp.eq.s32.totalorder %v3437, 1
        %vm3474 = vcmp.eq.s32.totalorder %v3438, 1
        %vm3475 = vcmp.eq.s32.totalorder %v3439, 1
        %vm3476 = vcmp.eq.s32.totalorder %v3440, 1
        %vm3477 = vcmp.eq.s32.totalorder %v3441, 1
        %vm3478 = vcmp.eq.s32.totalorder %v3442, 1
        %vm3479 = vcmp.eq.s32.totalorder %v3443, 1
        %vm3480 = vcmp.eq.s32.totalorder %v3444, 1
        %vm3481 = vcmp.eq.s32.totalorder %v3445, 1
        %vm3482 = vcmp.eq.s32.totalorder %v3446, 1
        %vm3483 = vcmp.eq.s32.totalorder %v3447, 1
        %vm3484 = vcmp.eq.s32.totalorder %v3448, 1
        %vm3485 = vcmp.eq.s32.totalorder %v3449, 1
        %vm3486 = vcmp.eq.s32.totalorder %v3450, 1
        %vm3487 = vcmp.eq.s32.totalorder %v3451, 1
        %vm3488 = vcmp.eq.s32.totalorder %v3452, 1
        %vm3489 = vcmp.eq.s32.totalorder %v3453, 1
        %vm3490 = vcmp.eq.s32.totalorder %v3454, 1
        %vm3491 = vcmp.eq.s32.totalorder %v3455, 1
        %vm3492 = vcmp.eq.s32.totalorder %v3456, 1
        %vm3493 = vcmp.eq.s32.totalorder %v3457, 1
        %vm3494 = vcmp.eq.s32.totalorder %v3458, 1
        %vm3495 = vcmp.eq.s32.totalorder %v3459, 1
        %vm3496 = vcmp.eq.s32.totalorder %v3460, 1
        %vm3497 = vcmp.eq.s32.totalorder %v3461, 1
        %vm3498 = vcmp.eq.s32.totalorder %v3462, 1
        %vm3499 = vcmp.eq.s32.totalorder %v3463, 1
        %vm3500 = vcmp.eq.s32.totalorder %v3464, 1
        %vm3501 = vcmp.eq.s32.totalorder %v3465, 1
        %v3502 = vsel %vm3466, %v3394, 0.0
        %v3503 = vsel %vm3467, %v3395, 0.0
        %v3504 = vsel %vm3468, %v3396, 0.0
        %v3505 = vsel %vm3469, %v3397, 0.0
        %v3506 = vsel %vm3470, %v3398, 0.0
        %v3507 = vsel %vm3471, %v3399, 0.0
        %v3508 = vsel %vm3472, %v3400, 0.0
        %v3509 = vsel %vm3473, %v3401, 0.0
        %v3510 = vsel %vm3474, %v3402, 0.0
        %v3511 = vsel %vm3475, %v3403, 0.0
        %v3512 = vsel %vm3476, %v3404, 0.0
        %v3513 = vsel %vm3477, %v3405, 0.0
        %v3514 = vsel %vm3478, %v3406, 0.0
        %v3515 = vsel %vm3479, %v3407, 0.0
        %v3516 = vsel %vm3480, %v3408, 0.0
        %v3517 = vsel %vm3481, %v3409, 0.0
        %v3518 = vsel %vm3482, %v3410, 0.0
        %v3519 = vsel %vm3483, %v3411, 0.0
        %v3520 = vsel %vm3484, %v3412, 0.0
        %v3521 = vsel %vm3485, %v3413, 0.0
        %v3522 = vsel %vm3486, %v3414, 0.0
        %v3523 = vsel %vm3487, %v3415, 0.0
        %v3524 = vsel %vm3488, %v3416, 0.0
        %v3525 = vsel %vm3489, %v3417, 0.0
        %v3526 = vsel %vm3490, %v3418, 0.0
        %v3527 = vsel %vm3491, %v3419, 0.0
        %v3528 = vsel %vm3492, %v3420, 0.0
        %v3529 = vsel %vm3493, %v3421, 0.0
        %v3530 = vsel %vm3494, %v3422, 0.0
        %v3531 = vsel %vm3495, %v3423, 0.0
        %v3532 = vsel %vm3496, %v3424, 0.0
        %v3533 = vsel %vm3497, %v3425, 0.0
        %v3534 = vsel %vm3498, %v3426, 0.0
        %v3535 = vsel %vm3499, %v3427, 0.0
        %v3536 = vsel %vm3500, %v3428, 0.0
        %v3537 = vsel %vm3501, %v3429, 0.0
        %v3538 = vadd.f32 %v3502, %v3503
        %v3539 = vadd.f32 %v3538, %v3504
        %v3540 = vadd.f32 %v3539, %v3505
        %v3541 = vadd.f32 %v3540, %v3506
        %v3542 = vadd.f32 %v3541, %v3507
        %v3543 = vadd.f32 %v3542, %v3508
        %v3544 = vadd.f32 %v3543, %v3509
        %v3545 = vadd.f32 %v3544, %v3510
        %v3546 = vadd.f32 %v3545, %v3511
        %v3547 = vadd.f32 %v3546, %v3512
        %v3548 = vadd.f32 %v3547, %v3513
        %v3549 = vadd.f32 %v3548, %v3514
        %v3550 = vadd.f32 %v3549, %v3515
        %v3551 = vadd.f32 %v3550, %v3516
        %v3552 = vadd.f32 %v3551, %v3517
        %v3553 = vadd.f32 %v3552, %v3518
        %v3554 = vadd.f32 %v3553, %v3519
        %v3555 = vadd.f32 %v3554, %v3520
        %v3556 = vadd.f32 %v3555, %v3521
        %v3557 = vadd.f32 %v3556, %v3522
        %v3558 = vadd.f32 %v3557, %v3523
        %v3559 = vadd.f32 %v3558, %v3524
        %v3560 = vadd.f32 %v3559, %v3525
        %v3561 = vadd.f32 %v3560, %v3526
        %v3562 = vadd.f32 %v3561, %v3527
        %v3563 = vadd.f32 %v3562, %v3528
        %v3564 = vadd.f32 %v3563, %v3529
        %v3565 = vadd.f32 %v3564, %v3530
        %v3566 = vadd.f32 %v3565, %v3531
        %v3567 = vadd.f32 %v3566, %v3532
        %v3568 = vadd.f32 %v3567, %v3533
        %v3569 = vadd.f32 %v3568, %v3534
        %v3570 = vadd.f32 %v3569, %v3535
        %v3571 = vadd.f32 %v3570, %v3536
        %v3572 = vadd.f32 %v3571, %v3537
        %v3573 = vrot.slane %v3572, 4
        %v3574 = vadd.f32 %v3572, %v3573
        %v3575 = vrot.slane %v3574, 2
        %v3576 = vadd.f32 %v3574, %v3575
        %v3577 = vrot.slane %v3576, 1
        %v3578 = vadd.f32 %v3576, %v3577
        %v3579 = vmul.f32 %v3502, %v3502
        %v3580 = vmul.f32 %v3503, %v3503
        %v3581 = vmul.f32 %v3504, %v3504
        %v3582 = vmul.f32 %v3505, %v3505
        %v3583 = vmul.f32 %v3506, %v3506
        %v3584 = vmul.f32 %v3507, %v3507
        %v3585 = vmul.f32 %v3508, %v3508
        %v3586 = vmul.f32 %v3509, %v3509
        %v3587 = vmul.f32 %v3510, %v3510
        %v3588 = vmul.f32 %v3511, %v3511
        %v3589 = vmul.f32 %v3512, %v3512
        %v3590 = vmul.f32 %v3513, %v3513
        %v3591 = vmul.f32 %v3514, %v3514
        %v3592 = vmul.f32 %v3515, %v3515
        %v3593 = vmul.f32 %v3516, %v3516
        %v3594 = vmul.f32 %v3517, %v3517
        %v3595 = vmul.f32 %v3518, %v3518
        %v3596 = vmul.f32 %v3519, %v3519
        %v3597 = vmul.f32 %v3520, %v3520
        %v3598 = vmul.f32 %v3521, %v3521
        %v3599 = vmul.f32 %v3522, %v3522
        %v3600 = vmul.f32 %v3523, %v3523
        %v3601 = vmul.f32 %v3524, %v3524
        %v3602 = vmul.f32 %v3525, %v3525
        %v3603 = vmul.f32 %v3526, %v3526
        %v3604 = vmul.f32 %v3527, %v3527
        %v3605 = vmul.f32 %v3528, %v3528
        %v3606 = vmul.f32 %v3529, %v3529
        %v3607 = vmul.f32 %v3530, %v3530
        %v3608 = vmul.f32 %v3531, %v3531
        %v3609 = vmul.f32 %v3532, %v3532
        %v3610 = vmul.f32 %v3533, %v3533
        %v3611 = vmul.f32 %v3534, %v3534
        %v3612 = vmul.f32 %v3535, %v3535
        %v3613 = vmul.f32 %v3536, %v3536
        %v3614 = vmul.f32 %v3537, %v3537
        %v3615 = vadd.f32 %v3579, %v3580
        %v3616 = vadd.f32 %v3615, %v3581
        %v3617 = vadd.f32 %v3616, %v3582
        %v3618 = vadd.f32 %v3617, %v3583
        %v3619 = vadd.f32 %v3618, %v3584
        %v3620 = vadd.f32 %v3619, %v3585
        %v3621 = vadd.f32 %v3620, %v3586
        %v3622 = vadd.f32 %v3621, %v3587
        %v3623 = vadd.f32 %v3622, %v3588
        %v3624 = vadd.f32 %v3623, %v3589
        %v3625 = vadd.f32 %v3624, %v3590
        %v3626 = vadd.f32 %v3625, %v3591
        %v3627 = vadd.f32 %v3626, %v3592
        %v3628 = vadd.f32 %v3627, %v3593
        %v3629 = vadd.f32 %v3628, %v3594
        %v3630 = vadd.f32 %v3629, %v3595
        %v3631 = vadd.f32 %v3630, %v3596
        %v3632 = vadd.f32 %v3631, %v3597
        %v3633 = vadd.f32 %v3632, %v3598
        %v3634 = vadd.f32 %v3633, %v3599
        %v3635 = vadd.f32 %v3634, %v3600
        %v3636 = vadd.f32 %v3635, %v3601
        %v3637 = vadd.f32 %v3636, %v3602
        %v3638 = vadd.f32 %v3637, %v3603
        %v3639 = vadd.f32 %v3638, %v3604
        %v3640 = vadd.f32 %v3639, %v3605
        %v3641 = vadd.f32 %v3640, %v3606
        %v3642 = vadd.f32 %v3641, %v3607
        %v3643 = vadd.f32 %v3642, %v3608
        %v3644 = vadd.f32 %v3643, %v3609
        %v3645 = vadd.f32 %v3644, %v3610
        %v3646 = vadd.f32 %v3645, %v3611
        %v3647 = vadd.f32 %v3646, %v3612
        %v3648 = vadd.f32 %v3647, %v3613
        %v3649 = vadd.f32 %v3648, %v3614
        %v3650 = vrot.slane %v3649, 4
        %v3651 = vadd.f32 %v3649, %v3650
        %v3652 = vrot.slane %v3651, 2
        %v3653 = vadd.f32 %v3651, %v3652
        %v3654 = vrot.slane %v3653, 1
        %v3655 = vadd.f32 %v3653, %v3654
        %v3656 = vmul.f32 %v3578, 0.00390625
        %v3657 = vmul.f32 %v3655, 0.00390625
        %v3658 = vmul.f32 %v3656, %v3656
        %v3659 = vsub.f32 %v3657, %v3658
        %v3660 = vmax.f32 %v3659, 0.0
        %v3661 = vsub.f32 %v3394, %v3656
        %v3662 = vsub.f32 %v3395, %v3656
        %v3663 = vsub.f32 %v3396, %v3656
        %v3664 = vsub.f32 %v3397, %v3656
        %v3665 = vsub.f32 %v3398, %v3656
        %v3666 = vsub.f32 %v3399, %v3656
        %v3667 = vsub.f32 %v3400, %v3656
        %v3668 = vsub.f32 %v3401, %v3656
        %v3669 = vsub.f32 %v3402, %v3656
        %v3670 = vsub.f32 %v3403, %v3656
        %v3671 = vsub.f32 %v3404, %v3656
        %v3672 = vsub.f32 %v3405, %v3656
        %v3673 = vsub.f32 %v3406, %v3656
        %v3674 = vsub.f32 %v3407, %v3656
        %v3675 = vsub.f32 %v3408, %v3656
        %v3676 = vsub.f32 %v3409, %v3656
        %v3677 = vsub.f32 %v3410, %v3656
        %v3678 = vsub.f32 %v3411, %v3656
        %v3679 = vsub.f32 %v3412, %v3656
        %v3680 = vsub.f32 %v3413, %v3656
        %v3681 = vsub.f32 %v3414, %v3656
        %v3682 = vsub.f32 %v3415, %v3656
        %v3683 = vsub.f32 %v3416, %v3656
        %v3684 = vsub.f32 %v3417, %v3656
        %v3685 = vsub.f32 %v3418, %v3656
        %v3686 = vsub.f32 %v3419, %v3656
        %v3687 = vsub.f32 %v3420, %v3656
        %v3688 = vsub.f32 %v3421, %v3656
        %v3689 = vsub.f32 %v3422, %v3656
        %v3690 = vsub.f32 %v3423, %v3656
        %v3691 = vsub.f32 %v3424, %v3656
        %v3692 = vsub.f32 %v3425, %v3656
        %v3693 = vsub.f32 %v3426, %v3656
        %v3694 = vsub.f32 %v3427, %v3656
        %v3695 = vsub.f32 %v3428, %v3656
        %v3696 = vsub.f32 %v3429, %v3656
        %v3697 = vadd.f32 %v3660, 1e-05
        %v3698 = vrsqrt.pop %v3697
        %v3699 = vmul.f32 %v3698, %v3697
        %v3700 = vmul.f32 %v3699, %v3698
        %v3701 = vmul.f32 0.5, %v3700
        %v3702 = vsub.f32 1.5, %v3701
        %v3703 = vmul.f32 %v3698, %v3702
        %vm3704 = vweird.f32 %v3697
        %vm3705 = vweird.f32 %v3698
        %vm3706 = vmor %vm3704, %vm3705
        %v3707 = vsel %vm3706, %v3698, %v3703
        %v3708 = vmul.f32 %v3661, %v3707
        %v3709 = vmul.f32 %v3662, %v3707
        %v3710 = vmul.f32 %v3663, %v3707
        %v3711 = vmul.f32 %v3664, %v3707
        %v3712 = vmul.f32 %v3665, %v3707
        %v3713 = vmul.f32 %v3666, %v3707
        %v3714 = vmul.f32 %v3667, %v3707
        %v3715 = vmul.f32 %v3668, %v3707
        %v3716 = vmul.f32 %v3669, %v3707
        %v3717 = vmul.f32 %v3670, %v3707
        %v3718 = vmul.f32 %v3671, %v3707
        %v3719 = vmul.f32 %v3672, %v3707
        %v3720 = vmul.f32 %v3673, %v3707
        %v3721 = vmul.f32 %v3674, %v3707
        %v3722 = vmul.f32 %v3675, %v3707
        %v3723 = vmul.f32 %v3676, %v3707
        %v3724 = vmul.f32 %v3677, %v3707
        %v3725 = vmul.f32 %v3678, %v3707
        %v3726 = vmul.f32 %v3679, %v3707
        %v3727 = vmul.f32 %v3680, %v3707
        %v3728 = vmul.f32 %v3681, %v3707
        %v3729 = vmul.f32 %v3682, %v3707
        %v3730 = vmul.f32 %v3683, %v3707
        %v3731 = vmul.f32 %v3684, %v3707
        %v3732 = vmul.f32 %v3685, %v3707
        %v3733 = vmul.f32 %v3686, %v3707
        %v3734 = vmul.f32 %v3687, %v3707
        %v3735 = vmul.f32 %v3688, %v3707
        %v3736 = vmul.f32 %v3689, %v3707
        %v3737 = vmul.f32 %v3690, %v3707
        %v3738 = vmul.f32 %v3691, %v3707
        %v3739 = vmul.f32 %v3692, %v3707
        %v3740 = vmul.f32 %v3693, %v3707
        %v3741 = vmul.f32 %v3694, %v3707
        %v3742 = vmul.f32 %v3695, %v3707
        %v3743 = vmul.f32 %v3696, %v3707
        %v3744 = vmax.f32 %v3708, 0.0
        %v3745 = vmax.f32 %v3709, 0.0
        %v3746 = vmax.f32 %v3710, 0.0
        %v3747 = vmax.f32 %v3711, 0.0
        %v3748 = vmax.f32 %v3712, 0.0
        %v3749 = vmax.f32 %v3713, 0.0
        %v3750 = vmax.f32 %v3714, 0.0
        %v3751 = vmax.f32 %v3715, 0.0
        %v3752 = vmax.f32 %v3716, 0.0
        %v3753 = vmax.f32 %v3717, 0.0
        %v3754 = vmax.f32 %v3718, 0.0
        %v3755 = vmax.f32 %v3719, 0.0
        %v3756 = vmax.f32 %v3720, 0.0
        %v3757 = vmax.f32 %v3721, 0.0
        %v3758 = vmax.f32 %v3722, 0.0
        %v3759 = vmax.f32 %v3723, 0.0
        %v3760 = vmax.f32 %v3724, 0.0
        %v3761 = vmax.f32 %v3725, 0.0
        %v3762 = vmax.f32 %v3726, 0.0
        %v3763 = vmax.f32 %v3727, 0.0
        %v3764 = vmax.f32 %v3728, 0.0
        %v3765 = vmax.f32 %v3729, 0.0
        %v3766 = vmax.f32 %v3730, 0.0
        %v3767 = vmax.f32 %v3731, 0.0
        %v3768 = vmax.f32 %v3732, 0.0
        %v3769 = vmax.f32 %v3733, 0.0
        %v3770 = vmax.f32 %v3734, 0.0
        %v3771 = vmax.f32 %v3735, 0.0
        %v3772 = vmax.f32 %v3736, 0.0
        %v3773 = vmax.f32 %v3737, 0.0
        %v3774 = vmax.f32 %v3738, 0.0
        %v3775 = vmax.f32 %v3739, 0.0
        %v3776 = vmax.f32 %v3740, 0.0
        %v3777 = vmax.f32 %v3741, 0.0
        %v3778 = vmax.f32 %v3742, 0.0
        %v3779 = vmax.f32 %v3743, 0.0
        %3780 = vst [vmem:[#allocation2 + $0x13] sm:$0xff] %v3744
        %3781 = vst [vmem:[#allocation2 + $0x1b] sm:$0xff] %v3745
        %3782 = vst [vmem:[#allocation2 + $0x23] sm:$0xff] %v3746
        %3783 = vst [vmem:[#allocation2 + $0x2b] sm:$0xff] %v3747
        %3784 = vst [vmem:[#allocation2 + $0x33] sm:$0xff] %v3748
        %3785 = vst [vmem:[#allocation2 + $0x3b] sm:$0xff] %v3749
        %3786 = vst [vmem:[#allocation2 + $0x43] sm:$0xff] %v3750
        %3787 = vst [vmem:[#allocation2 + $0x4b] sm:$0xff] %v3751
        %3788 = vst [vmem:[#allocation2 + $0x53] sm:$0xff] %v3752
        %3789 = vst [vmem:[#allocation2 + $0x5b] sm:$0xff] %v3753
        %3790 = vst [vmem:[#allocation2 + $0x63] sm:$0xff] %v3754
        %3791 = vst [vmem:[#allocation2 + $0x6b] sm:$0xff] %v3755
        %3792 = vst [vmem:[#allocation2 + $0x73] sm:$0xff] %v3756
        %3793 = vst [vmem:[#allocation2 + $0x7b] sm:$0xff] %v3757
        %3794 = vst [vmem:[#allocation2 + $0x83] sm:$0xff] %v3758
        %3795 = vst [vmem:[#allocation2 + $0x8b] sm:$0xff] %v3759
        %3796 = vst [vmem:[#allocation2 + $0x93] sm:$0xff] %v3760
        %3797 = vst [vmem:[#allocation2 + $0x9b] sm:$0xff] %v3761
        %3798 = vst [vmem:[#allocation2 + $0xa3] sm:$0xff] %v3762
        %3799 = vst [vmem:[#allocation2 + $0xab] sm:$0xff] %v3763
        %3800 = vst [vmem:[#allocation2 + $0xb3] sm:$0xff] %v3764
        %3801 = vst [vmem:[#allocation2 + $0xbb] sm:$0xff] %v3765
        %3802 = vst [vmem:[#allocation2 + $0xc3] sm:$0xff] %v3766
        %3803 = vst [vmem:[#allocation2 + $0xcb] sm:$0xff] %v3767
        %3804 = vst [vmem:[#allocation2 + $0xd3] sm:$0xff] %v3768
        %3805 = vst [vmem:[#allocation2 + $0xdb] sm:$0xff] %v3769
        %3806 = vst [vmem:[#allocation2 + $0xe3] sm:$0xff] %v3770
        %3807 = vst [vmem:[#allocation2 + $0xeb] sm:$0xff] %v3771
        %3808 = vst [vmem:[#allocation2 + $0xf3] sm:$0xff] %v3772
        %3809 = vst [vmem:[#allocation2 + $0xfb] sm:$0xff] %v3773
        %3810 = vst [vmem:[#allocation2 + $0x103] sm:$0xff] %v3774
        %3811 = vst [vmem:[#allocation2 + $0x10b] sm:$0xff] %v3775
        %3812 = vst [vmem:[#allocation2 + $0x113] sm:$0xff] %v3776
        %3813 = vst [vmem:[#allocation2 + $0x11b] sm:$0xff] %v3777
        %3814 = vst [vmem:[#allocation2 + $0x123] sm:$0xff] %v3778
        %3815 = vst [vmem:[#allocation2 + $0x12b] sm:$0xff] %v3779
        %v3816 = vld [vmem:[#allocation2 + $0x12] sm:$0xff]
        %v3817 = vld [vmem:[#allocation2 + $0x1a] sm:$0xff]
        %v3818 = vld [vmem:[#allocation2 + $0x22] sm:$0xff]
        %v3819 = vld [vmem:[#allocation2 + $0x2a] sm:$0xff]
        %v3820 = vld [vmem:[#allocation2 + $0x32] sm:$0xff]
        %v3821 = vld [vmem:[#allocation2 + $0x3a] sm:$0xff]
        %v3822 = vld [vmem:[#allocation2 + $0x42] sm:$0xff]
        %v3823 = vld [vmem:[#allocation2 + $0x4a] sm:$0xff]
        %v3824 = vld [vmem:[#allocation2 + $0x52] sm:$0xff]
        %v3825 = vld [vmem:[#allocation2 + $0x5a] sm:$0xff]
        %v3826 = vld [vmem:[#allocation2 + $0x62] sm:$0xff]
        %v3827 = vld [vmem:[#allocation2 + $0x6a] sm:$0xff]
        %v3828 = vld [vmem:[#allocation2 + $0x72] sm:$0xff]
        %v3829 = vld [vmem:[#allocation2 + $0x7a] sm:$0xff]
        %v3830 = vld [vmem:[#allocation2 + $0x82] sm:$0xff]
        %v3831 = vld [vmem:[#allocation2 + $0x8a] sm:$0xff]
        %v3832 = vld [vmem:[#allocation2 + $0x92] sm:$0xff]
        %v3833 = vld [vmem:[#allocation2 + $0x9a] sm:$0xff]
        %v3834 = vld [vmem:[#allocation2 + $0xa2] sm:$0xff]
        %v3835 = vld [vmem:[#allocation2 + $0xaa] sm:$0xff]
        %v3836 = vld [vmem:[#allocation2 + $0xb2] sm:$0xff]
        %v3837 = vld [vmem:[#allocation2 + $0xba] sm:$0xff]
        %v3838 = vld [vmem:[#allocation2 + $0xc2] sm:$0xff]
        %v3839 = vld [vmem:[#allocation2 + $0xca] sm:$0xff]
        %v3840 = vld [vmem:[#allocation2 + $0xd2] sm:$0xff]
        %v3841 = vld [vmem:[#allocation2 + $0xda] sm:$0xff]
        %v3842 = vld [vmem:[#allocation2 + $0xe2] sm:$0xff]
        %v3843 = vld [vmem:[#allocation2 + $0xea] sm:$0xff]
        %v3844 = vld [vmem:[#allocation2 + $0xf2] sm:$0xff]
        %v3845 = vld [vmem:[#allocation2 + $0xfa] sm:$0xff]
        %v3846 = vld [vmem:[#allocation2 + $0x102] sm:$0xff]
        %v3847 = vld [vmem:[#allocation2 + $0x10a] sm:$0xff]
        %v3848 = vld [vmem:[#allocation2 + $0x112] sm:$0xff]
        %v3849 = vld [vmem:[#allocation2 + $0x11a] sm:$0xff]
        %v3850 = vld [vmem:[#allocation2 + $0x122] sm:$0xff]
        %v3851 = vld [vmem:[#allocation2 + $0x12a] sm:$0xff]
        %v3852 = vld [vmem:[#allocation2 + $0x14] sm:$0xff]
        %v3853 = vld [vmem:[#allocation2 + $0x1c] sm:$0xff]
        %v3854 = vld [vmem:[#allocation2 + $0x24] sm:$0xff]
        %v3855 = vld [vmem:[#allocation2 + $0x2c] sm:$0xff]
        %v3856 = vld [vmem:[#allocation2 + $0x34] sm:$0xff]
        %v3857 = vld [vmem:[#allocation2 + $0x3c] sm:$0xff]
        %v3858 = vld [vmem:[#allocation2 + $0x44] sm:$0xff]
        %v3859 = vld [vmem:[#allocation2 + $0x4c] sm:$0xff]
        %v3860 = vld [vmem:[#allocation2 + $0x54] sm:$0xff]
        %v3861 = vld [vmem:[#allocation2 + $0x5c] sm:$0xff]
        %v3862 = vld [vmem:[#allocation2 + $0x64] sm:$0xff]
        %v3863 = vld [vmem:[#allocation2 + $0x6c] sm:$0xff]
        %v3864 = vld [vmem:[#allocation2 + $0x74] sm:$0xff]
        %v3865 = vld [vmem:[#allocation2 + $0x7c] sm:$0xff]
        %v3866 = vld [vmem:[#allocation2 + $0x84] sm:$0xff]
        %v3867 = vld [vmem:[#allocation2 + $0x8c] sm:$0xff]
        %v3868 = vld [vmem:[#allocation2 + $0x94] sm:$0xff]
        %v3869 = vld [vmem:[#allocation2 + $0x9c] sm:$0xff]
        %v3870 = vld [vmem:[#allocation2 + $0xa4] sm:$0xff]
        %v3871 = vld [vmem:[#allocation2 + $0xac] sm:$0xff]
        %v3872 = vld [vmem:[#allocation2 + $0xb4] sm:$0xff]
        %v3873 = vld [vmem:[#allocation2 + $0xbc] sm:$0xff]
        %v3874 = vld [vmem:[#allocation2 + $0xc4] sm:$0xff]
        %v3875 = vld [vmem:[#allocation2 + $0xcc] sm:$0xff]
        %v3876 = vld [vmem:[#allocation2 + $0xd4] sm:$0xff]
        %v3877 = vld [vmem:[#allocation2 + $0xdc] sm:$0xff]
        %v3878 = vld [vmem:[#allocation2 + $0xe4] sm:$0xff]
        %v3879 = vld [vmem:[#allocation2 + $0xec] sm:$0xff]
        %v3880 = vld [vmem:[#allocation2 + $0xf4] sm:$0xff]
        %v3881 = vld [vmem:[#allocation2 + $0xfc] sm:$0xff]
        %v3882 = vld [vmem:[#allocation2 + $0x104] sm:$0xff]
        %v3883 = vld [vmem:[#allocation2 + $0x10c] sm:$0xff]
        %v3884 = vld [vmem:[#allocation2 + $0x114] sm:$0xff]
        %v3885 = vld [vmem:[#allocation2 + $0x11c] sm:$0xff]
        %v3886 = vld [vmem:[#allocation2 + $0x124] sm:$0xff]
        %v3887 = vld [vmem:[#allocation2 + $0x12c] sm:$0xff]
        %v3888 = vld [vmem:[#allocation2 + $0x10] sm:$0xff]
        %v3889 = vld [vmem:[#allocation2 + $0x18] sm:$0xff]
        %v3890 = vld [vmem:[#allocation2 + $0x20] sm:$0xff]
        %v3891 = vld [vmem:[#allocation2 + $0x28] sm:$0xff]
        %v3892 = vld [vmem:[#allocation2 + $0x30] sm:$0xff]
        %v3893 = vld [vmem:[#allocation2 + $0x38] sm:$0xff]
        %v3894 = vld [vmem:[#allocation2 + $0x40] sm:$0xff]
        %v3895 = vld [vmem:[#allocation2 + $0x48] sm:$0xff]
        %v3896 = vld [vmem:[#allocation2 + $0x50] sm:$0xff]
        %v3897 = vld [vmem:[#allocation2 + $0x58] sm:$0xff]
        %v3898 = vld [vmem:[#allocation2 + $0x60] sm:$0xff]
        %v3899 = vld [vmem:[#allocation2 + $0x68] sm:$0xff]
        %v3900 = vld [vmem:[#allocation2 + $0x70] sm:$0xff]
        %v3901 = vld [vmem:[#allocation2 + $0x78] sm:$0xff]
        %v3902 = vld [vmem:[#allocation2 + $0x80] sm:$0xff]
        %v3903 = vld [vmem:[#allocation2 + $0x88] sm:$0xff]
        %v3904 = vld [vmem:[#allocation2 + $0x90] sm:$0xff]
        %v3905 = vld [vmem:[#allocation2 + $0x98] sm:$0xff]
        %v3906 = vld [vmem:[#allocation2 + $0xa0] sm:$0xff]
        %v3907 = vld [vmem:[#allocation2 + $0xa8] sm:$0xff]
        %v3908 = vld [vmem:[#allocation2 + $0xb0] sm:$0xff]
        %v3909 = vld [vmem:[#allocation2 + $0xb8] sm:$0xff]
        %v3910 = vld [vmem:[#allocation2 + $0xc0] sm:$0xff]
        %v3911 = vld [vmem:[#allocation2 + $0xc8] sm:$0xff]
        %v3912 = vld [vmem:[#allocation2 + $0xd0] sm:$0xff]
        %v3913 = vld [vmem:[#allocation2 + $0xd8] sm:$0xff]
        %v3914 = vld [vmem:[#allocation2 + $0xe0] sm:$0xff]
        %v3915 = vld [vmem:[#allocation2 + $0xe8] sm:$0xff]
        %v3916 = vld [vmem:[#allocation2 + $0xf0] sm:$0xff]
        %v3917 = vld [vmem:[#allocation2 + $0xf8] sm:$0xff]
        %v3918 = vld [vmem:[#allocation2 + $0x100] sm:$0xff]
        %v3919 = vld [vmem:[#allocation2 + $0x108] sm:$0xff]
        %v3920 = vld [vmem:[#allocation2 + $0x110] sm:$0xff]
        %v3921 = vld [vmem:[#allocation2 + $0x118] sm:$0xff]
        %v3922 = vld [vmem:[#allocation2 + $0x120] sm:$0xff]
        %v3923 = vld [vmem:[#allocation2 + $0x128] sm:$0xff]
        %vm3924 = vcmp.eq.s32.totalorder %v1465, 0
        %vm3925 = vcmp.eq.s32.totalorder %v1466, 0
        %vm3926 = vcmp.eq.s32.totalorder %v1467, 0
        %vm3927 = vcmp.eq.s32.totalorder %v1468, 0
        %vm3928 = vcmp.eq.s32.totalorder %v1469, 0
        %vm3929 = vcmp.eq.s32.totalorder %v1470, 0
        %vm3930 = vcmp.eq.s32.totalorder %v1471, 0
        %vm3931 = vcmp.eq.s32.totalorder %v1472, 0
        %vm3932 = vcmp.eq.s32.totalorder %v1473, 0
        %vm3933 = vcmp.eq.s32.totalorder %v1474, 0
        %vm3934 = vcmp.eq.s32.totalorder %v1475, 0
        %vm3935 = vcmp.eq.s32.totalorder %v1476, 0
        %vm3936 = vcmp.eq.s32.totalorder %v1477, 0
        %vm3937 = vcmp.eq.s32.totalorder %v1478, 0
        %vm3938 = vcmp.eq.s32.totalorder %v1479, 0
        %vm3939 = vcmp.eq.s32.totalorder %v1480, 0
        %vm3940 = vcmp.eq.s32.totalorder %v1481, 0
        %vm3941 = vcmp.eq.s32.totalorder %v1482, 0
        %vm3942 = vcmp.eq.s32.totalorder %v1483, 0
        %vm3943 = vcmp.eq.s32.totalorder %v1484, 0
        %vm3944 = vcmp.eq.s32.totalorder %v1485, 0
        %vm3945 = vcmp.eq.s32.totalorder %v1486, 0
        %vm3946 = vcmp.eq.s32.totalorder %v1487, 0
        %vm3947 = vcmp.eq.s32.totalorder %v1488, 0
        %vm3948 = vcmp.eq.s32.totalorder %v1489, 0
        %vm3949 = vcmp.eq.s32.totalorder %v1490, 0
        %vm3950 = vcmp.eq.s32.totalorder %v1491, 0
        %vm3951 = vcmp.eq.s32.totalorder %v1492, 0
        %vm3952 = vcmp.eq.s32.totalorder %v1493, 0
        %vm3953 = vcmp.eq.s32.totalorder %v1494, 0
        %vm3954 = vcmp.eq.s32.totalorder %v1495, 0
        %vm3955 = vcmp.eq.s32.totalorder %v1496, 0
        %vm3956 = vcmp.eq.s32.totalorder %v1497, 0
        %vm3957 = vcmp.eq.s32.totalorder %v1498, 0
        %vm3958 = vcmp.eq.s32.totalorder %v1499, 0
        %vm3959 = vcmp.eq.s32.totalorder %v1500, 0
        %vm3960 = vcmp.eq.s32.totalorder %v1465, 17
        %vm3961 = vcmp.eq.s32.totalorder %v1466, 17
        %vm3962 = vcmp.eq.s32.totalorder %v1467, 17
        %vm3963 = vcmp.eq.s32.totalorder %v1468, 17
        %vm3964 = vcmp.eq.s32.totalorder %v1469, 17
        %vm3965 = vcmp.eq.s32.totalorder %v1470, 17
        %vm3966 = vcmp.eq.s32.totalorder %v1471, 17
        %vm3967 = vcmp.eq.s32.totalorder %v1472, 17
        %vm3968 = vcmp.eq.s32.totalorder %v1473, 17
        %vm3969 = vcmp.eq.s32.totalorder %v1474, 17
        %vm3970 = vcmp.eq.s32.totalorder %v1475, 17
        %vm3971 = vcmp.eq.s32.totalorder %v1476, 17
        %vm3972 = vcmp.eq.s32.totalorder %v1477, 17
        %vm3973 = vcmp.eq.s32.totalorder %v1478, 17
        %vm3974 = vcmp.eq.s32.totalorder %v1479, 17
        %vm3975 = vcmp.eq.s32.totalorder %v1480, 17
        %vm3976 = vcmp.eq.s32.totalorder %v1481, 17
        %vm3977 = vcmp.eq.s32.totalorder %v1482, 17
        %vm3978 = vcmp.eq.s32.totalorder %v1483, 17
        %vm3979 = vcmp.eq.s32.totalorder %v1484, 17
        %vm3980 = vcmp.eq.s32.totalorder %v1485, 17
        %vm3981 = vcmp.eq.s32.totalorder %v1486, 17
        %vm3982 = vcmp.eq.s32.totalorder %v1487, 17
        %vm3983 = vcmp.eq.s32.totalorder %v1488, 17
        %vm3984 = vcmp.eq.s32.totalorder %v1489, 17
        %vm3985 = vcmp.eq.s32.totalorder %v1490, 17
        %vm3986 = vcmp.eq.s32.totalorder %v1491, 17
        %vm3987 = vcmp.eq.s32.totalorder %v1492, 17
        %vm3988 = vcmp.eq.s32.totalorder %v1493, 17
        %vm3989 = vcmp.eq.s32.totalorder %v1494, 17
        %vm3990 = vcmp.eq.s32.totalorder %v1495, 17
        %vm3991 = vcmp.eq.s32.totalorder %v1496, 17
        %vm3992 = vcmp.eq.s32.totalorder %v1497, 17
        %vm3993 = vcmp.eq.s32.totalorder %v1498, 17
        %vm3994 = vcmp.eq.s32.totalorder %v1499, 17
        %vm3995 = vcmp.eq.s32.totalorder %v1500, 17
        %v3996 = vsel %vm3960, 1, 0
        %v3997 = vsel %vm3961, 1, 0
        %v3998 = vsel %vm3962, 1, 0
        %v3999 = vsel %vm3963, 1, 0
        %v4000 = vsel %vm3964, 1, 0
        %v4001 = vsel %vm3965, 1, 0
        %v4002 = vsel %vm3966, 1, 0
        %v4003 = vsel %vm3967, 1, 0
        %v4004 = vsel %vm3968, 1, 0
        %v4005 = vsel %vm3969, 1, 0
        %v4006 = vsel %vm3970, 1, 0
        %v4007 = vsel %vm3971, 1, 0
        %v4008 = vsel %vm3972, 1, 0
        %v4009 = vsel %vm3973, 1, 0
        %v4010 = vsel %vm3974, 1, 0
        %v4011 = vsel %vm3975, 1, 0
        %v4012 = vsel %vm3976, 1, 0
        %v4013 = vsel %vm3977, 1, 0
        %v4014 = vsel %vm3978, 1, 0
        %v4015 = vsel %vm3979, 1, 0
        %v4016 = vsel %vm3980, 1, 0
        %v4017 = vsel %vm3981, 1, 0
        %v4018 = vsel %vm3982, 1, 0
        %v4019 = vsel %vm3983, 1, 0
        %v4020 = vsel %vm3984, 1, 0
        %v4021 = vsel %vm3985, 1, 0
        %v4022 = vsel %vm3986, 1, 0
        %v4023 = vsel %vm3987, 1, 0
        %v4024 = vsel %vm3988, 1, 0
        %v4025 = vsel %vm3989, 1, 0
        %v4026 = vsel %vm3990, 1, 0
        %v4027 = vsel %vm3991, 1, 0
        %v4028 = vsel %vm3992, 1, 0
        %v4029 = vsel %vm3993, 1, 0
        %v4030 = vsel %vm3994, 1, 0
        %v4031 = vsel %vm3995, 1, 0
        %vm4032 = vcmp.eq.s32.totalorder %v3996, 1
        %vm4033 = vcmp.eq.s32.totalorder %v3997, 1
        %vm4034 = vcmp.eq.s32.totalorder %v3998, 1
        %vm4035 = vcmp.eq.s32.totalorder %v3999, 1
        %vm4036 = vcmp.eq.s32.totalorder %v4000, 1
        %vm4037 = vcmp.eq.s32.totalorder %v4001, 1
        %vm4038 = vcmp.eq.s32.totalorder %v4002, 1
        %vm4039 = vcmp.eq.s32.totalorder %v4003, 1
        %vm4040 = vcmp.eq.s32.totalorder %v4004, 1
        %vm4041 = vcmp.eq.s32.totalorder %v4005, 1
        %vm4042 = vcmp.eq.s32.totalorder %v4006, 1
        %vm4043 = vcmp.eq.s32.totalorder %v4007, 1
        %vm4044 = vcmp.eq.s32.totalorder %v4008, 1
        %vm4045 = vcmp.eq.s32.totalorder %v4009, 1
        %vm4046 = vcmp.eq.s32.totalorder %v4010, 1
        %vm4047 = vcmp.eq.s32.totalorder %v4011, 1
        %vm4048 = vcmp.eq.s32.totalorder %v4012, 1
        %vm4049 = vcmp.eq.s32.totalorder %v4013, 1
        %vm4050 = vcmp.eq.s32.totalorder %v4014, 1
        %vm4051 = vcmp.eq.s32.totalorder %v4015, 1
        %vm4052 = vcmp.eq.s32.totalorder %v4016, 1
        %vm4053 = vcmp.eq.s32.totalorder %v4017, 1
        %vm4054 = vcmp.eq.s32.totalorder %v4018, 1
        %vm4055 = vcmp.eq.s32.totalorder %v4019, 1
        %vm4056 = vcmp.eq.s32.totalorder %v4020, 1
        %vm4057 = vcmp.eq.s32.totalorder %v4021, 1
        %vm4058 = vcmp.eq.s32.totalorder %v4022, 1
        %vm4059 = vcmp.eq.s32.totalorder %v4023, 1
        %vm4060 = vcmp.eq.s32.totalorder %v4024, 1
        %vm4061 = vcmp.eq.s32.totalorder %v4025, 1
        %vm4062 = vcmp.eq.s32.totalorder %v4026, 1
        %vm4063 = vcmp.eq.s32.totalorder %v4027, 1
        %vm4064 = vcmp.eq.s32.totalorder %v4028, 1
        %vm4065 = vcmp.eq.s32.totalorder %v4029, 1
        %vm4066 = vcmp.eq.s32.totalorder %v4030, 1
        %vm4067 = vcmp.eq.s32.totalorder %v4031, 1
        %v4068 = vsel %vm4032, %v3888, %v3816
        %v4069 = vsel %vm4033, %v3889, %v3817
        %v4070 = vsel %vm4034, %v3890, %v3818
        %v4071 = vsel %vm4035, %v3891, %v3819
        %v4072 = vsel %vm4036, %v3892, %v3820
        %v4073 = vsel %vm4037, %v3893, %v3821
        %v4074 = vsel %vm4038, %v3894, %v3822
        %v4075 = vsel %vm4039, %v3895, %v3823
        %v4076 = vsel %vm4040, %v3896, %v3824
        %v4077 = vsel %vm4041, %v3897, %v3825
        %v4078 = vsel %vm4042, %v3898, %v3826
        %v4079 = vsel %vm4043, %v3899, %v3827
        %v4080 = vsel %vm4044, %v3900, %v3828
        %v4081 = vsel %vm4045, %v3901, %v3829
        %v4082 = vsel %vm4046, %v3902, %v3830
        %v4083 = vsel %vm4047, %v3903, %v3831
        %v4084 = vsel %vm4048, %v3904, %v3832
        %v4085 = vsel %vm4049, %v3905, %v3833
        %v4086 = vsel %vm4050, %v3906, %v3834
        %v4087 = vsel %vm4051, %v3907, %v3835
        %v4088 = vsel %vm4052, %v3908, %v3836
        %v4089 = vsel %vm4053, %v3909, %v3837
        %v4090 = vsel %vm4054, %v3910, %v3838
        %v4091 = vsel %vm4055, %v3911, %v3839
        %v4092 = vsel %vm4056, %v3912, %v3840
        %v4093 = vsel %vm4057, %v3913, %v3841
        %v4094 = vsel %vm4058, %v3914, %v3842
        %v4095 = vsel %vm4059, %v3915, %v3843
        %v4096 = vsel %vm4060, %v3916, %v3844
        %v4097 = vsel %vm4061, %v3917, %v3845
        %v4098 = vsel %vm4062, %v3918, %v3846
        %v4099 = vsel %vm4063, %v3919, %v3847
        %v4100 = vsel %vm4064, %v3920, %v3848
        %v4101 = vsel %vm4065, %v3921, %v3849
        %v4102 = vsel %vm4066, %v3922, %v3850
        %v4103 = vsel %vm4067, %v3923, %v3851
        %v4104 = vsel %vm3924, 1, 0
        %v4105 = vsel %vm3925, 1, 0
        %v4106 = vsel %vm3926, 1, 0
        %v4107 = vsel %vm3927, 1, 0
        %v4108 = vsel %vm3928, 1, 0
        %v4109 = vsel %vm3929, 1, 0
        %v4110 = vsel %vm3930, 1, 0
        %v4111 = vsel %vm3931, 1, 0
        %v4112 = vsel %vm3932, 1, 0
        %v4113 = vsel %vm3933, 1, 0
        %v4114 = vsel %vm3934, 1, 0
        %v4115 = vsel %vm3935, 1, 0
        %v4116 = vsel %vm3936, 1, 0
        %v4117 = vsel %vm3937, 1, 0
        %v4118 = vsel %vm3938, 1, 0
        %v4119 = vsel %vm3939, 1, 0
        %v4120 = vsel %vm3940, 1, 0
        %v4121 = vsel %vm3941, 1, 0
        %v4122 = vsel %vm3942, 1, 0
        %v4123 = vsel %vm3943, 1, 0
        %v4124 = vsel %vm3944, 1, 0
        %v4125 = vsel %vm3945, 1, 0
        %v4126 = vsel %vm3946, 1, 0
        %v4127 = vsel %vm3947, 1, 0
        %v4128 = vsel %vm3948, 1, 0
        %v4129 = vsel %vm3949, 1, 0
        %v4130 = vsel %vm3950, 1, 0
        %v4131 = vsel %vm3951, 1, 0
        %v4132 = vsel %vm3952, 1, 0
        %v4133 = vsel %vm3953, 1, 0
        %v4134 = vsel %vm3954, 1, 0
        %v4135 = vsel %vm3955, 1, 0
        %v4136 = vsel %vm3956, 1, 0
        %v4137 = vsel %vm3957, 1, 0
        %v4138 = vsel %vm3958, 1, 0
        %v4139 = vsel %vm3959, 1, 0
        %vm4140 = vcmp.eq.s32.totalorder %v4104, 1
        %vm4141 = vcmp.eq.s32.totalorder %v4105, 1
        %vm4142 = vcmp.eq.s32.totalorder %v4106, 1
        %vm4143 = vcmp.eq.s32.totalorder %v4107, 1
        %vm4144 = vcmp.eq.s32.totalorder %v4108, 1
        %vm4145 = vcmp.eq.s32.totalorder %v4109, 1
        %vm4146 = vcmp.eq.s32.totalorder %v4110, 1
        %vm4147 = vcmp.eq.s32.totalorder %v4111, 1
        %vm4148 = vcmp.eq.s32.totalorder %v4112, 1
        %vm4149 = vcmp.eq.s32.totalorder %v4113, 1
        %vm4150 = vcmp.eq.s32.totalorder %v4114, 1
        %vm4151 = vcmp.eq.s32.totalorder %v4115, 1
        %vm4152 = vcmp.eq.s32.totalorder %v4116, 1
        %vm4153 = vcmp.eq.s32.totalorder %v4117, 1
        %vm4154 = vcmp.eq.s32.totalorder %v4118, 1
        %vm4155 = vcmp.eq.s32.totalorder %v4119, 1
        %vm4156 = vcmp.eq.s32.totalorder %v4120, 1
        %vm4157 = vcmp.eq.s32.totalorder %v4121, 1
        %vm4158 = vcmp.eq.s32.totalorder %v4122, 1
        %vm4159 = vcmp.eq.s32.totalorder %v4123, 1
        %vm4160 = vcmp.eq.s32.totalorder %v4124, 1
        %vm4161 = vcmp.eq.s32.totalorder %v4125, 1
        %vm4162 = vcmp.eq.s32.totalorder %v4126, 1
        %vm4163 = vcmp.eq.s32.totalorder %v4127, 1
        %vm4164 = vcmp.eq.s32.totalorder %v4128, 1
        %vm4165 = vcmp.eq.s32.totalorder %v4129, 1
        %vm4166 = vcmp.eq.s32.totalorder %v4130, 1
        %vm4167 = vcmp.eq.s32.totalorder %v4131, 1
        %vm4168 = vcmp.eq.s32.totalorder %v4132, 1
        %vm4169 = vcmp.eq.s32.totalorder %v4133, 1
        %vm4170 = vcmp.eq.s32.totalorder %v4134, 1
        %vm4171 = vcmp.eq.s32.totalorder %v4135, 1
        %vm4172 = vcmp.eq.s32.totalorder %v4136, 1
        %vm4173 = vcmp.eq.s32.totalorder %v4137, 1
        %vm4174 = vcmp.eq.s32.totalorder %v4138, 1
        %vm4175 = vcmp.eq.s32.totalorder %v4139, 1
        %v4176 = vsel %vm4140, %v3852, %v4068
        %v4177 = vsel %vm4141, %v3853, %v4069
        %v4178 = vsel %vm4142, %v3854, %v4070
        %v4179 = vsel %vm4143, %v3855, %v4071
        %v4180 = vsel %vm4144, %v3856, %v4072
        %v4181 = vsel %vm4145, %v3857, %v4073
        %v4182 = vsel %vm4146, %v3858, %v4074
        %v4183 = vsel %vm4147, %v3859, %v4075
        %v4184 = vsel %vm4148, %v3860, %v4076
        %v4185 = vsel %vm4149, %v3861, %v4077
        %v4186 = vsel %vm4150, %v3862, %v4078
        %v4187 = vsel %vm4151, %v3863, %v4079
        %v4188 = vsel %vm4152, %v3864, %v4080
        %v4189 = vsel %vm4153, %v3865, %v4081
        %v4190 = vsel %vm4154, %v3866, %v4082
        %v4191 = vsel %vm4155, %v3867, %v4083
        %v4192 = vsel %vm4156, %v3868, %v4084
        %v4193 = vsel %vm4157, %v3869, %v4085
        %v4194 = vsel %vm4158, %v3870, %v4086
        %v4195 = vsel %vm4159, %v3871, %v4087
        %v4196 = vsel %vm4160, %v3872, %v4088
        %v4197 = vsel %vm4161, %v3873, %v4089
        %v4198 = vsel %vm4162, %v3874, %v4090
        %v4199 = vsel %vm4163, %v3875, %v4091
        %v4200 = vsel %vm4164, %v3876, %v4092
        %v4201 = vsel %vm4165, %v3877, %v4093
        %v4202 = vsel %vm4166, %v3878, %v4094
        %v4203 = vsel %vm4167, %v3879, %v4095
        %v4204 = vsel %vm4168, %v3880, %v4096
        %v4205 = vsel %vm4169, %v3881, %v4097
        %v4206 = vsel %vm4170, %v3882, %v4098
        %v4207 = vsel %vm4171, %v3883, %v4099
        %v4208 = vsel %vm4172, %v3884, %v4100
        %v4209 = vsel %vm4173, %v3885, %v4101
        %v4210 = vsel %vm4174, %v3886, %v4102
        %v4211 = vsel %vm4175, %v3887, %v4103
        %4212 = vst [vmem:[#allocation2 + $0x12] sm:$0xff] %v4176
        %4213 = vst [vmem:[#allocation2 + $0x1a] sm:$0xff] %v4177
        %4214 = vst [vmem:[#allocation2 + $0x22] sm:$0xff] %v4178
        %4215 = vst [vmem:[#allocation2 + $0x2a] sm:$0xff] %v4179
        %4216 = vst [vmem:[#allocation2 + $0x32] sm:$0xff] %v4180
        %4217 = vst [vmem:[#allocation2 + $0x3a] sm:$0xff] %v4181
        %4218 = vst [vmem:[#allocation2 + $0x42] sm:$0xff] %v4182
        %4219 = vst [vmem:[#allocation2 + $0x4a] sm:$0xff] %v4183
        %4220 = vst [vmem:[#allocation2 + $0x52] sm:$0xff] %v4184
        %4221 = vst [vmem:[#allocation2 + $0x5a] sm:$0xff] %v4185
        %4222 = vst [vmem:[#allocation2 + $0x62] sm:$0xff] %v4186
        %4223 = vst [vmem:[#allocation2 + $0x6a] sm:$0xff] %v4187
        %4224 = vst [vmem:[#allocation2 + $0x72] sm:$0xff] %v4188
        %4225 = vst [vmem:[#allocation2 + $0x7a] sm:$0xff] %v4189
        %4226 = vst [vmem:[#allocation2 + $0x82] sm:$0xff] %v4190
        %4227 = vst [vmem:[#allocation2 + $0x8a] sm:$0xff] %v4191
        %4228 = vst [vmem:[#allocation2 + $0x92] sm:$0xff] %v4192
        %4229 = vst [vmem:[#allocation2 + $0x9a] sm:$0xff] %v4193
        %4230 = vst [vmem:[#allocation2 + $0xa2] sm:$0xff] %v4194
        %4231 = vst [vmem:[#allocation2 + $0xaa] sm:$0xff] %v4195
        %4232 = vst [vmem:[#allocation2 + $0xb2] sm:$0xff] %v4196
        %4233 = vst [vmem:[#allocation2 + $0xba] sm:$0xff] %v4197
        %4234 = vst [vmem:[#allocation2 + $0xc2] sm:$0xff] %v4198
        %4235 = vst [vmem:[#allocation2 + $0xca] sm:$0xff] %v4199
        %4236 = vst [vmem:[#allocation2 + $0xd2] sm:$0xff] %v4200
        %4237 = vst [vmem:[#allocation2 + $0xda] sm:$0xff] %v4201
        %4238 = vst [vmem:[#allocation2 + $0xe2] sm:$0xff] %v4202
        %4239 = vst [vmem:[#allocation2 + $0xea] sm:$0xff] %v4203
        %4240 = vst [vmem:[#allocation2 + $0xf2] sm:$0xff] %v4204
        %4241 = vst [vmem:[#allocation2 + $0xfa] sm:$0xff] %v4205
        %4242 = vst [vmem:[#allocation2 + $0x102] sm:$0xff] %v4206
        %4243 = vst [vmem:[#allocation2 + $0x10a] sm:$0xff] %v4207
        %4244 = vst [vmem:[#allocation2 + $0x112] sm:$0xff] %v4208
        %4245 = vst [vmem:[#allocation2 + $0x11a] sm:$0xff] %v4209
        %4246 = vst [vmem:[#allocation2 + $0x122] sm:$0xff] %v4210
        %4247 = vst [vmem:[#allocation2 + $0x12a] sm:$0xff] %v4211
        %v4248 = vld [vmem:[#allocation2 + $0x24] sm:$0xff]
        %v4249 = vld [vmem:[#allocation2 + $0x2c] sm:$0xff]
        %v4250 = vld [vmem:[#allocation2 + $0x34] sm:$0x3]
        %4251 = vst [vmem:[#allocation2] sm:$0xff] %v4248
        %4252 = vst [vmem:[#allocation2 + $0x8] sm:$0xff] %v4249
        %4253 = vst [vmem:[#allocation2 + $0x10] sm:$0x3] %v4250
        %v4254 = vld [vmem:[#allocation2 + $0x10e] sm:$0xff]
        %v4255 = vld [vmem:[#allocation2 + $0x116] sm:$0xff]
        %v4256 = vld [vmem:[#allocation2 + $0x11e] sm:$0x3]
        %4257 = vst [vmem:[#allocation2 + $0x132] sm:$0xff] %v4254
        %4258 = vst [vmem:[#allocation2 + $0x13a] sm:$0xff] %v4255
        %4259 = vst [vmem:[#allocation2 + $0x142] sm:$0x3] %v4256
        %4260 = vst [vmem:[#allocation2 + $0x144] sm:$0xff] 0.0
        %4261 = vst [vmem:[#allocation2 + $0x14c] sm:$0xff] 0.0
        %4262 = vst [vmem:[#allocation2 + $0x154] sm:$0x3] 0.0
        %v4263 = vld [vmem:[#allocation2] sm:$0xff]
        %v4264 = vld [vmem:[#allocation2 + $0x8] sm:$0xff]
        %v4265 = vld [vmem:[#allocation2 + $0x10] sm:$0xff]
        %v4266 = vld [vmem:[#allocation2 + $0x18] sm:$0xff]
        %v4267 = vld [vmem:[#allocation2 + $0x20] sm:$0xff]
        %v4268 = vld [vmem:[#allocation2 + $0x28] sm:$0xff]
        %v4269 = vld [vmem:[#allocation2 + $0x30] sm:$0xff]
        %v4270 = vld [vmem:[#allocation2 + $0x38] sm:$0xff]
        %v4271 = vld [vmem:[#allocation2 + $0x40] sm:$0xff]
        %v4272 = vld [vmem:[#allocation2 + $0x48] sm:$0xff]
        %v4273 = vld [vmem:[#allocation2 + $0x50] sm:$0xff]
        %v4274 = vld [vmem:[#allocation2 + $0x58] sm:$0xff]
        %v4275 = vld [vmem:[#allocation2 + $0x60] sm:$0xff]
        %v4276 = vld [vmem:[#allocation2 + $0x68] sm:$0xff]
        %v4277 = vld [vmem:[#allocation2 + $0x70] sm:$0xff]
        %v4278 = vld [vmem:[#allocation2 + $0x78] sm:$0xff]
        %v4279 = vld [vmem:[#allocation2 + $0x80] sm:$0xff]
        %v4280 = vld [vmem:[#allocation2 + $0x88] sm:$0xff]
        %v4281 = vld [vmem:[#allocation2 + $0x90] sm:$0xff]
        %v4282 = vld [vmem:[#allocation2 + $0x98] sm:$0xff]
        %v4283 = vld [vmem:[#allocation2 + $0xa0] sm:$0xff]
        %v4284 = vld [vmem:[#allocation2 + $0xa8] sm:$0xff]
        %v4285 = vld [vmem:[#allocation2 + $0xb0] sm:$0xff]
        %v4286 = vld [vmem:[#allocation2 + $0xb8] sm:$0xff]
        %v4287 = vld [vmem:[#allocation2 + $0xc0] sm:$0xff]
        %v4288 = vld [vmem:[#allocation2 + $0xc8] sm:$0xff]
        %v4289 = vld [vmem:[#allocation2 + $0xd0] sm:$0xff]
        %v4290 = vld [vmem:[#allocation2 + $0xd8] sm:$0xff]
        %v4291 = vld [vmem:[#allocation2 + $0xe0] sm:$0xff]
        %v4292 = vld [vmem:[#allocation2 + $0xe8] sm:$0xff]
        %v4293 = vld [vmem:[#allocation2 + $0xf0] sm:$0xff]
        %v4294 = vld [vmem:[#allocation2 + $0xf8] sm:$0xff]
        %v4295 = vld [vmem:[#allocation2 + $0x100] sm:$0xff]
        %v4296 = vld [vmem:[#allocation2 + $0x108] sm:$0xff]
        %v4297 = vld [vmem:[#allocation2 + $0x110] sm:$0xff]
        %v4298 = vld [vmem:[#allocation2 + $0x118] sm:$0xff]
        %v4299 = vld [vmem:[#allocation3] sm:$0xff]
        %v4300 = vld [vmem:[#allocation3 + $0x8] sm:$0xff]
        %v4301 = vld [vmem:[#allocation3 + $0x10] sm:$0xff]
        %v4302 = vld [vmem:[#allocation3 + $0x18] sm:$0xff]
        %v4303 = vld [vmem:[#allocation3 + $0x20] sm:$0xff]
        %v4304 = vld [vmem:[#allocation3 + $0x28] sm:$0xff]
        %v4305 = vld [vmem:[#allocation3 + $0x30] sm:$0xff]
        %v4306 = vld [vmem:[#allocation3 + $0x38] sm:$0xff]
        %v4307 = vld [vmem:[#allocation3 + $0x40] sm:$0xff]
        %v4308 = vld [vmem:[#allocation3 + $0x48] sm:$0xff]
        %v4309 = vld [vmem:[#allocation3 + $0x50] sm:$0xff]
        %v4310 = vld [vmem:[#allocation3 + $0x58] sm:$0xff]
        %v4311 = vld [vmem:[#allocation3 + $0x60] sm:$0xff]
        %v4312 = vld [vmem:[#allocation3 + $0x68] sm:$0xff]
        %v4313 = vld [vmem:[#allocation3 + $0x70] sm:$0xff]
        %v4314 = vld [vmem:[#allocation3 + $0x78] sm:$0xff]
        %v4315 = vld [vmem:[#allocation2 + $0x1] sm:$0xff]
        %v4316 = vld [vmem:[#allocation2 + $0x9] sm:$0xff]
        %v4317 = vld [vmem:[#allocation2 + $0x11] sm:$0xff]
        %v4318 = vld [vmem:[#allocation2 + $0x19] sm:$0xff]
        %v4319 = vld [vmem:[#allocation2 + $0x21] sm:$0xff]
        %v4320 = vld [vmem:[#allocation2 + $0x29] sm:$0xff]
        %v4321 = vld [vmem:[#allocation2 + $0x31] sm:$0xff]
        %v4322 = vld [vmem:[#allocation2 + $0x39] sm:$0xff]
        %v4323 = vld [vmem:[#allocation2 + $0x41] sm:$0xff]
        %v4324 = vld [vmem:[#allocation2 + $0x49] sm:$0xff]
        %v4325 = vld [vmem:[#allocation2 + $0x51] sm:$0xff]
        %v4326 = vld [vmem:[#allocation2 + $0x59] sm:$0xff]
        %v4327 = vld [vmem:[#allocation2 + $0x61] sm:$0xff]
        %v4328 = vld [vmem:[#allocation2 + $0x69] sm:$0xff]
        %v4329 = vld [vmem:[#allocation2 + $0x71] sm:$0xff]
        %v4330 = vld [vmem:[#allocation2 + $0x79] sm:$0xff]
        %v4331 = vld [vmem:[#allocation2 + $0x81] sm:$0xff]
        %v4332 = vld [vmem:[#allocation2 + $0x89] sm:$0xff]
        %v4333 = vld [vmem:[#allocation2 + $0x91] sm:$0xff]
        %v4334 = vld [vmem:[#allocation2 + $0x99] sm:$0xff]
        %v4335 = vld [vmem:[#allocation2 + $0xa1] sm:$0xff]
        %v4336 = vld [vmem:[#allocation2 + $0xa9] sm:$0xff]
        %v4337 = vld [vmem:[#allocation2 + $0xb1] sm:$0xff]
        %v4338 = vld [vmem:[#allocation2 + $0xb9] sm:$0xff]
        %v4339 = vld [vmem:[#allocation2 + $0xc1] sm:$0xff]
        %v4340 = vld [vmem:[#allocation2 + $0xc9] sm:$0xff]
        %v4341 = vld [vmem:[#allocation2 + $0xd1] sm:$0xff]
        %v4342 = vld [vmem:[#allocation2 + $0xd9] sm:$0xff]
        %v4343 = vld [vmem:[#allocation2 + $0xe1] sm:$0xff]
        %v4344 = vld [vmem:[#allocation2 + $0xe9] sm:$0xff]
        %v4345 = vld [vmem:[#allocation2 + $0xf1] sm:$0xff]
        %v4346 = vld [vmem:[#allocation2 + $0xf9] sm:$0xff]
        %v4347 = vld [vmem:[#allocation2 + $0x101] sm:$0xff]
        %v4348 = vld [vmem:[#allocation2 + $0x109] sm:$0xff]
        %v4349 = vld [vmem:[#allocation2 + $0x111] sm:$0xff]
        %v4350 = vld [vmem:[#allocation2 + $0x119] sm:$0xff]
        %s4351 = scalar_lea.vmem [#allocation3], 128
        %v4352 = vld [vmem:[%s4351] sm:$0xff]
        %v4353 = vld [vmem:[%s4351 + $0x8] sm:$0xff]
        %v4354 = vld [vmem:[%s4351 + $0x10] sm:$0xff]
        %v4355 = vld [vmem:[%s4351 + $0x18] sm:$0xff]
        %v4356 = vld [vmem:[%s4351 + $0x20] sm:$0xff]
        %v4357 = vld [vmem:[%s4351 + $0x28] sm:$0xff]
        %v4358 = vld [vmem:[%s4351 + $0x30] sm:$0xff]
        %v4359 = vld [vmem:[%s4351 + $0x38] sm:$0xff]
        %v4360 = vld [vmem:[%s4351 + $0x40] sm:$0xff]
        %v4361 = vld [vmem:[%s4351 + $0x48] sm:$0xff]
        %v4362 = vld [vmem:[%s4351 + $0x50] sm:$0xff]
        %v4363 = vld [vmem:[%s4351 + $0x58] sm:$0xff]
        %v4364 = vld [vmem:[%s4351 + $0x60] sm:$0xff]
        %v4365 = vld [vmem:[%s4351 + $0x68] sm:$0xff]
        %v4366 = vld [vmem:[%s4351 + $0x70] sm:$0xff]
        %v4367 = vld [vmem:[%s4351 + $0x78] sm:$0xff]
        %4368 = vmatpush.msra.mxu0 %v4367
        %4369 = vmatpush.msra.mxu0 %v4366
        %4370 = vmatpush.msra.mxu0 %v4365
        %4371 = vmatpush.msra.mxu0 %v4364
        %4372 = vmatpush.msra.mxu0 %v4363
        %4373 = vmatpush.msra.mxu0 %v4362
        %4374 = vmatpush.msra.mxu0 %v4361
        %4375 = vmatpush.msra.mxu0 %v4360
        %4376 = vmatpush.msra.mxu0 %v4359
        %4377 = vmatpush.msra.mxu0 %v4358
        %4378 = vmatpush.msra.mxu0 %v4357
        %4379 = vmatpush.msra.mxu0 %v4356
        %4380 = vmatpush.msra.mxu0 %v4355
        %4381 = vmatpush.msra.mxu0 %v4354
        %4382 = vmatpush.msra.mxu0 %v4353
        %4383 = vmatpush.msra.mxu0 %v4352
        %4384 = vmatmul.f32.gmra.mxu0 %v4315
        %v4385 = vpop.f32.mrf.mxu0
        %v4386 = vadd.f32 0.0, %v4385
        %4387 = vmatmul.f32.gmra.mxu0 %v4316
        %v4388 = vpop.f32.mrf.mxu0
        %v4389 = vadd.f32 0.0, %v4388
        %4390 = vmatmul.f32.gmra.mxu0 %v4317
        %v4391 = vpop.f32.mrf.mxu0
        %v4392 = vadd.f32 0.0, %v4391
        %4393 = vmatmul.f32.gmra.mxu0 %v4318
        %v4394 = vpop.f32.mrf.mxu0
        %v4395 = vadd.f32 0.0, %v4394
        %4396 = vmatmul.f32.gmra.mxu0 %v4319
        %v4397 = vpop.f32.mrf.mxu0
        %v4398 = vadd.f32 0.0, %v4397
        %4399 = vmatmul.f32.gmra.mxu0 %v4320
        %v4400 = vpop.f32.mrf.mxu0
        %v4401 = vadd.f32 0.0, %v4400
        %4402 = vmatmul.f32.gmra.mxu0 %v4321
        %v4403 = vpop.f32.mrf.mxu0
        %v4404 = vadd.f32 0.0, %v4403
        %4405 = vmatmul.f32.gmra.mxu0 %v4322
        %v4406 = vpop.f32.mrf.mxu0
        %v4407 = vadd.f32 0.0, %v4406
        %4408 = vmatmul.f32.gmra.mxu0 %v4323
        %v4409 = vpop.f32.mrf.mxu0
        %v4410 = vadd.f32 0.0, %v4409
        %4411 = vmatmul.f32.gmra.mxu0 %v4324
        %v4412 = vpop.f32.mrf.mxu0
        %v4413 = vadd.f32 0.0, %v4412
        %4414 = vmatmul.f32.gmra.mxu0 %v4325
        %v4415 = vpop.f32.mrf.mxu0
        %v4416 = vadd.f32 0.0, %v4415
        %4417 = vmatmul.f32.gmra.mxu0 %v4326
        %v4418 = vpop.f32.mrf.mxu0
        %v4419 = vadd.f32 0.0, %v4418
        %4420 = vmatmul.f32.gmra.mxu0 %v4327
        %v4421 = vpop.f32.mrf.mxu0
        %v4422 = vadd.f32 0.0, %v4421
        %4423 = vmatmul.f32.gmra.mxu0 %v4328
        %v4424 = vpop.f32.mrf.mxu0
        %v4425 = vadd.f32 0.0, %v4424
        %4426 = vmatmul.f32.gmra.mxu0 %v4329
        %v4427 = vpop.f32.mrf.mxu0
        %v4428 = vadd.f32 0.0, %v4427
        %4429 = vmatmul.f32.gmra.mxu0 %v4330
        %v4430 = vpop.f32.mrf.mxu0
        %v4431 = vadd.f32 0.0, %v4430
        %4432 = vmatmul.f32.gmra.mxu0 %v4331
        %v4433 = vpop.f32.mrf.mxu0
        %v4434 = vadd.f32 0.0, %v4433
        %4435 = vmatmul.f32.gmra.mxu0 %v4332
        %v4436 = vpop.f32.mrf.mxu0
        %v4437 = vadd.f32 0.0, %v4436
        %4438 = vmatmul.f32.gmra.mxu0 %v4333
        %v4439 = vpop.f32.mrf.mxu0
        %v4440 = vadd.f32 0.0, %v4439
        %4441 = vmatmul.f32.gmra.mxu0 %v4334
        %v4442 = vpop.f32.mrf.mxu0
        %v4443 = vadd.f32 0.0, %v4442
        %4444 = vmatmul.f32.gmra.mxu0 %v4335
        %v4445 = vpop.f32.mrf.mxu0
        %v4446 = vadd.f32 0.0, %v4445
        %4447 = vmatmul.f32.gmra.mxu0 %v4336
        %v4448 = vpop.f32.mrf.mxu0
        %v4449 = vadd.f32 0.0, %v4448
        %4450 = vmatmul.f32.gmra.mxu0 %v4337
        %v4451 = vpop.f32.mrf.mxu0
        %v4452 = vadd.f32 0.0, %v4451
        %4453 = vmatmul.f32.gmra.mxu0 %v4338
        %v4454 = vpop.f32.mrf.mxu0
        %v4455 = vadd.f32 0.0, %v4454
        %4456 = vmatmul.f32.gmra.mxu0 %v4339
        %v4457 = vpop.f32.mrf.mxu0
        %v4458 = vadd.f32 0.0, %v4457
        %4459 = vmatmul.f32.gmra.mxu0 %v4340
        %v4460 = vpop.f32.mrf.mxu0
        %v4461 = vadd.f32 0.0, %v4460
        %4462 = vmatmul.f32.gmra.mxu0 %v4341
        %v4463 = vpop.f32.mrf.mxu0
        %v4464 = vadd.f32 0.0, %v4463
        %4465 = vmatmul.f32.gmra.mxu0 %v4342
        %v4466 = vpop.f32.mrf.mxu0
        %v4467 = vadd.f32 0.0, %v4466
        %4468 = vmatmul.f32.gmra.mxu0 %v4343
        %v4469 = vpop.f32.mrf.mxu0
        %v4470 = vadd.f32 0.0, %v4469
        %4471 = vmatmul.f32.gmra.mxu0 %v4344
        %v4472 = vpop.f32.mrf.mxu0
        %v4473 = vadd.f32 0.0, %v4472
        %4474 = vmatmul.f32.gmra.mxu0 %v4345
        %v4475 = vpop.f32.mrf.mxu0
        %v4476 = vadd.f32 0.0, %v4475
        %4477 = vmatmul.f32.gmra.mxu0 %v4346
        %v4478 = vpop.f32.mrf.mxu0
        %v4479 = vadd.f32 0.0, %v4478
        %4480 = vmatmul.f32.gmra.mxu0 %v4347
        %v4481 = vpop.f32.mrf.mxu0
        %v4482 = vadd.f32 0.0, %v4481
        %4483 = vmatmul.f32.gmra.mxu0 %v4348
        %v4484 = vpop.f32.mrf.mxu0
        %v4485 = vadd.f32 0.0, %v4484
        %4486 = vmatmul.f32.gmra.mxu0 %v4349
        %v4487 = vpop.f32.mrf.mxu0
        %v4488 = vadd.f32 0.0, %v4487
        %4489 = vmatmul.f32.gmra.mxu0 %v4350
        %v4490 = vpop.f32.mrf.mxu0
        %v4491 = vadd.f32 0.0, %v4490
        %4492 = vdwg.mxu0
        %4493 = vmatpush.msra.mxu0 %v4314
        %4494 = vmatpush.msra.mxu0 %v4313
        %4495 = vmatpush.msra.mxu0 %v4312
        %4496 = vmatpush.msra.mxu0 %v4311
        %4497 = vmatpush.msra.mxu0 %v4310
        %4498 = vmatpush.msra.mxu0 %v4309
        %4499 = vmatpush.msra.mxu0 %v4308
        %4500 = vmatpush.msra.mxu0 %v4307
        %4501 = vmatpush.msra.mxu0 %v4306
        %4502 = vmatpush.msra.mxu0 %v4305
        %4503 = vmatpush.msra.mxu0 %v4304
        %4504 = vmatpush.msra.mxu0 %v4303
        %4505 = vmatpush.msra.mxu0 %v4302
        %4506 = vmatpush.msra.mxu0 %v4301
        %4507 = vmatpush.msra.mxu0 %v4300
        %4508 = vmatpush.msra.mxu0 %v4299
        %4509 = vmatmul.f32.gmra.mxu0 %v4263
        %v4510 = vpop.f32.mrf.mxu0
        %v4511 = vadd.f32 %v4386, %v4510
        %4512 = vmatmul.f32.gmra.mxu0 %v4264
        %v4513 = vpop.f32.mrf.mxu0
        %v4514 = vadd.f32 %v4389, %v4513
        %4515 = vmatmul.f32.gmra.mxu0 %v4265
        %v4516 = vpop.f32.mrf.mxu0
        %v4517 = vadd.f32 %v4392, %v4516
        %4518 = vmatmul.f32.gmra.mxu0 %v4266
        %v4519 = vpop.f32.mrf.mxu0
        %v4520 = vadd.f32 %v4395, %v4519
        %4521 = vmatmul.f32.gmra.mxu0 %v4267
        %v4522 = vpop.f32.mrf.mxu0
        %v4523 = vadd.f32 %v4398, %v4522
        %4524 = vmatmul.f32.gmra.mxu0 %v4268
        %v4525 = vpop.f32.mrf.mxu0
        %v4526 = vadd.f32 %v4401, %v4525
        %4527 = vmatmul.f32.gmra.mxu0 %v4269
        %v4528 = vpop.f32.mrf.mxu0
        %v4529 = vadd.f32 %v4404, %v4528
        %4530 = vmatmul.f32.gmra.mxu0 %v4270
        %v4531 = vpop.f32.mrf.mxu0
        %v4532 = vadd.f32 %v4407, %v4531
        %4533 = vmatmul.f32.gmra.mxu0 %v4271
        %v4534 = vpop.f32.mrf.mxu0
        %v4535 = vadd.f32 %v4410, %v4534
        %4536 = vmatmul.f32.gmra.mxu0 %v4272
        %v4537 = vpop.f32.mrf.mxu0
        %v4538 = vadd.f32 %v4413, %v4537
        %4539 = vmatmul.f32.gmra.mxu0 %v4273
        %v4540 = vpop.f32.mrf.mxu0
        %v4541 = vadd.f32 %v4416, %v4540
        %4542 = vmatmul.f32.gmra.mxu0 %v4274
        %v4543 = vpop.f32.mrf.mxu0
        %v4544 = vadd.f32 %v4419, %v4543
        %4545 = vmatmul.f32.gmra.mxu0 %v4275
        %v4546 = vpop.f32.mrf.mxu0
        %v4547 = vadd.f32 %v4422, %v4546
        %4548 = vmatmul.f32.gmra.mxu0 %v4276
        %v4549 = vpop.f32.mrf.mxu0
        %v4550 = vadd.f32 %v4425, %v4549
        %4551 = vmatmul.f32.gmra.mxu0 %v4277
        %v4552 = vpop.f32.mrf.mxu0
        %v4553 = vadd.f32 %v4428, %v4552
        %4554 = vmatmul.f32.gmra.mxu0 %v4278
        %v4555 = vpop.f32.mrf.mxu0
        %v4556 = vadd.f32 %v4431, %v4555
        %4557 = vmatmul.f32.gmra.mxu0 %v4279
        %v4558 = vpop.f32.mrf.mxu0
        %v4559 = vadd.f32 %v4434, %v4558
        %4560 = vmatmul.f32.gmra.mxu0 %v4280
        %v4561 = vpop.f32.mrf.mxu0
        %v4562 = vadd.f32 %v4437, %v4561
        %4563 = vmatmul.f32.gmra.mxu0 %v4281
        %v4564 = vpop.f32.mrf.mxu0
        %v4565 = vadd.f32 %v4440, %v4564
        %4566 = vmatmul.f32.gmra.mxu0 %v4282
        %v4567 = vpop.f32.mrf.mxu0
        %v4568 = vadd.f32 %v4443, %v4567
        %4569 = vmatmul.f32.gmra.mxu0 %v4283
        %v4570 = vpop.f32.mrf.mxu0
        %v4571 = vadd.f32 %v4446, %v4570
        %4572 = vmatmul.f32.gmra.mxu0 %v4284
        %v4573 = vpop.f32.mrf.mxu0
        %v4574 = vadd.f32 %v4449, %v4573
        %4575 = vmatmul.f32.gmra.mxu0 %v4285
        %v4576 = vpop.f32.mrf.mxu0
        %v4577 = vadd.f32 %v4452, %v4576
        %4578 = vmatmul.f32.gmra.mxu0 %v4286
        %v4579 = vpop.f32.mrf.mxu0
        %v4580 = vadd.f32 %v4455, %v4579
        %4581 = vmatmul.f32.gmra.mxu0 %v4287
        %v4582 = vpop.f32.mrf.mxu0
        %v4583 = vadd.f32 %v4458, %v4582
        %4584 = vmatmul.f32.gmra.mxu0 %v4288
        %v4585 = vpop.f32.mrf.mxu0
        %v4586 = vadd.f32 %v4461, %v4585
        %4587 = vmatmul.f32.gmra.mxu0 %v4289
        %v4588 = vpop.f32.mrf.mxu0
        %v4589 = vadd.f32 %v4464, %v4588
        %4590 = vmatmul.f32.gmra.mxu0 %v4290
        %v4591 = vpop.f32.mrf.mxu0
        %v4592 = vadd.f32 %v4467, %v4591
        %4593 = vmatmul.f32.gmra.mxu0 %v4291
        %v4594 = vpop.f32.mrf.mxu0
        %v4595 = vadd.f32 %v4470, %v4594
        %4596 = vmatmul.f32.gmra.mxu0 %v4292
        %v4597 = vpop.f32.mrf.mxu0
        %v4598 = vadd.f32 %v4473, %v4597
        %4599 = vmatmul.f32.gmra.mxu0 %v4293
        %v4600 = vpop.f32.mrf.mxu0
        %v4601 = vadd.f32 %v4476, %v4600
        %4602 = vmatmul.f32.gmra.mxu0 %v4294
        %v4603 = vpop.f32.mrf.mxu0
        %v4604 = vadd.f32 %v4479, %v4603
        %4605 = vmatmul.f32.gmra.mxu0 %v4295
        %v4606 = vpop.f32.mrf.mxu0
        %v4607 = vadd.f32 %v4482, %v4606
        %4608 = vmatmul.f32.gmra.mxu0 %v4296
        %v4609 = vpop.f32.mrf.mxu0
        %v4610 = vadd.f32 %v4485, %v4609
        %4611 = vmatmul.f32.gmra.mxu0 %v4297
        %v4612 = vpop.f32.mrf.mxu0
        %v4613 = vadd.f32 %v4488, %v4612
        %4614 = vmatmul.f32.gmra.mxu0 %v4298
        %v4615 = vpop.f32.mrf.mxu0
        %v4616 = vadd.f32 %v4491, %v4615
        %4617 = vdwg.mxu0
        %v4618 = vld [vmem:[#allocation2 + $0x2] sm:$0xff]
        %v4619 = vld [vmem:[#allocation2 + $0xa] sm:$0xff]
        %v4620 = vld [vmem:[#allocation2 + $0x12] sm:$0xff]
        %v4621 = vld [vmem:[#allocation2 + $0x1a] sm:$0xff]
        %v4622 = vld [vmem:[#allocation2 + $0x22] sm:$0xff]
        %v4623 = vld [vmem:[#allocation2 + $0x2a] sm:$0xff]
        %v4624 = vld [vmem:[#allocation2 + $0x32] sm:$0xff]
        %v4625 = vld [vmem:[#allocation2 + $0x3a] sm:$0xff]
        %v4626 = vld [vmem:[#allocation2 + $0x42] sm:$0xff]
        %v4627 = vld [vmem:[#allocation2 + $0x4a] sm:$0xff]
        %v4628 = vld [vmem:[#allocation2 + $0x52] sm:$0xff]
        %v4629 = vld [vmem:[#allocation2 + $0x5a] sm:$0xff]
        %v4630 = vld [vmem:[#allocation2 + $0x62] sm:$0xff]
        %v4631 = vld [vmem:[#allocation2 + $0x6a] sm:$0xff]
        %v4632 = vld [vmem:[#allocation2 + $0x72] sm:$0xff]
        %v4633 = vld [vmem:[#allocation2 + $0x7a] sm:$0xff]
        %v4634 = vld [vmem:[#allocation2 + $0x82] sm:$0xff]
        %v4635 = vld [vmem:[#allocation2 + $0x8a] sm:$0xff]
        %v4636 = vld [vmem:[#allocation2 + $0x92] sm:$0xff]
        %v4637 = vld [vmem:[#allocation2 + $0x9a] sm:$0xff]
        %v4638 = vld [vmem:[#allocation2 + $0xa2] sm:$0xff]
        %v4639 = vld [vmem:[#allocation2 + $0xaa] sm:$0xff]
        %v4640 = vld [vmem:[#allocation2 + $0xb2] sm:$0xff]
        %v4641 = vld [vmem:[#allocation2 + $0xba] sm:$0xff]
        %v4642 = vld [vmem:[#allocation2 + $0xc2] sm:$0xff]
        %v4643 = vld [vmem:[#allocation2 + $0xca] sm:$0xff]
        %v4644 = vld [vmem:[#allocation2 + $0xd2] sm:$0xff]
        %v4645 = vld [vmem:[#allocation2 + $0xda] sm:$0xff]
        %v4646 = vld [vmem:[#allocation2 + $0xe2] sm:$0xff]
        %v4647 = vld [vmem:[#allocation2 + $0xea] sm:$0xff]
        %v4648 = vld [vmem:[#allocation2 + $0xf2] sm:$0xff]
        %v4649 = vld [vmem:[#allocation2 + $0xfa] sm:$0xff]
        %v4650 = vld [vmem:[#allocation2 + $0x102] sm:$0xff]
        %v4651 = vld [vmem:[#allocation2 + $0x10a] sm:$0xff]
        %v4652 = vld [vmem:[#allocation2 + $0x112] sm:$0xff]
        %v4653 = vld [vmem:[#allocation2 + $0x11a] sm:$0xff]
        %s4654 = scalar_lea.vmem [#allocation3], 256
        %v4655 = vld [vmem:[%s4654] sm:$0xff]
        %v4656 = vld [vmem:[%s4654 + $0x8] sm:$0xff]
        %v4657 = vld [vmem:[%s4654 + $0x10] sm:$0xff]
        %v4658 = vld [vmem:[%s4654 + $0x18] sm:$0xff]
        %v4659 = vld [vmem:[%s4654 + $0x20] sm:$0xff]
        %v4660 = vld [vmem:[%s4654 + $0x28] sm:$0xff]
        %v4661 = vld [vmem:[%s4654 + $0x30] sm:$0xff]
        %v4662 = vld [vmem:[%s4654 + $0x38] sm:$0xff]
        %v4663 = vld [vmem:[%s4654 + $0x40] sm:$0xff]
        %v4664 = vld [vmem:[%s4654 + $0x48] sm:$0xff]
        %v4665 = vld [vmem:[%s4654 + $0x50] sm:$0xff]
        %v4666 = vld [vmem:[%s4654 + $0x58] sm:$0xff]
        %v4667 = vld [vmem:[%s4654 + $0x60] sm:$0xff]
        %v4668 = vld [vmem:[%s4654 + $0x68] sm:$0xff]
        %v4669 = vld [vmem:[%s4654 + $0x70] sm:$0xff]
        %v4670 = vld [vmem:[%s4654 + $0x78] sm:$0xff]
        %4671 = vmatpush.msra.mxu0 %v4670
        %4672 = vmatpush.msra.mxu0 %v4669
        %4673 = vmatpush.msra.mxu0 %v4668
        %4674 = vmatpush.msra.mxu0 %v4667
        %4675 = vmatpush.msra.mxu0 %v4666
        %4676 = vmatpush.msra.mxu0 %v4665
        %4677 = vmatpush.msra.mxu0 %v4664
        %4678 = vmatpush.msra.mxu0 %v4663
        %4679 = vmatpush.msra.mxu0 %v4662
        %4680 = vmatpush.msra.mxu0 %v4661
        %4681 = vmatpush.msra.mxu0 %v4660
        %4682 = vmatpush.msra.mxu0 %v4659
        %4683 = vmatpush.msra.mxu0 %v4658
        %4684 = vmatpush.msra.mxu0 %v4657
        %4685 = vmatpush.msra.mxu0 %v4656
        %4686 = vmatpush.msra.mxu0 %v4655
        %4687 = vmatmul.f32.gmra.mxu0 %v4618
        %v4688 = vpop.f32.mrf.mxu0
        %v4689 = vadd.f32 0.0, %v4688
        %4690 = vmatmul.f32.gmra.mxu0 %v4619
        %v4691 = vpop.f32.mrf.mxu0
        %v4692 = vadd.f32 0.0, %v4691
        %4693 = vmatmul.f32.gmra.mxu0 %v4620
        %v4694 = vpop.f32.mrf.mxu0
        %v4695 = vadd.f32 0.0, %v4694
        %4696 = vmatmul.f32.gmra.mxu0 %v4621
        %v4697 = vpop.f32.mrf.mxu0
        %v4698 = vadd.f32 0.0, %v4697
        %4699 = vmatmul.f32.gmra.mxu0 %v4622
        %v4700 = vpop.f32.mrf.mxu0
        %v4701 = vadd.f32 0.0, %v4700
        %4702 = vmatmul.f32.gmra.mxu0 %v4623
        %v4703 = vpop.f32.mrf.mxu0
        %v4704 = vadd.f32 0.0, %v4703
        %4705 = vmatmul.f32.gmra.mxu0 %v4624
        %v4706 = vpop.f32.mrf.mxu0
        %v4707 = vadd.f32 0.0, %v4706
        %4708 = vmatmul.f32.gmra.mxu0 %v4625
        %v4709 = vpop.f32.mrf.mxu0
        %v4710 = vadd.f32 0.0, %v4709
        %4711 = vmatmul.f32.gmra.mxu0 %v4626
        %v4712 = vpop.f32.mrf.mxu0
        %v4713 = vadd.f32 0.0, %v4712
        %4714 = vmatmul.f32.gmra.mxu0 %v4627
        %v4715 = vpop.f32.mrf.mxu0
        %v4716 = vadd.f32 0.0, %v4715
        %4717 = vmatmul.f32.gmra.mxu0 %v4628
        %v4718 = vpop.f32.mrf.mxu0
        %v4719 = vadd.f32 0.0, %v4718
        %4720 = vmatmul.f32.gmra.mxu0 %v4629
        %v4721 = vpop.f32.mrf.mxu0
        %v4722 = vadd.f32 0.0, %v4721
        %4723 = vmatmul.f32.gmra.mxu0 %v4630
        %v4724 = vpop.f32.mrf.mxu0
        %v4725 = vadd.f32 0.0, %v4724
        %4726 = vmatmul.f32.gmra.mxu0 %v4631
        %v4727 = vpop.f32.mrf.mxu0
        %v4728 = vadd.f32 0.0, %v4727
        %4729 = vmatmul.f32.gmra.mxu0 %v4632
        %v4730 = vpop.f32.mrf.mxu0
        %v4731 = vadd.f32 0.0, %v4730
        %4732 = vmatmul.f32.gmra.mxu0 %v4633
        %v4733 = vpop.f32.mrf.mxu0
        %v4734 = vadd.f32 0.0, %v4733
        %4735 = vmatmul.f32.gmra.mxu0 %v4634
        %v4736 = vpop.f32.mrf.mxu0
        %v4737 = vadd.f32 0.0, %v4736
        %4738 = vmatmul.f32.gmra.mxu0 %v4635
        %v4739 = vpop.f32.mrf.mxu0
        %v4740 = vadd.f32 0.0, %v4739
        %4741 = vmatmul.f32.gmra.mxu0 %v4636
        %v4742 = vpop.f32.mrf.mxu0
        %v4743 = vadd.f32 0.0, %v4742
        %4744 = vmatmul.f32.gmra.mxu0 %v4637
        %v4745 = vpop.f32.mrf.mxu0
        %v4746 = vadd.f32 0.0, %v4745
        %4747 = vmatmul.f32.gmra.mxu0 %v4638
        %v4748 = vpop.f32.mrf.mxu0
        %v4749 = vadd.f32 0.0, %v4748
        %4750 = vmatmul.f32.gmra.mxu0 %v4639
        %v4751 = vpop.f32.mrf.mxu0
        %v4752 = vadd.f32 0.0, %v4751
        %4753 = vmatmul.f32.gmra.mxu0 %v4640
        %v4754 = vpop.f32.mrf.mxu0
        %v4755 = vadd.f32 0.0, %v4754
        %4756 = vmatmul.f32.gmra.mxu0 %v4641
        %v4757 = vpop.f32.mrf.mxu0
        %v4758 = vadd.f32 0.0, %v4757
        %4759 = vmatmul.f32.gmra.mxu0 %v4642
        %v4760 = vpop.f32.mrf.mxu0
        %v4761 = vadd.f32 0.0, %v4760
        %4762 = vmatmul.f32.gmra.mxu0 %v4643
        %v4763 = vpop.f32.mrf.mxu0
        %v4764 = vadd.f32 0.0, %v4763
        %4765 = vmatmul.f32.gmra.mxu0 %v4644
        %v4766 = vpop.f32.mrf.mxu0
        %v4767 = vadd.f32 0.0, %v4766
        %4768 = vmatmul.f32.gmra.mxu0 %v4645
        %v4769 = vpop.f32.mrf.mxu0
        %v4770 = vadd.f32 0.0, %v4769
        %4771 = vmatmul.f32.gmra.mxu0 %v4646
        %v4772 = vpop.f32.mrf.mxu0
        %v4773 = vadd.f32 0.0, %v4772
        %4774 = vmatmul.f32.gmra.mxu0 %v4647
        %v4775 = vpop.f32.mrf.mxu0
        %v4776 = vadd.f32 0.0, %v4775
        %4777 = vmatmul.f32.gmra.mxu0 %v4648
        %v4778 = vpop.f32.mrf.mxu0
        %v4779 = vadd.f32 0.0, %v4778
        %4780 = vmatmul.f32.gmra.mxu0 %v4649
        %v4781 = vpop.f32.mrf.mxu0
        %v4782 = vadd.f32 0.0, %v4781
        %4783 = vmatmul.f32.gmra.mxu0 %v4650
        %v4784 = vpop.f32.mrf.mxu0
        %v4785 = vadd.f32 0.0, %v4784
        %4786 = vmatmul.f32.gmra.mxu0 %v4651
        %v4787 = vpop.f32.mrf.mxu0
        %v4788 = vadd.f32 0.0, %v4787
        %4789 = vmatmul.f32.gmra.mxu0 %v4652
        %v4790 = vpop.f32.mrf.mxu0
        %v4791 = vadd.f32 0.0, %v4790
        %4792 = vmatmul.f32.gmra.mxu0 %v4653
        %v4793 = vpop.f32.mrf.mxu0
        %v4794 = vadd.f32 0.0, %v4793
        %4795 = vdwg.mxu0
        %v4796 = vadd.f32 %v4511, %v4689
        %v4797 = vadd.f32 %v4514, %v4692
        %v4798 = vadd.f32 %v4517, %v4695
        %v4799 = vadd.f32 %v4520, %v4698
        %v4800 = vadd.f32 %v4523, %v4701
        %v4801 = vadd.f32 %v4526, %v4704
        %v4802 = vadd.f32 %v4529, %v4707
        %v4803 = vadd.f32 %v4532, %v4710
        %v4804 = vadd.f32 %v4535, %v4713
        %v4805 = vadd.f32 %v4538, %v4716
        %v4806 = vadd.f32 %v4541, %v4719
        %v4807 = vadd.f32 %v4544, %v4722
        %v4808 = vadd.f32 %v4547, %v4725
        %v4809 = vadd.f32 %v4550, %v4728
        %v4810 = vadd.f32 %v4553, %v4731
        %v4811 = vadd.f32 %v4556, %v4734
        %v4812 = vadd.f32 %v4559, %v4737
        %v4813 = vadd.f32 %v4562, %v4740
        %v4814 = vadd.f32 %v4565, %v4743
        %v4815 = vadd.f32 %v4568, %v4746
        %v4816 = vadd.f32 %v4571, %v4749
        %v4817 = vadd.f32 %v4574, %v4752
        %v4818 = vadd.f32 %v4577, %v4755
        %v4819 = vadd.f32 %v4580, %v4758
        %v4820 = vadd.f32 %v4583, %v4761
        %v4821 = vadd.f32 %v4586, %v4764
        %v4822 = vadd.f32 %v4589, %v4767
        %v4823 = vadd.f32 %v4592, %v4770
        %v4824 = vadd.f32 %v4595, %v4773
        %v4825 = vadd.f32 %v4598, %v4776
        %v4826 = vadd.f32 %v4601, %v4779
        %v4827 = vadd.f32 %v4604, %v4782
        %v4828 = vadd.f32 %v4607, %v4785
        %v4829 = vadd.f32 %v4610, %v4788
        %v4830 = vadd.f32 %v4613, %v4791
        %v4831 = vadd.f32 %v4616, %v4794
        %v4832 = vld [vmem:[#allocation2 + $0x12] sm:$0xff]
        %v4833 = vld [vmem:[#allocation2 + $0x1a] sm:$0xff]
        %v4834 = vld [vmem:[#allocation2 + $0x22] sm:$0xff]
        %v4835 = vld [vmem:[#allocation2 + $0x2a] sm:$0xff]
        %v4836 = vld [vmem:[#allocation2 + $0x32] sm:$0xff]
        %v4837 = vld [vmem:[#allocation2 + $0x3a] sm:$0xff]
        %v4838 = vld [vmem:[#allocation2 + $0x42] sm:$0xff]
        %v4839 = vld [vmem:[#allocation2 + $0x4a] sm:$0xff]
        %v4840 = vld [vmem:[#allocation2 + $0x52] sm:$0xff]
        %v4841 = vld [vmem:[#allocation2 + $0x5a] sm:$0xff]
        %v4842 = vld [vmem:[#allocation2 + $0x62] sm:$0xff]
        %v4843 = vld [vmem:[#allocation2 + $0x6a] sm:$0xff]
        %v4844 = vld [vmem:[#allocation2 + $0x72] sm:$0xff]
        %v4845 = vld [vmem:[#allocation2 + $0x7a] sm:$0xff]
        %v4846 = vld [vmem:[#allocation2 + $0x82] sm:$0xff]
        %v4847 = vld [vmem:[#allocation2 + $0x8a] sm:$0xff]
        %v4848 = vld [vmem:[#allocation2 + $0x92] sm:$0xff]
        %v4849 = vld [vmem:[#allocation2 + $0x9a] sm:$0xff]
        %v4850 = vld [vmem:[#allocation2 + $0xa2] sm:$0xff]
        %v4851 = vld [vmem:[#allocation2 + $0xaa] sm:$0xff]
        %v4852 = vld [vmem:[#allocation2 + $0xb2] sm:$0xff]
        %v4853 = vld [vmem:[#allocation2 + $0xba] sm:$0xff]
        %v4854 = vld [vmem:[#allocation2 + $0xc2] sm:$0xff]
        %v4855 = vld [vmem:[#allocation2 + $0xca] sm:$0xff]
        %v4856 = vld [vmem:[#allocation2 + $0xd2] sm:$0xff]
        %v4857 = vld [vmem:[#allocation2 + $0xda] sm:$0xff]
        %v4858 = vld [vmem:[#allocation2 + $0xe2] sm:$0xff]
        %v4859 = vld [vmem:[#allocation2 + $0xea] sm:$0xff]
        %v4860 = vld [vmem:[#allocation2 + $0xf2] sm:$0xff]
        %v4861 = vld [vmem:[#allocation2 + $0xfa] sm:$0xff]
        %v4862 = vld [vmem:[#allocation2 + $0x102] sm:$0xff]
        %v4863 = vld [vmem:[#allocation2 + $0x10a] sm:$0xff]
        %v4864 = vld [vmem:[#allocation2 + $0x112] sm:$0xff]
        %v4865 = vld [vmem:[#allocation2 + $0x11a] sm:$0xff]
        %v4866 = vld [vmem:[#allocation2 + $0x122] sm:$0xff]
        %v4867 = vld [vmem:[#allocation2 + $0x12a] sm:$0xff]
        %s4868 = scalar_lea.vmem [#allocation3], 384
        %v4869 = vld [vmem:[%s4868] sm:$0xff]
        %v4870 = vld [vmem:[%s4868 + $0x8] sm:$0xff]
        %v4871 = vld [vmem:[%s4868 + $0x10] sm:$0xff]
        %v4872 = vld [vmem:[%s4868 + $0x18] sm:$0xff]
        %v4873 = vld [vmem:[%s4868 + $0x20] sm:$0xff]
        %v4874 = vld [vmem:[%s4868 + $0x28] sm:$0xff]
        %v4875 = vld [vmem:[%s4868 + $0x30] sm:$0xff]
        %v4876 = vld [vmem:[%s4868 + $0x38] sm:$0xff]
        %v4877 = vld [vmem:[%s4868 + $0x40] sm:$0xff]
        %v4878 = vld [vmem:[%s4868 + $0x48] sm:$0xff]
        %v4879 = vld [vmem:[%s4868 + $0x50] sm:$0xff]
        %v4880 = vld [vmem:[%s4868 + $0x58] sm:$0xff]
        %v4881 = vld [vmem:[%s4868 + $0x60] sm:$0xff]
        %v4882 = vld [vmem:[%s4868 + $0x68] sm:$0xff]
        %v4883 = vld [vmem:[%s4868 + $0x70] sm:$0xff]
        %v4884 = vld [vmem:[%s4868 + $0x78] sm:$0xff]
        %4885 = vmatpush.msra.mxu0 %v4884
        %4886 = vmatpush.msra.mxu0 %v4883
        %4887 = vmatpush.msra.mxu0 %v4882
        %4888 = vmatpush.msra.mxu0 %v4881
        %4889 = vmatpush.msra.mxu0 %v4880
        %4890 = vmatpush.msra.mxu0 %v4879
        %4891 = vmatpush.msra.mxu0 %v4878
        %4892 = vmatpush.msra.mxu0 %v4877
        %4893 = vmatpush.msra.mxu0 %v4876
        %4894 = vmatpush.msra.mxu0 %v4875
        %4895 = vmatpush.msra.mxu0 %v4874
        %4896 = vmatpush.msra.mxu0 %v4873
        %4897 = vmatpush.msra.mxu0 %v4872
        %4898 = vmatpush.msra.mxu0 %v4871
        %4899 = vmatpush.msra.mxu0 %v4870
        %4900 = vmatpush.msra.mxu0 %v4869
        %4901 = vmatmul.f32.gmra.mxu0 %v4832
        %v4902 = vpop.f32.mrf.mxu0
        %v4903 = vadd.f32 0.0, %v4902
        %4904 = vmatmul.f32.gmra.mxu0 %v4833
        %v4905 = vpop.f32.mrf.mxu0
        %v4906 = vadd.f32 0.0, %v4905
        %4907 = vmatmul.f32.gmra.mxu0 %v4834
        %v4908 = vpop.f32.mrf.mxu0
        %v4909 = vadd.f32 0.0, %v4908
        %4910 = vmatmul.f32.gmra.mxu0 %v4835
        %v4911 = vpop.f32.mrf.mxu0
        %v4912 = vadd.f32 0.0, %v4911
        %4913 = vmatmul.f32.gmra.mxu0 %v4836
        %v4914 = vpop.f32.mrf.mxu0
        %v4915 = vadd.f32 0.0, %v4914
        %4916 = vmatmul.f32.gmra.mxu0 %v4837
        %v4917 = vpop.f32.mrf.mxu0
        %v4918 = vadd.f32 0.0, %v4917
        %4919 = vmatmul.f32.gmra.mxu0 %v4838
        %v4920 = vpop.f32.mrf.mxu0
        %v4921 = vadd.f32 0.0, %v4920
        %4922 = vmatmul.f32.gmra.mxu0 %v4839
        %v4923 = vpop.f32.mrf.mxu0
        %v4924 = vadd.f32 0.0, %v4923
        %4925 = vmatmul.f32.gmra.mxu0 %v4840
        %v4926 = vpop.f32.mrf.mxu0
        %v4927 = vadd.f32 0.0, %v4926
        %4928 = vmatmul.f32.gmra.mxu0 %v4841
        %v4929 = vpop.f32.mrf.mxu0
        %v4930 = vadd.f32 0.0, %v4929
        %4931 = vmatmul.f32.gmra.mxu0 %v4842
        %v4932 = vpop.f32.mrf.mxu0
        %v4933 = vadd.f32 0.0, %v4932
        %4934 = vmatmul.f32.gmra.mxu0 %v4843
        %v4935 = vpop.f32.mrf.mxu0
        %v4936 = vadd.f32 0.0, %v4935
        %4937 = vmatmul.f32.gmra.mxu0 %v4844
        %v4938 = vpop.f32.mrf.mxu0
        %v4939 = vadd.f32 0.0, %v4938
        %4940 = vmatmul.f32.gmra.mxu0 %v4845
        %v4941 = vpop.f32.mrf.mxu0
        %v4942 = vadd.f32 0.0, %v4941
        %4943 = vmatmul.f32.gmra.mxu0 %v4846
        %v4944 = vpop.f32.mrf.mxu0
        %v4945 = vadd.f32 0.0, %v4944
        %4946 = vmatmul.f32.gmra.mxu0 %v4847
        %v4947 = vpop.f32.mrf.mxu0
        %v4948 = vadd.f32 0.0, %v4947
        %4949 = vmatmul.f32.gmra.mxu0 %v4848
        %v4950 = vpop.f32.mrf.mxu0
        %v4951 = vadd.f32 0.0, %v4950
        %4952 = vmatmul.f32.gmra.mxu0 %v4849
        %v4953 = vpop.f32.mrf.mxu0
        %v4954 = vadd.f32 0.0, %v4953
        %4955 = vmatmul.f32.gmra.mxu0 %v4850
        %v4956 = vpop.f32.mrf.mxu0
        %v4957 = vadd.f32 0.0, %v4956
        %4958 = vmatmul.f32.gmra.mxu0 %v4851
        %v4959 = vpop.f32.mrf.mxu0
        %v4960 = vadd.f32 0.0, %v4959
        %4961 = vmatmul.f32.gmra.mxu0 %v4852
        %v4962 = vpop.f32.mrf.mxu0
        %v4963 = vadd.f32 0.0, %v4962
        %4964 = vmatmul.f32.gmra.mxu0 %v4853
        %v4965 = vpop.f32.mrf.mxu0
        %v4966 = vadd.f32 0.0, %v4965
        %4967 = vmatmul.f32.gmra.mxu0 %v4854
        %v4968 = vpop.f32.mrf.mxu0
        %v4969 = vadd.f32 0.0, %v4968
        %4970 = vmatmul.f32.gmra.mxu0 %v4855
        %v4971 = vpop.f32.mrf.mxu0
        %v4972 = vadd.f32 0.0, %v4971
        %4973 = vmatmul.f32.gmra.mxu0 %v4856
        %v4974 = vpop.f32.mrf.mxu0
        %v4975 = vadd.f32 0.0, %v4974
        %4976 = vmatmul.f32.gmra.mxu0 %v4857
        %v4977 = vpop.f32.mrf.mxu0
        %v4978 = vadd.f32 0.0, %v4977
        %4979 = vmatmul.f32.gmra.mxu0 %v4858
        %v4980 = vpop.f32.mrf.mxu0
        %v4981 = vadd.f32 0.0, %v4980
        %4982 = vmatmul.f32.gmra.mxu0 %v4859
        %v4983 = vpop.f32.mrf.mxu0
        %v4984 = vadd.f32 0.0, %v4983
        %4985 = vmatmul.f32.gmra.mxu0 %v4860
        %v4986 = vpop.f32.mrf.mxu0
        %v4987 = vadd.f32 0.0, %v4986
        %4988 = vmatmul.f32.gmra.mxu0 %v4861
        %v4989 = vpop.f32.mrf.mxu0
        %v4990 = vadd.f32 0.0, %v4989
        %4991 = vmatmul.f32.gmra.mxu0 %v4862
        %v4992 = vpop.f32.mrf.mxu0
        %v4993 = vadd.f32 0.0, %v4992
        %4994 = vmatmul.f32.gmra.mxu0 %v4863
        %v4995 = vpop.f32.mrf.mxu0
        %v4996 = vadd.f32 0.0, %v4995
        %4997 = vmatmul.f32.gmra.mxu0 %v4864
        %v4998 = vpop.f32.mrf.mxu0
        %v4999 = vadd.f32 0.0, %v4998
        %5000 = vmatmul.f32.gmra.mxu0 %v4865
        %v5001 = vpop.f32.mrf.mxu0
        %v5002 = vadd.f32 0.0, %v5001
        %5003 = vmatmul.f32.gmra.mxu0 %v4866
        %v5004 = vpop.f32.mrf.mxu0
        %v5005 = vadd.f32 0.0, %v5004
        %5006 = vmatmul.f32.gmra.mxu0 %v4867
        %v5007 = vpop.f32.mrf.mxu0
        %v5008 = vadd.f32 0.0, %v5007
        %5009 = vdwg.mxu0
        %v5010 = vadd.f32 %v4796, %v4903
        %v5011 = vadd.f32 %v4797, %v4906
        %v5012 = vadd.f32 %v4798, %v4909
        %v5013 = vadd.f32 %v4799, %v4912
        %v5014 = vadd.f32 %v4800, %v4915
        %v5015 = vadd.f32 %v4801, %v4918
        %v5016 = vadd.f32 %v4802, %v4921
        %v5017 = vadd.f32 %v4803, %v4924
        %v5018 = vadd.f32 %v4804, %v4927
        %v5019 = vadd.f32 %v4805, %v4930
        %v5020 = vadd.f32 %v4806, %v4933
        %v5021 = vadd.f32 %v4807, %v4936
        %v5022 = vadd.f32 %v4808, %v4939
        %v5023 = vadd.f32 %v4809, %v4942
        %v5024 = vadd.f32 %v4810, %v4945
        %v5025 = vadd.f32 %v4811, %v4948
        %v5026 = vadd.f32 %v4812, %v4951
        %v5027 = vadd.f32 %v4813, %v4954
        %v5028 = vadd.f32 %v4814, %v4957
        %v5029 = vadd.f32 %v4815, %v4960
        %v5030 = vadd.f32 %v4816, %v4963
        %v5031 = vadd.f32 %v4817, %v4966
        %v5032 = vadd.f32 %v4818, %v4969
        %v5033 = vadd.f32 %v4819, %v4972
        %v5034 = vadd.f32 %v4820, %v4975
        %v5035 = vadd.f32 %v4821, %v4978
        %v5036 = vadd.f32 %v4822, %v4981
        %v5037 = vadd.f32 %v4823, %v4984
        %v5038 = vadd.f32 %v4824, %v4987
        %v5039 = vadd.f32 %v4825, %v4990
        %v5040 = vadd.f32 %v4826, %v4993
        %v5041 = vadd.f32 %v4827, %v4996
        %v5042 = vadd.f32 %v4828, %v4999
        %v5043 = vadd.f32 %v4829, %v5002
        %v5044 = vadd.f32 %v4830, %v5005
        %v5045 = vadd.f32 %v4831, %v5008
        %v5046 = vld [vmem:[#allocation2 + $0x13] sm:$0xff]
        %v5047 = vld [vmem:[#allocation2 + $0x1b] sm:$0xff]
        %v5048 = vld [vmem:[#allocation2 + $0x23] sm:$0xff]
        %v5049 = vld [vmem:[#allocation2 + $0x2b] sm:$0xff]
        %v5050 = vld [vmem:[#allocation2 + $0x33] sm:$0xff]
        %v5051 = vld [vmem:[#allocation2 + $0x3b] sm:$0xff]
        %v5052 = vld [vmem:[#allocation2 + $0x43] sm:$0xff]
        %v5053 = vld [vmem:[#allocation2 + $0x4b] sm:$0xff]
        %v5054 = vld [vmem:[#allocation2 + $0x53] sm:$0xff]
        %v5055 = vld [vmem:[#allocation2 + $0x5b] sm:$0xff]
        %v5056 = vld [vmem:[#allocation2 + $0x63] sm:$0xff]
        %v5057 = vld [vmem:[#allocation2 + $0x6b] sm:$0xff]
        %v5058 = vld [vmem:[#allocation2 + $0x73] sm:$0xff]
        %v5059 = vld [vmem:[#allocation2 + $0x7b] sm:$0xff]
        %v5060 = vld [vmem:[#allocation2 + $0x83] sm:$0xff]
        %v5061 = vld [vmem:[#allocation2 + $0x8b] sm:$0xff]
        %v5062 = vld [vmem:[#allocation2 + $0x93] sm:$0xff]
        %v5063 = vld [vmem:[#allocation2 + $0x9b] sm:$0xff]
        %v5064 = vld [vmem:[#allocation2 + $0xa3] sm:$0xff]
        %v5065 = vld [vmem:[#allocation2 + $0xab] sm:$0xff]
        %v5066 = vld [vmem:[#allocation2 + $0xb3] sm:$0xff]
        %v5067 = vld [vmem:[#allocation2 + $0xbb] sm:$0xff]
        %v5068 = vld [vmem:[#allocation2 + $0xc3] sm:$0xff]
        %v5069 = vld [vmem:[#allocation2 + $0xcb] sm:$0xff]
        %v5070 = vld [vmem:[#allocation2 + $0xd3] sm:$0xff]
        %v5071 = vld [vmem:[#allocation2 + $0xdb] sm:$0xff]
        %v5072 = vld [vmem:[#allocation2 + $0xe3] sm:$0xff]
        %v5073 = vld [vmem:[#allocation2 + $0xeb] sm:$0xff]
        %v5074 = vld [vmem:[#allocation2 + $0xf3] sm:$0xff]
        %v5075 = vld [vmem:[#allocation2 + $0xfb] sm:$0xff]
        %v5076 = vld [vmem:[#allocation2 + $0x103] sm:$0xff]
        %v5077 = vld [vmem:[#allocation2 + $0x10b] sm:$0xff]
        %v5078 = vld [vmem:[#allocation2 + $0x113] sm:$0xff]
        %v5079 = vld [vmem:[#allocation2 + $0x11b] sm:$0xff]
        %v5080 = vld [vmem:[#allocation2 + $0x123] sm:$0xff]
        %v5081 = vld [vmem:[#allocation2 + $0x12b] sm:$0xff]
        %s5082 = scalar_lea.vmem [#allocation3], 512
        %v5083 = vld [vmem:[%s5082] sm:$0xff]
        %v5084 = vld [vmem:[%s5082 + $0x8] sm:$0xff]
        %v5085 = vld [vmem:[%s5082 + $0x10] sm:$0xff]
        %v5086 = vld [vmem:[%s5082 + $0x18] sm:$0xff]
        %v5087 = vld [vmem:[%s5082 + $0x20] sm:$0xff]
        %v5088 = vld [vmem:[%s5082 + $0x28] sm:$0xff]
        %v5089 = vld [vmem:[%s5082 + $0x30] sm:$0xff]
        %v5090 = vld [vmem:[%s5082 + $0x38] sm:$0xff]
        %v5091 = vld [vmem:[%s5082 + $0x40] sm:$0xff]
        %v5092 = vld [vmem:[%s5082 + $0x48] sm:$0xff]
        %v5093 = vld [vmem:[%s5082 + $0x50] sm:$0xff]
        %v5094 = vld [vmem:[%s5082 + $0x58] sm:$0xff]
        %v5095 = vld [vmem:[%s5082 + $0x60] sm:$0xff]
        %v5096 = vld [vmem:[%s5082 + $0x68] sm:$0xff]
        %v5097 = vld [vmem:[%s5082 + $0x70] sm:$0xff]
        %v5098 = vld [vmem:[%s5082 + $0x78] sm:$0xff]
        %5099 = vmatpush.msra.mxu0 %v5098
        %5100 = vmatpush.msra.mxu0 %v5097
        %5101 = vmatpush.msra.mxu0 %v5096
        %5102 = vmatpush.msra.mxu0 %v5095
        %5103 = vmatpush.msra.mxu0 %v5094
        %5104 = vmatpush.msra.mxu0 %v5093
        %5105 = vmatpush.msra.mxu0 %v5092
        %5106 = vmatpush.msra.mxu0 %v5091
        %5107 = vmatpush.msra.mxu0 %v5090
        %5108 = vmatpush.msra.mxu0 %v5089
        %5109 = vmatpush.msra.mxu0 %v5088
        %5110 = vmatpush.msra.mxu0 %v5087
        %5111 = vmatpush.msra.mxu0 %v5086
        %5112 = vmatpush.msra.mxu0 %v5085
        %5113 = vmatpush.msra.mxu0 %v5084
        %5114 = vmatpush.msra.mxu0 %v5083
        %5115 = vmatmul.f32.gmra.mxu0 %v5046
        %v5116 = vpop.f32.mrf.mxu0
        %v5117 = vadd.f32 0.0, %v5116
        %5118 = vmatmul.f32.gmra.mxu0 %v5047
        %v5119 = vpop.f32.mrf.mxu0
        %v5120 = vadd.f32 0.0, %v5119
        %5121 = vmatmul.f32.gmra.mxu0 %v5048
        %v5122 = vpop.f32.mrf.mxu0
        %v5123 = vadd.f32 0.0, %v5122
        %5124 = vmatmul.f32.gmra.mxu0 %v5049
        %v5125 = vpop.f32.mrf.mxu0
        %v5126 = vadd.f32 0.0, %v5125
        %5127 = vmatmul.f32.gmra.mxu0 %v5050
        %v5128 = vpop.f32.mrf.mxu0
        %v5129 = vadd.f32 0.0, %v5128
        %5130 = vmatmul.f32.gmra.mxu0 %v5051
        %v5131 = vpop.f32.mrf.mxu0
        %v5132 = vadd.f32 0.0, %v5131
        %5133 = vmatmul.f32.gmra.mxu0 %v5052
        %v5134 = vpop.f32.mrf.mxu0
        %v5135 = vadd.f32 0.0, %v5134
        %5136 = vmatmul.f32.gmra.mxu0 %v5053
        %v5137 = vpop.f32.mrf.mxu0
        %v5138 = vadd.f32 0.0, %v5137
        %5139 = vmatmul.f32.gmra.mxu0 %v5054
        %v5140 = vpop.f32.mrf.mxu0
        %v5141 = vadd.f32 0.0, %v5140
        %5142 = vmatmul.f32.gmra.mxu0 %v5055
        %v5143 = vpop.f32.mrf.mxu0
        %v5144 = vadd.f32 0.0, %v5143
        %5145 = vmatmul.f32.gmra.mxu0 %v5056
        %v5146 = vpop.f32.mrf.mxu0
        %v5147 = vadd.f32 0.0, %v5146
        %5148 = vmatmul.f32.gmra.mxu0 %v5057
        %v5149 = vpop.f32.mrf.mxu0
        %v5150 = vadd.f32 0.0, %v5149
        %5151 = vmatmul.f32.gmra.mxu0 %v5058
        %v5152 = vpop.f32.mrf.mxu0
        %v5153 = vadd.f32 0.0, %v5152
        %5154 = vmatmul.f32.gmra.mxu0 %v5059
        %v5155 = vpop.f32.mrf.mxu0
        %v5156 = vadd.f32 0.0, %v5155
        %5157 = vmatmul.f32.gmra.mxu0 %v5060
        %v5158 = vpop.f32.mrf.mxu0
        %v5159 = vadd.f32 0.0, %v5158
        %5160 = vmatmul.f32.gmra.mxu0 %v5061
        %v5161 = vpop.f32.mrf.mxu0
        %v5162 = vadd.f32 0.0, %v5161
        %5163 = vmatmul.f32.gmra.mxu0 %v5062
        %v5164 = vpop.f32.mrf.mxu0
        %v5165 = vadd.f32 0.0, %v5164
        %5166 = vmatmul.f32.gmra.mxu0 %v5063
        %v5167 = vpop.f32.mrf.mxu0
        %v5168 = vadd.f32 0.0, %v5167
        %5169 = vmatmul.f32.gmra.mxu0 %v5064
        %v5170 = vpop.f32.mrf.mxu0
        %v5171 = vadd.f32 0.0, %v5170
        %5172 = vmatmul.f32.gmra.mxu0 %v5065
        %v5173 = vpop.f32.mrf.mxu0
        %v5174 = vadd.f32 0.0, %v5173
        %5175 = vmatmul.f32.gmra.mxu0 %v5066
        %v5176 = vpop.f32.mrf.mxu0
        %v5177 = vadd.f32 0.0, %v5176
        %5178 = vmatmul.f32.gmra.mxu0 %v5067
        %v5179 = vpop.f32.mrf.mxu0
        %v5180 = vadd.f32 0.0, %v5179
        %5181 = vmatmul.f32.gmra.mxu0 %v5068
        %v5182 = vpop.f32.mrf.mxu0
        %v5183 = vadd.f32 0.0, %v5182
        %5184 = vmatmul.f32.gmra.mxu0 %v5069
        %v5185 = vpop.f32.mrf.mxu0
        %v5186 = vadd.f32 0.0, %v5185
        %5187 = vmatmul.f32.gmra.mxu0 %v5070
        %v5188 = vpop.f32.mrf.mxu0
        %v5189 = vadd.f32 0.0, %v5188
        %5190 = vmatmul.f32.gmra.mxu0 %v5071
        %v5191 = vpop.f32.mrf.mxu0
        %v5192 = vadd.f32 0.0, %v5191
        %5193 = vmatmul.f32.gmra.mxu0 %v5072
        %v5194 = vpop.f32.mrf.mxu0
        %v5195 = vadd.f32 0.0, %v5194
        %5196 = vmatmul.f32.gmra.mxu0 %v5073
        %v5197 = vpop.f32.mrf.mxu0
        %v5198 = vadd.f32 0.0, %v5197
        %5199 = vmatmul.f32.gmra.mxu0 %v5074
        %v5200 = vpop.f32.mrf.mxu0
        %v5201 = vadd.f32 0.0, %v5200
        %5202 = vmatmul.f32.gmra.mxu0 %v5075
        %v5203 = vpop.f32.mrf.mxu0
        %v5204 = vadd.f32 0.0, %v5203
        %5205 = vmatmul.f32.gmra.mxu0 %v5076
        %v5206 = vpop.f32.mrf.mxu0
        %v5207 = vadd.f32 0.0, %v5206
        %5208 = vmatmul.f32.gmra.mxu0 %v5077
        %v5209 = vpop.f32.mrf.mxu0
        %v5210 = vadd.f32 0.0, %v5209
        %5211 = vmatmul.f32.gmra.mxu0 %v5078
        %v5212 = vpop.f32.mrf.mxu0
        %v5213 = vadd.f32 0.0, %v5212
        %5214 = vmatmul.f32.gmra.mxu0 %v5079
        %v5215 = vpop.f32.mrf.mxu0
        %v5216 = vadd.f32 0.0, %v5215
        %5217 = vmatmul.f32.gmra.mxu0 %v5080
        %v5218 = vpop.f32.mrf.mxu0
        %v5219 = vadd.f32 0.0, %v5218
        %5220 = vmatmul.f32.gmra.mxu0 %v5081
        %v5221 = vpop.f32.mrf.mxu0
        %v5222 = vadd.f32 0.0, %v5221
        %5223 = vdwg.mxu0
        %v5224 = vadd.f32 %v5010, %v5117
        %v5225 = vadd.f32 %v5011, %v5120
        %v5226 = vadd.f32 %v5012, %v5123
        %v5227 = vadd.f32 %v5013, %v5126
        %v5228 = vadd.f32 %v5014, %v5129
        %v5229 = vadd.f32 %v5015, %v5132
        %v5230 = vadd.f32 %v5016, %v5135
        %v5231 = vadd.f32 %v5017, %v5138
        %v5232 = vadd.f32 %v5018, %v5141
        %v5233 = vadd.f32 %v5019, %v5144
        %v5234 = vadd.f32 %v5020, %v5147
        %v5235 = vadd.f32 %v5021, %v5150
        %v5236 = vadd.f32 %v5022, %v5153
        %v5237 = vadd.f32 %v5023, %v5156
        %v5238 = vadd.f32 %v5024, %v5159
        %v5239 = vadd.f32 %v5025, %v5162
        %v5240 = vadd.f32 %v5026, %v5165
        %v5241 = vadd.f32 %v5027, %v5168
        %v5242 = vadd.f32 %v5028, %v5171
        %v5243 = vadd.f32 %v5029, %v5174
        %v5244 = vadd.f32 %v5030, %v5177
        %v5245 = vadd.f32 %v5031, %v5180
        %v5246 = vadd.f32 %v5032, %v5183
        %v5247 = vadd.f32 %v5033, %v5186
        %v5248 = vadd.f32 %v5034, %v5189
        %v5249 = vadd.f32 %v5035, %v5192
        %v5250 = vadd.f32 %v5036, %v5195
        %v5251 = vadd.f32 %v5037, %v5198
        %v5252 = vadd.f32 %v5038, %v5201
        %v5253 = vadd.f32 %v5039, %v5204
        %v5254 = vadd.f32 %v5040, %v5207
        %v5255 = vadd.f32 %v5041, %v5210
        %v5256 = vadd.f32 %v5042, %v5213
        %v5257 = vadd.f32 %v5043, %v5216
        %v5258 = vadd.f32 %v5044, %v5219
        %v5259 = vadd.f32 %v5045, %v5222
        %v5260 = vld [vmem:[#allocation2 + $0x14] sm:$0xff]
        %v5261 = vld [vmem:[#allocation2 + $0x1c] sm:$0xff]
        %v5262 = vld [vmem:[#allocation2 + $0x24] sm:$0xff]
        %v5263 = vld [vmem:[#allocation2 + $0x2c] sm:$0xff]
        %v5264 = vld [vmem:[#allocation2 + $0x34] sm:$0xff]
        %v5265 = vld [vmem:[#allocation2 + $0x3c] sm:$0xff]
        %v5266 = vld [vmem:[#allocation2 + $0x44] sm:$0xff]
        %v5267 = vld [vmem:[#allocation2 + $0x4c] sm:$0xff]
        %v5268 = vld [vmem:[#allocation2 + $0x54] sm:$0xff]
        %v5269 = vld [vmem:[#allocation2 + $0x5c] sm:$0xff]
        %v5270 = vld [vmem:[#allocation2 + $0x64] sm:$0xff]
        %v5271 = vld [vmem:[#allocation2 + $0x6c] sm:$0xff]
        %v5272 = vld [vmem:[#allocation2 + $0x74] sm:$0xff]
        %v5273 = vld [vmem:[#allocation2 + $0x7c] sm:$0xff]
        %v5274 = vld [vmem:[#allocation2 + $0x84] sm:$0xff]
        %v5275 = vld [vmem:[#allocation2 + $0x8c] sm:$0xff]
        %v5276 = vld [vmem:[#allocation2 + $0x94] sm:$0xff]
        %v5277 = vld [vmem:[#allocation2 + $0x9c] sm:$0xff]
        %v5278 = vld [vmem:[#allocation2 + $0xa4] sm:$0xff]
        %v5279 = vld [vmem:[#allocation2 + $0xac] sm:$0xff]
        %v5280 = vld [vmem:[#allocation2 + $0xb4] sm:$0xff]
        %v5281 = vld [vmem:[#allocation2 + $0xbc] sm:$0xff]
        %v5282 = vld [vmem:[#allocation2 + $0xc4] sm:$0xff]
        %v5283 = vld [vmem:[#allocation2 + $0xcc] sm:$0xff]
        %v5284 = vld [vmem:[#allocation2 + $0xd4] sm:$0xff]
        %v5285 = vld [vmem:[#allocation2 + $0xdc] sm:$0xff]
        %v5286 = vld [vmem:[#allocation2 + $0xe4] sm:$0xff]
        %v5287 = vld [vmem:[#allocation2 + $0xec] sm:$0xff]
        %v5288 = vld [vmem:[#allocation2 + $0xf4] sm:$0xff]
        %v5289 = vld [vmem:[#allocation2 + $0xfc] sm:$0xff]
        %v5290 = vld [vmem:[#allocation2 + $0x104] sm:$0xff]
        %v5291 = vld [vmem:[#allocation2 + $0x10c] sm:$0xff]
        %v5292 = vld [vmem:[#allocation2 + $0x114] sm:$0xff]
        %v5293 = vld [vmem:[#allocation2 + $0x11c] sm:$0xff]
        %v5294 = vld [vmem:[#allocation2 + $0x124] sm:$0xff]
        %v5295 = vld [vmem:[#allocation2 + $0x12c] sm:$0xff]
        %s5296 = scalar_lea.vmem [#allocation3], 640
        %v5297 = vld [vmem:[%s5296] sm:$0xff]
        %v5298 = vld [vmem:[%s5296 + $0x8] sm:$0xff]
        %v5299 = vld [vmem:[%s5296 + $0x10] sm:$0xff]
        %v5300 = vld [vmem:[%s5296 + $0x18] sm:$0xff]
        %v5301 = vld [vmem:[%s5296 + $0x20] sm:$0xff]
        %v5302 = vld [vmem:[%s5296 + $0x28] sm:$0xff]
        %v5303 = vld [vmem:[%s5296 + $0x30] sm:$0xff]
        %v5304 = vld [vmem:[%s5296 + $0x38] sm:$0xff]
        %v5305 = vld [vmem:[%s5296 + $0x40] sm:$0xff]
        %v5306 = vld [vmem:[%s5296 + $0x48] sm:$0xff]
        %v5307 = vld [vmem:[%s5296 + $0x50] sm:$0xff]
        %v5308 = vld [vmem:[%s5296 + $0x58] sm:$0xff]
        %v5309 = vld [vmem:[%s5296 + $0x60] sm:$0xff]
        %v5310 = vld [vmem:[%s5296 + $0x68] sm:$0xff]
        %v5311 = vld [vmem:[%s5296 + $0x70] sm:$0xff]
        %v5312 = vld [vmem:[%s5296 + $0x78] sm:$0xff]
        %5313 = vmatpush.msra.mxu0 %v5312
        %5314 = vmatpush.msra.mxu0 %v5311
        %5315 = vmatpush.msra.mxu0 %v5310
        %5316 = vmatpush.msra.mxu0 %v5309
        %5317 = vmatpush.msra.mxu0 %v5308
        %5318 = vmatpush.msra.mxu0 %v5307
        %5319 = vmatpush.msra.mxu0 %v5306
        %5320 = vmatpush.msra.mxu0 %v5305
        %5321 = vmatpush.msra.mxu0 %v5304
        %5322 = vmatpush.msra.mxu0 %v5303
        %5323 = vmatpush.msra.mxu0 %v5302
        %5324 = vmatpush.msra.mxu0 %v5301
        %5325 = vmatpush.msra.mxu0 %v5300
        %5326 = vmatpush.msra.mxu0 %v5299
        %5327 = vmatpush.msra.mxu0 %v5298
        %5328 = vmatpush.msra.mxu0 %v5297
        %5329 = vmatmul.f32.gmra.mxu0 %v5260
        %v5330 = vpop.f32.mrf.mxu0
        %v5331 = vadd.f32 0.0, %v5330
        %5332 = vmatmul.f32.gmra.mxu0 %v5261
        %v5333 = vpop.f32.mrf.mxu0
        %v5334 = vadd.f32 0.0, %v5333
        %5335 = vmatmul.f32.gmra.mxu0 %v5262
        %v5336 = vpop.f32.mrf.mxu0
        %v5337 = vadd.f32 0.0, %v5336
        %5338 = vmatmul.f32.gmra.mxu0 %v5263
        %v5339 = vpop.f32.mrf.mxu0
        %v5340 = vadd.f32 0.0, %v5339
        %5341 = vmatmul.f32.gmra.mxu0 %v5264
        %v5342 = vpop.f32.mrf.mxu0
        %v5343 = vadd.f32 0.0, %v5342
        %5344 = vmatmul.f32.gmra.mxu0 %v5265
        %v5345 = vpop.f32.mrf.mxu0
        %v5346 = vadd.f32 0.0, %v5345
        %5347 = vmatmul.f32.gmra.mxu0 %v5266
        %v5348 = vpop.f32.mrf.mxu0
        %v5349 = vadd.f32 0.0, %v5348
        %5350 = vmatmul.f32.gmra.mxu0 %v5267
        %v5351 = vpop.f32.mrf.mxu0
        %v5352 = vadd.f32 0.0, %v5351
        %5353 = vmatmul.f32.gmra.mxu0 %v5268
        %v5354 = vpop.f32.mrf.mxu0
        %v5355 = vadd.f32 0.0, %v5354
        %5356 = vmatmul.f32.gmra.mxu0 %v5269
        %v5357 = vpop.f32.mrf.mxu0
        %v5358 = vadd.f32 0.0, %v5357
        %5359 = vmatmul.f32.gmra.mxu0 %v5270
        %v5360 = vpop.f32.mrf.mxu0
        %v5361 = vadd.f32 0.0, %v5360
        %5362 = vmatmul.f32.gmra.mxu0 %v5271
        %v5363 = vpop.f32.mrf.mxu0
        %v5364 = vadd.f32 0.0, %v5363
        %5365 = vmatmul.f32.gmra.mxu0 %v5272
        %v5366 = vpop.f32.mrf.mxu0
        %v5367 = vadd.f32 0.0, %v5366
        %5368 = vmatmul.f32.gmra.mxu0 %v5273
        %v5369 = vpop.f32.mrf.mxu0
        %v5370 = vadd.f32 0.0, %v5369
        %5371 = vmatmul.f32.gmra.mxu0 %v5274
        %v5372 = vpop.f32.mrf.mxu0
        %v5373 = vadd.f32 0.0, %v5372
        %5374 = vmatmul.f32.gmra.mxu0 %v5275
        %v5375 = vpop.f32.mrf.mxu0
        %v5376 = vadd.f32 0.0, %v5375
        %5377 = vmatmul.f32.gmra.mxu0 %v5276
        %v5378 = vpop.f32.mrf.mxu0
        %v5379 = vadd.f32 0.0, %v5378
        %5380 = vmatmul.f32.gmra.mxu0 %v5277
        %v5381 = vpop.f32.mrf.mxu0
        %v5382 = vadd.f32 0.0, %v5381
        %5383 = vmatmul.f32.gmra.mxu0 %v5278
        %v5384 = vpop.f32.mrf.mxu0
        %v5385 = vadd.f32 0.0, %v5384
        %5386 = vmatmul.f32.gmra.mxu0 %v5279
        %v5387 = vpop.f32.mrf.mxu0
        %v5388 = vadd.f32 0.0, %v5387
        %5389 = vmatmul.f32.gmra.mxu0 %v5280
        %v5390 = vpop.f32.mrf.mxu0
        %v5391 = vadd.f32 0.0, %v5390
        %5392 = vmatmul.f32.gmra.mxu0 %v5281
        %v5393 = vpop.f32.mrf.mxu0
        %v5394 = vadd.f32 0.0, %v5393
        %5395 = vmatmul.f32.gmra.mxu0 %v5282
        %v5396 = vpop.f32.mrf.mxu0
        %v5397 = vadd.f32 0.0, %v5396
        %5398 = vmatmul.f32.gmra.mxu0 %v5283
        %v5399 = vpop.f32.mrf.mxu0
        %v5400 = vadd.f32 0.0, %v5399
        %5401 = vmatmul.f32.gmra.mxu0 %v5284
        %v5402 = vpop.f32.mrf.mxu0
        %v5403 = vadd.f32 0.0, %v5402
        %5404 = vmatmul.f32.gmra.mxu0 %v5285
        %v5405 = vpop.f32.mrf.mxu0
        %v5406 = vadd.f32 0.0, %v5405
        %5407 = vmatmul.f32.gmra.mxu0 %v5286
        %v5408 = vpop.f32.mrf.mxu0
        %v5409 = vadd.f32 0.0, %v5408
        %5410 = vmatmul.f32.gmra.mxu0 %v5287
        %v5411 = vpop.f32.mrf.mxu0
        %v5412 = vadd.f32 0.0, %v5411
        %5413 = vmatmul.f32.gmra.mxu0 %v5288
        %v5414 = vpop.f32.mrf.mxu0
        %v5415 = vadd.f32 0.0, %v5414
        %5416 = vmatmul.f32.gmra.mxu0 %v5289
        %v5417 = vpop.f32.mrf.mxu0
        %v5418 = vadd.f32 0.0, %v5417
        %5419 = vmatmul.f32.gmra.mxu0 %v5290
        %v5420 = vpop.f32.mrf.mxu0
        %v5421 = vadd.f32 0.0, %v5420
        %5422 = vmatmul.f32.gmra.mxu0 %v5291
        %v5423 = vpop.f32.mrf.mxu0
        %v5424 = vadd.f32 0.0, %v5423
        %5425 = vmatmul.f32.gmra.mxu0 %v5292
        %v5426 = vpop.f32.mrf.mxu0
        %v5427 = vadd.f32 0.0, %v5426
        %5428 = vmatmul.f32.gmra.mxu0 %v5293
        %v5429 = vpop.f32.mrf.mxu0
        %v5430 = vadd.f32 0.0, %v5429
        %5431 = vmatmul.f32.gmra.mxu0 %v5294
        %v5432 = vpop.f32.mrf.mxu0
        %v5433 = vadd.f32 0.0, %v5432
        %5434 = vmatmul.f32.gmra.mxu0 %v5295
        %v5435 = vpop.f32.mrf.mxu0
        %v5436 = vadd.f32 0.0, %v5435
        %5437 = vdwg.mxu0
        %v5438 = vadd.f32 %v5224, %v5331
        %v5439 = vadd.f32 %v5225, %v5334
        %v5440 = vadd.f32 %v5226, %v5337
        %v5441 = vadd.f32 %v5227, %v5340
        %v5442 = vadd.f32 %v5228, %v5343
        %v5443 = vadd.f32 %v5229, %v5346
        %v5444 = vadd.f32 %v5230, %v5349
        %v5445 = vadd.f32 %v5231, %v5352
        %v5446 = vadd.f32 %v5232, %v5355
        %v5447 = vadd.f32 %v5233, %v5358
        %v5448 = vadd.f32 %v5234, %v5361
        %v5449 = vadd.f32 %v5235, %v5364
        %v5450 = vadd.f32 %v5236, %v5367
        %v5451 = vadd.f32 %v5237, %v5370
        %v5452 = vadd.f32 %v5238, %v5373
        %v5453 = vadd.f32 %v5239, %v5376
        %v5454 = vadd.f32 %v5240, %v5379
        %v5455 = vadd.f32 %v5241, %v5382
        %v5456 = vadd.f32 %v5242, %v5385
        %v5457 = vadd.f32 %v5243, %v5388
        %v5458 = vadd.f32 %v5244, %v5391
        %v5459 = vadd.f32 %v5245, %v5394
        %v5460 = vadd.f32 %v5246, %v5397
        %v5461 = vadd.f32 %v5247, %v5400
        %v5462 = vadd.f32 %v5248, %v5403
        %v5463 = vadd.f32 %v5249, %v5406
        %v5464 = vadd.f32 %v5250, %v5409
        %v5465 = vadd.f32 %v5251, %v5412
        %v5466 = vadd.f32 %v5252, %v5415
        %v5467 = vadd.f32 %v5253, %v5418
        %v5468 = vadd.f32 %v5254, %v5421
        %v5469 = vadd.f32 %v5255, %v5424
        %v5470 = vadd.f32 %v5256, %v5427
        %v5471 = vadd.f32 %v5257, %v5430
        %v5472 = vadd.f32 %v5258, %v5433
        %v5473 = vadd.f32 %v5259, %v5436
        %v5474 = vld [vmem:[#allocation2 + $0x24] sm:$0xff]
        %v5475 = vld [vmem:[#allocation2 + $0x2c] sm:$0xff]
        %v5476 = vld [vmem:[#allocation2 + $0x34] sm:$0xff]
        %v5477 = vld [vmem:[#allocation2 + $0x3c] sm:$0xff]
        %v5478 = vld [vmem:[#allocation2 + $0x44] sm:$0xff]
        %v5479 = vld [vmem:[#allocation2 + $0x4c] sm:$0xff]
        %v5480 = vld [vmem:[#allocation2 + $0x54] sm:$0xff]
        %v5481 = vld [vmem:[#allocation2 + $0x5c] sm:$0xff]
        %v5482 = vld [vmem:[#allocation2 + $0x64] sm:$0xff]
        %v5483 = vld [vmem:[#allocation2 + $0x6c] sm:$0xff]
        %v5484 = vld [vmem:[#allocation2 + $0x74] sm:$0xff]
        %v5485 = vld [vmem:[#allocation2 + $0x7c] sm:$0xff]
        %v5486 = vld [vmem:[#allocation2 + $0x84] sm:$0xff]
        %v5487 = vld [vmem:[#allocation2 + $0x8c] sm:$0xff]
        %v5488 = vld [vmem:[#allocation2 + $0x94] sm:$0xff]
        %v5489 = vld [vmem:[#allocation2 + $0x9c] sm:$0xff]
        %v5490 = vld [vmem:[#allocation2 + $0xa4] sm:$0xff]
        %v5491 = vld [vmem:[#allocation2 + $0xac] sm:$0xff]
        %v5492 = vld [vmem:[#allocation2 + $0xb4] sm:$0xff]
        %v5493 = vld [vmem:[#allocation2 + $0xbc] sm:$0xff]
        %v5494 = vld [vmem:[#allocation2 + $0xc4] sm:$0xff]
        %v5495 = vld [vmem:[#allocation2 + $0xcc] sm:$0xff]
        %v5496 = vld [vmem:[#allocation2 + $0xd4] sm:$0xff]
        %v5497 = vld [vmem:[#allocation2 + $0xdc] sm:$0xff]
        %v5498 = vld [vmem:[#allocation2 + $0xe4] sm:$0xff]
        %v5499 = vld [vmem:[#allocation2 + $0xec] sm:$0xff]
        %v5500 = vld [vmem:[#allocation2 + $0xf4] sm:$0xff]
        %v5501 = vld [vmem:[#allocation2 + $0xfc] sm:$0xff]
        %v5502 = vld [vmem:[#allocation2 + $0x104] sm:$0xff]
        %v5503 = vld [vmem:[#allocation2 + $0x10c] sm:$0xff]
        %v5504 = vld [vmem:[#allocation2 + $0x114] sm:$0xff]
        %v5505 = vld [vmem:[#allocation2 + $0x11c] sm:$0xff]
        %v5506 = vld [vmem:[#allocation2 + $0x124] sm:$0xff]
        %v5507 = vld [vmem:[#allocation2 + $0x12c] sm:$0xff]
        %v5508 = vld [vmem:[#allocation2 + $0x134] sm:$0xff]
        %v5509 = vld [vmem:[#allocation2 + $0x13c] sm:$0xff]
        %s5510 = scalar_lea.vmem [#allocation3], 768
        %v5511 = vld [vmem:[%s5510] sm:$0xff]
        %v5512 = vld [vmem:[%s5510 + $0x8] sm:$0xff]
        %v5513 = vld [vmem:[%s5510 + $0x10] sm:$0xff]
        %v5514 = vld [vmem:[%s5510 + $0x18] sm:$0xff]
        %v5515 = vld [vmem:[%s5510 + $0x20] sm:$0xff]
        %v5516 = vld [vmem:[%s5510 + $0x28] sm:$0xff]
        %v5517 = vld [vmem:[%s5510 + $0x30] sm:$0xff]
        %v5518 = vld [vmem:[%s5510 + $0x38] sm:$0xff]
        %v5519 = vld [vmem:[%s5510 + $0x40] sm:$0xff]
        %v5520 = vld [vmem:[%s5510 + $0x48] sm:$0xff]
        %v5521 = vld [vmem:[%s5510 + $0x50] sm:$0xff]
        %v5522 = vld [vmem:[%s5510 + $0x58] sm:$0xff]
        %v5523 = vld [vmem:[%s5510 + $0x60] sm:$0xff]
        %v5524 = vld [vmem:[%s5510 + $0x68] sm:$0xff]
        %v5525 = vld [vmem:[%s5510 + $0x70] sm:$0xff]
        %v5526 = vld [vmem:[%s5510 + $0x78] sm:$0xff]
        %5527 = vmatpush.msra.mxu0 %v5526
        %5528 = vmatpush.msra.mxu0 %v5525
        %5529 = vmatpush.msra.mxu0 %v5524
        %5530 = vmatpush.msra.mxu0 %v5523
        %5531 = vmatpush.msra.mxu0 %v5522
        %5532 = vmatpush.msra.mxu0 %v5521
        %5533 = vmatpush.msra.mxu0 %v5520
        %5534 = vmatpush.msra.mxu0 %v5519
        %5535 = vmatpush.msra.mxu0 %v5518
        %5536 = vmatpush.msra.mxu0 %v5517
        %5537 = vmatpush.msra.mxu0 %v5516
        %5538 = vmatpush.msra.mxu0 %v5515
        %5539 = vmatpush.msra.mxu0 %v5514
        %5540 = vmatpush.msra.mxu0 %v5513
        %5541 = vmatpush.msra.mxu0 %v5512
        %5542 = vmatpush.msra.mxu0 %v5511
        %5543 = vmatmul.f32.gmra.mxu0 %v5474
        %v5544 = vpop.f32.mrf.mxu0
        %v5545 = vadd.f32 0.0, %v5544
        %5546 = vmatmul.f32.gmra.mxu0 %v5475
        %v5547 = vpop.f32.mrf.mxu0
        %v5548 = vadd.f32 0.0, %v5547
        %5549 = vmatmul.f32.gmra.mxu0 %v5476
        %v5550 = vpop.f32.mrf.mxu0
        %v5551 = vadd.f32 0.0, %v5550
        %5552 = vmatmul.f32.gmra.mxu0 %v5477
        %v5553 = vpop.f32.mrf.mxu0
        %v5554 = vadd.f32 0.0, %v5553
        %5555 = vmatmul.f32.gmra.mxu0 %v5478
        %v5556 = vpop.f32.mrf.mxu0
        %v5557 = vadd.f32 0.0, %v5556
        %5558 = vmatmul.f32.gmra.mxu0 %v5479
        %v5559 = vpop.f32.mrf.mxu0
        %v5560 = vadd.f32 0.0, %v5559
        %5561 = vmatmul.f32.gmra.mxu0 %v5480
        %v5562 = vpop.f32.mrf.mxu0
        %v5563 = vadd.f32 0.0, %v5562
        %5564 = vmatmul.f32.gmra.mxu0 %v5481
        %v5565 = vpop.f32.mrf.mxu0
        %v5566 = vadd.f32 0.0, %v5565
        %5567 = vmatmul.f32.gmra.mxu0 %v5482
        %v5568 = vpop.f32.mrf.mxu0
        %v5569 = vadd.f32 0.0, %v5568
        %5570 = vmatmul.f32.gmra.mxu0 %v5483
        %v5571 = vpop.f32.mrf.mxu0
        %v5572 = vadd.f32 0.0, %v5571
        %5573 = vmatmul.f32.gmra.mxu0 %v5484
        %v5574 = vpop.f32.mrf.mxu0
        %v5575 = vadd.f32 0.0, %v5574
        %5576 = vmatmul.f32.gmra.mxu0 %v5485
        %v5577 = vpop.f32.mrf.mxu0
        %v5578 = vadd.f32 0.0, %v5577
        %5579 = vmatmul.f32.gmra.mxu0 %v5486
        %v5580 = vpop.f32.mrf.mxu0
        %v5581 = vadd.f32 0.0, %v5580
        %5582 = vmatmul.f32.gmra.mxu0 %v5487
        %v5583 = vpop.f32.mrf.mxu0
        %v5584 = vadd.f32 0.0, %v5583
        %5585 = vmatmul.f32.gmra.mxu0 %v5488
        %v5586 = vpop.f32.mrf.mxu0
        %v5587 = vadd.f32 0.0, %v5586
        %5588 = vmatmul.f32.gmra.mxu0 %v5489
        %v5589 = vpop.f32.mrf.mxu0
        %v5590 = vadd.f32 0.0, %v5589
        %5591 = vmatmul.f32.gmra.mxu0 %v5490
        %v5592 = vpop.f32.mrf.mxu0
        %v5593 = vadd.f32 0.0, %v5592
        %5594 = vmatmul.f32.gmra.mxu0 %v5491
        %v5595 = vpop.f32.mrf.mxu0
        %v5596 = vadd.f32 0.0, %v5595
        %5597 = vmatmul.f32.gmra.mxu0 %v5492
        %v5598 = vpop.f32.mrf.mxu0
        %v5599 = vadd.f32 0.0, %v5598
        %5600 = vmatmul.f32.gmra.mxu0 %v5493
        %v5601 = vpop.f32.mrf.mxu0
        %v5602 = vadd.f32 0.0, %v5601
        %5603 = vmatmul.f32.gmra.mxu0 %v5494
        %v5604 = vpop.f32.mrf.mxu0
        %v5605 = vadd.f32 0.0, %v5604
        %5606 = vmatmul.f32.gmra.mxu0 %v5495
        %v5607 = vpop.f32.mrf.mxu0
        %v5608 = vadd.f32 0.0, %v5607
        %5609 = vmatmul.f32.gmra.mxu0 %v5496
        %v5610 = vpop.f32.mrf.mxu0
        %v5611 = vadd.f32 0.0, %v5610
        %5612 = vmatmul.f32.gmra.mxu0 %v5497
        %v5613 = vpop.f32.mrf.mxu0
        %v5614 = vadd.f32 0.0, %v5613
        %5615 = vmatmul.f32.gmra.mxu0 %v5498
        %v5616 = vpop.f32.mrf.mxu0
        %v5617 = vadd.f32 0.0, %v5616
        %5618 = vmatmul.f32.gmra.mxu0 %v5499
        %v5619 = vpop.f32.mrf.mxu0
        %v5620 = vadd.f32 0.0, %v5619
        %5621 = vmatmul.f32.gmra.mxu0 %v5500
        %v5622 = vpop.f32.mrf.mxu0
        %v5623 = vadd.f32 0.0, %v5622
        %5624 = vmatmul.f32.gmra.mxu0 %v5501
        %v5625 = vpop.f32.mrf.mxu0
        %v5626 = vadd.f32 0.0, %v5625
        %5627 = vmatmul.f32.gmra.mxu0 %v5502
        %v5628 = vpop.f32.mrf.mxu0
        %v5629 = vadd.f32 0.0, %v5628
        %5630 = vmatmul.f32.gmra.mxu0 %v5503
        %v5631 = vpop.f32.mrf.mxu0
        %v5632 = vadd.f32 0.0, %v5631
        %5633 = vmatmul.f32.gmra.mxu0 %v5504
        %v5634 = vpop.f32.mrf.mxu0
        %v5635 = vadd.f32 0.0, %v5634
        %5636 = vmatmul.f32.gmra.mxu0 %v5505
        %v5637 = vpop.f32.mrf.mxu0
        %v5638 = vadd.f32 0.0, %v5637
        %5639 = vmatmul.f32.gmra.mxu0 %v5506
        %v5640 = vpop.f32.mrf.mxu0
        %v5641 = vadd.f32 0.0, %v5640
        %5642 = vmatmul.f32.gmra.mxu0 %v5507
        %v5643 = vpop.f32.mrf.mxu0
        %v5644 = vadd.f32 0.0, %v5643
        %5645 = vmatmul.f32.gmra.mxu0 %v5508
        %v5646 = vpop.f32.mrf.mxu0
        %v5647 = vadd.f32 0.0, %v5646
        %5648 = vmatmul.f32.gmra.mxu0 %v5509
        %v5649 = vpop.f32.mrf.mxu0
        %v5650 = vadd.f32 0.0, %v5649
        %5651 = vdwg.mxu0
        %v5652 = vadd.f32 %v5438, %v5545
        %v5653 = vadd.f32 %v5439, %v5548
        %v5654 = vadd.f32 %v5440, %v5551
        %v5655 = vadd.f32 %v5441, %v5554
        %v5656 = vadd.f32 %v5442, %v5557
        %v5657 = vadd.f32 %v5443, %v5560
        %v5658 = vadd.f32 %v5444, %v5563
        %v5659 = vadd.f32 %v5445, %v5566
        %v5660 = vadd.f32 %v5446, %v5569
        %v5661 = vadd.f32 %v5447, %v5572
        %v5662 = vadd.f32 %v5448, %v5575
        %v5663 = vadd.f32 %v5449, %v5578
        %v5664 = vadd.f32 %v5450, %v5581
        %v5665 = vadd.f32 %v5451, %v5584
        %v5666 = vadd.f32 %v5452, %v5587
        %v5667 = vadd.f32 %v5453, %v5590
        %v5668 = vadd.f32 %v5454, %v5593
        %v5669 = vadd.f32 %v5455, %v5596
        %v5670 = vadd.f32 %v5456, %v5599
        %v5671 = vadd.f32 %v5457, %v5602
        %v5672 = vadd.f32 %v5458, %v5605
        %v5673 = vadd.f32 %v5459, %v5608
        %v5674 = vadd.f32 %v5460, %v5611
        %v5675 = vadd.f32 %v5461, %v5614
        %v5676 = vadd.f32 %v5462, %v5617
        %v5677 = vadd.f32 %v5463, %v5620
        %v5678 = vadd.f32 %v5464, %v5623
        %v5679 = vadd.f32 %v5465, %v5626
        %v5680 = vadd.f32 %v5466, %v5629
        %v5681 = vadd.f32 %v5467, %v5632
        %v5682 = vadd.f32 %v5468, %v5635
        %v5683 = vadd.f32 %v5469, %v5638
        %v5684 = vadd.f32 %v5470, %v5641
        %v5685 = vadd.f32 %v5471, %v5644
        %v5686 = vadd.f32 %v5472, %v5647
        %v5687 = vadd.f32 %v5473, %v5650
        %v5688 = vld [vmem:[#allocation2 + $0x25] sm:$0xff]
        %v5689 = vld [vmem:[#allocation2 + $0x2d] sm:$0xff]
        %v5690 = vld [vmem:[#allocation2 + $0x35] sm:$0xff]
        %v5691 = vld [vmem:[#allocation2 + $0x3d] sm:$0xff]
        %v5692 = vld [vmem:[#allocation2 + $0x45] sm:$0xff]
        %v5693 = vld [vmem:[#allocation2 + $0x4d] sm:$0xff]
        %v5694 = vld [vmem:[#allocation2 + $0x55] sm:$0xff]
        %v5695 = vld [vmem:[#allocation2 + $0x5d] sm:$0xff]
        %v5696 = vld [vmem:[#allocation2 + $0x65] sm:$0xff]
        %v5697 = vld [vmem:[#allocation2 + $0x6d] sm:$0xff]
        %v5698 = vld [vmem:[#allocation2 + $0x75] sm:$0xff]
        %v5699 = vld [vmem:[#allocation2 + $0x7d] sm:$0xff]
        %v5700 = vld [vmem:[#allocation2 + $0x85] sm:$0xff]
        %v5701 = vld [vmem:[#allocation2 + $0x8d] sm:$0xff]
        %v5702 = vld [vmem:[#allocation2 + $0x95] sm:$0xff]
        %v5703 = vld [vmem:[#allocation2 + $0x9d] sm:$0xff]
        %v5704 = vld [vmem:[#allocation2 + $0xa5] sm:$0xff]
        %v5705 = vld [vmem:[#allocation2 + $0xad] sm:$0xff]
        %v5706 = vld [vmem:[#allocation2 + $0xb5] sm:$0xff]
        %v5707 = vld [vmem:[#allocation2 + $0xbd] sm:$0xff]
        %v5708 = vld [vmem:[#allocation2 + $0xc5] sm:$0xff]
        %v5709 = vld [vmem:[#allocation2 + $0xcd] sm:$0xff]
        %v5710 = vld [vmem:[#allocation2 + $0xd5] sm:$0xff]
        %v5711 = vld [vmem:[#allocation2 + $0xdd] sm:$0xff]
        %v5712 = vld [vmem:[#allocation2 + $0xe5] sm:$0xff]
        %v5713 = vld [vmem:[#allocation2 + $0xed] sm:$0xff]
        %v5714 = vld [vmem:[#allocation2 + $0xf5] sm:$0xff]
        %v5715 = vld [vmem:[#allocation2 + $0xfd] sm:$0xff]
        %v5716 = vld [vmem:[#allocation2 + $0x105] sm:$0xff]
        %v5717 = vld [vmem:[#allocation2 + $0x10d] sm:$0xff]
        %v5718 = vld [vmem:[#allocation2 + $0x115] sm:$0xff]
        %v5719 = vld [vmem:[#allocation2 + $0x11d] sm:$0xff]
        %v5720 = vld [vmem:[#allocation2 + $0x125] sm:$0xff]
        %v5721 = vld [vmem:[#allocation2 + $0x12d] sm:$0xff]
        %v5722 = vld [vmem:[#allocation2 + $0x135] sm:$0xff]
        %v5723 = vld [vmem:[#allocation2 + $0x13d] sm:$0xff]
        %s5724 = scalar_lea.vmem [#allocation3], 896
        %v5725 = vld [vmem:[%s5724] sm:$0xff]
        %v5726 = vld [vmem:[%s5724 + $0x8] sm:$0xff]
        %v5727 = vld [vmem:[%s5724 + $0x10] sm:$0xff]
        %v5728 = vld [vmem:[%s5724 + $0x18] sm:$0xff]
        %v5729 = vld [vmem:[%s5724 + $0x20] sm:$0xff]
        %v5730 = vld [vmem:[%s5724 + $0x28] sm:$0xff]
        %v5731 = vld [vmem:[%s5724 + $0x30] sm:$0xff]
        %v5732 = vld [vmem:[%s5724 + $0x38] sm:$0xff]
        %v5733 = vld [vmem:[%s5724 + $0x40] sm:$0xff]
        %v5734 = vld [vmem:[%s5724 + $0x48] sm:$0xff]
        %v5735 = vld [vmem:[%s5724 + $0x50] sm:$0xff]
        %v5736 = vld [vmem:[%s5724 + $0x58] sm:$0xff]
        %v5737 = vld [vmem:[%s5724 + $0x60] sm:$0xff]
        %v5738 = vld [vmem:[%s5724 + $0x68] sm:$0xff]
        %v5739 = vld [vmem:[%s5724 + $0x70] sm:$0xff]
        %v5740 = vld [vmem:[%s5724 + $0x78] sm:$0xff]
        %5741 = vmatpush.msra.mxu0 %v5740
        %5742 = vmatpush.msra.mxu0 %v5739
        %5743 = vmatpush.msra.mxu0 %v5738
        %5744 = vmatpush.msra.mxu0 %v5737
        %5745 = vmatpush.msra.mxu0 %v5736
        %5746 = vmatpush.msra.mxu0 %v5735
        %5747 = vmatpush.msra.mxu0 %v5734
        %5748 = vmatpush.msra.mxu0 %v5733
        %5749 = vmatpush.msra.mxu0 %v5732
        %5750 = vmatpush.msra.mxu0 %v5731
        %5751 = vmatpush.msra.mxu0 %v5730
        %5752 = vmatpush.msra.mxu0 %v5729
        %5753 = vmatpush.msra.mxu0 %v5728
        %5754 = vmatpush.msra.mxu0 %v5727
        %5755 = vmatpush.msra.mxu0 %v5726
        %5756 = vmatpush.msra.mxu0 %v5725
        %5757 = vmatmul.f32.gmra.mxu0 %v5688
        %v5758 = vpop.f32.mrf.mxu0
        %v5759 = vadd.f32 0.0, %v5758
        %5760 = vmatmul.f32.gmra.mxu0 %v5689
        %v5761 = vpop.f32.mrf.mxu0
        %v5762 = vadd.f32 0.0, %v5761
        %5763 = vmatmul.f32.gmra.mxu0 %v5690
        %v5764 = vpop.f32.mrf.mxu0
        %v5765 = vadd.f32 0.0, %v5764
        %5766 = vmatmul.f32.gmra.mxu0 %v5691
        %v5767 = vpop.f32.mrf.mxu0
        %v5768 = vadd.f32 0.0, %v5767
        %5769 = vmatmul.f32.gmra.mxu0 %v5692
        %v5770 = vpop.f32.mrf.mxu0
        %v5771 = vadd.f32 0.0, %v5770
        %5772 = vmatmul.f32.gmra.mxu0 %v5693
        %v5773 = vpop.f32.mrf.mxu0
        %v5774 = vadd.f32 0.0, %v5773
        %5775 = vmatmul.f32.gmra.mxu0 %v5694
        %v5776 = vpop.f32.mrf.mxu0
        %v5777 = vadd.f32 0.0, %v5776
        %5778 = vmatmul.f32.gmra.mxu0 %v5695
        %v5779 = vpop.f32.mrf.mxu0
        %v5780 = vadd.f32 0.0, %v5779
        %5781 = vmatmul.f32.gmra.mxu0 %v5696
        %v5782 = vpop.f32.mrf.mxu0
        %v5783 = vadd.f32 0.0, %v5782
        %5784 = vmatmul.f32.gmra.mxu0 %v5697
        %v5785 = vpop.f32.mrf.mxu0
        %v5786 = vadd.f32 0.0, %v5785
        %5787 = vmatmul.f32.gmra.mxu0 %v5698
        %v5788 = vpop.f32.mrf.mxu0
        %v5789 = vadd.f32 0.0, %v5788
        %5790 = vmatmul.f32.gmra.mxu0 %v5699
        %v5791 = vpop.f32.mrf.mxu0
        %v5792 = vadd.f32 0.0, %v5791
        %5793 = vmatmul.f32.gmra.mxu0 %v5700
        %v5794 = vpop.f32.mrf.mxu0
        %v5795 = vadd.f32 0.0, %v5794
        %5796 = vmatmul.f32.gmra.mxu0 %v5701
        %v5797 = vpop.f32.mrf.mxu0
        %v5798 = vadd.f32 0.0, %v5797
        %5799 = vmatmul.f32.gmra.mxu0 %v5702
        %v5800 = vpop.f32.mrf.mxu0
        %v5801 = vadd.f32 0.0, %v5800
        %5802 = vmatmul.f32.gmra.mxu0 %v5703
        %v5803 = vpop.f32.mrf.mxu0
        %v5804 = vadd.f32 0.0, %v5803
        %5805 = vmatmul.f32.gmra.mxu0 %v5704
        %v5806 = vpop.f32.mrf.mxu0
        %v5807 = vadd.f32 0.0, %v5806
        %5808 = vmatmul.f32.gmra.mxu0 %v5705
        %v5809 = vpop.f32.mrf.mxu0
        %v5810 = vadd.f32 0.0, %v5809
        %5811 = vmatmul.f32.gmra.mxu0 %v5706
        %v5812 = vpop.f32.mrf.mxu0
        %v5813 = vadd.f32 0.0, %v5812
        %5814 = vmatmul.f32.gmra.mxu0 %v5707
        %v5815 = vpop.f32.mrf.mxu0
        %v5816 = vadd.f32 0.0, %v5815
        %5817 = vmatmul.f32.gmra.mxu0 %v5708
        %v5818 = vpop.f32.mrf.mxu0
        %v5819 = vadd.f32 0.0, %v5818
        %5820 = vmatmul.f32.gmra.mxu0 %v5709
        %v5821 = vpop.f32.mrf.mxu0
        %v5822 = vadd.f32 0.0, %v5821
        %5823 = vmatmul.f32.gmra.mxu0 %v5710
        %v5824 = vpop.f32.mrf.mxu0
        %v5825 = vadd.f32 0.0, %v5824
        %5826 = vmatmul.f32.gmra.mxu0 %v5711
        %v5827 = vpop.f32.mrf.mxu0
        %v5828 = vadd.f32 0.0, %v5827
        %5829 = vmatmul.f32.gmra.mxu0 %v5712
        %v5830 = vpop.f32.mrf.mxu0
        %v5831 = vadd.f32 0.0, %v5830
        %5832 = vmatmul.f32.gmra.mxu0 %v5713
        %v5833 = vpop.f32.mrf.mxu0
        %v5834 = vadd.f32 0.0, %v5833
        %5835 = vmatmul.f32.gmra.mxu0 %v5714
        %v5836 = vpop.f32.mrf.mxu0
        %v5837 = vadd.f32 0.0, %v5836
        %5838 = vmatmul.f32.gmra.mxu0 %v5715
        %v5839 = vpop.f32.mrf.mxu0
        %v5840 = vadd.f32 0.0, %v5839
        %5841 = vmatmul.f32.gmra.mxu0 %v5716
        %v5842 = vpop.f32.mrf.mxu0
        %v5843 = vadd.f32 0.0, %v5842
        %5844 = vmatmul.f32.gmra.mxu0 %v5717
        %v5845 = vpop.f32.mrf.mxu0
        %v5846 = vadd.f32 0.0, %v5845
        %5847 = vmatmul.f32.gmra.mxu0 %v5718
        %v5848 = vpop.f32.mrf.mxu0
        %v5849 = vadd.f32 0.0, %v5848
        %5850 = vmatmul.f32.gmra.mxu0 %v5719
        %v5851 = vpop.f32.mrf.mxu0
        %v5852 = vadd.f32 0.0, %v5851
        %5853 = vmatmul.f32.gmra.mxu0 %v5720
        %v5854 = vpop.f32.mrf.mxu0
        %v5855 = vadd.f32 0.0, %v5854
        %5856 = vmatmul.f32.gmra.mxu0 %v5721
        %v5857 = vpop.f32.mrf.mxu0
        %v5858 = vadd.f32 0.0, %v5857
        %5859 = vmatmul.f32.gmra.mxu0 %v5722
        %v5860 = vpop.f32.mrf.mxu0
        %v5861 = vadd.f32 0.0, %v5860
        %5862 = vmatmul.f32.gmra.mxu0 %v5723
        %v5863 = vpop.f32.mrf.mxu0
        %v5864 = vadd.f32 0.0, %v5863
        %5865 = vdwg.mxu0
        %v5866 = vadd.f32 %v5652, %v5759
        %v5867 = vadd.f32 %v5653, %v5762
        %v5868 = vadd.f32 %v5654, %v5765
        %v5869 = vadd.f32 %v5655, %v5768
        %v5870 = vadd.f32 %v5656, %v5771
        %v5871 = vadd.f32 %v5657, %v5774
        %v5872 = vadd.f32 %v5658, %v5777
        %v5873 = vadd.f32 %v5659, %v5780
        %v5874 = vadd.f32 %v5660, %v5783
        %v5875 = vadd.f32 %v5661, %v5786
        %v5876 = vadd.f32 %v5662, %v5789
        %v5877 = vadd.f32 %v5663, %v5792
        %v5878 = vadd.f32 %v5664, %v5795
        %v5879 = vadd.f32 %v5665, %v5798
        %v5880 = vadd.f32 %v5666, %v5801
        %v5881 = vadd.f32 %v5667, %v5804
        %v5882 = vadd.f32 %v5668, %v5807
        %v5883 = vadd.f32 %v5669, %v5810
        %v5884 = vadd.f32 %v5670, %v5813
        %v5885 = vadd.f32 %v5671, %v5816
        %v5886 = vadd.f32 %v5672, %v5819
        %v5887 = vadd.f32 %v5673, %v5822
        %v5888 = vadd.f32 %v5674, %v5825
        %v5889 = vadd.f32 %v5675, %v5828
        %v5890 = vadd.f32 %v5676, %v5831
        %v5891 = vadd.f32 %v5677, %v5834
        %v5892 = vadd.f32 %v5678, %v5837
        %v5893 = vadd.f32 %v5679, %v5840
        %v5894 = vadd.f32 %v5680, %v5843
        %v5895 = vadd.f32 %v5681, %v5846
        %v5896 = vadd.f32 %v5682, %v5849
        %v5897 = vadd.f32 %v5683, %v5852
        %v5898 = vadd.f32 %v5684, %v5855
        %v5899 = vadd.f32 %v5685, %v5858
        %v5900 = vadd.f32 %v5686, %v5861
        %v5901 = vadd.f32 %v5687, %v5864
        %v5902 = vld [vmem:[#allocation2 + $0x26] sm:$0xff]
        %v5903 = vld [vmem:[#allocation2 + $0x2e] sm:$0xff]
        %v5904 = vld [vmem:[#allocation2 + $0x36] sm:$0xff]
        %v5905 = vld [vmem:[#allocation2 + $0x3e] sm:$0xff]
        %v5906 = vld [vmem:[#allocation2 + $0x46] sm:$0xff]
        %v5907 = vld [vmem:[#allocation2 + $0x4e] sm:$0xff]
        %v5908 = vld [vmem:[#allocation2 + $0x56] sm:$0xff]
        %v5909 = vld [vmem:[#allocation2 + $0x5e] sm:$0xff]
        %v5910 = vld [vmem:[#allocation2 + $0x66] sm:$0xff]
        %v5911 = vld [vmem:[#allocation2 + $0x6e] sm:$0xff]
        %v5912 = vld [vmem:[#allocation2 + $0x76] sm:$0xff]
        %v5913 = vld [vmem:[#allocation2 + $0x7e] sm:$0xff]
        %v5914 = vld [vmem:[#allocation2 + $0x86] sm:$0xff]
        %v5915 = vld [vmem:[#allocation2 + $0x8e] sm:$0xff]
        %v5916 = vld [vmem:[#allocation2 + $0x96] sm:$0xff]
        %v5917 = vld [vmem:[#allocation2 + $0x9e] sm:$0xff]
        %v5918 = vld [vmem:[#allocation2 + $0xa6] sm:$0xff]
        %v5919 = vld [vmem:[#allocation2 + $0xae] sm:$0xff]
        %v5920 = vld [vmem:[#allocation2 + $0xb6] sm:$0xff]
        %v5921 = vld [vmem:[#allocation2 + $0xbe] sm:$0xff]
        %v5922 = vld [vmem:[#allocation2 + $0xc6] sm:$0xff]
        %v5923 = vld [vmem:[#allocation2 + $0xce] sm:$0xff]
        %v5924 = vld [vmem:[#allocation2 + $0xd6] sm:$0xff]
        %v5925 = vld [vmem:[#allocation2 + $0xde] sm:$0xff]
        %v5926 = vld [vmem:[#allocation2 + $0xe6] sm:$0xff]
        %v5927 = vld [vmem:[#allocation2 + $0xee] sm:$0xff]
        %v5928 = vld [vmem:[#allocation2 + $0xf6] sm:$0xff]
        %v5929 = vld [vmem:[#allocation2 + $0xfe] sm:$0xff]
        %v5930 = vld [vmem:[#allocation2 + $0x106] sm:$0xff]
        %v5931 = vld [vmem:[#allocation2 + $0x10e] sm:$0xff]
        %v5932 = vld [vmem:[#allocation2 + $0x116] sm:$0xff]
        %v5933 = vld [vmem:[#allocation2 + $0x11e] sm:$0xff]
        %v5934 = vld [vmem:[#allocation2 + $0x126] sm:$0xff]
        %v5935 = vld [vmem:[#allocation2 + $0x12e] sm:$0xff]
        %v5936 = vld [vmem:[#allocation2 + $0x136] sm:$0xff]
        %v5937 = vld [vmem:[#allocation2 + $0x13e] sm:$0xff]
        %s5938 = scalar_lea.vmem [#allocation3], 1024
        %v5939 = vld [vmem:[%s5938] sm:$0xff]
        %v5940 = vld [vmem:[%s5938 + $0x8] sm:$0xff]
        %v5941 = vld [vmem:[%s5938 + $0x10] sm:$0xff]
        %v5942 = vld [vmem:[%s5938 + $0x18] sm:$0xff]
        %v5943 = vld [vmem:[%s5938 + $0x20] sm:$0xff]
        %v5944 = vld [vmem:[%s5938 + $0x28] sm:$0xff]
        %v5945 = vld [vmem:[%s5938 + $0x30] sm:$0xff]
        %v5946 = vld [vmem:[%s5938 + $0x38] sm:$0xff]
        %v5947 = vld [vmem:[%s5938 + $0x40] sm:$0xff]
        %v5948 = vld [vmem:[%s5938 + $0x48] sm:$0xff]
        %v5949 = vld [vmem:[%s5938 + $0x50] sm:$0xff]
        %v5950 = vld [vmem:[%s5938 + $0x58] sm:$0xff]
        %v5951 = vld [vmem:[%s5938 + $0x60] sm:$0xff]
        %v5952 = vld [vmem:[%s5938 + $0x68] sm:$0xff]
        %v5953 = vld [vmem:[%s5938 + $0x70] sm:$0xff]
        %v5954 = vld [vmem:[%s5938 + $0x78] sm:$0xff]
        %5955 = vmatpush.msra.mxu0 %v5954
        %5956 = vmatpush.msra.mxu0 %v5953
        %5957 = vmatpush.msra.mxu0 %v5952
        %5958 = vmatpush.msra.mxu0 %v5951
        %5959 = vmatpush.msra.mxu0 %v5950
        %5960 = vmatpush.msra.mxu0 %v5949
        %5961 = vmatpush.msra.mxu0 %v5948
        %5962 = vmatpush.msra.mxu0 %v5947
        %5963 = vmatpush.msra.mxu0 %v5946
        %5964 = vmatpush.msra.mxu0 %v5945
        %5965 = vmatpush.msra.mxu0 %v5944
        %5966 = vmatpush.msra.mxu0 %v5943
        %5967 = vmatpush.msra.mxu0 %v5942
        %5968 = vmatpush.msra.mxu0 %v5941
        %5969 = vmatpush.msra.mxu0 %v5940
        %5970 = vmatpush.msra.mxu0 %v5939
        %5971 = vmatmul.f32.gmra.mxu0 %v5902
        %v5972 = vpop.f32.mrf.mxu0
        %v5973 = vadd.f32 0.0, %v5972
        %5974 = vmatmul.f32.gmra.mxu0 %v5903
        %v5975 = vpop.f32.mrf.mxu0
        %v5976 = vadd.f32 0.0, %v5975
        %5977 = vmatmul.f32.gmra.mxu0 %v5904
        %v5978 = vpop.f32.mrf.mxu0
        %v5979 = vadd.f32 0.0, %v5978
        %5980 = vmatmul.f32.gmra.mxu0 %v5905
        %v5981 = vpop.f32.mrf.mxu0
        %v5982 = vadd.f32 0.0, %v5981
        %5983 = vmatmul.f32.gmra.mxu0 %v5906
        %v5984 = vpop.f32.mrf.mxu0
        %v5985 = vadd.f32 0.0, %v5984
        %5986 = vmatmul.f32.gmra.mxu0 %v5907
        %v5987 = vpop.f32.mrf.mxu0
        %v5988 = vadd.f32 0.0, %v5987
        %5989 = vmatmul.f32.gmra.mxu0 %v5908
        %v5990 = vpop.f32.mrf.mxu0
        %v5991 = vadd.f32 0.0, %v5990
        %5992 = vmatmul.f32.gmra.mxu0 %v5909
        %v5993 = vpop.f32.mrf.mxu0
        %v5994 = vadd.f32 0.0, %v5993
        %5995 = vmatmul.f32.gmra.mxu0 %v5910
        %v5996 = vpop.f32.mrf.mxu0
        %v5997 = vadd.f32 0.0, %v5996
        %5998 = vmatmul.f32.gmra.mxu0 %v5911
        %v5999 = vpop.f32.mrf.mxu0
        %v6000 = vadd.f32 0.0, %v5999
        %6001 = vmatmul.f32.gmra.mxu0 %v5912
        %v6002 = vpop.f32.mrf.mxu0
        %v6003 = vadd.f32 0.0, %v6002
        %6004 = vmatmul.f32.gmra.mxu0 %v5913
        %v6005 = vpop.f32.mrf.mxu0
        %v6006 = vadd.f32 0.0, %v6005
        %6007 = vmatmul.f32.gmra.mxu0 %v5914
        %v6008 = vpop.f32.mrf.mxu0
        %v6009 = vadd.f32 0.0, %v6008
        %6010 = vmatmul.f32.gmra.mxu0 %v5915
        %v6011 = vpop.f32.mrf.mxu0
        %v6012 = vadd.f32 0.0, %v6011
        %6013 = vmatmul.f32.gmra.mxu0 %v5916
        %v6014 = vpop.f32.mrf.mxu0
        %v6015 = vadd.f32 0.0, %v6014
        %6016 = vmatmul.f32.gmra.mxu0 %v5917
        %v6017 = vpop.f32.mrf.mxu0
        %v6018 = vadd.f32 0.0, %v6017
        %6019 = vmatmul.f32.gmra.mxu0 %v5918
        %v6020 = vpop.f32.mrf.mxu0
        %v6021 = vadd.f32 0.0, %v6020
        %6022 = vmatmul.f32.gmra.mxu0 %v5919
        %v6023 = vpop.f32.mrf.mxu0
        %v6024 = vadd.f32 0.0, %v6023
        %6025 = vmatmul.f32.gmra.mxu0 %v5920
        %v6026 = vpop.f32.mrf.mxu0
        %v6027 = vadd.f32 0.0, %v6026
        %6028 = vmatmul.f32.gmra.mxu0 %v5921
        %v6029 = vpop.f32.mrf.mxu0
        %v6030 = vadd.f32 0.0, %v6029
        %6031 = vmatmul.f32.gmra.mxu0 %v5922
        %v6032 = vpop.f32.mrf.mxu0
        %v6033 = vadd.f32 0.0, %v6032
        %6034 = vmatmul.f32.gmra.mxu0 %v5923
        %v6035 = vpop.f32.mrf.mxu0
        %v6036 = vadd.f32 0.0, %v6035
        %6037 = vmatmul.f32.gmra.mxu0 %v5924
        %v6038 = vpop.f32.mrf.mxu0
        %v6039 = vadd.f32 0.0, %v6038
        %6040 = vmatmul.f32.gmra.mxu0 %v5925
        %v6041 = vpop.f32.mrf.mxu0
        %v6042 = vadd.f32 0.0, %v6041
        %6043 = vmatmul.f32.gmra.mxu0 %v5926
        %v6044 = vpop.f32.mrf.mxu0
        %v6045 = vadd.f32 0.0, %v6044
        %6046 = vmatmul.f32.gmra.mxu0 %v5927
        %v6047 = vpop.f32.mrf.mxu0
        %v6048 = vadd.f32 0.0, %v6047
        %6049 = vmatmul.f32.gmra.mxu0 %v5928
        %v6050 = vpop.f32.mrf.mxu0
        %v6051 = vadd.f32 0.0, %v6050
        %6052 = vmatmul.f32.gmra.mxu0 %v5929
        %v6053 = vpop.f32.mrf.mxu0
        %v6054 = vadd.f32 0.0, %v6053
        %6055 = vmatmul.f32.gmra.mxu0 %v5930
        %v6056 = vpop.f32.mrf.mxu0
        %v6057 = vadd.f32 0.0, %v6056
        %6058 = vmatmul.f32.gmra.mxu0 %v5931
        %v6059 = vpop.f32.mrf.mxu0
        %v6060 = vadd.f32 0.0, %v6059
        %6061 = vmatmul.f32.gmra.mxu0 %v5932
        %v6062 = vpop.f32.mrf.mxu0
        %v6063 = vadd.f32 0.0, %v6062
        %6064 = vmatmul.f32.gmra.mxu0 %v5933
        %v6065 = vpop.f32.mrf.mxu0
        %v6066 = vadd.f32 0.0, %v6065
        %6067 = vmatmul.f32.gmra.mxu0 %v5934
        %v6068 = vpop.f32.mrf.mxu0
        %v6069 = vadd.f32 0.0, %v6068
        %6070 = vmatmul.f32.gmra.mxu0 %v5935
        %v6071 = vpop.f32.mrf.mxu0
        %v6072 = vadd.f32 0.0, %v6071
        %6073 = vmatmul.f32.gmra.mxu0 %v5936
        %v6074 = vpop.f32.mrf.mxu0
        %v6075 = vadd.f32 0.0, %v6074
        %6076 = vmatmul.f32.gmra.mxu0 %v5937
        %v6077 = vpop.f32.mrf.mxu0
        %v6078 = vadd.f32 0.0, %v6077
        %6079 = vdwg.mxu0
        %v6080 = vadd.f32 %v5866, %v5973
        %v6081 = vadd.f32 %v5867, %v5976
        %v6082 = vadd.f32 %v5868, %v5979
        %v6083 = vadd.f32 %v5869, %v5982
        %v6084 = vadd.f32 %v5870, %v5985
        %v6085 = vadd.f32 %v5871, %v5988
        %v6086 = vadd.f32 %v5872, %v5991
        %v6087 = vadd.f32 %v5873, %v5994
        %v6088 = vadd.f32 %v5874, %v5997
        %v6089 = vadd.f32 %v5875, %v6000
        %v6090 = vadd.f32 %v5876, %v6003
        %v6091 = vadd.f32 %v5877, %v6006
        %v6092 = vadd.f32 %v5878, %v6009
        %v6093 = vadd.f32 %v5879, %v6012
        %v6094 = vadd.f32 %v5880, %v6015
        %v6095 = vadd.f32 %v5881, %v6018
        %v6096 = vadd.f32 %v5882, %v6021
        %v6097 = vadd.f32 %v5883, %v6024
        %v6098 = vadd.f32 %v5884, %v6027
        %v6099 = vadd.f32 %v5885, %v6030
        %v6100 = vadd.f32 %v5886, %v6033
        %v6101 = vadd.f32 %v5887, %v6036
        %v6102 = vadd.f32 %v5888, %v6039
        %v6103 = vadd.f32 %v5889, %v6042
        %v6104 = vadd.f32 %v5890, %v6045
        %v6105 = vadd.f32 %v5891, %v6048
        %v6106 = vadd.f32 %v5892, %v6051
        %v6107 = vadd.f32 %v5893, %v6054
        %v6108 = vadd.f32 %v5894, %v6057
        %v6109 = vadd.f32 %v5895, %v6060
        %v6110 = vadd.f32 %v5896, %v6063
        %v6111 = vadd.f32 %v5897, %v6066
        %v6112 = vadd.f32 %v5898, %v6069
        %v6113 = vadd.f32 %v5899, %v6072
        %v6114 = vadd.f32 %v5900, %v6075
        %v6115 = vadd.f32 %v5901, %v6078
        %v6116 = vld [vmem:[%s4] sm:$0x1]
        %v6118 = vperm.slane %v6116, 0
        %v6120 = vadd.f32 %v6080, %v6118
        %v6121 = vadd.f32 %v6081, %v6118
        %v6122 = vadd.f32 %v6082, %v6118
        %v6123 = vadd.f32 %v6083, %v6118
        %v6124 = vadd.f32 %v6084, %v6118
        %v6125 = vadd.f32 %v6085, %v6118
        %v6126 = vadd.f32 %v6086, %v6118
        %v6127 = vadd.f32 %v6087, %v6118
        %v6128 = vadd.f32 %v6088, %v6118
        %v6129 = vadd.f32 %v6089, %v6118
        %v6130 = vadd.f32 %v6090, %v6118
        %v6131 = vadd.f32 %v6091, %v6118
        %v6132 = vadd.f32 %v6092, %v6118
        %v6133 = vadd.f32 %v6093, %v6118
        %v6134 = vadd.f32 %v6094, %v6118
        %v6135 = vadd.f32 %v6095, %v6118
        %v6136 = vadd.f32 %v6096, %v6118
        %v6137 = vadd.f32 %v6097, %v6118
        %v6138 = vadd.f32 %v6098, %v6118
        %v6139 = vadd.f32 %v6099, %v6118
        %v6140 = vadd.f32 %v6100, %v6118
        %v6141 = vadd.f32 %v6101, %v6118
        %v6142 = vadd.f32 %v6102, %v6118
        %v6143 = vadd.f32 %v6103, %v6118
        %v6144 = vadd.f32 %v6104, %v6118
        %v6145 = vadd.f32 %v6105, %v6118
        %v6146 = vadd.f32 %v6106, %v6118
        %v6147 = vadd.f32 %v6107, %v6118
        %v6148 = vadd.f32 %v6108, %v6118
        %v6149 = vadd.f32 %v6109, %v6118
        %v6150 = vadd.f32 %v6110, %v6118
        %v6151 = vadd.f32 %v6111, %v6118
        %v6152 = vadd.f32 %v6112, %v6118
        %v6153 = vadd.f32 %v6113, %v6118
        %v6154 = vadd.f32 %v6114, %v6118
        %v6155 = vadd.f32 %v6115, %v6118
        %v6156 = vsel %vm3466, %v6120, 0.0
        %v6157 = vsel %vm3467, %v6121, 0.0
        %v6158 = vsel %vm3468, %v6122, 0.0
        %v6159 = vsel %vm3469, %v6123, 0.0
        %v6160 = vsel %vm3470, %v6124, 0.0
        %v6161 = vsel %vm3471, %v6125, 0.0
        %v6162 = vsel %vm3472, %v6126, 0.0
        %v6163 = vsel %vm3473, %v6127, 0.0
        %v6164 = vsel %vm3474, %v6128, 0.0
        %v6165 = vsel %vm3475, %v6129, 0.0
        %v6166 = vsel %vm3476, %v6130, 0.0
        %v6167 = vsel %vm3477, %v6131, 0.0
        %v6168 = vsel %vm3478, %v6132, 0.0
        %v6169 = vsel %vm3479, %v6133, 0.0
        %v6170 = vsel %vm3480, %v6134, 0.0
        %v6171 = vsel %vm3481, %v6135, 0.0
        %v6172 = vsel %vm3482, %v6136, 0.0
        %v6173 = vsel %vm3483, %v6137, 0.0
        %v6174 = vsel %vm3484, %v6138, 0.0
        %v6175 = vsel %vm3485, %v6139, 0.0
        %v6176 = vsel %vm3486, %v6140, 0.0
        %v6177 = vsel %vm3487, %v6141, 0.0
        %v6178 = vsel %vm3488, %v6142, 0.0
        %v6179 = vsel %vm3489, %v6143, 0.0
        %v6180 = vsel %vm3490, %v6144, 0.0
        %v6181 = vsel %vm3491, %v6145, 0.0
        %v6182 = vsel %vm3492, %v6146, 0.0
        %v6183 = vsel %vm3493, %v6147, 0.0
        %v6184 = vsel %vm3494, %v6148, 0.0
        %v6185 = vsel %vm3495, %v6149, 0.0
        %v6186 = vsel %vm3496, %v6150, 0.0
        %v6187 = vsel %vm3497, %v6151, 0.0
        %v6188 = vsel %vm3498, %v6152, 0.0
        %v6189 = vsel %vm3499, %v6153, 0.0
        %v6190 = vsel %vm3500, %v6154, 0.0
        %v6191 = vsel %vm3501, %v6155, 0.0
        %v6192 = vadd.f32 %v6156, %v6157
        %v6193 = vadd.f32 %v6192, %v6158
        %v6194 = vadd.f32 %v6193, %v6159
        %v6195 = vadd.f32 %v6194, %v6160
        %v6196 = vadd.f32 %v6195, %v6161
        %v6197 = vadd.f32 %v6196, %v6162
        %v6198 = vadd.f32 %v6197, %v6163
        %v6199 = vadd.f32 %v6198, %v6164
        %v6200 = vadd.f32 %v6199, %v6165
        %v6201 = vadd.f32 %v6200, %v6166
        %v6202 = vadd.f32 %v6201, %v6167
        %v6203 = vadd.f32 %v6202, %v6168
        %v6204 = vadd.f32 %v6203, %v6169
        %v6205 = vadd.f32 %v6204, %v6170
        %v6206 = vadd.f32 %v6205, %v6171
        %v6207 = vadd.f32 %v6206, %v6172
        %v6208 = vadd.f32 %v6207, %v6173
        %v6209 = vadd.f32 %v6208, %v6174
        %v6210 = vadd.f32 %v6209, %v6175
        %v6211 = vadd.f32 %v6210, %v6176
        %v6212 = vadd.f32 %v6211, %v6177
        %v6213 = vadd.f32 %v6212, %v6178
        %v6214 = vadd.f32 %v6213, %v6179
        %v6215 = vadd.f32 %v6214, %v6180
        %v6216 = vadd.f32 %v6215, %v6181
        %v6217 = vadd.f32 %v6216, %v6182
        %v6218 = vadd.f32 %v6217, %v6183
        %v6219 = vadd.f32 %v6218, %v6184
        %v6220 = vadd.f32 %v6219, %v6185
        %v6221 = vadd.f32 %v6220, %v6186
        %v6222 = vadd.f32 %v6221, %v6187
        %v6223 = vadd.f32 %v6222, %v6188
        %v6224 = vadd.f32 %v6223, %v6189
        %v6225 = vadd.f32 %v6224, %v6190
        %v6226 = vadd.f32 %v6225, %v6191
        %v6227 = vrot.slane %v6226, 4
        %v6228 = vadd.f32 %v6226, %v6227
        %v6229 = vrot.slane %v6228, 2
        %v6230 = vadd.f32 %v6228, %v6229
        %v6231 = vrot.slane %v6230, 1
        %v6232 = vadd.f32 %v6230, %v6231
        %v6233 = vmul.f32 %v6156, %v6156
        %v6234 = vmul.f32 %v6157, %v6157
        %v6235 = vmul.f32 %v6158, %v6158
        %v6236 = vmul.f32 %v6159, %v6159
        %v6237 = vmul.f32 %v6160, %v6160
        %v6238 = vmul.f32 %v6161, %v6161
        %v6239 = vmul.f32 %v6162, %v6162
        %v6240 = vmul.f32 %v6163, %v6163
        %v6241 = vmul.f32 %v6164, %v6164
        %v6242 = vmul.f32 %v6165, %v6165
        %v6243 = vmul.f32 %v6166, %v6166
        %v6244 = vmul.f32 %v6167, %v6167
        %v6245 = vmul.f32 %v6168, %v6168
        %v6246 = vmul.f32 %v6169, %v6169
        %v6247 = vmul.f32 %v6170, %v6170
        %v6248 = vmul.f32 %v6171, %v6171
        %v6249 = vmul.f32 %v6172, %v6172
        %v6250 = vmul.f32 %v6173, %v6173
        %v6251 = vmul.f32 %v6174, %v6174
        %v6252 = vmul.f32 %v6175, %v6175
        %v6253 = vmul.f32 %v6176, %v6176
        %v6254 = vmul.f32 %v6177, %v6177
        %v6255 = vmul.f32 %v6178, %v6178
        %v6256 = vmul.f32 %v6179, %v6179
        %v6257 = vmul.f32 %v6180, %v6180
        %v6258 = vmul.f32 %v6181, %v6181
        %v6259 = vmul.f32 %v6182, %v6182
        %v6260 = vmul.f32 %v6183, %v6183
        %v6261 = vmul.f32 %v6184, %v6184
        %v6262 = vmul.f32 %v6185, %v6185
        %v6263 = vmul.f32 %v6186, %v6186
        %v6264 = vmul.f32 %v6187, %v6187
        %v6265 = vmul.f32 %v6188, %v6188
        %v6266 = vmul.f32 %v6189, %v6189
        %v6267 = vmul.f32 %v6190, %v6190
        %v6268 = vmul.f32 %v6191, %v6191
        %v6269 = vadd.f32 %v6233, %v6234
        %v6270 = vadd.f32 %v6269, %v6235
        %v6271 = vadd.f32 %v6270, %v6236
        %v6272 = vadd.f32 %v6271, %v6237
        %v6273 = vadd.f32 %v6272, %v6238
        %v6274 = vadd.f32 %v6273, %v6239
        %v6275 = vadd.f32 %v6274, %v6240
        %v6276 = vadd.f32 %v6275, %v6241
        %v6277 = vadd.f32 %v6276, %v6242
        %v6278 = vadd.f32 %v6277, %v6243
        %v6279 = vadd.f32 %v6278, %v6244
        %v6280 = vadd.f32 %v6279, %v6245
        %v6281 = vadd.f32 %v6280, %v6246
        %v6282 = vadd.f32 %v6281, %v6247
        %v6283 = vadd.f32 %v6282, %v6248
        %v6284 = vadd.f32 %v6283, %v6249
        %v6285 = vadd.f32 %v6284, %v6250
        %v6286 = vadd.f32 %v6285, %v6251
        %v6287 = vadd.f32 %v6286, %v6252
        %v6288 = vadd.f32 %v6287, %v6253
        %v6289 = vadd.f32 %v6288, %v6254
        %v6290 = vadd.f32 %v6289, %v6255
        %v6291 = vadd.f32 %v6290, %v6256
        %v6292 = vadd.f32 %v6291, %v6257
        %v6293 = vadd.f32 %v6292, %v6258
        %v6294 = vadd.f32 %v6293, %v6259
        %v6295 = vadd.f32 %v6294, %v6260
        %v6296 = vadd.f32 %v6295, %v6261
        %v6297 = vadd.f32 %v6296, %v6262
        %v6298 = vadd.f32 %v6297, %v6263
        %v6299 = vadd.f32 %v6298, %v6264
        %v6300 = vadd.f32 %v6299, %v6265
        %v6301 = vadd.f32 %v6300, %v6266
        %v6302 = vadd.f32 %v6301, %v6267
        %v6303 = vadd.f32 %v6302, %v6268
        %v6304 = vrot.slane %v6303, 4
        %v6305 = vadd.f32 %v6303, %v6304
        %v6306 = vrot.slane %v6305, 2
        %v6307 = vadd.f32 %v6305, %v6306
        %v6308 = vrot.slane %v6307, 1
        %v6309 = vadd.f32 %v6307, %v6308
        %v6310 = vmul.f32 %v6232, 0.00390625
        %v6311 = vmul.f32 %v6309, 0.00390625
        %v6312 = vmul.f32 %v6310, %v6310
        %v6313 = vsub.f32 %v6311, %v6312
        %v6314 = vmax.f32 %v6313, 0.0
        %v6315 = vsub.f32 %v6120, %v6310
        %v6316 = vsub.f32 %v6121, %v6310
        %v6317 = vsub.f32 %v6122, %v6310
        %v6318 = vsub.f32 %v6123, %v6310
        %v6319 = vsub.f32 %v6124, %v6310
        %v6320 = vsub.f32 %v6125, %v6310
        %v6321 = vsub.f32 %v6126, %v6310
        %v6322 = vsub.f32 %v6127, %v6310
        %v6323 = vsub.f32 %v6128, %v6310
        %v6324 = vsub.f32 %v6129, %v6310
        %v6325 = vsub.f32 %v6130, %v6310
        %v6326 = vsub.f32 %v6131, %v6310
        %v6327 = vsub.f32 %v6132, %v6310
        %v6328 = vsub.f32 %v6133, %v6310
        %v6329 = vsub.f32 %v6134, %v6310
        %v6330 = vsub.f32 %v6135, %v6310
        %v6331 = vsub.f32 %v6136, %v6310
        %v6332 = vsub.f32 %v6137, %v6310
        %v6333 = vsub.f32 %v6138, %v6310
        %v6334 = vsub.f32 %v6139, %v6310
        %v6335 = vsub.f32 %v6140, %v6310
        %v6336 = vsub.f32 %v6141, %v6310
        %v6337 = vsub.f32 %v6142, %v6310
        %v6338 = vsub.f32 %v6143, %v6310
        %v6339 = vsub.f32 %v6144, %v6310
        %v6340 = vsub.f32 %v6145, %v6310
        %v6341 = vsub.f32 %v6146, %v6310
        %v6342 = vsub.f32 %v6147, %v6310
        %v6343 = vsub.f32 %v6148, %v6310
        %v6344 = vsub.f32 %v6149, %v6310
        %v6345 = vsub.f32 %v6150, %v6310
        %v6346 = vsub.f32 %v6151, %v6310
        %v6347 = vsub.f32 %v6152, %v6310
        %v6348 = vsub.f32 %v6153, %v6310
        %v6349 = vsub.f32 %v6154, %v6310
        %v6350 = vsub.f32 %v6155, %v6310
        %v6351 = vadd.f32 %v6314, 1e-05
        %v6352 = vrsqrt.pop %v6351
        %v6353 = vmul.f32 %v6352, %v6351
        %v6354 = vmul.f32 %v6353, %v6352
        %v6355 = vmul.f32 0.5, %v6354
        %v6356 = vsub.f32 1.5, %v6355
        %v6357 = vmul.f32 %v6352, %v6356
        %vm6358 = vweird.f32 %v6351
        %vm6359 = vweird.f32 %v6352
        %vm6360 = vmor %vm6358, %vm6359
        %v6361 = vsel %vm6360, %v6352, %v6357
        %v6362 = vmul.f32 %v6315, %v6361
        %v6363 = vmul.f32 %v6316, %v6361
        %v6364 = vmul.f32 %v6317, %v6361
        %v6365 = vmul.f32 %v6318, %v6361
        %v6366 = vmul.f32 %v6319, %v6361
        %v6367 = vmul.f32 %v6320, %v6361
        %v6368 = vmul.f32 %v6321, %v6361
        %v6369 = vmul.f32 %v6322, %v6361
        %v6370 = vmul.f32 %v6323, %v6361
        %v6371 = vmul.f32 %v6324, %v6361
        %v6372 = vmul.f32 %v6325, %v6361
        %v6373 = vmul.f32 %v6326, %v6361
        %v6374 = vmul.f32 %v6327, %v6361
        %v6375 = vmul.f32 %v6328, %v6361
        %v6376 = vmul.f32 %v6329, %v6361
        %v6377 = vmul.f32 %v6330, %v6361
        %v6378 = vmul.f32 %v6331, %v6361
        %v6379 = vmul.f32 %v6332, %v6361
        %v6380 = vmul.f32 %v6333, %v6361
        %v6381 = vmul.f32 %v6334, %v6361
        %v6382 = vmul.f32 %v6335, %v6361
        %v6383 = vmul.f32 %v6336, %v6361
        %v6384 = vmul.f32 %v6337, %v6361
        %v6385 = vmul.f32 %v6338, %v6361
        %v6386 = vmul.f32 %v6339, %v6361
        %v6387 = vmul.f32 %v6340, %v6361
        %v6388 = vmul.f32 %v6341, %v6361
        %v6389 = vmul.f32 %v6342, %v6361
        %v6390 = vmul.f32 %v6343, %v6361
        %v6391 = vmul.f32 %v6344, %v6361
        %v6392 = vmul.f32 %v6345, %v6361
        %v6393 = vmul.f32 %v6346, %v6361
        %v6394 = vmul.f32 %v6347, %v6361
        %v6395 = vmul.f32 %v6348, %v6361
        %v6396 = vmul.f32 %v6349, %v6361
        %v6397 = vmul.f32 %v6350, %v6361
        %v6398 = vld [vmem:[%s239 + $0x13] sm:$0xff]
        %v6399 = vld [vmem:[%s239 + $0x1b] sm:$0xff]
        %v6400 = vld [vmem:[%s239 + $0x23] sm:$0xff]
        %v6401 = vld [vmem:[%s239 + $0x2b] sm:$0xff]
        %v6402 = vld [vmem:[%s239 + $0x33] sm:$0xff]
        %v6403 = vld [vmem:[%s239 + $0x3b] sm:$0xff]
        %v6404 = vld [vmem:[%s239 + $0x43] sm:$0xff]
        %v6405 = vld [vmem:[%s239 + $0x4b] sm:$0xff]
        %v6406 = vld [vmem:[%s239 + $0x53] sm:$0xff]
        %v6407 = vld [vmem:[%s239 + $0x5b] sm:$0xff]
        %v6408 = vld [vmem:[%s239 + $0x63] sm:$0xff]
        %v6409 = vld [vmem:[%s239 + $0x6b] sm:$0xff]
        %v6410 = vld [vmem:[%s239 + $0x73] sm:$0xff]
        %v6411 = vld [vmem:[%s239 + $0x7b] sm:$0xff]
        %v6412 = vld [vmem:[%s239 + $0x83] sm:$0xff]
        %v6413 = vld [vmem:[%s239 + $0x8b] sm:$0xff]
        %v6414 = vld [vmem:[%s239 + $0x93] sm:$0xff]
        %v6415 = vld [vmem:[%s239 + $0x9b] sm:$0xff]
        %v6416 = vld [vmem:[%s239 + $0xa3] sm:$0xff]
        %v6417 = vld [vmem:[%s239 + $0xab] sm:$0xff]
        %v6418 = vld [vmem:[%s239 + $0xb3] sm:$0xff]
        %v6419 = vld [vmem:[%s239 + $0xbb] sm:$0xff]
        %v6420 = vld [vmem:[%s239 + $0xc3] sm:$0xff]
        %v6421 = vld [vmem:[%s239 + $0xcb] sm:$0xff]
        %v6422 = vld [vmem:[%s239 + $0xd3] sm:$0xff]
        %v6423 = vld [vmem:[%s239 + $0xdb] sm:$0xff]
        %v6424 = vld [vmem:[%s239 + $0xe3] sm:$0xff]
        %v6425 = vld [vmem:[%s239 + $0xeb] sm:$0xff]
        %v6426 = vld [vmem:[%s239 + $0xf3] sm:$0xff]
        %v6427 = vld [vmem:[%s239 + $0xfb] sm:$0xff]
        %v6428 = vld [vmem:[%s239 + $0x103] sm:$0xff]
        %v6429 = vld [vmem:[%s239 + $0x10b] sm:$0xff]
        %v6430 = vld [vmem:[%s239 + $0x113] sm:$0xff]
        %v6431 = vld [vmem:[%s239 + $0x11b] sm:$0xff]
        %v6432 = vld [vmem:[%s239 + $0x123] sm:$0xff]
        %v6433 = vld [vmem:[%s239 + $0x12b] sm:$0xff]
        %v6434 = vadd.f32 %v6398, %v6362
        %v6435 = vadd.f32 %v6399, %v6363
        %v6436 = vadd.f32 %v6400, %v6364
        %v6437 = vadd.f32 %v6401, %v6365
        %v6438 = vadd.f32 %v6402, %v6366
        %v6439 = vadd.f32 %v6403, %v6367
        %v6440 = vadd.f32 %v6404, %v6368
        %v6441 = vadd.f32 %v6405, %v6369
        %v6442 = vadd.f32 %v6406, %v6370
        %v6443 = vadd.f32 %v6407, %v6371
        %v6444 = vadd.f32 %v6408, %v6372
        %v6445 = vadd.f32 %v6409, %v6373
        %v6446 = vadd.f32 %v6410, %v6374
        %v6447 = vadd.f32 %v6411, %v6375
        %v6448 = vadd.f32 %v6412, %v6376
        %v6449 = vadd.f32 %v6413, %v6377
        %v6450 = vadd.f32 %v6414, %v6378
        %v6451 = vadd.f32 %v6415, %v6379
        %v6452 = vadd.f32 %v6416, %v6380
        %v6453 = vadd.f32 %v6417, %v6381
        %v6454 = vadd.f32 %v6418, %v6382
        %v6455 = vadd.f32 %v6419, %v6383
        %v6456 = vadd.f32 %v6420, %v6384
        %v6457 = vadd.f32 %v6421, %v6385
        %v6458 = vadd.f32 %v6422, %v6386
        %v6459 = vadd.f32 %v6423, %v6387
        %v6460 = vadd.f32 %v6424, %v6388
        %v6461 = vadd.f32 %v6425, %v6389
        %v6462 = vadd.f32 %v6426, %v6390
        %v6463 = vadd.f32 %v6427, %v6391
        %v6464 = vadd.f32 %v6428, %v6392
        %v6465 = vadd.f32 %v6429, %v6393
        %v6466 = vadd.f32 %v6430, %v6394
        %v6467 = vadd.f32 %v6431, %v6395
        %v6468 = vadd.f32 %v6432, %v6396
        %v6469 = vadd.f32 %v6433, %v6397
        %6470 = vst [vmem:[%s234] sm:$0xff] %v6434
        %6471 = vst [vmem:[%s234 + $0x8] sm:$0xff] %v6435
        %6472 = vst [vmem:[%s234 + $0x10] sm:$0xff] %v6436
        %6473 = vst [vmem:[%s234 + $0x18] sm:$0xff] %v6437
        %6474 = vst [vmem:[%s234 + $0x20] sm:$0xff] %v6438
        %6475 = vst [vmem:[%s234 + $0x28] sm:$0xff] %v6439
        %6476 = vst [vmem:[%s234 + $0x30] sm:$0xff] %v6440
        %6477 = vst [vmem:[%s234 + $0x38] sm:$0xff] %v6441
        %6478 = vst [vmem:[%s234 + $0x40] sm:$0xff] %v6442
        %6479 = vst [vmem:[%s234 + $0x48] sm:$0xff] %v6443
        %6480 = vst [vmem:[%s234 + $0x50] sm:$0xff] %v6444
        %6481 = vst [vmem:[%s234 + $0x58] sm:$0xff] %v6445
        %6482 = vst [vmem:[%s234 + $0x60] sm:$0xff] %v6446
        %6483 = vst [vmem:[%s234 + $0x68] sm:$0xff] %v6447
        %6484 = vst [vmem:[%s234 + $0x70] sm:$0xff] %v6448
        %6485 = vst [vmem:[%s234 + $0x78] sm:$0xff] %v6449
        %6486 = vst [vmem:[%s234 + $0x80] sm:$0xff] %v6450
        %6487 = vst [vmem:[%s234 + $0x88] sm:$0xff] %v6451
        %6488 = vst [vmem:[%s234 + $0x90] sm:$0xff] %v6452
        %6489 = vst [vmem:[%s234 + $0x98] sm:$0xff] %v6453
        %6490 = vst [vmem:[%s234 + $0xa0] sm:$0xff] %v6454
        %6491 = vst [vmem:[%s234 + $0xa8] sm:$0xff] %v6455
        %6492 = vst [vmem:[%s234 + $0xb0] sm:$0xff] %v6456
        %6493 = vst [vmem:[%s234 + $0xb8] sm:$0xff] %v6457
        %6494 = vst [vmem:[%s234 + $0xc0] sm:$0xff] %v6458
        %6495 = vst [vmem:[%s234 + $0xc8] sm:$0xff] %v6459
        %6496 = vst [vmem:[%s234 + $0xd0] sm:$0xff] %v6460
        %6497 = vst [vmem:[%s234 + $0xd8] sm:$0xff] %v6461
        %6498 = vst [vmem:[%s234 + $0xe0] sm:$0xff] %v6462
        %6499 = vst [vmem:[%s234 + $0xe8] sm:$0xff] %v6463
        %6500 = vst [vmem:[%s234 + $0xf0] sm:$0xff] %v6464
        %6501 = vst [vmem:[%s234 + $0xf8] sm:$0xff] %v6465
        %6502 = vst [vmem:[%s234 + $0x100] sm:$0xff] %v6466
        %6503 = vst [vmem:[%s234 + $0x108] sm:$0xff] %v6467
        %6504 = vst [vmem:[%s234 + $0x110] sm:$0xff] %v6468
        %6505 = vst [vmem:[%s234 + $0x118] sm:$0xff] %v6469
        %s6506 = sand.u32 %s138, 1
        %s6507 = scalar_lea.sflag [#allocation5], %s6506
        %s6508 = sand.u32 %s138, 1
        %s6509 = smul.addr %s6508, 288
        %s6510 = scalar_lea.vmem [#allocation6], %s6509
        // Predicated region
        $region45: #{tpu_custom_call.1} parent=39 // pred_check
          %p6511 = pneg %p148
        $region46: #{tpu_custom_call.1} parent=39 // pred_check_branch
          %6513 = sbr.rel (%p6511) target = $region48
        $region47: #{tpu_custom_call.1} parent=39 // pred_region
          %6515 = vsyncadd %s6507, 0
          %s6516 = smul.addr %s20, 36
          %s6517 = smul.addr %s6516, 8
          %s6518 = scalar_lea.hbm %s5, %s6517
          %s6519 = sshll.u32 %s6510, 4
          %s6520 = int_to_ptr.vmem [resolvable:$true] %s6519
          %s6521 = sshll.u32 %s6518, 4
          %s6522 = int_to_ptr.hbm [resolvable:$true] %s6521
          %6527 = dma.vmem_to_hbm [thread:$0]  %s6520, 4608, %s6522, %s6507, 128, 128, 8
        $region48: #{tpu_custom_call.1} parent=39 // pred_fallthru
          _
      $region40: #{tpu_custom_call.1} parent=5 // pred_fallthru
        _
      %p6528 = scmp.le.s32.totalorder 2, %s15
      // Predicated region
      $region49: #{tpu_custom_call.1} parent=5 // pred_check
        %p6529 = pneg %p6528
      $region50: #{tpu_custom_call.1} parent=5 // pred_check_branch
        %6531 = sbr.rel (%p6529) target = $region52
      $region51: #{tpu_custom_call.1} parent=5 // pred_region
        %s6532 = ssub.s32 %s15, 2
        // Predicated region
        $region53: #{tpu_custom_call.1} parent=51 // pred_check
          %p6533 = pneg %p154
        $region54: #{tpu_custom_call.1} parent=51 // pred_check_branch
          %6535 = sbr.rel (%p6533) target = $region56
        $region55: #{tpu_custom_call.1} parent=51 // pred_region
          %s6536 = sand.u32 %s139, 1
          %s6537 = scalar_lea.sflag [#allocation5], %s6536
          %s6538 = sand.u32 %s139, 1
          %s6539 = smul.addr %s6538, 288
          %s6540 = scalar_lea.vmem [#allocation6], %s6539
          %6542 = dma.done %s6537, 4608
        $region56: #{tpu_custom_call.1} parent=51 // pred_fallthru
          _
      $region52: #{tpu_custom_call.1} parent=5 // pred_fallthru
        _
    $region6: #{tpu_custom_call.1} parent=1 // loop_footer
      %s19 = sadd.s32 1, %s15
    $region7: #{tpu_custom_call.1} parent=1 // loop_footer_branch
      %14 = sbr.rel target = $region3
    $region8: #{tpu_custom_call.1} parent=1 // loop_exit
      _
    %6543 = vsyncpa [#allocation4], 1
    %s6544 = scalar_lea.sflag [#allocation4], 1
    %6545 = vsyncpa %s6544, 1
    %6546 = vsyncpa [#allocation5], 1
    %s6547 = scalar_lea.sflag [#allocation5], 1
    %6548 = vsyncpa %s6547, 1

</llo_original>
